<compile_context>
chip_gen: v7x
topology: tpu7x:2x2x1
jax: 0.10.0
libtpu: 0.0.40
codegen_flags: <defaults>
</compile_context>

<pallas_src>
import functools

import jax
import jax.numpy as jnp
from jax.experimental import pallas as pl
from jax.experimental.pallas import tpu as pltpu


def _round_up(x, m):
    return (x + m - 1) // m * m


def _pick_group(n, rows_per_item, target=256, cap=2048):
    """Smallest divisor g of n with g*rows_per_item >= target (VMEM-capped)."""
    best = 1
    for g in range(1, n + 1):
        if n % g == 0:
            if g * rows_per_item >= target:
                return g if g * rows_per_item <= cap else best
            best = g
    return best


# ----------------------------------------------------------------------------
# Kernels
# ----------------------------------------------------------------------------
def _mm_bn_relu_kernel(x_ref, w_ref, scale_ref, bias_ref, o_ref):
    """1x1 conv + folded BN + ReLU: one (TM, Cin) x (Cin, Cout) MXU matmul."""
    y = jnp.dot(x_ref[...].astype(jnp.bfloat16), w_ref[...],
                preferred_element_type=jnp.float32)
    y = y * scale_ref[...] + bias_ref[...]
    o_ref[...] = jnp.maximum(y, 0.0).astype(o_ref.dtype)


def _conv1d_bn_relu_kernel(x_ref, w_ref, scale_ref, bias_ref, o_ref, pad_ref,
                           *, K, axis, pad):
    """1x7 (axis=2) or 7x1 (axis=1) conv + folded BN + ReLU on whole images.

    x_ref:     (TB, H, W, Cin)     input block (group of whole images)
    w_ref:     (K, Cin, Cout)      bf16 conv taps
    scale_ref: (1, Cout)           gamma / sqrt(var + eps)
    bias_ref:  (1, Cout)           beta - mean * scale
    o_ref:     (TB, H, W, Cout)
    pad_ref:   VMEM scratch holding the zero-halo padded block (halo built in
               VMEM, never materialized in HBM).
    """
    TB, H, W, Cin = x_ref.shape
    Cout = o_ref.shape[-1]
    M = TB * H * W

    # Build the zero halo in VMEM scratch.
    pad_ref[...] = jnp.zeros(pad_ref.shape, jnp.float32)
    if axis == 1:
        pad_ref[:, pad:pad + H, :, :] = x_ref[...]
    else:
        pad_ref[:, :, pad:pad + W, :] = x_ref[...]

    acc = jnp.zeros((M, Cout), jnp.float32)
    for d in range(K):                               # K == 7, fully unrolled
        if axis == 1:                                # shift along H (7x1)
            xs = pad_ref[:, d:d + H, :, :]
        else:                                        # shift along W (1x7)
            xs = pad_ref[:, :, d:d + W, :]
        xs = xs.reshape(M, Cin).astype(jnp.bfloat16)
        acc = acc + jnp.dot(xs, w_ref[d], preferred_element_type=jnp.float32)

    y = acc * scale_ref[...] + bias_ref[...]
    y = jnp.maximum(y, 0.0)                          # ReLU
    o_ref[...] = y.reshape(TB, H, W, Cout).astype(o_ref.dtype)


def _avgpool_conv_bn_relu_kernel(x_ref, w_ref, scale_ref, bias_ref, o_ref, pad_ref):
    """Fused AvgPool2d(3,1,1,count_include_pad) + 1x1 conv + BN + ReLU."""
    TB, H, W, Cin = x_ref.shape
    Cout = o_ref.shape[-1]

    # Zero halo in VMEM (no padded / pooled intermediates in HBM).
    pad_ref[...] = jnp.zeros(pad_ref.shape, jnp.float32)
    pad_ref[:, 1:1 + H, 1:1 + W, :] = x_ref[...]

    acc = jnp.zeros((TB, H, W, Cin), jnp.float32)
    for dh in range(3):
        for dw in range(3):
            acc = acc + pad_ref[:, dh:dh + H, dw:dw + W, :]
    pooled = (acc * (1.0 / 9.0)).reshape(TB * H * W, Cin)

    y = jnp.dot(pooled.astype(jnp.bfloat16), w_ref[...],
                preferred_element_type=jnp.float32)
    y = y * scale_ref[...] + bias_ref[...]
    y = jnp.maximum(y, 0.0)
    o_ref[...] = y.reshape(TB, H, W, Cout).astype(o_ref.dtype)


# ----------------------------------------------------------------------------
# Wrappers around pallas_call
# ----------------------------------------------------------------------------
def conv1x1_bn_relu(x, w, scale, bias, *, tm=256):
    """x: (N,H,W,Cin).  w: (Cin,Cout) bf16.  Collapses (N,H,W) into a tiled M axis."""
    N, H, W, Cin = x.shape
    Cout = w.shape[-1]
    M = N * H * W
    TM = tm if M >= tm else _round_up(M, 8)
    Mp = _round_up(M, TM)
    xr = x.reshape(M, Cin)
    if Mp != M:
        xr = jnp.pad(xr, ((0, Mp - M), (0, 0)))

    out = pl.pallas_call(
        _mm_bn_relu_kernel,
        out_shape=jax.ShapeDtypeStruct((Mp, Cout), x.dtype),
        grid=(Mp // TM,),
        in_specs=[
            pl.BlockSpec((TM, Cin), lambda i: (i, 0)),
            pl.BlockSpec((Cin, Cout), lambda i: (0, 0)),
            pl.BlockSpec((1, Cout), lambda i: (0, 0)),
            pl.BlockSpec((1, Cout), lambda i: (0, 0)),
        ],
        out_specs=pl.BlockSpec((TM, Cout), lambda i: (i, 0)),
        compiler_params=pltpu.CompilerParams(dimension_semantics=("parallel",)),
    )(xr, w, scale, bias)

    if Mp != M:
        out = out[:M]
    return out.reshape(N, H, W, Cout)


def conv1d_bn_relu(x, w, scale, bias, *, axis, pad):
    """1-D conv along H (axis=1, 7x1) or W (axis=2, 1x7) + BN + ReLU, NHWC."""
    N, H, W, Cin = x.shape
    K, _, Cout = w.shape
    assert K % 2 == 1 and pad == (K - 1) // 2, "kernel assumes 'same' padding"
    TB = _pick_group(N, H * W)
    pad_shape = ((TB, H + 2 * pad, W, Cin) if axis == 1
                 else (TB, H, W + 2 * pad, Cin))

    return pl.pallas_call(
        functools.partial(_conv1d_bn_relu_kernel, K=K, axis=axis, pad=pad),
        out_shape=jax.ShapeDtypeStruct((N, H, W, Cout), x.dtype),
        grid=(N // TB,),
        in_specs=[
            pl.BlockSpec((TB, H, W, Cin), lambda b: (b, 0, 0, 0)),
            pl.BlockSpec((K, Cin, Cout), lambda b: (0, 0, 0)),
            pl.BlockSpec((1, Cout), lambda b: (0, 0)),
            pl.BlockSpec((1, Cout), lambda b: (0, 0)),
        ],
        out_specs=pl.BlockSpec((TB, H, W, Cout), lambda b: (b, 0, 0, 0)),
        scratch_shapes=[pltpu.VMEM(pad_shape, jnp.float32)],
        compiler_params=pltpu.CompilerParams(dimension_semantics=("parallel",)),
    )(x, w, scale, bias)


def avgpool_conv1x1_bn_relu(x, w, scale, bias):
    """Fused AvgPool2d(3,1,1) + 1x1 conv + BN + ReLU, NHWC."""
    N, H, W, Cin = x.shape
    Cout = w.shape[-1]
    TB = _pick_group(N, H * W)

    return pl.pallas_call(
        _avgpool_conv_bn_relu_kernel,
        out_shape=jax.ShapeDtypeStruct((N, H, W, Cout), x.dtype),
        grid=(N // TB,),
        in_specs=[
            pl.BlockSpec((TB, H, W, Cin), lambda b: (b, 0, 0, 0)),
            pl.BlockSpec((Cin, Cout), lambda b: (0, 0)),
            pl.BlockSpec((1, Cout), lambda b: (0, 0)),
            pl.BlockSpec((1, Cout), lambda b: (0, 0)),
        ],
        out_specs=pl.BlockSpec((TB, H, W, Cout), lambda b: (b, 0, 0, 0)),
        scratch_shapes=[pltpu.VMEM((TB, H + 2, W + 2, Cin), jnp.float32)],
        compiler_params=pltpu.CompilerParams(dimension_semantics=("parallel",)),
    )(x, w, scale, bias)


# ----------------------------------------------------------------------------
# Parameter initialization (deterministic, synthetic; BN folded, lane-padded)
# ----------------------------------------------------------------------------
def _basic_conv_params(key, cin_real, cin_pad, cout_real, cout_pad, kh, kw):
    kw_, kg, kb, km, kv = jax.random.split(key, 5)
    K = kh * kw
    fan_in = cin_real * kh * kw
    w = jax.random.normal(kw_, (K, cin_real, cout_real), jnp.float32) / jnp.sqrt(
        jnp.float32(fan_in))
    gamma = 1.0 + 0.1 * jax.random.normal(kg, (cout_real,), jnp.float32)
    beta = 0.05 * jax.random.normal(kb, (cout_real,), jnp.float32)
    mean = 0.05 * jax.random.normal(km, (cout_real,), jnp.float32)
    var = 0.1 * jnp.abs(jax.random.normal(kv, (cout_real,), jnp.float32)) + 1.0
    eps = 1e-5
    scale = gamma / jnp.sqrt(var + eps)          # BN (inference) folded
    bias = beta - mean * scale
    # Lane padding: extra Cin rows / Cout cols are zero; padded output channels get
    # scale = bias = 0 -> exactly 0 after ReLU, and zero weight rows downstream.
    w = jnp.pad(w, ((0, 0), (0, cin_pad - cin_real), (0, cout_pad - cout_real)))
    scale = jnp.pad(scale, (0, cout_pad - cout_real))
    bias = jnp.pad(bias, (0, cout_pad - cout_real))
    return {
        "w": w.astype(jnp.bfloat16),                       # bf16 MXU operands
        "scale": scale.reshape(1, cout_pad),
        "bias": bias.reshape(1, cout_pad),
    }


def init_inception_b_params(key, in_planes, *, lane=128):
    # (cout, kh, kw, pad, mode)
    specs = {
        "b1x1": [(384, 1, 1, 0, "1x1")],
        "b7x7": [(192, 1, 1, 0, "1x1"),
                 (224, 1, 7, 3, "1xk"),
                 (256, 7, 1, 3, "kx1")],
        "b7x7stack": [(192, 1, 1, 0, "1x1"),
                      (192, 1, 7, 3, "1xk"),
                      (224, 7, 1, 3, "kx1"),
                      (224, 1, 7, 3, "1xk"),
                      (256, 7, 1, 3, "kx1")],
        "bpool": [(128, 1, 1, 0, "pool1x1")],
    }
    n_layers = sum(len(v) for v in specs.values())
    keys = jax.random.split(key, n_layers)
    params, i = {}, 0
    for name, layers in specs.items():
        plist = []
        cin_real = cin_pad = in_planes
        for (cout_real, kh, kw, pad, mode) in layers:
            cout_pad = _round_up(cout_real, lane)
            p = _basic_conv_params(keys[i], cin_real, cin_pad, cout_real, cout_pad,
                                   kh, kw)
            p["pad"], p["mode"] = pad, mode
            plist.append(p)
            cin_real, cin_pad = cout_real, cout_pad
            i += 1
        params[name] = plist
    return params


# ----------------------------------------------------------------------------
# InceptionB forward
# ----------------------------------------------------------------------------
def inception_b_forward(x_nchw, params):
    x = jnp.transpose(x_nchw, (0, 2, 3, 1))        # NCHW -> NHWC

    def run_branch(h, plist):
        for p in plist:
            if p["mode"] == "1x1":
                h = conv1x1_bn_relu(h, p["w"][0], p["scale"], p["bias"])
            elif p["mode"] == "1xk":               # conv along W
                h = conv1d_bn_relu(h, p["w"], p["scale"], p["bias"],
                                   axis=2, pad=p["pad"])
            else:                                  # "kx1": conv along H
                h = conv1d_bn_relu(h, p["w"], p["scale"], p["bias"],
                                   axis=1, pad=p["pad"])
        return h

    b1 = run_branch(x, params["b1x1"])             # (N, H, W, 384)
    b2 = run_branch(x, params["b7x7"])             # (N, H, W, 256)
    b3 = run_branch(x, params["b7x7stack"])        # (N, H, W, 256)
    pp = params["bpool"][0]
    bp = avgpool_conv1x1_bn_relu(x, pp["w"][0], pp["scale"], pp["bias"])  # (N,H,W,128)

    out = jnp.concatenate([b1, b2, b3, bp], axis=-1)   # channel concat (dim 1 in NCHW)
    return jnp.transpose(out, (0, 3, 1, 2))        # NHWC -> NCHW


# ----------------------------------------------------------------------------
if __name__ == "__main__":
    key = jax.random.PRNGKey(0)
    kx, kp = jax.random.split(key)

    N, C_IN, H, W = 2, 32, 8, 8                    # small synthetic shapes
    x = jax.random.normal(kx, (N, C_IN, H, W), jnp.float32)
    params = init_inception_b_params(kp, C_IN)

    fwd = jax.jit(lambda xx: inception_b_forward(xx, params))
    out = jax.block_until_ready(fwd(x))

    assert out.shape == (N, 384 + 256 + 256 + 128, H, W), out.shape
    assert out.dtype == jnp.float32
    assert bool(jnp.all(out >= 0.0))               # ReLU epilogue sanity check
    print("KERNEL_OK")
</pallas_src>

<mosaic_0001>
module attributes {stable_mosaic.version = 11 : i64} {
  func.func @_conv1d_bn_relu_kernel(%arg0: i32, %arg1: memref<2x8x8x256xf32, #tpu.memory_space<vmem>>, %arg2: memref<7x256x256xbf16, #tpu.memory_space<vmem>>, %arg3: memref<1x256xf32, #tpu.memory_space<vmem>>, %arg4: memref<1x256xf32, #tpu.memory_space<vmem>>, %arg5: memref<2x8x8x256xf32, #tpu.memory_space<vmem>>, %arg6: memref<2x8x14x256xf32, #tpu.memory_space<vmem>>) attributes {dimension_semantics = [#tpu.dimension_semantics<parallel>], iteration_bounds = array<i64: 1>, scalar_prefetch = 0 : i64, scratch_operands = 1 : i64, tpu.core_type = #tpu.core_type<tc>, window_params = [{transform_indices = @transform_0, window_bounds = array<i64: 2, 8, 8, 256>}, {pipeline_mode = #tpu.pipeline_mode<synchronous>, transform_indices = @transform_1, window_bounds = array<i64: 7, 256, 256>}, {pipeline_mode = #tpu.pipeline_mode<synchronous>, transform_indices = @transform_2, window_bounds = array<i64: 1, 256>}, {pipeline_mode = #tpu.pipeline_mode<synchronous>, transform_indices = @transform_3, window_bounds = array<i64: 1, 256>}, {transform_indices = @transform_4, window_bounds = array<i64: 2, 8, 8, 256>}]} {
    %cst = arith.constant 0.000000e+00 : f32
    %0 = vector.broadcast %cst : f32 to vector<2x8x14x256xf32>
    %c0 = arith.constant 0 : index
    %c0_0 = arith.constant 0 : index
    %c0_1 = arith.constant 0 : index
    %c0_2 = arith.constant 0 : index
    %1 = vector.load %arg6[%c0, %c0_0, %c0_1, %c0_2] : memref<2x8x14x256xf32, #tpu.memory_space<vmem>>, vector<2x8x14x256xf32>
    tpu.vector_store %arg6[%c0, %c0_0, %c0_1, %c0_2], %0 {strides = array<i32>} : memref<2x8x14x256xf32, #tpu.memory_space<vmem>>, vector<2x8x14x256xf32>,
    %c0_3 = arith.constant 0 : index
    %c0_4 = arith.constant 0 : index
    %c0_5 = arith.constant 0 : index
    %c0_6 = arith.constant 0 : index
    %2 = vector.load %arg1[%c0_3, %c0_4, %c0_5, %c0_6] : memref<2x8x8x256xf32, #tpu.memory_space<vmem>>, vector<2x8x8x256xf32>
    %c0_7 = arith.constant 0 : index
    %c0_8 = arith.constant 0 : index
    %c3 = arith.constant 3 : index
    %c0_9 = arith.constant 0 : index
    %3 = vector.load %arg6[%c0_7, %c0_8, %c3, %c0_9] : memref<2x8x14x256xf32, #tpu.memory_space<vmem>>, vector<2x8x8x256xf32>
    tpu.vector_store %arg6[%c0_7, %c0_8, %c3, %c0_9], %2 {strides = array<i32>} : memref<2x8x14x256xf32, #tpu.memory_space<vmem>>, vector<2x8x8x256xf32>,
    %cst_10 = arith.constant 0.000000e+00 : f32
    %4 = vector.broadcast %cst_10 : f32 to vector<128x256xf32>
    %c0_11 = arith.constant 0 : index
    %c0_12 = arith.constant 0 : index
    %c0_13 = arith.constant 0 : index
    %c0_14 = arith.constant 0 : index
    %5 = vector.load %arg6[%c0_11, %c0_12, %c0_13, %c0_14] : memref<2x8x14x256xf32, #tpu.memory_space<vmem>>, vector<2x8x8x256xf32>
    %6 = vector.shape_cast %5 : vector<2x8x8x256xf32> to vector<128x256xf32>
    %7 = arith.truncf %6 : vector<128x256xf32> to vector<128x256xbf16>
    %c0_15 = arith.constant 0 : index
    %c0_16 = arith.constant 0 : index
    %c0_17 = arith.constant 0 : index
    %8 = vector.load %arg2[%c0_15, %c0_16, %c0_17] : memref<7x256x256xbf16, #tpu.memory_space<vmem>>, vector<1x256x256xbf16>
    %9 = vector.shape_cast %8 : vector<1x256x256xbf16> to vector<256x256xbf16>
    %cst_18 = arith.constant dense<0.000000e+00> : vector<128x256xf32>
    %10 = tpu.matmul %7, %9, %cst_18 {dimension_numbers = #tpu.dot_dimension_numbers<[1], [0], [0], [1], [0, 0, 1, 1], [], []>} : vector<128x256xbf16>, vector<256x256xbf16>, vector<128x256xf32> -> vector<128x256xf32>
    %11 = arith.addf %4, %10 : vector<128x256xf32>
    %c0_19 = arith.constant 0 : index
    %c0_20 = arith.constant 0 : index
    %c1 = arith.constant 1 : index
    %c0_21 = arith.constant 0 : index
    %12 = vector.load %arg6[%c0_19, %c0_20, %c1, %c0_21] : memref<2x8x14x256xf32, #tpu.memory_space<vmem>>, vector<2x8x8x256xf32>
    %13 = vector.shape_cast %12 : vector<2x8x8x256xf32> to vector<128x256xf32>
    %14 = arith.truncf %13 : vector<128x256xf32> to vector<128x256xbf16>
    %c1_22 = arith.constant 1 : index
    %c0_23 = arith.constant 0 : index
    %c0_24 = arith.constant 0 : index
    %15 = vector.load %arg2[%c1_22, %c0_23, %c0_24] : memref<7x256x256xbf16, #tpu.memory_space<vmem>>, vector<1x256x256xbf16>
    %16 = vector.shape_cast %15 : vector<1x256x256xbf16> to vector<256x256xbf16>
    %cst_25 = arith.constant dense<0.000000e+00> : vector<128x256xf32>
    %17 = tpu.matmul %14, %16, %cst_25 {dimension_numbers = #tpu.dot_dimension_numbers<[1], [0], [0], [1], [0, 0, 1, 1], [], []>} : vector<128x256xbf16>, vector<256x256xbf16>, vector<128x256xf32> -> vector<128x256xf32>
    %18 = arith.addf %11, %17 : vector<128x256xf32>
    %c0_26 = arith.constant 0 : index
    %c0_27 = arith.constant 0 : index
    %c2 = arith.constant 2 : index
    %c0_28 = arith.constant 0 : index
    %19 = vector.load %arg6[%c0_26, %c0_27, %c2, %c0_28] : memref<2x8x14x256xf32, #tpu.memory_space<vmem>>, vector<2x8x8x256xf32>
    %20 = vector.shape_cast %19 : vector<2x8x8x256xf32> to vector<128x256xf32>
    %21 = arith.truncf %20 : vector<128x256xf32> to vector<128x256xbf16>
    %c2_29 = arith.constant 2 : index
    %c0_30 = arith.constant 0 : index
    %c0_31 = arith.constant 0 : index
    %22 = vector.load %arg2[%c2_29, %c0_30, %c0_31] : memref<7x256x256xbf16, #tpu.memory_space<vmem>>, vector<1x256x256xbf16>
    %23 = vector.shape_cast %22 : vector<1x256x256xbf16> to vector<256x256xbf16>
    %cst_32 = arith.constant dense<0.000000e+00> : vector<128x256xf32>
    %24 = tpu.matmul %21, %23, %cst_32 {dimension_numbers = #tpu.dot_dimension_numbers<[1], [0], [0], [1], [0, 0, 1, 1], [], []>} : vector<128x256xbf16>, vector<256x256xbf16>, vector<128x256xf32> -> vector<128x256xf32>
    %25 = arith.addf %18, %24 : vector<128x256xf32>
    %c0_33 = arith.constant 0 : index
    %c0_34 = arith.constant 0 : index
    %c3_35 = arith.constant 3 : index
    %c0_36 = arith.constant 0 : index
    %26 = vector.load %arg6[%c0_33, %c0_34, %c3_35, %c0_36] : memref<2x8x14x256xf32, #tpu.memory_space<vmem>>, vector<2x8x8x256xf32>
    %27 = vector.shape_cast %26 : vector<2x8x8x256xf32> to vector<128x256xf32>
    %28 = arith.truncf %27 : vector<128x256xf32> to vector<128x256xbf16>
    %c3_37 = arith.constant 3 : index
    %c0_38 = arith.constant 0 : index
    %c0_39 = arith.constant 0 : index
    %29 = vector.load %arg2[%c3_37, %c0_38, %c0_39] : memref<7x256x256xbf16, #tpu.memory_space<vmem>>, vector<1x256x256xbf16>
    %30 = vector.shape_cast %29 : vector<1x256x256xbf16> to vector<256x256xbf16>
    %cst_40 = arith.constant dense<0.000000e+00> : vector<128x256xf32>
    %31 = tpu.matmul %28, %30, %cst_40 {dimension_numbers = #tpu.dot_dimension_numbers<[1], [0], [0], [1], [0, 0, 1, 1], [], []>} : vector<128x256xbf16>, vector<256x256xbf16>, vector<128x256xf32> -> vector<128x256xf32>
    %32 = arith.addf %25, %31 : vector<128x256xf32>
    %c0_41 = arith.constant 0 : index
    %c0_42 = arith.constant 0 : index
    %c4 = arith.constant 4 : index
    %c0_43 = arith.constant 0 : index
    %33 = vector.load %arg6[%c0_41, %c0_42, %c4, %c0_43] : memref<2x8x14x256xf32, #tpu.memory_space<vmem>>, vector<2x8x8x256xf32>
    %34 = vector.shape_cast %33 : vector<2x8x8x256xf32> to vector<128x256xf32>
    %35 = arith.truncf %34 : vector<128x256xf32> to vector<128x256xbf16>
    %c4_44 = arith.constant 4 : index
    %c0_45 = arith.constant 0 : index
    %c0_46 = arith.constant 0 : index
    %36 = vector.load %arg2[%c4_44, %c0_45, %c0_46] : memref<7x256x256xbf16, #tpu.memory_space<vmem>>, vector<1x256x256xbf16>
    %37 = vector.shape_cast %36 : vector<1x256x256xbf16> to vector<256x256xbf16>
    %cst_47 = arith.constant dense<0.000000e+00> : vector<128x256xf32>
    %38 = tpu.matmul %35, %37, %cst_47 {dimension_numbers = #tpu.dot_dimension_numbers<[1], [0], [0], [1], [0, 0, 1, 1], [], []>} : vector<128x256xbf16>, vector<256x256xbf16>, vector<128x256xf32> -> vector<128x256xf32>
    %39 = arith.addf %32, %38 : vector<128x256xf32>
    %c0_48 = arith.constant 0 : index
    %c0_49 = arith.constant 0 : index
    %c5 = arith.constant 5 : index
    %c0_50 = arith.constant 0 : index
    %40 = vector.load %arg6[%c0_48, %c0_49, %c5, %c0_50] : memref<2x8x14x256xf32, #tpu.memory_space<vmem>>, vector<2x8x8x256xf32>
    %41 = vector.shape_cast %40 : vector<2x8x8x256xf32> to vector<128x256xf32>
    %42 = arith.truncf %41 : vector<128x256xf32> to vector<128x256xbf16>
    %c5_51 = arith.constant 5 : index
    %c0_52 = arith.constant 0 : index
    %c0_53 = arith.constant 0 : index
    %43 = vector.load %arg2[%c5_51, %c0_52, %c0_53] : memref<7x256x256xbf16, #tpu.memory_space<vmem>>, vector<1x256x256xbf16>
    %44 = vector.shape_cast %43 : vector<1x256x256xbf16> to vector<256x256xbf16>
    %cst_54 = arith.constant dense<0.000000e+00> : vector<128x256xf32>
    %45 = tpu.matmul %42, %44, %cst_54 {dimension_numbers = #tpu.dot_dimension_numbers<[1], [0], [0], [1], [0, 0, 1, 1], [], []>} : vector<128x256xbf16>, vector<256x256xbf16>, vector<128x256xf32> -> vector<128x256xf32>
    %46 = arith.addf %39, %45 : vector<128x256xf32>
    %c0_55 = arith.constant 0 : index
    %c0_56 = arith.constant 0 : index
    %c6 = arith.constant 6 : index
    %c0_57 = arith.constant 0 : index
    %47 = vector.load %arg6[%c0_55, %c0_56, %c6, %c0_57] : memref<2x8x14x256xf32, #tpu.memory_space<vmem>>, vector<2x8x8x256xf32>
    %48 = vector.shape_cast %47 : vector<2x8x8x256xf32> to vector<128x256xf32>
    %49 = arith.truncf %48 : vector<128x256xf32> to vector<128x256xbf16>
    %c6_58 = arith.constant 6 : index
    %c0_59 = arith.constant 0 : index
    %c0_60 = arith.constant 0 : index
    %50 = vector.load %arg2[%c6_58, %c0_59, %c0_60] : memref<7x256x256xbf16, #tpu.memory_space<vmem>>, vector<1x256x256xbf16>
    %51 = vector.shape_cast %50 : vector<1x256x256xbf16> to vector<256x256xbf16>
    %cst_61 = arith.constant dense<0.000000e+00> : vector<128x256xf32>
    %52 = tpu.matmul %49, %51, %cst_61 {dimension_numbers = #tpu.dot_dimension_numbers<[1], [0], [0], [1], [0, 0, 1, 1], [], []>} : vector<128x256xbf16>, vector<256x256xbf16>, vector<128x256xf32> -> vector<128x256xf32>
    %53 = arith.addf %46, %52 : vector<128x256xf32>
    %c0_62 = arith.constant 0 : index
    %c0_63 = arith.constant 0 : index
    %54 = vector.load %arg3[%c0_62, %c0_63] : memref<1x256xf32, #tpu.memory_space<vmem>>, vector<1x256xf32>
    %55 = vector.broadcast %54 : vector<1x256xf32> to vector<128x256xf32>
    %56 = arith.mulf %53, %55 : vector<128x256xf32>
    %c0_64 = arith.constant 0 : index
    %c0_65 = arith.constant 0 : index
    %57 = vector.load %arg4[%c0_64, %c0_65] : memref<1x256xf32, #tpu.memory_space<vmem>>, vector<1x256xf32>
    %58 = vector.broadcast %57 : vector<1x256xf32> to vector<128x256xf32>
    %59 = arith.addf %56, %58 : vector<128x256xf32>
    %cst_66 = arith.constant 0.000000e+00 : f32
    %60 = vector.broadcast %cst_66 : f32 to vector<128x256xf32>
    %61 = arith.maximumf %59, %60 : vector<128x256xf32>
    %62 = vector.shape_cast %61 : vector<128x256xf32> to vector<2x8x8x256xf32>
    %c0_67 = arith.constant 0 : index
    %c0_68 = arith.constant 0 : index
    %c0_69 = arith.constant 0 : index
    %c0_70 = arith.constant 0 : index
    %63 = vector.load %arg5[%c0_67, %c0_68, %c0_69, %c0_70] : memref<2x8x8x256xf32, #tpu.memory_space<vmem>>, vector<2x8x8x256xf32>
    tpu.vector_store %arg5[%c0_67, %c0_68, %c0_69, %c0_70], %62 {strides = array<i32>} : memref<2x8x8x256xf32, #tpu.memory_space<vmem>>, vector<2x8x8x256xf32>,
    return
  }
  func.func @transform_0(%arg0: i32) -> (i32, i32, i32, i32) {
    %c0_i32 = arith.constant 0 : i32
    %c0_i32_0 = arith.constant 0 : i32
    %c0_i32_1 = arith.constant 0 : i32
    %c0_i32_2 = arith.constant 0 : i32
    return %arg0, %c0_i32, %c0_i32_0, %c0_i32_1 : i32, i32, i32, i32
  }
  func.func @transform_1(%arg0: i32) -> (i32, i32, i32) {
    %c0_i32 = arith.constant 0 : i32
    %c0_i32_0 = arith.constant 0 : i32
    %c0_i32_1 = arith.constant 0 : i32
    %c0_i32_2 = arith.constant 0 : i32
    return %c0_i32, %c0_i32_0, %c0_i32_1 : i32, i32, i32
  }
  func.func @transform_2(%arg0: i32) -> (i32, i32) {
    %c0_i32 = arith.constant 0 : i32
    %c0_i32_0 = arith.constant 0 : i32
    %c0_i32_1 = arith.constant 0 : i32
    return %c0_i32, %c0_i32_0 : i32, i32
  }
  func.func @transform_3(%arg0: i32) -> (i32, i32) {
    %c0_i32 = arith.constant 0 : i32
    %c0_i32_0 = arith.constant 0 : i32
    %c0_i32_1 = arith.constant 0 : i32
    return %c0_i32, %c0_i32_0 : i32, i32
  }
  func.func @transform_4(%arg0: i32) -> (i32, i32, i32, i32) {
    %c0_i32 = arith.constant 0 : i32
    %c0_i32_0 = arith.constant 0 : i32
    %c0_i32_1 = arith.constant 0 : i32
    %c0_i32_2 = arith.constant 0 : i32
    return %arg0, %c0_i32, %c0_i32_0, %c0_i32_1 : i32, i32, i32, i32
  }
}

module attributes {stable_mosaic.version = 11 : i64} {
  func.func @_mm_bn_relu_kernel(%arg0: i32, %arg1: memref<128x32xf32, #tpu.memory_space<vmem>>, %arg2: memref<32x256xbf16, #tpu.memory_space<vmem>>, %arg3: memref<1x256xf32, #tpu.memory_space<vmem>>, %arg4: memref<1x256xf32, #tpu.memory_space<vmem>>, %arg5: memref<128x256xf32, #tpu.memory_space<vmem>>) attributes {dimension_semantics = [#tpu.dimension_semantics<parallel>], iteration_bounds = array<i64: 1>, scalar_prefetch = 0 : i64, scratch_operands = 0 : i64, tpu.core_type = #tpu.core_type<tc>, window_params = [{transform_indices = @transform_0, window_bounds = array<i64: 128, 32>}, {pipeline_mode = #tpu.pipeline_mode<synchronous>, transform_indices = @transform_1, window_bounds = array<i64: 32, 256>}, {pipeline_mode = #tpu.pipeline_mode<synchronous>, transform_indices = @transform_2, window_bounds = array<i64: 1, 256>}, {pipeline_mode = #tpu.pipeline_mode<synchronous>, transform_indices = @transform_3, window_bounds = array<i64: 1, 256>}, {transform_indices = @transform_4, window_bounds = array<i64: 128, 256>}]} {
    %c0 = arith.constant 0 : index
    %c0_0 = arith.constant 0 : index
    %0 = vector.load %arg1[%c0, %c0_0] : memref<128x32xf32, #tpu.memory_space<vmem>>, vector<128x32xf32>
    %1 = arith.truncf %0 : vector<128x32xf32> to vector<128x32xbf16>
    %c0_1 = arith.constant 0 : index
    %c0_2 = arith.constant 0 : index
    %2 = vector.load %arg2[%c0_1, %c0_2] : memref<32x256xbf16, #tpu.memory_space<vmem>>, vector<32x256xbf16>
    %cst = arith.constant dense<0.000000e+00> : vector<128x256xf32>
    %3 = tpu.matmul %1, %2, %cst {dimension_numbers = #tpu.dot_dimension_numbers<[1], [0], [0], [1], [0, 0, 1, 1], [], []>} : vector<128x32xbf16>, vector<32x256xbf16>, vector<128x256xf32> -> vector<128x256xf32>
    %c0_3 = arith.constant 0 : index
    %c0_4 = arith.constant 0 : index
    %4 = vector.load %arg3[%c0_3, %c0_4] : memref<1x256xf32, #tpu.memory_space<vmem>>, vector<1x256xf32>
    %5 = vector.broadcast %4 : vector<1x256xf32> to vector<128x256xf32>
    %6 = arith.mulf %3, %5 : vector<128x256xf32>
    %c0_5 = arith.constant 0 : index
    %c0_6 = arith.constant 0 : index
    %7 = vector.load %arg4[%c0_5, %c0_6] : memref<1x256xf32, #tpu.memory_space<vmem>>, vector<1x256xf32>
    %8 = vector.broadcast %7 : vector<1x256xf32> to vector<128x256xf32>
    %9 = arith.addf %6, %8 : vector<128x256xf32>
    %cst_7 = arith.constant 0.000000e+00 : f32
    %10 = vector.broadcast %cst_7 : f32 to vector<128x256xf32>
    %11 = arith.maximumf %9, %10 : vector<128x256xf32>
    %c0_8 = arith.constant 0 : index
    %c0_9 = arith.constant 0 : index
    %12 = vector.load %arg5[%c0_8, %c0_9] : memref<128x256xf32, #tpu.memory_space<vmem>>, vector<128x256xf32>
    tpu.vector_store %arg5[%c0_8, %c0_9], %11 {strides = array<i32>} : memref<128x256xf32, #tpu.memory_space<vmem>>, vector<128x256xf32>,
    return
  }
  func.func @transform_0(%arg0: i32) -> (i32, i32) {
    %c0_i32 = arith.constant 0 : i32
    %c0_i32_0 = arith.constant 0 : i32
    return %arg0, %c0_i32 : i32, i32
  }
  func.func @transform_1(%arg0: i32) -> (i32, i32) {
    %c0_i32 = arith.constant 0 : i32
    %c0_i32_0 = arith.constant 0 : i32
    %c0_i32_1 = arith.constant 0 : i32
    return %c0_i32, %c0_i32_0 : i32, i32
  }
  func.func @transform_2(%arg0: i32) -> (i32, i32) {
    %c0_i32 = arith.constant 0 : i32
    %c0_i32_0 = arith.constant 0 : i32
    %c0_i32_1 = arith.constant 0 : i32
    return %c0_i32, %c0_i32_0 : i32, i32
  }
  func.func @transform_3(%arg0: i32) -> (i32, i32) {
    %c0_i32 = arith.constant 0 : i32
    %c0_i32_0 = arith.constant 0 : i32
    %c0_i32_1 = arith.constant 0 : i32
    return %c0_i32, %c0_i32_0 : i32, i32
  }
  func.func @transform_4(%arg0: i32) -> (i32, i32) {
    %c0_i32 = arith.constant 0 : i32
    %c0_i32_0 = arith.constant 0 : i32
    return %arg0, %c0_i32 : i32, i32
  }
}

module attributes {stable_mosaic.version = 11 : i64} {
  func.func @_conv1d_bn_relu_kernel(%arg0: i32, %arg1: memref<2x8x8x256xf32, #tpu.memory_space<vmem>>, %arg2: memref<7x256x256xbf16, #tpu.memory_space<vmem>>, %arg3: memref<1x256xf32, #tpu.memory_space<vmem>>, %arg4: memref<1x256xf32, #tpu.memory_space<vmem>>, %arg5: memref<2x8x8x256xf32, #tpu.memory_space<vmem>>, %arg6: memref<2x14x8x256xf32, #tpu.memory_space<vmem>>) attributes {dimension_semantics = [#tpu.dimension_semantics<parallel>], iteration_bounds = array<i64: 1>, scalar_prefetch = 0 : i64, scratch_operands = 1 : i64, tpu.core_type = #tpu.core_type<tc>, window_params = [{transform_indices = @transform_0, window_bounds = array<i64: 2, 8, 8, 256>}, {pipeline_mode = #tpu.pipeline_mode<synchronous>, transform_indices = @transform_1, window_bounds = array<i64: 7, 256, 256>}, {pipeline_mode = #tpu.pipeline_mode<synchronous>, transform_indices = @transform_2, window_bounds = array<i64: 1, 256>}, {pipeline_mode = #tpu.pipeline_mode<synchronous>, transform_indices = @transform_3, window_bounds = array<i64: 1, 256>}, {transform_indices = @transform_4, window_bounds = array<i64: 2, 8, 8, 256>}]} {
    %cst = arith.constant 0.000000e+00 : f32
    %0 = vector.broadcast %cst : f32 to vector<2x14x8x256xf32>
    %c0 = arith.constant 0 : index
    %c0_0 = arith.constant 0 : index
    %c0_1 = arith.constant 0 : index
    %c0_2 = arith.constant 0 : index
    %1 = vector.load %arg6[%c0, %c0_0, %c0_1, %c0_2] : memref<2x14x8x256xf32, #tpu.memory_space<vmem>>, vector<2x14x8x256xf32>
    tpu.vector_store %arg6[%c0, %c0_0, %c0_1, %c0_2], %0 {strides = array<i32>} : memref<2x14x8x256xf32, #tpu.memory_space<vmem>>, vector<2x14x8x256xf32>,
    %c0_3 = arith.constant 0 : index
    %c0_4 = arith.constant 0 : index
    %c0_5 = arith.constant 0 : index
    %c0_6 = arith.constant 0 : index
    %2 = vector.load %arg1[%c0_3, %c0_4, %c0_5, %c0_6] : memref<2x8x8x256xf32, #tpu.memory_space<vmem>>, vector<2x8x8x256xf32>
    %c0_7 = arith.constant 0 : index
    %c3 = arith.constant 3 : index
    %c0_8 = arith.constant 0 : index
    %c0_9 = arith.constant 0 : index
    %3 = vector.load %arg6[%c0_7, %c3, %c0_8, %c0_9] : memref<2x14x8x256xf32, #tpu.memory_space<vmem>>, vector<2x8x8x256xf32>
    tpu.vector_store %arg6[%c0_7, %c3, %c0_8, %c0_9], %2 {strides = array<i32>} : memref<2x14x8x256xf32, #tpu.memory_space<vmem>>, vector<2x8x8x256xf32>,
    %cst_10 = arith.constant 0.000000e+00 : f32
    %4 = vector.broadcast %cst_10 : f32 to vector<128x256xf32>
    %c0_11 = arith.constant 0 : index
    %c0_12 = arith.constant 0 : index
    %c0_13 = arith.constant 0 : index
    %c0_14 = arith.constant 0 : index
    %5 = vector.load %arg6[%c0_11, %c0_12, %c0_13, %c0_14] : memref<2x14x8x256xf32, #tpu.memory_space<vmem>>, vector<2x8x8x256xf32>
    %6 = vector.shape_cast %5 : vector<2x8x8x256xf32> to vector<128x256xf32>
    %7 = arith.truncf %6 : vector<128x256xf32> to vector<128x256xbf16>
    %c0_15 = arith.constant 0 : index
    %c0_16 = arith.constant 0 : index
    %c0_17 = arith.constant 0 : index
    %8 = vector.load %arg2[%c0_15, %c0_16, %c0_17] : memref<7x256x256xbf16, #tpu.memory_space<vmem>>, vector<1x256x256xbf16>
    %9 = vector.shape_cast %8 : vector<1x256x256xbf16> to vector<256x256xbf16>
    %cst_18 = arith.constant dense<0.000000e+00> : vector<128x256xf32>
    %10 = tpu.matmul %7, %9, %cst_18 {dimension_numbers = #tpu.dot_dimension_numbers<[1], [0], [0], [1], [0, 0, 1, 1], [], []>} : vector<128x256xbf16>, vector<256x256xbf16>, vector<128x256xf32> -> vector<128x256xf32>
    %11 = arith.addf %4, %10 : vector<128x256xf32>
    %c0_19 = arith.constant 0 : index
    %c1 = arith.constant 1 : index
    %c0_20 = arith.constant 0 : index
    %c0_21 = arith.constant 0 : index
    %12 = vector.load %arg6[%c0_19, %c1, %c0_20, %c0_21] : memref<2x14x8x256xf32, #tpu.memory_space<vmem>>, vector<2x8x8x256xf32>
    %13 = vector.shape_cast %12 : vector<2x8x8x256xf32> to vector<128x256xf32>
    %14 = arith.truncf %13 : vector<128x256xf32> to vector<128x256xbf16>
    %c1_22 = arith.constant 1 : index
    %c0_23 = arith.constant 0 : index
    %c0_24 = arith.constant 0 : index
    %15 = vector.load %arg2[%c1_22, %c0_23, %c0_24] : memref<7x256x256xbf16, #tpu.memory_space<vmem>>, vector<1x256x256xbf16>
    %16 = vector.shape_cast %15 : vector<1x256x256xbf16> to vector<256x256xbf16>
    %cst_25 = arith.constant dense<0.000000e+00> : vector<128x256xf32>
    %17 = tpu.matmul %14, %16, %cst_25 {dimension_numbers = #tpu.dot_dimension_numbers<[1], [0], [0], [1], [0, 0, 1, 1], [], []>} : vector<128x256xbf16>, vector<256x256xbf16>, vector<128x256xf32> -> vector<128x256xf32>
    %18 = arith.addf %11, %17 : vector<128x256xf32>
    %c0_26 = arith.constant 0 : index
    %c2 = arith.constant 2 : index
    %c0_27 = arith.constant 0 : index
    %c0_28 = arith.constant 0 : index
    %19 = vector.load %arg6[%c0_26, %c2, %c0_27, %c0_28] : memref<2x14x8x256xf32, #tpu.memory_space<vmem>>, vector<2x8x8x256xf32>
    %20 = vector.shape_cast %19 : vector<2x8x8x256xf32> to vector<128x256xf32>
    %21 = arith.truncf %20 : vector<128x256xf32> to vector<128x256xbf16>
    %c2_29 = arith.constant 2 : index
    %c0_30 = arith.constant 0 : index
    %c0_31 = arith.constant 0 : index
    %22 = vector.load %arg2[%c2_29, %c0_30, %c0_31] : memref<7x256x256xbf16, #tpu.memory_space<vmem>>, vector<1x256x256xbf16>
    %23 = vector.shape_cast %22 : vector<1x256x256xbf16> to vector<256x256xbf16>
    %cst_32 = arith.constant dense<0.000000e+00> : vector<128x256xf32>
    %24 = tpu.matmul %21, %23, %cst_32 {dimension_numbers = #tpu.dot_dimension_numbers<[1], [0], [0], [1], [0, 0, 1, 1], [], []>} : vector<128x256xbf16>, vector<256x256xbf16>, vector<128x256xf32> -> vector<128x256xf32>
    %25 = arith.addf %18, %24 : vector<128x256xf32>
    %c0_33 = arith.constant 0 : index
    %c3_34 = arith.constant 3 : index
    %c0_35 = arith.constant 0 : index
    %c0_36 = arith.constant 0 : index
    %26 = vector.load %arg6[%c0_33, %c3_34, %c0_35, %c0_36] : memref<2x14x8x256xf32, #tpu.memory_space<vmem>>, vector<2x8x8x256xf32>
    %27 = vector.shape_cast %26 : vector<2x8x8x256xf32> to vector<128x256xf32>
    %28 = arith.truncf %27 : vector<128x256xf32> to vector<128x256xbf16>
    %c3_37 = arith.constant 3 : index
    %c0_38 = arith.constant 0 : index
    %c0_39 = arith.constant 0 : index
    %29 = vector.load %arg2[%c3_37, %c0_38, %c0_39] : memref<7x256x256xbf16, #tpu.memory_space<vmem>>, vector<1x256x256xbf16>
    %30 = vector.shape_cast %29 : vector<1x256x256xbf16> to vector<256x256xbf16>
    %cst_40 = arith.constant dense<0.000000e+00> : vector<128x256xf32>
    %31 = tpu.matmul %28, %30, %cst_40 {dimension_numbers = #tpu.dot_dimension_numbers<[1], [0], [0], [1], [0, 0, 1, 1], [], []>} : vector<128x256xbf16>, vector<256x256xbf16>, vector<128x256xf32> -> vector<128x256xf32>
    %32 = arith.addf %25, %31 : vector<128x256xf32>
    %c0_41 = arith.constant 0 : index
    %c4 = arith.constant 4 : index
    %c0_42 = arith.constant 0 : index
    %c0_43 = arith.constant 0 : index
    %33 = vector.load %arg6[%c0_41, %c4, %c0_42, %c0_43] : memref<2x14x8x256xf32, #tpu.memory_space<vmem>>, vector<2x8x8x256xf32>
    %34 = vector.shape_cast %33 : vector<2x8x8x256xf32> to vector<128x256xf32>
    %35 = arith.truncf %34 : vector<128x256xf32> to vector<128x256xbf16>
    %c4_44 = arith.constant 4 : index
    %c0_45 = arith.constant 0 : index
    %c0_46 = arith.constant 0 : index
    %36 = vector.load %arg2[%c4_44, %c0_45, %c0_46] : memref<7x256x256xbf16, #tpu.memory_space<vmem>>, vector<1x256x256xbf16>
    %37 = vector.shape_cast %36 : vector<1x256x256xbf16> to vector<256x256xbf16>
    %cst_47 = arith.constant dense<0.000000e+00> : vector<128x256xf32>
    %38 = tpu.matmul %35, %37, %cst_47 {dimension_numbers = #tpu.dot_dimension_numbers<[1], [0], [0], [1], [0, 0, 1, 1], [], []>} : vector<128x256xbf16>, vector<256x256xbf16>, vector<128x256xf32> -> vector<128x256xf32>
    %39 = arith.addf %32, %38 : vector<128x256xf32>
    %c0_48 = arith.constant 0 : index
    %c5 = arith.constant 5 : index
    %c0_49 = arith.constant 0 : index
    %c0_50 = arith.constant 0 : index
    %40 = vector.load %arg6[%c0_48, %c5, %c0_49, %c0_50] : memref<2x14x8x256xf32, #tpu.memory_space<vmem>>, vector<2x8x8x256xf32>
    %41 = vector.shape_cast %40 : vector<2x8x8x256xf32> to vector<128x256xf32>
    %42 = arith.truncf %41 : vector<128x256xf32> to vector<128x256xbf16>
    %c5_51 = arith.constant 5 : index
    %c0_52 = arith.constant 0 : index
    %c0_53 = arith.constant 0 : index
    %43 = vector.load %arg2[%c5_51, %c0_52, %c0_53] : memref<7x256x256xbf16, #tpu.memory_space<vmem>>, vector<1x256x256xbf16>
    %44 = vector.shape_cast %43 : vector<1x256x256xbf16> to vector<256x256xbf16>
    %cst_54 = arith.constant dense<0.000000e+00> : vector<128x256xf32>
    %45 = tpu.matmul %42, %44, %cst_54 {dimension_numbers = #tpu.dot_dimension_numbers<[1], [0], [0], [1], [0, 0, 1, 1], [], []>} : vector<128x256xbf16>, vector<256x256xbf16>, vector<128x256xf32> -> vector<128x256xf32>
    %46 = arith.addf %39, %45 : vector<128x256xf32>
    %c0_55 = arith.constant 0 : index
    %c6 = arith.constant 6 : index
    %c0_56 = arith.constant 0 : index
    %c0_57 = arith.constant 0 : index
    %47 = vector.load %arg6[%c0_55, %c6, %c0_56, %c0_57] : memref<2x14x8x256xf32, #tpu.memory_space<vmem>>, vector<2x8x8x256xf32>
    %48 = vector.shape_cast %47 : vector<2x8x8x256xf32> to vector<128x256xf32>
    %49 = arith.truncf %48 : vector<128x256xf32> to vector<128x256xbf16>
    %c6_58 = arith.constant 6 : index
    %c0_59 = arith.constant 0 : index
    %c0_60 = arith.constant 0 : index
    %50 = vector.load %arg2[%c6_58, %c0_59, %c0_60] : memref<7x256x256xbf16, #tpu.memory_space<vmem>>, vector<1x256x256xbf16>
    %51 = vector.shape_cast %50 : vector<1x256x256xbf16> to vector<256x256xbf16>
    %cst_61 = arith.constant dense<0.000000e+00> : vector<128x256xf32>
    %52 = tpu.matmul %49, %51, %cst_61 {dimension_numbers = #tpu.dot_dimension_numbers<[1], [0], [0], [1], [0, 0, 1, 1], [], []>} : vector<128x256xbf16>, vector<256x256xbf16>, vector<128x256xf32> -> vector<128x256xf32>
    %53 = arith.addf %46, %52 : vector<128x256xf32>
    %c0_62 = arith.constant 0 : index
    %c0_63 = arith.constant 0 : index
    %54 = vector.load %arg3[%c0_62, %c0_63] : memref<1x256xf32, #tpu.memory_space<vmem>>, vector<1x256xf32>
    %55 = vector.broadcast %54 : vector<1x256xf32> to vector<128x256xf32>
    %56 = arith.mulf %53, %55 : vector<128x256xf32>
    %c0_64 = arith.constant 0 : index
    %c0_65 = arith.constant 0 : index
    %57 = vector.load %arg4[%c0_64, %c0_65] : memref<1x256xf32, #tpu.memory_space<vmem>>, vector<1x256xf32>
    %58 = vector.broadcast %57 : vector<1x256xf32> to vector<128x256xf32>
    %59 = arith.addf %56, %58 : vector<128x256xf32>
    %cst_66 = arith.constant 0.000000e+00 : f32
    %60 = vector.broadcast %cst_66 : f32 to vector<128x256xf32>
    %61 = arith.maximumf %59, %60 : vector<128x256xf32>
    %62 = vector.shape_cast %61 : vector<128x256xf32> to vector<2x8x8x256xf32>
    %c0_67 = arith.constant 0 : index
    %c0_68 = arith.constant 0 : index
    %c0_69 = arith.constant 0 : index
    %c0_70 = arith.constant 0 : index
    %63 = vector.load %arg5[%c0_67, %c0_68, %c0_69, %c0_70] : memref<2x8x8x256xf32, #tpu.memory_space<vmem>>, vector<2x8x8x256xf32>
    tpu.vector_store %arg5[%c0_67, %c0_68, %c0_69, %c0_70], %62 {strides = array<i32>} : memref<2x8x8x256xf32, #tpu.memory_space<vmem>>, vector<2x8x8x256xf32>,
    return
  }
  func.func @transform_0(%arg0: i32) -> (i32, i32, i32, i32) {
    %c0_i32 = arith.constant 0 : i32
    %c0_i32_0 = arith.constant 0 : i32
    %c0_i32_1 = arith.constant 0 : i32
    %c0_i32_2 = arith.constant 0 : i32
    return %arg0, %c0_i32, %c0_i32_0, %c0_i32_1 : i32, i32, i32, i32
  }
  func.func @transform_1(%arg0: i32) -> (i32, i32, i32) {
    %c0_i32 = arith.constant 0 : i32
    %c0_i32_0 = arith.constant 0 : i32
    %c0_i32_1 = arith.constant 0 : i32
    %c0_i32_2 = arith.constant 0 : i32
    return %c0_i32, %c0_i32_0, %c0_i32_1 : i32, i32, i32
  }
  func.func @transform_2(%arg0: i32) -> (i32, i32) {
    %c0_i32 = arith.constant 0 : i32
    %c0_i32_0 = arith.constant 0 : i32
    %c0_i32_1 = arith.constant 0 : i32
    return %c0_i32, %c0_i32_0 : i32, i32
  }
  func.func @transform_3(%arg0: i32) -> (i32, i32) {
    %c0_i32 = arith.constant 0 : i32
    %c0_i32_0 = arith.constant 0 : i32
    %c0_i32_1 = arith.constant 0 : i32
    return %c0_i32, %c0_i32_0 : i32, i32
  }
  func.func @transform_4(%arg0: i32) -> (i32, i32, i32, i32) {
    %c0_i32 = arith.constant 0 : i32
    %c0_i32_0 = arith.constant 0 : i32
    %c0_i32_1 = arith.constant 0 : i32
    %c0_i32_2 = arith.constant 0 : i32
    return %arg0, %c0_i32, %c0_i32_0, %c0_i32_1 : i32, i32, i32, i32
  }
}

module attributes {stable_mosaic.version = 11 : i64} {
  func.func @_mm_bn_relu_kernel(%arg0: i32, %arg1: memref<128x32xf32, #tpu.memory_space<vmem>>, %arg2: memref<32x256xbf16, #tpu.memory_space<vmem>>, %arg3: memref<1x256xf32, #tpu.memory_space<vmem>>, %arg4: memref<1x256xf32, #tpu.memory_space<vmem>>, %arg5: memref<128x256xf32, #tpu.memory_space<vmem>>) attributes {dimension_semantics = [#tpu.dimension_semantics<parallel>], iteration_bounds = array<i64: 1>, scalar_prefetch = 0 : i64, scratch_operands = 0 : i64, tpu.core_type = #tpu.core_type<tc>, window_params = [{transform_indices = @transform_0, window_bounds = array<i64: 128, 32>}, {pipeline_mode = #tpu.pipeline_mode<synchronous>, transform_indices = @transform_1, window_bounds = array<i64: 32, 256>}, {pipeline_mode = #tpu.pipeline_mode<synchronous>, transform_indices = @transform_2, window_bounds = array<i64: 1, 256>}, {pipeline_mode = #tpu.pipeline_mode<synchronous>, transform_indices = @transform_3, window_bounds = array<i64: 1, 256>}, {transform_indices = @transform_4, window_bounds = array<i64: 128, 256>}]} {
    %c0 = arith.constant 0 : index
    %c0_0 = arith.constant 0 : index
    %0 = vector.load %arg1[%c0, %c0_0] : memref<128x32xf32, #tpu.memory_space<vmem>>, vector<128x32xf32>
    %1 = arith.truncf %0 : vector<128x32xf32> to vector<128x32xbf16>
    %c0_1 = arith.constant 0 : index
    %c0_2 = arith.constant 0 : index
    %2 = vector.load %arg2[%c0_1, %c0_2] : memref<32x256xbf16, #tpu.memory_space<vmem>>, vector<32x256xbf16>
    %cst = arith.constant dense<0.000000e+00> : vector<128x256xf32>
    %3 = tpu.matmul %1, %2, %cst {dimension_numbers = #tpu.dot_dimension_numbers<[1], [0], [0], [1], [0, 0, 1, 1], [], []>} : vector<128x32xbf16>, vector<32x256xbf16>, vector<128x256xf32> -> vector<128x256xf32>
    %c0_3 = arith.constant 0 : index
    %c0_4 = arith.constant 0 : index
    %4 = vector.load %arg3[%c0_3, %c0_4] : memref<1x256xf32, #tpu.memory_space<vmem>>, vector<1x256xf32>
    %5 = vector.broadcast %4 : vector<1x256xf32> to vector<128x256xf32>
    %6 = arith.mulf %3, %5 : vector<128x256xf32>
    %c0_5 = arith.constant 0 : index
    %c0_6 = arith.constant 0 : index
    %7 = vector.load %arg4[%c0_5, %c0_6] : memref<1x256xf32, #tpu.memory_space<vmem>>, vector<1x256xf32>
    %8 = vector.broadcast %7 : vector<1x256xf32> to vector<128x256xf32>
    %9 = arith.addf %6, %8 : vector<128x256xf32>
    %cst_7 = arith.constant 0.000000e+00 : f32
    %10 = vector.broadcast %cst_7 : f32 to vector<128x256xf32>
    %11 = arith.maximumf %9, %10 : vector<128x256xf32>
    %c0_8 = arith.constant 0 : index
    %c0_9 = arith.constant 0 : index
    %12 = vector.load %arg5[%c0_8, %c0_9] : memref<128x256xf32, #tpu.memory_space<vmem>>, vector<128x256xf32>
    tpu.vector_store %arg5[%c0_8, %c0_9], %11 {strides = array<i32>} : memref<128x256xf32, #tpu.memory_space<vmem>>, vector<128x256xf32>,
    return
  }
  func.func @transform_0(%arg0: i32) -> (i32, i32) {
    %c0_i32 = arith.constant 0 : i32
    %c0_i32_0 = arith.constant 0 : i32
    return %arg0, %c0_i32 : i32, i32
  }
  func.func @transform_1(%arg0: i32) -> (i32, i32) {
    %c0_i32 = arith.constant 0 : i32
    %c0_i32_0 = arith.constant 0 : i32
    %c0_i32_1 = arith.constant 0 : i32
    return %c0_i32, %c0_i32_0 : i32, i32
  }
  func.func @transform_2(%arg0: i32) -> (i32, i32) {
    %c0_i32 = arith.constant 0 : i32
    %c0_i32_0 = arith.constant 0 : i32
    %c0_i32_1 = arith.constant 0 : i32
    return %c0_i32, %c0_i32_0 : i32, i32
  }
  func.func @transform_3(%arg0: i32) -> (i32, i32) {
    %c0_i32 = arith.constant 0 : i32
    %c0_i32_0 = arith.constant 0 : i32
    %c0_i32_1 = arith.constant 0 : i32
    return %c0_i32, %c0_i32_0 : i32, i32
  }
  func.func @transform_4(%arg0: i32) -> (i32, i32) {
    %c0_i32 = arith.constant 0 : i32
    %c0_i32_0 = arith.constant 0 : i32
    return %arg0, %c0_i32 : i32, i32
  }
}

module attributes {stable_mosaic.version = 11 : i64} {
  func.func @_mm_bn_relu_kernel(%arg0: i32, %arg1: memref<128x32xf32, #tpu.memory_space<vmem>>, %arg2: memref<32x384xbf16, #tpu.memory_space<vmem>>, %arg3: memref<1x384xf32, #tpu.memory_space<vmem>>, %arg4: memref<1x384xf32, #tpu.memory_space<vmem>>, %arg5: memref<128x384xf32, #tpu.memory_space<vmem>>) attributes {dimension_semantics = [#tpu.dimension_semantics<parallel>], iteration_bounds = array<i64: 1>, scalar_prefetch = 0 : i64, scratch_operands = 0 : i64, tpu.core_type = #tpu.core_type<tc>, window_params = [{transform_indices = @transform_0, window_bounds = array<i64: 128, 32>}, {pipeline_mode = #tpu.pipeline_mode<synchronous>, transform_indices = @transform_1, window_bounds = array<i64: 32, 384>}, {pipeline_mode = #tpu.pipeline_mode<synchronous>, transform_indices = @transform_2, window_bounds = array<i64: 1, 384>}, {pipeline_mode = #tpu.pipeline_mode<synchronous>, transform_indices = @transform_3, window_bounds = array<i64: 1, 384>}, {transform_indices = @transform_4, window_bounds = array<i64: 128, 384>}]} {
    %c0 = arith.constant 0 : index
    %c0_0 = arith.constant 0 : index
    %0 = vector.load %arg1[%c0, %c0_0] : memref<128x32xf32, #tpu.memory_space<vmem>>, vector<128x32xf32>
    %1 = arith.truncf %0 : vector<128x32xf32> to vector<128x32xbf16>
    %c0_1 = arith.constant 0 : index
    %c0_2 = arith.constant 0 : index
    %2 = vector.load %arg2[%c0_1, %c0_2] : memref<32x384xbf16, #tpu.memory_space<vmem>>, vector<32x384xbf16>
    %cst = arith.constant dense<0.000000e+00> : vector<128x384xf32>
    %3 = tpu.matmul %1, %2, %cst {dimension_numbers = #tpu.dot_dimension_numbers<[1], [0], [0], [1], [0, 0, 1, 1], [], []>} : vector<128x32xbf16>, vector<32x384xbf16>, vector<128x384xf32> -> vector<128x384xf32>
    %c0_3 = arith.constant 0 : index
    %c0_4 = arith.constant 0 : index
    %4 = vector.load %arg3[%c0_3, %c0_4] : memref<1x384xf32, #tpu.memory_space<vmem>>, vector<1x384xf32>
    %5 = vector.broadcast %4 : vector<1x384xf32> to vector<128x384xf32>
    %6 = arith.mulf %3, %5 : vector<128x384xf32>
    %c0_5 = arith.constant 0 : index
    %c0_6 = arith.constant 0 : index
    %7 = vector.load %arg4[%c0_5, %c0_6] : memref<1x384xf32, #tpu.memory_space<vmem>>, vector<1x384xf32>
    %8 = vector.broadcast %7 : vector<1x384xf32> to vector<128x384xf32>
    %9 = arith.addf %6, %8 : vector<128x384xf32>
    %cst_7 = arith.constant 0.000000e+00 : f32
    %10 = vector.broadcast %cst_7 : f32 to vector<128x384xf32>
    %11 = arith.maximumf %9, %10 : vector<128x384xf32>
    %c0_8 = arith.constant 0 : index
    %c0_9 = arith.constant 0 : index
    %12 = vector.load %arg5[%c0_8, %c0_9] : memref<128x384xf32, #tpu.memory_space<vmem>>, vector<128x384xf32>
    tpu.vector_store %arg5[%c0_8, %c0_9], %11 {strides = array<i32>} : memref<128x384xf32, #tpu.memory_space<vmem>>, vector<128x384xf32>,
    return
  }
  func.func @transform_0(%arg0: i32) -> (i32, i32) {
    %c0_i32 = arith.constant 0 : i32
    %c0_i32_0 = arith.constant 0 : i32
    return %arg0, %c0_i32 : i32, i32
  }
  func.func @transform_1(%arg0: i32) -> (i32, i32) {
    %c0_i32 = arith.constant 0 : i32
    %c0_i32_0 = arith.constant 0 : i32
    %c0_i32_1 = arith.constant 0 : i32
    return %c0_i32, %c0_i32_0 : i32, i32
  }
  func.func @transform_2(%arg0: i32) -> (i32, i32) {
    %c0_i32 = arith.constant 0 : i32
    %c0_i32_0 = arith.constant 0 : i32
    %c0_i32_1 = arith.constant 0 : i32
    return %c0_i32, %c0_i32_0 : i32, i32
  }
  func.func @transform_3(%arg0: i32) -> (i32, i32) {
    %c0_i32 = arith.constant 0 : i32
    %c0_i32_0 = arith.constant 0 : i32
    %c0_i32_1 = arith.constant 0 : i32
    return %c0_i32, %c0_i32_0 : i32, i32
  }
  func.func @transform_4(%arg0: i32) -> (i32, i32) {
    %c0_i32 = arith.constant 0 : i32
    %c0_i32_0 = arith.constant 0 : i32
    return %arg0, %c0_i32 : i32, i32
  }
}

module attributes {stable_mosaic.version = 11 : i64} {
  func.func @_avgpool_conv_bn_relu_kernel(%arg0: i32, %arg1: memref<2x8x8x32xf32, #tpu.memory_space<vmem>>, %arg2: memref<32x128xbf16, #tpu.memory_space<vmem>>, %arg3: memref<1x128xf32, #tpu.memory_space<vmem>>, %arg4: memref<1x128xf32, #tpu.memory_space<vmem>>, %arg5: memref<2x8x8x128xf32, #tpu.memory_space<vmem>>, %arg6: memref<2x10x10x32xf32, #tpu.memory_space<vmem>>) attributes {dimension_semantics = [#tpu.dimension_semantics<parallel>], iteration_bounds = array<i64: 1>, scalar_prefetch = 0 : i64, scratch_operands = 1 : i64, tpu.core_type = #tpu.core_type<tc>, window_params = [{transform_indices = @transform_0, window_bounds = array<i64: 2, 8, 8, 32>}, {pipeline_mode = #tpu.pipeline_mode<synchronous>, transform_indices = @transform_1, window_bounds = array<i64: 32, 128>}, {pipeline_mode = #tpu.pipeline_mode<synchronous>, transform_indices = @transform_2, window_bounds = array<i64: 1, 128>}, {pipeline_mode = #tpu.pipeline_mode<synchronous>, transform_indices = @transform_3, window_bounds = array<i64: 1, 128>}, {transform_indices = @transform_4, window_bounds = array<i64: 2, 8, 8, 128>}]} {
    %cst = arith.constant 0.000000e+00 : f32
    %0 = vector.broadcast %cst : f32 to vector<2x10x10x32xf32>
    %c0 = arith.constant 0 : index
    %c0_0 = arith.constant 0 : index
    %c0_1 = arith.constant 0 : index
    %c0_2 = arith.constant 0 : index
    %1 = vector.load %arg6[%c0, %c0_0, %c0_1, %c0_2] : memref<2x10x10x32xf32, #tpu.memory_space<vmem>>, vector<2x10x10x32xf32>
    tpu.vector_store %arg6[%c0, %c0_0, %c0_1, %c0_2], %0 {strides = array<i32>} : memref<2x10x10x32xf32, #tpu.memory_space<vmem>>, vector<2x10x10x32xf32>,
    %c0_3 = arith.constant 0 : index
    %c0_4 = arith.constant 0 : index
    %c0_5 = arith.constant 0 : index
    %c0_6 = arith.constant 0 : index
    %2 = vector.load %arg1[%c0_3, %c0_4, %c0_5, %c0_6] : memref<2x8x8x32xf32, #tpu.memory_space<vmem>>, vector<2x8x8x32xf32>
    %c0_7 = arith.constant 0 : index
    %c1 = arith.constant 1 : index
    %c1_8 = arith.constant 1 : index
    %c0_9 = arith.constant 0 : index
    %3 = vector.load %arg6[%c0_7, %c1, %c1_8, %c0_9] : memref<2x10x10x32xf32, #tpu.memory_space<vmem>>, vector<2x8x8x32xf32>
    tpu.vector_store %arg6[%c0_7, %c1, %c1_8, %c0_9], %2 {strides = array<i32>} : memref<2x10x10x32xf32, #tpu.memory_space<vmem>>, vector<2x8x8x32xf32>,
    %cst_10 = arith.constant 0.000000e+00 : f32
    %4 = vector.broadcast %cst_10 : f32 to vector<2x8x8x32xf32>
    %c0_11 = arith.constant 0 : index
    %c0_12 = arith.constant 0 : index
    %c0_13 = arith.constant 0 : index
    %c0_14 = arith.constant 0 : index
    %5 = vector.load %arg6[%c0_11, %c0_12, %c0_13, %c0_14] : memref<2x10x10x32xf32, #tpu.memory_space<vmem>>, vector<2x8x8x32xf32>
    %6 = arith.addf %4, %5 : vector<2x8x8x32xf32>
    %c0_15 = arith.constant 0 : index
    %c0_16 = arith.constant 0 : index
    %c1_17 = arith.constant 1 : index
    %c0_18 = arith.constant 0 : index
    %7 = vector.load %arg6[%c0_15, %c0_16, %c1_17, %c0_18] : memref<2x10x10x32xf32, #tpu.memory_space<vmem>>, vector<2x8x8x32xf32>
    %8 = arith.addf %6, %7 : vector<2x8x8x32xf32>
    %c0_19 = arith.constant 0 : index
    %c0_20 = arith.constant 0 : index
    %c2 = arith.constant 2 : index
    %c0_21 = arith.constant 0 : index
    %9 = vector.load %arg6[%c0_19, %c0_20, %c2, %c0_21] : memref<2x10x10x32xf32, #tpu.memory_space<vmem>>, vector<2x8x8x32xf32>
    %10 = arith.addf %8, %9 : vector<2x8x8x32xf32>
    %c0_22 = arith.constant 0 : index
    %c1_23 = arith.constant 1 : index
    %c0_24 = arith.constant 0 : index
    %c0_25 = arith.constant 0 : index
    %11 = vector.load %arg6[%c0_22, %c1_23, %c0_24, %c0_25] : memref<2x10x10x32xf32, #tpu.memory_space<vmem>>, vector<2x8x8x32xf32>
    %12 = arith.addf %10, %11 : vector<2x8x8x32xf32>
    %c0_26 = arith.constant 0 : index
    %c1_27 = arith.constant 1 : index
    %c1_28 = arith.constant 1 : index
    %c0_29 = arith.constant 0 : index
    %13 = vector.load %arg6[%c0_26, %c1_27, %c1_28, %c0_29] : memref<2x10x10x32xf32, #tpu.memory_space<vmem>>, vector<2x8x8x32xf32>
    %14 = arith.addf %12, %13 : vector<2x8x8x32xf32>
    %c0_30 = arith.constant 0 : index
    %c1_31 = arith.constant 1 : index
    %c2_32 = arith.constant 2 : index
    %c0_33 = arith.constant 0 : index
    %15 = vector.load %arg6[%c0_30, %c1_31, %c2_32, %c0_33] : memref<2x10x10x32xf32, #tpu.memory_space<vmem>>, vector<2x8x8x32xf32>
    %16 = arith.addf %14, %15 : vector<2x8x8x32xf32>
    %c0_34 = arith.constant 0 : index
    %c2_35 = arith.constant 2 : index
    %c0_36 = arith.constant 0 : index
    %c0_37 = arith.constant 0 : index
    %17 = vector.load %arg6[%c0_34, %c2_35, %c0_36, %c0_37] : memref<2x10x10x32xf32, #tpu.memory_space<vmem>>, vector<2x8x8x32xf32>
    %18 = arith.addf %16, %17 : vector<2x8x8x32xf32>
    %c0_38 = arith.constant 0 : index
    %c2_39 = arith.constant 2 : index
    %c1_40 = arith.constant 1 : index
    %c0_41 = arith.constant 0 : index
    %19 = vector.load %arg6[%c0_38, %c2_39, %c1_40, %c0_41] : memref<2x10x10x32xf32, #tpu.memory_space<vmem>>, vector<2x8x8x32xf32>
    %20 = arith.addf %18, %19 : vector<2x8x8x32xf32>
    %c0_42 = arith.constant 0 : index
    %c2_43 = arith.constant 2 : index
    %c2_44 = arith.constant 2 : index
    %c0_45 = arith.constant 0 : index
    %21 = vector.load %arg6[%c0_42, %c2_43, %c2_44, %c0_45] : memref<2x10x10x32xf32, #tpu.memory_space<vmem>>, vector<2x8x8x32xf32>
    %22 = arith.addf %20, %21 : vector<2x8x8x32xf32>
    %cst_46 = arith.constant 0.111111112 : f32
    %23 = vector.broadcast %cst_46 : f32 to vector<2x8x8x32xf32>
    %24 = arith.mulf %22, %23 : vector<2x8x8x32xf32>
    %25 = vector.shape_cast %24 : vector<2x8x8x32xf32> to vector<128x32xf32>
    %26 = arith.truncf %25 : vector<128x32xf32> to vector<128x32xbf16>
    %c0_47 = arith.constant 0 : index
    %c0_48 = arith.constant 0 : index
    %27 = vector.load %arg2[%c0_47, %c0_48] : memref<32x128xbf16, #tpu.memory_space<vmem>>, vector<32x128xbf16>
    %cst_49 = arith.constant dense<0.000000e+00> : vector<128x128xf32>
    %28 = tpu.matmul %26, %27, %cst_49 {dimension_numbers = #tpu.dot_dimension_numbers<[1], [0], [0], [1], [0, 0, 1, 1], [], []>} : vector<128x32xbf16>, vector<32x128xbf16>, vector<128x128xf32> -> vector<128x128xf32>
    %c0_50 = arith.constant 0 : index
    %c0_51 = arith.constant 0 : index
    %29 = vector.load %arg3[%c0_50, %c0_51] : memref<1x128xf32, #tpu.memory_space<vmem>>, vector<1x128xf32>
    %30 = vector.broadcast %29 : vector<1x128xf32> to vector<128x128xf32>
    %31 = arith.mulf %28, %30 : vector<128x128xf32>
    %c0_52 = arith.constant 0 : index
    %c0_53 = arith.constant 0 : index
    %32 = vector.load %arg4[%c0_52, %c0_53] : memref<1x128xf32, #tpu.memory_space<vmem>>, vector<1x128xf32>
    %33 = vector.broadcast %32 : vector<1x128xf32> to vector<128x128xf32>
    %34 = arith.addf %31, %33 : vector<128x128xf32>
    %cst_54 = arith.constant 0.000000e+00 : f32
    %35 = vector.broadcast %cst_54 : f32 to vector<128x128xf32>
    %36 = arith.maximumf %34, %35 : vector<128x128xf32>
    %37 = vector.shape_cast %36 : vector<128x128xf32> to vector<2x8x8x128xf32>
    %c0_55 = arith.constant 0 : index
    %c0_56 = arith.constant 0 : index
    %c0_57 = arith.constant 0 : index
    %c0_58 = arith.constant 0 : index
    %38 = vector.load %arg5[%c0_55, %c0_56, %c0_57, %c0_58] : memref<2x8x8x128xf32, #tpu.memory_space<vmem>>, vector<2x8x8x128xf32>
    tpu.vector_store %arg5[%c0_55, %c0_56, %c0_57, %c0_58], %37 {strides = array<i32>} : memref<2x8x8x128xf32, #tpu.memory_space<vmem>>, vector<2x8x8x128xf32>,
    return
  }
  func.func @transform_0(%arg0: i32) -> (i32, i32, i32, i32) {
    %c0_i32 = arith.constant 0 : i32
    %c0_i32_0 = arith.constant 0 : i32
    %c0_i32_1 = arith.constant 0 : i32
    %c0_i32_2 = arith.constant 0 : i32
    return %arg0, %c0_i32, %c0_i32_0, %c0_i32_1 : i32, i32, i32, i32
  }
  func.func @transform_1(%arg0: i32) -> (i32, i32) {
    %c0_i32 = arith.constant 0 : i32
    %c0_i32_0 = arith.constant 0 : i32
    %c0_i32_1 = arith.constant 0 : i32
    return %c0_i32, %c0_i32_0 : i32, i32
  }
  func.func @transform_2(%arg0: i32) -> (i32, i32) {
    %c0_i32 = arith.constant 0 : i32
    %c0_i32_0 = arith.constant 0 : i32
    %c0_i32_1 = arith.constant 0 : i32
    return %c0_i32, %c0_i32_0 : i32, i32
  }
  func.func @transform_3(%arg0: i32) -> (i32, i32) {
    %c0_i32 = arith.constant 0 : i32
    %c0_i32_0 = arith.constant 0 : i32
    %c0_i32_1 = arith.constant 0 : i32
    return %c0_i32, %c0_i32_0 : i32, i32
  }
  func.func @transform_4(%arg0: i32) -> (i32, i32, i32, i32) {
    %c0_i32 = arith.constant 0 : i32
    %c0_i32_0 = arith.constant 0 : i32
    %c0_i32_1 = arith.constant 0 : i32
    %c0_i32_2 = arith.constant 0 : i32
    return %arg0, %c0_i32, %c0_i32_0, %c0_i32_1 : i32, i32, i32, i32
  }
}

</mosaic_0001>

<llo_original>
// kernel: _lambda_.14
$region0: #{_lambda_.14}
  #allocation0 [shape = 'u32[]', space=smem, size = 0x4, offset = 0x4, fixed_abs, tag = 'smem constant byte address 0x4 - core index']
  #allocation1 [shape = 'u32[144,128]{1,0:T(1,128)}', space=vmem, size = 0x12000, scoped, tag = 'internal scratch']
  %s0 = inlined_call_operand.hbm [shape: f32[128,32], index: 0, kind: input, shape index: {}]
  %s1 = inlined_call_operand.vmem [shape: bf16[32,256], index: 1, kind: input, shape index: {}]
  %s2 = inlined_call_operand.vmem [shape: f32[1,256], index: 2, kind: input, shape index: {}]
  %s3 = inlined_call_operand.vmem [shape: f32[1,256], index: 3, kind: input, shape index: {}]
  %s4 = inlined_call_operand.vmem [shape: f32[128,256], index: 4, kind: output, shape index: {}]
  %s5 = sld [smem:[#allocation0]]
  $region30: #{_lambda_.14} parent=0
    _
  %s7 = ssub.s32 1, %s5
  %s8 = scalar_select 0, %s7, %s5
  $region1: #{_lambda_.14} parent=0
    #allocation2 [shape = 'u8[65536]{0}', space=vmem, size = 0x10000, scoped, tag = 'input window, operand 0, single buffered']
    #allocation3 [shape = 's32[1]{0}', space=sflag, size = 0x4, scoped, tag = 'scoped memory for _lambda_.14']
    %9 = vsyncpa [#allocation3], 0
    // Predicated region
    $region2: #{_lambda_.14} parent=1 // pred_check
      _
    $region3: #{_lambda_.14} parent=1 // pred_check_branch
      %11 = sbr.rel (0) target = $region5
    $region4: #{_lambda_.14} parent=1 // pred_region
      %s13 = ssub.s32 2048, 2048
      %14 = vsyncadd [#allocation3], %s13
      %s15 = sshll.u32 [#allocation2], 4
      %s16 = int_to_ptr.vmem [resolvable:$true] %s15
      %21 = dma.hbm_to_vmem [thread:$0]  %s0, 2048, %s16, [#allocation3], 128, 128, 8
    $region5: #{_lambda_.14} parent=1 // pred_fallthru
      _
    // Predicated region
    $region6: #{_lambda_.14} parent=1 // pred_check
      _
    $region7: #{_lambda_.14} parent=1 // pred_check_branch
      %23 = sbr.rel (0) target = $region9
    $region8: #{_lambda_.14} parent=1 // pred_region
      _
    $region9: #{_lambda_.14} parent=1 // pred_fallthru
      _
    // Predicated region
    $region10: #{_lambda_.14} parent=1 // pred_check
      _
    $region11: #{_lambda_.14} parent=1 // pred_check_branch
      %25 = sbr.rel (0) target = $region13
    $region12: #{_lambda_.14} parent=1 // pred_region
      _
    $region13: #{_lambda_.14} parent=1 // pred_fallthru
      _
    // Predicated region
    $region14: #{_lambda_.14} parent=1 // pred_check
      _
    $region15: #{_lambda_.14} parent=1 // pred_check_branch
      %27 = sbr.rel (0) target = $region17
    $region16: #{_lambda_.14} parent=1 // pred_region
      _
    $region17: #{_lambda_.14} parent=1 // pred_fallthru
      _
    // Predicated region
    $region18: #{_lambda_.14} parent=1 // pred_check
      _
    $region19: #{_lambda_.14} parent=1 // pred_check_branch
      %29 = sbr.rel (0) target = $region21
    $region20: #{_lambda_.14} parent=1 // pred_region
      %30 = dma.done [#allocation3], 2048
    $region21: #{_lambda_.14} parent=1 // pred_fallthru
      _
    %v32 = vld [vmem:[#allocation2] sm:$0xff]
    %v33 = vld [vmem:[#allocation2 + $0x8] sm:$0xff]
    %v34 = vld [vmem:[#allocation2 + $0x10] sm:$0xff]
    %v35 = vld [vmem:[#allocation2 + $0x18] sm:$0xff]
    %v36 = vld [vmem:[#allocation2 + $0x20] sm:$0xff]
    %v37 = vld [vmem:[#allocation2 + $0x28] sm:$0xff]
    %v38 = vld [vmem:[#allocation2 + $0x30] sm:$0xff]
    %v39 = vld [vmem:[#allocation2 + $0x38] sm:$0xff]
    %v40 = vld [vmem:[#allocation2 + $0x40] sm:$0xff]
    %v41 = vld [vmem:[#allocation2 + $0x48] sm:$0xff]
    %v42 = vld [vmem:[#allocation2 + $0x50] sm:$0xff]
    %v43 = vld [vmem:[#allocation2 + $0x58] sm:$0xff]
    %v44 = vld [vmem:[#allocation2 + $0x60] sm:$0xff]
    %v45 = vld [vmem:[#allocation2 + $0x68] sm:$0xff]
    %v46 = vld [vmem:[#allocation2 + $0x70] sm:$0xff]
    %v47 = vld [vmem:[#allocation2 + $0x78] sm:$0xff]
    %v48 = vpack.c.bf16 %v33, %v32
    %v49 = vpack.c.bf16 %v35, %v34
    %v50 = vpack.c.bf16 %v37, %v36
    %v51 = vpack.c.bf16 %v39, %v38
    %v52 = vpack.c.bf16 %v41, %v40
    %v53 = vpack.c.bf16 %v43, %v42
    %v54 = vpack.c.bf16 %v45, %v44
    %v55 = vpack.c.bf16 %v47, %v46
    %v56 = vld [vmem:[%s1] sm:$0xff]
    %v57 = vld [vmem:[%s1 + $0x8] sm:$0xff]
    %v58 = vld [vmem:[%s1 + $0x10] sm:$0xff]
    %v59 = vld [vmem:[%s1 + $0x18] sm:$0xff]
    %v64 = vunpack.c.l.b16 %v56
    %v65 = vunpack.c.h.b16 %v56
    %v66 = vunpack.c.l.b16 %v57
    %v67 = vunpack.c.h.b16 %v57
    %v68 = vunpack.c.l.b16 %v58
    %v69 = vunpack.c.h.b16 %v58
    %v70 = vunpack.c.l.b16 %v59
    %v71 = vunpack.c.h.b16 %v59
    %v72 = vpack.c.b16 %v66, %v64
    %v73 = vpack.c.b16 %v67, %v65
    %v74 = vpack.c.b16 %v70, %v68
    %v75 = vpack.c.b16 %v71, %v69
    %vm80 = vcmask 261120
    %v82 = vsel %vm80, %v48, 0
    %v85 = vsel %vm80, %v49, 0
    %v88 = vsel %vm80, %v50, 0
    %v91 = vsel %vm80, %v51, 0
    %v94 = vsel %vm80, %v52, 0
    %v97 = vsel %vm80, %v53, 0
    %v100 = vsel %vm80, %v54, 0
    %v103 = vsel %vm80, %v55, 0
    %105 = vmatprep.subr.bf16.mxu0 %v73
    %106 = vmatpush1.bf16.msra.mxu0 %v72
    %107 = vmatprep.subr.bf16.mxu0 %v75
    %108 = vmatpush1.bf16.msra.mxu0 %v74
    %109 = vmatprep.subr.bf16.mxu0 0
    %110 = vmatpush1.bf16.msra.mxu0 0
    %111 = vmatprep.subr.bf16.mxu0 0
    %112 = vmatpush1.bf16.msra.mxu0 0
    %113 = vmatprep.subr.bf16.mxu0 0
    %114 = vmatpush1.bf16.msra.mxu0 0
    %115 = vmatprep.subr.bf16.mxu0 0
    %116 = vmatpush1.bf16.msra.mxu0 0
    %117 = vmatprep.subr.bf16.mxu0 0
    %118 = vmatpush1.bf16.msra.mxu0 0
    %119 = vmatprep.subr.bf16.mxu0 0
    %120 = vmatpush1.bf16.msra.mxu0 0
    %121 = vmatprep.subr.bf16.mxu0 0
    %122 = vmatpush1.bf16.msra.mxu0 0
    %123 = vmatprep.subr.bf16.mxu0 0
    %124 = vmatpush1.bf16.msra.mxu0 0
    %125 = vmatprep.subr.bf16.mxu0 0
    %126 = vmatpush1.bf16.msra.mxu0 0
    %127 = vmatprep.subr.bf16.mxu0 0
    %128 = vmatpush1.bf16.msra.mxu0 0
    %129 = vmatprep.subr.bf16.mxu0 0
    %130 = vmatpush1.bf16.msra.mxu0 0
    %131 = vmatprep.subr.bf16.mxu0 0
    %132 = vmatpush1.bf16.msra.mxu0 0
    %133 = vmatprep.subr.bf16.mxu0 0
    %134 = vmatpush1.bf16.msra.mxu0 0
    %135 = vmatprep.subr.bf16.mxu0 0
    %136 = vmatpush1.bf16.msra.mxu0 0
    %137 = vmatprep.mubr.bf16.mxu0 0
    %138 = vmatmul.mubr.bf16.gmra.mrb[0].mxu0 %v82
    %v139 = vpop.f32.mrb[0].mxu0
    %v140 = vadd.f32 0.0, %v139
    %v141 = vpop.f32.mrb[0].mxu0
    %v142 = vadd.f32 0.0, %v141
    %v143 = vpop.f32.mrb[0].mxu0
    %v144 = vadd.f32 0.0, %v143
    %v145 = vpop.f32.mrb[0].mxu0
    %v146 = vadd.f32 0.0, %v145
    %147 = vmatprep.mubr.bf16.mxu0 0
    %148 = vmatmul.mubr.bf16.gmra.mrb[0].mxu0 %v85
    %v149 = vpop.f32.mrb[0].mxu0
    %v150 = vadd.f32 0.0, %v149
    %v151 = vpop.f32.mrb[0].mxu0
    %v152 = vadd.f32 0.0, %v151
    %v153 = vpop.f32.mrb[0].mxu0
    %v154 = vadd.f32 0.0, %v153
    %v155 = vpop.f32.mrb[0].mxu0
    %v156 = vadd.f32 0.0, %v155
    %157 = vmatprep.mubr.bf16.mxu0 0
    %158 = vmatmul.mubr.bf16.gmra.mrb[0].mxu0 %v88
    %v159 = vpop.f32.mrb[0].mxu0
    %v160 = vadd.f32 0.0, %v159
    %v161 = vpop.f32.mrb[0].mxu0
    %v162 = vadd.f32 0.0, %v161
    %v163 = vpop.f32.mrb[0].mxu0
    %v164 = vadd.f32 0.0, %v163
    %v165 = vpop.f32.mrb[0].mxu0
    %v166 = vadd.f32 0.0, %v165
    %167 = vmatprep.mubr.bf16.mxu0 0
    %168 = vmatmul.mubr.bf16.gmra.mrb[0].mxu0 %v91
    %v169 = vpop.f32.mrb[0].mxu0
    %v170 = vadd.f32 0.0, %v169
    %v171 = vpop.f32.mrb[0].mxu0
    %v172 = vadd.f32 0.0, %v171
    %v173 = vpop.f32.mrb[0].mxu0
    %v174 = vadd.f32 0.0, %v173
    %v175 = vpop.f32.mrb[0].mxu0
    %v176 = vadd.f32 0.0, %v175
    %177 = vmatprep.mubr.bf16.mxu0 0
    %178 = vmatmul.mubr.bf16.gmra.mrb[0].mxu0 %v94
    %v179 = vpop.f32.mrb[0].mxu0
    %v180 = vadd.f32 0.0, %v179
    %v181 = vpop.f32.mrb[0].mxu0
    %v182 = vadd.f32 0.0, %v181
    %v183 = vpop.f32.mrb[0].mxu0
    %v184 = vadd.f32 0.0, %v183
    %v185 = vpop.f32.mrb[0].mxu0
    %v186 = vadd.f32 0.0, %v185
    %187 = vmatprep.mubr.bf16.mxu0 0
    %188 = vmatmul.mubr.bf16.gmra.mrb[0].mxu0 %v97
    %v189 = vpop.f32.mrb[0].mxu0
    %v190 = vadd.f32 0.0, %v189
    %v191 = vpop.f32.mrb[0].mxu0
    %v192 = vadd.f32 0.0, %v191
    %v193 = vpop.f32.mrb[0].mxu0
    %v194 = vadd.f32 0.0, %v193
    %v195 = vpop.f32.mrb[0].mxu0
    %v196 = vadd.f32 0.0, %v195
    %197 = vmatprep.mubr.bf16.mxu0 0
    %198 = vmatmul.mubr.bf16.gmra.mrb[0].mxu0 %v100
    %v199 = vpop.f32.mrb[0].mxu0
    %v200 = vadd.f32 0.0, %v199
    %v201 = vpop.f32.mrb[0].mxu0
    %v202 = vadd.f32 0.0, %v201
    %v203 = vpop.f32.mrb[0].mxu0
    %v204 = vadd.f32 0.0, %v203
    %v205 = vpop.f32.mrb[0].mxu0
    %v206 = vadd.f32 0.0, %v205
    %207 = vmatprep.mubr.bf16.mxu0 0
    %208 = vmatmul.mubr.bf16.gmra.mrb[0].mxu0 %v103
    %v209 = vpop.f32.mrb[0].mxu0
    %v210 = vadd.f32 0.0, %v209
    %v211 = vpop.f32.mrb[0].mxu0
    %v212 = vadd.f32 0.0, %v211
    %v213 = vpop.f32.mrb[0].mxu0
    %v214 = vadd.f32 0.0, %v213
    %v215 = vpop.f32.mrb[0].mxu0
    %v216 = vadd.f32 0.0, %v215
    %217 = vdwg.mxu0
    %v218 = vld [vmem:[%s2] sm:$0x3]
    %v220 = vlaneseq
    %v221 = vshrl.u32 %v220, 7
    %v222 = vsub.s32 0, %v221
    %v223 = vrot.slane %v218, %v222
    %v224 = vlaneseq
    %v225 = vshrl.u32 %v224, 7
    %v226 = vsub.s32 1, %v225
    %v227 = vrot.slane %v218, %v226
    %v230 = vmul.f32 %v140, %v223
    %v231 = vmul.f32 %v142, %v227
    %v232 = vmul.f32 %v144, %v223
    %v233 = vmul.f32 %v146, %v227
    %v234 = vmul.f32 %v150, %v223
    %v235 = vmul.f32 %v152, %v227
    %v236 = vmul.f32 %v154, %v223
    %v237 = vmul.f32 %v156, %v227
    %v238 = vmul.f32 %v160, %v223
    %v239 = vmul.f32 %v162, %v227
    %v240 = vmul.f32 %v164, %v223
    %v241 = vmul.f32 %v166, %v227
    %v242 = vmul.f32 %v170, %v223
    %v243 = vmul.f32 %v172, %v227
    %v244 = vmul.f32 %v174, %v223
    %v245 = vmul.f32 %v176, %v227
    %v246 = vmul.f32 %v180, %v223
    %v247 = vmul.f32 %v182, %v227
    %v248 = vmul.f32 %v184, %v223
    %v249 = vmul.f32 %v186, %v227
    %v250 = vmul.f32 %v190, %v223
    %v251 = vmul.f32 %v192, %v227
    %v252 = vmul.f32 %v194, %v223
    %v253 = vmul.f32 %v196, %v227
    %v254 = vmul.f32 %v200, %v223
    %v255 = vmul.f32 %v202, %v227
    %v256 = vmul.f32 %v204, %v223
    %v257 = vmul.f32 %v206, %v227
    %v258 = vmul.f32 %v210, %v223
    %v259 = vmul.f32 %v212, %v227
    %v260 = vmul.f32 %v214, %v223
    %v261 = vmul.f32 %v216, %v227
    %v262 = vld [vmem:[%s3] sm:$0x3]
    %v264 = vlaneseq
    %v265 = vshrl.u32 %v264, 7
    %v266 = vsub.s32 0, %v265
    %v267 = vrot.slane %v262, %v266
    %v268 = vlaneseq
    %v269 = vshrl.u32 %v268, 7
    %v270 = vsub.s32 1, %v269
    %v271 = vrot.slane %v262, %v270
    %v274 = vadd.f32 %v230, %v267
    %v275 = vadd.f32 %v231, %v271
    %v276 = vadd.f32 %v232, %v267
    %v277 = vadd.f32 %v233, %v271
    %v278 = vadd.f32 %v234, %v267
    %v279 = vadd.f32 %v235, %v271
    %v280 = vadd.f32 %v236, %v267
    %v281 = vadd.f32 %v237, %v271
    %v282 = vadd.f32 %v238, %v267
    %v283 = vadd.f32 %v239, %v271
    %v284 = vadd.f32 %v240, %v267
    %v285 = vadd.f32 %v241, %v271
    %v286 = vadd.f32 %v242, %v267
    %v287 = vadd.f32 %v243, %v271
    %v288 = vadd.f32 %v244, %v267
    %v289 = vadd.f32 %v245, %v271
    %v290 = vadd.f32 %v246, %v267
    %v291 = vadd.f32 %v247, %v271
    %v292 = vadd.f32 %v248, %v267
    %v293 = vadd.f32 %v249, %v271
    %v294 = vadd.f32 %v250, %v267
    %v295 = vadd.f32 %v251, %v271
    %v296 = vadd.f32 %v252, %v267
    %v297 = vadd.f32 %v253, %v271
    %v298 = vadd.f32 %v254, %v267
    %v299 = vadd.f32 %v255, %v271
    %v300 = vadd.f32 %v256, %v267
    %v301 = vadd.f32 %v257, %v271
    %v302 = vadd.f32 %v258, %v267
    %v303 = vadd.f32 %v259, %v271
    %v304 = vadd.f32 %v260, %v267
    %v305 = vadd.f32 %v261, %v271
    %v306 = vmax.f32 %v274, 0.0
    %v307 = vmax.f32 %v275, 0.0
    %v308 = vmax.f32 %v276, 0.0
    %v309 = vmax.f32 %v277, 0.0
    %v310 = vmax.f32 %v278, 0.0
    %v311 = vmax.f32 %v279, 0.0
    %v312 = vmax.f32 %v280, 0.0
    %v313 = vmax.f32 %v281, 0.0
    %v314 = vmax.f32 %v282, 0.0
    %v315 = vmax.f32 %v283, 0.0
    %v316 = vmax.f32 %v284, 0.0
    %v317 = vmax.f32 %v285, 0.0
    %v318 = vmax.f32 %v286, 0.0
    %v319 = vmax.f32 %v287, 0.0
    %v320 = vmax.f32 %v288, 0.0
    %v321 = vmax.f32 %v289, 0.0
    %v322 = vmax.f32 %v290, 0.0
    %v323 = vmax.f32 %v291, 0.0
    %v324 = vmax.f32 %v292, 0.0
    %v325 = vmax.f32 %v293, 0.0
    %v326 = vmax.f32 %v294, 0.0
    %v327 = vmax.f32 %v295, 0.0
    %v328 = vmax.f32 %v296, 0.0
    %v329 = vmax.f32 %v297, 0.0
    %v330 = vmax.f32 %v298, 0.0
    %v331 = vmax.f32 %v299, 0.0
    %v332 = vmax.f32 %v300, 0.0
    %v333 = vmax.f32 %v301, 0.0
    %v334 = vmax.f32 %v302, 0.0
    %v335 = vmax.f32 %v303, 0.0
    %v336 = vmax.f32 %v304, 0.0
    %v337 = vmax.f32 %v305, 0.0
    %338 = vst [vmem:[%s4] sm:$0xff] %v306
    %339 = vst [vmem:[%s4 + $0x8] sm:$0xff] %v307
    %340 = vst [vmem:[%s4 + $0x10] sm:$0xff] %v308
    %341 = vst [vmem:[%s4 + $0x18] sm:$0xff] %v309
    %342 = vst [vmem:[%s4 + $0x20] sm:$0xff] %v310
    %343 = vst [vmem:[%s4 + $0x28] sm:$0xff] %v311
    %344 = vst [vmem:[%s4 + $0x30] sm:$0xff] %v312
    %345 = vst [vmem:[%s4 + $0x38] sm:$0xff] %v313
    %346 = vst [vmem:[%s4 + $0x40] sm:$0xff] %v314
    %347 = vst [vmem:[%s4 + $0x48] sm:$0xff] %v315
    %348 = vst [vmem:[%s4 + $0x50] sm:$0xff] %v316
    %349 = vst [vmem:[%s4 + $0x58] sm:$0xff] %v317
    %350 = vst [vmem:[%s4 + $0x60] sm:$0xff] %v318
    %351 = vst [vmem:[%s4 + $0x68] sm:$0xff] %v319
    %352 = vst [vmem:[%s4 + $0x70] sm:$0xff] %v320
    %353 = vst [vmem:[%s4 + $0x78] sm:$0xff] %v321
    %354 = vst [vmem:[%s4 + $0x80] sm:$0xff] %v322
    %355 = vst [vmem:[%s4 + $0x88] sm:$0xff] %v323
    %356 = vst [vmem:[%s4 + $0x90] sm:$0xff] %v324
    %357 = vst [vmem:[%s4 + $0x98] sm:$0xff] %v325
    %358 = vst [vmem:[%s4 + $0xa0] sm:$0xff] %v326
    %359 = vst [vmem:[%s4 + $0xa8] sm:$0xff] %v327
    %360 = vst [vmem:[%s4 + $0xb0] sm:$0xff] %v328
    %361 = vst [vmem:[%s4 + $0xb8] sm:$0xff] %v329
    %362 = vst [vmem:[%s4 + $0xc0] sm:$0xff] %v330
    %363 = vst [vmem:[%s4 + $0xc8] sm:$0xff] %v331
    %364 = vst [vmem:[%s4 + $0xd0] sm:$0xff] %v332
    %365 = vst [vmem:[%s4 + $0xd8] sm:$0xff] %v333
    %366 = vst [vmem:[%s4 + $0xe0] sm:$0xff] %v334
    %367 = vst [vmem:[%s4 + $0xe8] sm:$0xff] %v335
    %368 = vst [vmem:[%s4 + $0xf0] sm:$0xff] %v336
    %369 = vst [vmem:[%s4 + $0xf8] sm:$0xff] %v337
    // Predicated region
    $region22: #{_lambda_.14} parent=1 // pred_check
      _
    $region23: #{_lambda_.14} parent=1 // pred_check_branch
      %371 = sbr.rel (0) target = $region25
    $region24: #{_lambda_.14} parent=1 // pred_region
      _
    $region25: #{_lambda_.14} parent=1 // pred_fallthru
      _
    // Predicated region
    $region26: #{_lambda_.14} parent=1 // pred_check
      _
    $region27: #{_lambda_.14} parent=1 // pred_check_branch
      %373 = sbr.rel (0) target = $region29
    $region28: #{_lambda_.14} parent=1 // pred_region
      _
    $region29: #{_lambda_.14} parent=1 // pred_fallthru
      _
    %374 = vsyncpa [#allocation3], 1

// kernel: _lambda_.11
$region0: #{_lambda_.11}
  #allocation0 [shape = 'u32[]', space=smem, size = 0x4, offset = 0x4, fixed_abs, tag = 'smem constant byte address 0x4 - core index']
  #allocation1 [shape = 'u32[144,128]{1,0:T(1,128)}', space=vmem, size = 0x12000, scoped, tag = 'internal scratch']
  %s0 = inlined_call_operand.vmem [shape: f32[128,32], index: 0, kind: input, shape index: {}]
  %s1 = inlined_call_operand.vmem [shape: bf16[32,256], index: 1, kind: input, shape index: {}]
  %s2 = inlined_call_operand.vmem [shape: f32[1,256], index: 2, kind: input, shape index: {}]
  %s3 = inlined_call_operand.vmem [shape: f32[1,256], index: 3, kind: input, shape index: {}]
  %s4 = inlined_call_operand.vmem [shape: f32[128,256], index: 4, kind: output, shape index: {}]
  %s5 = sld [smem:[#allocation0]]
  $region26: #{_lambda_.11} parent=0
    _
  %s7 = ssub.s32 1, %s5
  %s8 = scalar_select 0, %s7, %s5
  // Predicated region
  $region2: #{_lambda_.11} parent=0 // pred_check
    _
  $region3: #{_lambda_.11} parent=0 // pred_check_branch
    %10 = sbr.rel (0) target = $region5
  $region4: #{_lambda_.11} parent=0 // pred_region
    _
  $region5: #{_lambda_.11} parent=0 // pred_fallthru
    _
  // Predicated region
  $region6: #{_lambda_.11} parent=0 // pred_check
    _
  $region7: #{_lambda_.11} parent=0 // pred_check_branch
    %12 = sbr.rel (0) target = $region9
  $region8: #{_lambda_.11} parent=0 // pred_region
    _
  $region9: #{_lambda_.11} parent=0 // pred_fallthru
    _
  // Predicated region
  $region10: #{_lambda_.11} parent=0 // pred_check
    _
  $region11: #{_lambda_.11} parent=0 // pred_check_branch
    %14 = sbr.rel (0) target = $region13
  $region12: #{_lambda_.11} parent=0 // pred_region
    _
  $region13: #{_lambda_.11} parent=0 // pred_fallthru
    _
  // Predicated region
  $region14: #{_lambda_.11} parent=0 // pred_check
    _
  $region15: #{_lambda_.11} parent=0 // pred_check_branch
    %16 = sbr.rel (0) target = $region17
  $region16: #{_lambda_.11} parent=0 // pred_region
    _
  $region17: #{_lambda_.11} parent=0 // pred_fallthru
    _
  %v18 = vld [vmem:[%s0] sm:$0xff]
  %v19 = vld [vmem:[%s0 + $0x8] sm:$0xff]
  %v20 = vld [vmem:[%s0 + $0x10] sm:$0xff]
  %v21 = vld [vmem:[%s0 + $0x18] sm:$0xff]
  %v22 = vld [vmem:[%s0 + $0x20] sm:$0xff]
  %v23 = vld [vmem:[%s0 + $0x28] sm:$0xff]
  %v24 = vld [vmem:[%s0 + $0x30] sm:$0xff]
  %v25 = vld [vmem:[%s0 + $0x38] sm:$0xff]
  %v26 = vld [vmem:[%s0 + $0x40] sm:$0xff]
  %v27 = vld [vmem:[%s0 + $0x48] sm:$0xff]
  %v28 = vld [vmem:[%s0 + $0x50] sm:$0xff]
  %v29 = vld [vmem:[%s0 + $0x58] sm:$0xff]
  %v30 = vld [vmem:[%s0 + $0x60] sm:$0xff]
  %v31 = vld [vmem:[%s0 + $0x68] sm:$0xff]
  %v32 = vld [vmem:[%s0 + $0x70] sm:$0xff]
  %v33 = vld [vmem:[%s0 + $0x78] sm:$0xff]
  %v34 = vpack.c.bf16 %v19, %v18
  %v35 = vpack.c.bf16 %v21, %v20
  %v36 = vpack.c.bf16 %v23, %v22
  %v37 = vpack.c.bf16 %v25, %v24
  %v38 = vpack.c.bf16 %v27, %v26
  %v39 = vpack.c.bf16 %v29, %v28
  %v40 = vpack.c.bf16 %v31, %v30
  %v41 = vpack.c.bf16 %v33, %v32
  %v42 = vld [vmem:[%s1] sm:$0xff]
  %v43 = vld [vmem:[%s1 + $0x8] sm:$0xff]
  %v44 = vld [vmem:[%s1 + $0x10] sm:$0xff]
  %v45 = vld [vmem:[%s1 + $0x18] sm:$0xff]
  %v50 = vunpack.c.l.b16 %v42
  %v51 = vunpack.c.h.b16 %v42
  %v52 = vunpack.c.l.b16 %v43
  %v53 = vunpack.c.h.b16 %v43
  %v54 = vunpack.c.l.b16 %v44
  %v55 = vunpack.c.h.b16 %v44
  %v56 = vunpack.c.l.b16 %v45
  %v57 = vunpack.c.h.b16 %v45
  %v58 = vpack.c.b16 %v52, %v50
  %v59 = vpack.c.b16 %v53, %v51
  %v60 = vpack.c.b16 %v56, %v54
  %v61 = vpack.c.b16 %v57, %v55
  %vm66 = vcmask 261120
  %v68 = vsel %vm66, %v34, 0
  %v71 = vsel %vm66, %v35, 0
  %v74 = vsel %vm66, %v36, 0
  %v77 = vsel %vm66, %v37, 0
  %v80 = vsel %vm66, %v38, 0
  %v83 = vsel %vm66, %v39, 0
  %v86 = vsel %vm66, %v40, 0
  %v89 = vsel %vm66, %v41, 0
  %91 = vmatprep.subr.bf16.mxu0 %v59
  %92 = vmatpush1.bf16.msra.mxu0 %v58
  %93 = vmatprep.subr.bf16.mxu0 %v61
  %94 = vmatpush1.bf16.msra.mxu0 %v60
  %95 = vmatprep.subr.bf16.mxu0 0
  %96 = vmatpush1.bf16.msra.mxu0 0
  %97 = vmatprep.subr.bf16.mxu0 0
  %98 = vmatpush1.bf16.msra.mxu0 0
  %99 = vmatprep.subr.bf16.mxu0 0
  %100 = vmatpush1.bf16.msra.mxu0 0
  %101 = vmatprep.subr.bf16.mxu0 0
  %102 = vmatpush1.bf16.msra.mxu0 0
  %103 = vmatprep.subr.bf16.mxu0 0
  %104 = vmatpush1.bf16.msra.mxu0 0
  %105 = vmatprep.subr.bf16.mxu0 0
  %106 = vmatpush1.bf16.msra.mxu0 0
  %107 = vmatprep.subr.bf16.mxu0 0
  %108 = vmatpush1.bf16.msra.mxu0 0
  %109 = vmatprep.subr.bf16.mxu0 0
  %110 = vmatpush1.bf16.msra.mxu0 0
  %111 = vmatprep.subr.bf16.mxu0 0
  %112 = vmatpush1.bf16.msra.mxu0 0
  %113 = vmatprep.subr.bf16.mxu0 0
  %114 = vmatpush1.bf16.msra.mxu0 0
  %115 = vmatprep.subr.bf16.mxu0 0
  %116 = vmatpush1.bf16.msra.mxu0 0
  %117 = vmatprep.subr.bf16.mxu0 0
  %118 = vmatpush1.bf16.msra.mxu0 0
  %119 = vmatprep.subr.bf16.mxu0 0
  %120 = vmatpush1.bf16.msra.mxu0 0
  %121 = vmatprep.subr.bf16.mxu0 0
  %122 = vmatpush1.bf16.msra.mxu0 0
  %123 = vmatprep.mubr.bf16.mxu0 0
  %124 = vmatmul.mubr.bf16.gmra.mrb[0].mxu0 %v68
  %v125 = vpop.f32.mrb[0].mxu0
  %v126 = vadd.f32 0.0, %v125
  %v127 = vpop.f32.mrb[0].mxu0
  %v128 = vadd.f32 0.0, %v127
  %v129 = vpop.f32.mrb[0].mxu0
  %v130 = vadd.f32 0.0, %v129
  %v131 = vpop.f32.mrb[0].mxu0
  %v132 = vadd.f32 0.0, %v131
  %133 = vmatprep.mubr.bf16.mxu0 0
  %134 = vmatmul.mubr.bf16.gmra.mrb[0].mxu0 %v71
  %v135 = vpop.f32.mrb[0].mxu0
  %v136 = vadd.f32 0.0, %v135
  %v137 = vpop.f32.mrb[0].mxu0
  %v138 = vadd.f32 0.0, %v137
  %v139 = vpop.f32.mrb[0].mxu0
  %v140 = vadd.f32 0.0, %v139
  %v141 = vpop.f32.mrb[0].mxu0
  %v142 = vadd.f32 0.0, %v141
  %143 = vmatprep.mubr.bf16.mxu0 0
  %144 = vmatmul.mubr.bf16.gmra.mrb[0].mxu0 %v74
  %v145 = vpop.f32.mrb[0].mxu0
  %v146 = vadd.f32 0.0, %v145
  %v147 = vpop.f32.mrb[0].mxu0
  %v148 = vadd.f32 0.0, %v147
  %v149 = vpop.f32.mrb[0].mxu0
  %v150 = vadd.f32 0.0, %v149
  %v151 = vpop.f32.mrb[0].mxu0
  %v152 = vadd.f32 0.0, %v151
  %153 = vmatprep.mubr.bf16.mxu0 0
  %154 = vmatmul.mubr.bf16.gmra.mrb[0].mxu0 %v77
  %v155 = vpop.f32.mrb[0].mxu0
  %v156 = vadd.f32 0.0, %v155
  %v157 = vpop.f32.mrb[0].mxu0
  %v158 = vadd.f32 0.0, %v157
  %v159 = vpop.f32.mrb[0].mxu0
  %v160 = vadd.f32 0.0, %v159
  %v161 = vpop.f32.mrb[0].mxu0
  %v162 = vadd.f32 0.0, %v161
  %163 = vmatprep.mubr.bf16.mxu0 0
  %164 = vmatmul.mubr.bf16.gmra.mrb[0].mxu0 %v80
  %v165 = vpop.f32.mrb[0].mxu0
  %v166 = vadd.f32 0.0, %v165
  %v167 = vpop.f32.mrb[0].mxu0
  %v168 = vadd.f32 0.0, %v167
  %v169 = vpop.f32.mrb[0].mxu0
  %v170 = vadd.f32 0.0, %v169
  %v171 = vpop.f32.mrb[0].mxu0
  %v172 = vadd.f32 0.0, %v171
  %173 = vmatprep.mubr.bf16.mxu0 0
  %174 = vmatmul.mubr.bf16.gmra.mrb[0].mxu0 %v83
  %v175 = vpop.f32.mrb[0].mxu0
  %v176 = vadd.f32 0.0, %v175
  %v177 = vpop.f32.mrb[0].mxu0
  %v178 = vadd.f32 0.0, %v177
  %v179 = vpop.f32.mrb[0].mxu0
  %v180 = vadd.f32 0.0, %v179
  %v181 = vpop.f32.mrb[0].mxu0
  %v182 = vadd.f32 0.0, %v181
  %183 = vmatprep.mubr.bf16.mxu0 0
  %184 = vmatmul.mubr.bf16.gmra.mrb[0].mxu0 %v86
  %v185 = vpop.f32.mrb[0].mxu0
  %v186 = vadd.f32 0.0, %v185
  %v187 = vpop.f32.mrb[0].mxu0
  %v188 = vadd.f32 0.0, %v187
  %v189 = vpop.f32.mrb[0].mxu0
  %v190 = vadd.f32 0.0, %v189
  %v191 = vpop.f32.mrb[0].mxu0
  %v192 = vadd.f32 0.0, %v191
  %193 = vmatprep.mubr.bf16.mxu0 0
  %194 = vmatmul.mubr.bf16.gmra.mrb[0].mxu0 %v89
  %v195 = vpop.f32.mrb[0].mxu0
  %v196 = vadd.f32 0.0, %v195
  %v197 = vpop.f32.mrb[0].mxu0
  %v198 = vadd.f32 0.0, %v197
  %v199 = vpop.f32.mrb[0].mxu0
  %v200 = vadd.f32 0.0, %v199
  %v201 = vpop.f32.mrb[0].mxu0
  %v202 = vadd.f32 0.0, %v201
  %203 = vdwg.mxu0
  %v204 = vld [vmem:[%s2] sm:$0x3]
  %v206 = vlaneseq
  %v207 = vshrl.u32 %v206, 7
  %v208 = vsub.s32 0, %v207
  %v209 = vrot.slane %v204, %v208
  %v210 = vlaneseq
  %v211 = vshrl.u32 %v210, 7
  %v212 = vsub.s32 1, %v211
  %v213 = vrot.slane %v204, %v212
  %v216 = vmul.f32 %v126, %v209
  %v217 = vmul.f32 %v128, %v213
  %v218 = vmul.f32 %v130, %v209
  %v219 = vmul.f32 %v132, %v213
  %v220 = vmul.f32 %v136, %v209
  %v221 = vmul.f32 %v138, %v213
  %v222 = vmul.f32 %v140, %v209
  %v223 = vmul.f32 %v142, %v213
  %v224 = vmul.f32 %v146, %v209
  %v225 = vmul.f32 %v148, %v213
  %v226 = vmul.f32 %v150, %v209
  %v227 = vmul.f32 %v152, %v213
  %v228 = vmul.f32 %v156, %v209
  %v229 = vmul.f32 %v158, %v213
  %v230 = vmul.f32 %v160, %v209
  %v231 = vmul.f32 %v162, %v213
  %v232 = vmul.f32 %v166, %v209
  %v233 = vmul.f32 %v168, %v213
  %v234 = vmul.f32 %v170, %v209
  %v235 = vmul.f32 %v172, %v213
  %v236 = vmul.f32 %v176, %v209
  %v237 = vmul.f32 %v178, %v213
  %v238 = vmul.f32 %v180, %v209
  %v239 = vmul.f32 %v182, %v213
  %v240 = vmul.f32 %v186, %v209
  %v241 = vmul.f32 %v188, %v213
  %v242 = vmul.f32 %v190, %v209
  %v243 = vmul.f32 %v192, %v213
  %v244 = vmul.f32 %v196, %v209
  %v245 = vmul.f32 %v198, %v213
  %v246 = vmul.f32 %v200, %v209
  %v247 = vmul.f32 %v202, %v213
  %v248 = vld [vmem:[%s3] sm:$0x3]
  %v250 = vlaneseq
  %v251 = vshrl.u32 %v250, 7
  %v252 = vsub.s32 0, %v251
  %v253 = vrot.slane %v248, %v252
  %v254 = vlaneseq
  %v255 = vshrl.u32 %v254, 7
  %v256 = vsub.s32 1, %v255
  %v257 = vrot.slane %v248, %v256
  %v260 = vadd.f32 %v216, %v253
  %v261 = vadd.f32 %v217, %v257
  %v262 = vadd.f32 %v218, %v253
  %v263 = vadd.f32 %v219, %v257
  %v264 = vadd.f32 %v220, %v253
  %v265 = vadd.f32 %v221, %v257
  %v266 = vadd.f32 %v222, %v253
  %v267 = vadd.f32 %v223, %v257
  %v268 = vadd.f32 %v224, %v253
  %v269 = vadd.f32 %v225, %v257
  %v270 = vadd.f32 %v226, %v253
  %v271 = vadd.f32 %v227, %v257
  %v272 = vadd.f32 %v228, %v253
  %v273 = vadd.f32 %v229, %v257
  %v274 = vadd.f32 %v230, %v253
  %v275 = vadd.f32 %v231, %v257
  %v276 = vadd.f32 %v232, %v253
  %v277 = vadd.f32 %v233, %v257
  %v278 = vadd.f32 %v234, %v253
  %v279 = vadd.f32 %v235, %v257
  %v280 = vadd.f32 %v236, %v253
  %v281 = vadd.f32 %v237, %v257
  %v282 = vadd.f32 %v238, %v253
  %v283 = vadd.f32 %v239, %v257
  %v284 = vadd.f32 %v240, %v253
  %v285 = vadd.f32 %v241, %v257
  %v286 = vadd.f32 %v242, %v253
  %v287 = vadd.f32 %v243, %v257
  %v288 = vadd.f32 %v244, %v253
  %v289 = vadd.f32 %v245, %v257
  %v290 = vadd.f32 %v246, %v253
  %v291 = vadd.f32 %v247, %v257
  %v292 = vmax.f32 %v260, 0.0
  %v293 = vmax.f32 %v261, 0.0
  %v294 = vmax.f32 %v262, 0.0
  %v295 = vmax.f32 %v263, 0.0
  %v296 = vmax.f32 %v264, 0.0
  %v297 = vmax.f32 %v265, 0.0
  %v298 = vmax.f32 %v266, 0.0
  %v299 = vmax.f32 %v267, 0.0
  %v300 = vmax.f32 %v268, 0.0
  %v301 = vmax.f32 %v269, 0.0
  %v302 = vmax.f32 %v270, 0.0
  %v303 = vmax.f32 %v271, 0.0
  %v304 = vmax.f32 %v272, 0.0
  %v305 = vmax.f32 %v273, 0.0
  %v306 = vmax.f32 %v274, 0.0
  %v307 = vmax.f32 %v275, 0.0
  %v308 = vmax.f32 %v276, 0.0
  %v309 = vmax.f32 %v277, 0.0
  %v310 = vmax.f32 %v278, 0.0
  %v311 = vmax.f32 %v279, 0.0
  %v312 = vmax.f32 %v280, 0.0
  %v313 = vmax.f32 %v281, 0.0
  %v314 = vmax.f32 %v282, 0.0
  %v315 = vmax.f32 %v283, 0.0
  %v316 = vmax.f32 %v284, 0.0
  %v317 = vmax.f32 %v285, 0.0
  %v318 = vmax.f32 %v286, 0.0
  %v319 = vmax.f32 %v287, 0.0
  %v320 = vmax.f32 %v288, 0.0
  %v321 = vmax.f32 %v289, 0.0
  %v322 = vmax.f32 %v290, 0.0
  %v323 = vmax.f32 %v291, 0.0
  %324 = vst [vmem:[%s4] sm:$0xff] %v292
  %325 = vst [vmem:[%s4 + $0x8] sm:$0xff] %v293
  %326 = vst [vmem:[%s4 + $0x10] sm:$0xff] %v294
  %327 = vst [vmem:[%s4 + $0x18] sm:$0xff] %v295
  %328 = vst [vmem:[%s4 + $0x20] sm:$0xff] %v296
  %329 = vst [vmem:[%s4 + $0x28] sm:$0xff] %v297
  %330 = vst [vmem:[%s4 + $0x30] sm:$0xff] %v298
  %331 = vst [vmem:[%s4 + $0x38] sm:$0xff] %v299
  %332 = vst [vmem:[%s4 + $0x40] sm:$0xff] %v300
  %333 = vst [vmem:[%s4 + $0x48] sm:$0xff] %v301
  %334 = vst [vmem:[%s4 + $0x50] sm:$0xff] %v302
  %335 = vst [vmem:[%s4 + $0x58] sm:$0xff] %v303
  %336 = vst [vmem:[%s4 + $0x60] sm:$0xff] %v304
  %337 = vst [vmem:[%s4 + $0x68] sm:$0xff] %v305
  %338 = vst [vmem:[%s4 + $0x70] sm:$0xff] %v306
  %339 = vst [vmem:[%s4 + $0x78] sm:$0xff] %v307
  %340 = vst [vmem:[%s4 + $0x80] sm:$0xff] %v308
  %341 = vst [vmem:[%s4 + $0x88] sm:$0xff] %v309
  %342 = vst [vmem:[%s4 + $0x90] sm:$0xff] %v310
  %343 = vst [vmem:[%s4 + $0x98] sm:$0xff] %v311
  %344 = vst [vmem:[%s4 + $0xa0] sm:$0xff] %v312
  %345 = vst [vmem:[%s4 + $0xa8] sm:$0xff] %v313
  %346 = vst [vmem:[%s4 + $0xb0] sm:$0xff] %v314
  %347 = vst [vmem:[%s4 + $0xb8] sm:$0xff] %v315
  %348 = vst [vmem:[%s4 + $0xc0] sm:$0xff] %v316
  %349 = vst [vmem:[%s4 + $0xc8] sm:$0xff] %v317
  %350 = vst [vmem:[%s4 + $0xd0] sm:$0xff] %v318
  %351 = vst [vmem:[%s4 + $0xd8] sm:$0xff] %v319
  %352 = vst [vmem:[%s4 + $0xe0] sm:$0xff] %v320
  %353 = vst [vmem:[%s4 + $0xe8] sm:$0xff] %v321
  %354 = vst [vmem:[%s4 + $0xf0] sm:$0xff] %v322
  %355 = vst [vmem:[%s4 + $0xf8] sm:$0xff] %v323
  // Predicated region
  $region18: #{_lambda_.11} parent=0 // pred_check
    _
  $region19: #{_lambda_.11} parent=0 // pred_check_branch
    %357 = sbr.rel (0) target = $region21
  $region20: #{_lambda_.11} parent=0 // pred_region
    _
  $region21: #{_lambda_.11} parent=0 // pred_fallthru
    _
  // Predicated region
  $region22: #{_lambda_.11} parent=0 // pred_check
    _
  $region23: #{_lambda_.11} parent=0 // pred_check_branch
    %359 = sbr.rel (0) target = $region25
  $region24: #{_lambda_.11} parent=0 // pred_region
    _
  $region25: #{_lambda_.11} parent=0 // pred_fallthru
    _

// kernel: _lambda_.10
$region0: #{_lambda_.10}
  #allocation0 [shape = 'u32[]', space=smem, size = 0x4, offset = 0x4, fixed_abs, tag = 'smem constant byte address 0x4 - core index']
  #allocation1 [shape = 'u32[144,128]{1,0:T(1,128)}', space=vmem, size = 0x12000, scoped, tag = 'internal scratch']
  %s0 = inlined_call_operand.vmem [shape: f32[128,32], index: 0, kind: input, shape index: {}]
  %s1 = inlined_call_operand.vmem [shape: bf16[32,384], index: 1, kind: input, shape index: {}]
  %s2 = inlined_call_operand.vmem [shape: f32[1,384], index: 2, kind: input, shape index: {}]
  %s3 = inlined_call_operand.vmem [shape: f32[1,384], index: 3, kind: input, shape index: {}]
  %s4 = inlined_call_operand.vmem [shape: f32[128,384], index: 4, kind: output, shape index: {}]
  %s5 = sld [smem:[#allocation0]]
  $region26: #{_lambda_.10} parent=0
    _
  %s7 = ssub.s32 1, %s5
  %s8 = scalar_select 0, %s7, %s5
  // Predicated region
  $region2: #{_lambda_.10} parent=0 // pred_check
    _
  $region3: #{_lambda_.10} parent=0 // pred_check_branch
    %10 = sbr.rel (0) target = $region5
  $region4: #{_lambda_.10} parent=0 // pred_region
    _
  $region5: #{_lambda_.10} parent=0 // pred_fallthru
    _
  // Predicated region
  $region6: #{_lambda_.10} parent=0 // pred_check
    _
  $region7: #{_lambda_.10} parent=0 // pred_check_branch
    %12 = sbr.rel (0) target = $region9
  $region8: #{_lambda_.10} parent=0 // pred_region
    _
  $region9: #{_lambda_.10} parent=0 // pred_fallthru
    _
  // Predicated region
  $region10: #{_lambda_.10} parent=0 // pred_check
    _
  $region11: #{_lambda_.10} parent=0 // pred_check_branch
    %14 = sbr.rel (0) target = $region13
  $region12: #{_lambda_.10} parent=0 // pred_region
    _
  $region13: #{_lambda_.10} parent=0 // pred_fallthru
    _
  // Predicated region
  $region14: #{_lambda_.10} parent=0 // pred_check
    _
  $region15: #{_lambda_.10} parent=0 // pred_check_branch
    %16 = sbr.rel (0) target = $region17
  $region16: #{_lambda_.10} parent=0 // pred_region
    _
  $region17: #{_lambda_.10} parent=0 // pred_fallthru
    _
  %v18 = vld [vmem:[%s0] sm:$0xff]
  %v19 = vld [vmem:[%s0 + $0x8] sm:$0xff]
  %v20 = vld [vmem:[%s0 + $0x10] sm:$0xff]
  %v21 = vld [vmem:[%s0 + $0x18] sm:$0xff]
  %v22 = vld [vmem:[%s0 + $0x20] sm:$0xff]
  %v23 = vld [vmem:[%s0 + $0x28] sm:$0xff]
  %v24 = vld [vmem:[%s0 + $0x30] sm:$0xff]
  %v25 = vld [vmem:[%s0 + $0x38] sm:$0xff]
  %v26 = vld [vmem:[%s0 + $0x40] sm:$0xff]
  %v27 = vld [vmem:[%s0 + $0x48] sm:$0xff]
  %v28 = vld [vmem:[%s0 + $0x50] sm:$0xff]
  %v29 = vld [vmem:[%s0 + $0x58] sm:$0xff]
  %v30 = vld [vmem:[%s0 + $0x60] sm:$0xff]
  %v31 = vld [vmem:[%s0 + $0x68] sm:$0xff]
  %v32 = vld [vmem:[%s0 + $0x70] sm:$0xff]
  %v33 = vld [vmem:[%s0 + $0x78] sm:$0xff]
  %v34 = vpack.c.bf16 %v19, %v18
  %v35 = vpack.c.bf16 %v21, %v20
  %v36 = vpack.c.bf16 %v23, %v22
  %v37 = vpack.c.bf16 %v25, %v24
  %v38 = vpack.c.bf16 %v27, %v26
  %v39 = vpack.c.bf16 %v29, %v28
  %v40 = vpack.c.bf16 %v31, %v30
  %v41 = vpack.c.bf16 %v33, %v32
  %v42 = vld [vmem:[%s1] sm:$0xff]
  %v43 = vld [vmem:[%s1 + $0x8] sm:$0xf]
  %v44 = vld [vmem:[%s1 + $0xc] sm:$0xff]
  %v45 = vld [vmem:[%s1 + $0x14] sm:$0xf]
  %v46 = vld [vmem:[%s1 + $0x18] sm:$0xff]
  %v47 = vld [vmem:[%s1 + $0x20] sm:$0xf]
  %v48 = vld [vmem:[%s1 + $0x24] sm:$0xff]
  %v49 = vld [vmem:[%s1 + $0x2c] sm:$0xf]
  %v58 = vunpack.c.l.b16 %v42
  %v59 = vunpack.c.h.b16 %v42
  %v60 = vunpack.c.l.b16 %v43
  %v61 = vunpack.c.l.b16 %v44
  %v62 = vunpack.c.h.b16 %v44
  %v63 = vunpack.c.l.b16 %v45
  %v64 = vunpack.c.l.b16 %v46
  %v65 = vunpack.c.h.b16 %v46
  %v66 = vunpack.c.l.b16 %v47
  %v67 = vunpack.c.l.b16 %v48
  %v68 = vunpack.c.h.b16 %v48
  %v69 = vunpack.c.l.b16 %v49
  %v70 = vpack.c.b16 %v61, %v58
  %v71 = vpack.c.b16 %v62, %v59
  %v72 = vpack.c.b16 %v63, %v60
  %v73 = vpack.c.b16 %v67, %v64
  %v74 = vpack.c.b16 %v68, %v65
  %v75 = vpack.c.b16 %v69, %v66
  %vm82 = vcmask 261120
  %v84 = vsel %vm82, %v34, 0
  %v87 = vsel %vm82, %v35, 0
  %v90 = vsel %vm82, %v36, 0
  %v93 = vsel %vm82, %v37, 0
  %v96 = vsel %vm82, %v38, 0
  %v99 = vsel %vm82, %v39, 0
  %v102 = vsel %vm82, %v40, 0
  %v105 = vsel %vm82, %v41, 0
  %107 = vmatprep.subr.bf16.mxu0 %v71
  %108 = vmatpush1.bf16.msra.mxu0 %v70
  %109 = vmatprep.subr.bf16.mxu0 %v74
  %110 = vmatpush1.bf16.msra.mxu0 %v73
  %111 = vmatprep.subr.bf16.mxu0 0
  %112 = vmatpush1.bf16.msra.mxu0 0
  %113 = vmatprep.subr.bf16.mxu0 0
  %114 = vmatpush1.bf16.msra.mxu0 0
  %115 = vmatprep.subr.bf16.mxu0 0
  %116 = vmatpush1.bf16.msra.mxu0 0
  %117 = vmatprep.subr.bf16.mxu0 0
  %118 = vmatpush1.bf16.msra.mxu0 0
  %119 = vmatprep.subr.bf16.mxu0 0
  %120 = vmatpush1.bf16.msra.mxu0 0
  %121 = vmatprep.subr.bf16.mxu0 0
  %122 = vmatpush1.bf16.msra.mxu0 0
  %123 = vmatprep.subr.bf16.mxu0 0
  %124 = vmatpush1.bf16.msra.mxu0 0
  %125 = vmatprep.subr.bf16.mxu0 0
  %126 = vmatpush1.bf16.msra.mxu0 0
  %127 = vmatprep.subr.bf16.mxu0 0
  %128 = vmatpush1.bf16.msra.mxu0 0
  %129 = vmatprep.subr.bf16.mxu0 0
  %130 = vmatpush1.bf16.msra.mxu0 0
  %131 = vmatprep.subr.bf16.mxu0 0
  %132 = vmatpush1.bf16.msra.mxu0 0
  %133 = vmatprep.subr.bf16.mxu0 0
  %134 = vmatpush1.bf16.msra.mxu0 0
  %135 = vmatprep.subr.bf16.mxu0 0
  %136 = vmatpush1.bf16.msra.mxu0 0
  %137 = vmatprep.subr.bf16.mxu0 0
  %138 = vmatpush1.bf16.msra.mxu0 0
  %139 = vmatprep.mubr.bf16.mxu0 0
  %140 = vmatmul.mubr.bf16.gmra.mrb[0].mxu0 %v84
  %v141 = vpop.f32.mrb[0].mxu0
  %v142 = vadd.f32 0.0, %v141
  %v143 = vpop.f32.mrb[0].mxu0
  %v144 = vadd.f32 0.0, %v143
  %v145 = vpop.f32.mrb[0].mxu0
  %v146 = vadd.f32 0.0, %v145
  %v147 = vpop.f32.mrb[0].mxu0
  %v148 = vadd.f32 0.0, %v147
  %149 = vmatprep.mubr.bf16.mxu0 0
  %150 = vmatmul.mubr.bf16.gmra.mrb[0].mxu0 %v87
  %v151 = vpop.f32.mrb[0].mxu0
  %v152 = vadd.f32 0.0, %v151
  %v153 = vpop.f32.mrb[0].mxu0
  %v154 = vadd.f32 0.0, %v153
  %v155 = vpop.f32.mrb[0].mxu0
  %v156 = vadd.f32 0.0, %v155
  %v157 = vpop.f32.mrb[0].mxu0
  %v158 = vadd.f32 0.0, %v157
  %159 = vmatprep.mubr.bf16.mxu0 0
  %160 = vmatmul.mubr.bf16.gmra.mrb[0].mxu0 %v90
  %v161 = vpop.f32.mrb[0].mxu0
  %v162 = vadd.f32 0.0, %v161
  %v163 = vpop.f32.mrb[0].mxu0
  %v164 = vadd.f32 0.0, %v163
  %v165 = vpop.f32.mrb[0].mxu0
  %v166 = vadd.f32 0.0, %v165
  %v167 = vpop.f32.mrb[0].mxu0
  %v168 = vadd.f32 0.0, %v167
  %169 = vmatprep.mubr.bf16.mxu0 0
  %170 = vmatmul.mubr.bf16.gmra.mrb[0].mxu0 %v93
  %v171 = vpop.f32.mrb[0].mxu0
  %v172 = vadd.f32 0.0, %v171
  %v173 = vpop.f32.mrb[0].mxu0
  %v174 = vadd.f32 0.0, %v173
  %v175 = vpop.f32.mrb[0].mxu0
  %v176 = vadd.f32 0.0, %v175
  %v177 = vpop.f32.mrb[0].mxu0
  %v178 = vadd.f32 0.0, %v177
  %179 = vmatprep.mubr.bf16.mxu0 0
  %180 = vmatmul.mubr.bf16.gmra.mrb[0].mxu0 %v96
  %v181 = vpop.f32.mrb[0].mxu0
  %v182 = vadd.f32 0.0, %v181
  %v183 = vpop.f32.mrb[0].mxu0
  %v184 = vadd.f32 0.0, %v183
  %v185 = vpop.f32.mrb[0].mxu0
  %v186 = vadd.f32 0.0, %v185
  %v187 = vpop.f32.mrb[0].mxu0
  %v188 = vadd.f32 0.0, %v187
  %189 = vmatprep.mubr.bf16.mxu0 0
  %190 = vmatmul.mubr.bf16.gmra.mrb[0].mxu0 %v99
  %v191 = vpop.f32.mrb[0].mxu0
  %v192 = vadd.f32 0.0, %v191
  %v193 = vpop.f32.mrb[0].mxu0
  %v194 = vadd.f32 0.0, %v193
  %v195 = vpop.f32.mrb[0].mxu0
  %v196 = vadd.f32 0.0, %v195
  %v197 = vpop.f32.mrb[0].mxu0
  %v198 = vadd.f32 0.0, %v197
  %199 = vmatprep.mubr.bf16.mxu0 0
  %200 = vmatmul.mubr.bf16.gmra.mrb[0].mxu0 %v102
  %v201 = vpop.f32.mrb[0].mxu0
  %v202 = vadd.f32 0.0, %v201
  %v203 = vpop.f32.mrb[0].mxu0
  %v204 = vadd.f32 0.0, %v203
  %v205 = vpop.f32.mrb[0].mxu0
  %v206 = vadd.f32 0.0, %v205
  %v207 = vpop.f32.mrb[0].mxu0
  %v208 = vadd.f32 0.0, %v207
  %209 = vmatprep.mubr.bf16.mxu0 0
  %210 = vmatmul.mubr.bf16.gmra.mrb[0].mxu0 %v105
  %v211 = vpop.f32.mrb[0].mxu0
  %v212 = vadd.f32 0.0, %v211
  %v213 = vpop.f32.mrb[0].mxu0
  %v214 = vadd.f32 0.0, %v213
  %v215 = vpop.f32.mrb[0].mxu0
  %v216 = vadd.f32 0.0, %v215
  %v217 = vpop.f32.mrb[0].mxu0
  %v218 = vadd.f32 0.0, %v217
  %219 = vdwg.mxu0
  %220 = vmatprep.subr.bf16.mxu0 0
  %221 = vmatpush1.bf16.msra.mxu0 %v72
  %222 = vmatprep.subr.bf16.mxu0 0
  %223 = vmatpush1.bf16.msra.mxu0 %v75
  %224 = vmatprep.subr.bf16.mxu0 0
  %225 = vmatpush1.bf16.msra.mxu0 0
  %226 = vmatprep.subr.bf16.mxu0 0
  %227 = vmatpush1.bf16.msra.mxu0 0
  %228 = vmatprep.subr.bf16.mxu0 0
  %229 = vmatpush1.bf16.msra.mxu0 0
  %230 = vmatprep.subr.bf16.mxu0 0
  %231 = vmatpush1.bf16.msra.mxu0 0
  %232 = vmatprep.subr.bf16.mxu0 0
  %233 = vmatpush1.bf16.msra.mxu0 0
  %234 = vmatprep.subr.bf16.mxu0 0
  %235 = vmatpush1.bf16.msra.mxu0 0
  %236 = vmatprep.subr.bf16.mxu0 0
  %237 = vmatpush1.bf16.msra.mxu0 0
  %238 = vmatprep.subr.bf16.mxu0 0
  %239 = vmatpush1.bf16.msra.mxu0 0
  %240 = vmatprep.subr.bf16.mxu0 0
  %241 = vmatpush1.bf16.msra.mxu0 0
  %242 = vmatprep.subr.bf16.mxu0 0
  %243 = vmatpush1.bf16.msra.mxu0 0
  %244 = vmatprep.subr.bf16.mxu0 0
  %245 = vmatpush1.bf16.msra.mxu0 0
  %246 = vmatprep.subr.bf16.mxu0 0
  %247 = vmatpush1.bf16.msra.mxu0 0
  %248 = vmatprep.subr.bf16.mxu0 0
  %249 = vmatpush1.bf16.msra.mxu0 0
  %250 = vmatprep.subr.bf16.mxu0 0
  %251 = vmatpush1.bf16.msra.mxu0 0
  %252 = vmatprep.mubr.bf16.mxu0 0
  %253 = vmatmul.mubr.bf16.gmra.mrb[0].mxu0 %v84
  %v254 = vpop.f32.mrb[0].mxu0
  %v255 = vadd.f32 0.0, %v254
  %v256 = vpop.f32.mrb[0].mxu0
  %v257 = vpop.f32.mrb[0].mxu0
  %v258 = vadd.f32 0.0, %v257
  %v259 = vpop.f32.mrb[0].mxu0
  %260 = vmatprep.mubr.bf16.mxu0 0
  %261 = vmatmul.mubr.bf16.gmra.mrb[0].mxu0 %v87
  %v262 = vpop.f32.mrb[0].mxu0
  %v263 = vadd.f32 0.0, %v262
  %v264 = vpop.f32.mrb[0].mxu0
  %v265 = vpop.f32.mrb[0].mxu0
  %v266 = vadd.f32 0.0, %v265
  %v267 = vpop.f32.mrb[0].mxu0
  %268 = vmatprep.mubr.bf16.mxu0 0
  %269 = vmatmul.mubr.bf16.gmra.mrb[0].mxu0 %v90
  %v270 = vpop.f32.mrb[0].mxu0
  %v271 = vadd.f32 0.0, %v270
  %v272 = vpop.f32.mrb[0].mxu0
  %v273 = vpop.f32.mrb[0].mxu0
  %v274 = vadd.f32 0.0, %v273
  %v275 = vpop.f32.mrb[0].mxu0
  %276 = vmatprep.mubr.bf16.mxu0 0
  %277 = vmatmul.mubr.bf16.gmra.mrb[0].mxu0 %v93
  %v278 = vpop.f32.mrb[0].mxu0
  %v279 = vadd.f32 0.0, %v278
  %v280 = vpop.f32.mrb[0].mxu0
  %v281 = vpop.f32.mrb[0].mxu0
  %v282 = vadd.f32 0.0, %v281
  %v283 = vpop.f32.mrb[0].mxu0
  %284 = vmatprep.mubr.bf16.mxu0 0
  %285 = vmatmul.mubr.bf16.gmra.mrb[0].mxu0 %v96
  %v286 = vpop.f32.mrb[0].mxu0
  %v287 = vadd.f32 0.0, %v286
  %v288 = vpop.f32.mrb[0].mxu0
  %v289 = vpop.f32.mrb[0].mxu0
  %v290 = vadd.f32 0.0, %v289
  %v291 = vpop.f32.mrb[0].mxu0
  %292 = vmatprep.mubr.bf16.mxu0 0
  %293 = vmatmul.mubr.bf16.gmra.mrb[0].mxu0 %v99
  %v294 = vpop.f32.mrb[0].mxu0
  %v295 = vadd.f32 0.0, %v294
  %v296 = vpop.f32.mrb[0].mxu0
  %v297 = vpop.f32.mrb[0].mxu0
  %v298 = vadd.f32 0.0, %v297
  %v299 = vpop.f32.mrb[0].mxu0
  %300 = vmatprep.mubr.bf16.mxu0 0
  %301 = vmatmul.mubr.bf16.gmra.mrb[0].mxu0 %v102
  %v302 = vpop.f32.mrb[0].mxu0
  %v303 = vadd.f32 0.0, %v302
  %v304 = vpop.f32.mrb[0].mxu0
  %v305 = vpop.f32.mrb[0].mxu0
  %v306 = vadd.f32 0.0, %v305
  %v307 = vpop.f32.mrb[0].mxu0
  %308 = vmatprep.mubr.bf16.mxu0 0
  %309 = vmatmul.mubr.bf16.gmra.mrb[0].mxu0 %v105
  %v310 = vpop.f32.mrb[0].mxu0
  %v311 = vadd.f32 0.0, %v310
  %v312 = vpop.f32.mrb[0].mxu0
  %v313 = vpop.f32.mrb[0].mxu0
  %v314 = vadd.f32 0.0, %v313
  %v315 = vpop.f32.mrb[0].mxu0
  %316 = vdwg.mxu0
  %v317 = vld [vmem:[%s2] sm:$0x7]
  %v319 = vlaneseq
  %v320 = vshrl.u32 %v319, 7
  %v321 = vsub.s32 0, %v320
  %v322 = vrot.slane %v317, %v321
  %v323 = vlaneseq
  %v324 = vshrl.u32 %v323, 7
  %v325 = vsub.s32 1, %v324
  %v326 = vrot.slane %v317, %v325
  %v327 = vlaneseq
  %v328 = vshrl.u32 %v327, 7
  %v329 = vsub.s32 2, %v328
  %v330 = vrot.slane %v317, %v329
  %v334 = vmul.f32 %v142, %v322
  %v335 = vmul.f32 %v144, %v326
  %v336 = vmul.f32 %v255, %v330
  %v337 = vmul.f32 %v146, %v322
  %v338 = vmul.f32 %v148, %v326
  %v339 = vmul.f32 %v258, %v330
  %v340 = vmul.f32 %v152, %v322
  %v341 = vmul.f32 %v154, %v326
  %v342 = vmul.f32 %v263, %v330
  %v343 = vmul.f32 %v156, %v322
  %v344 = vmul.f32 %v158, %v326
  %v345 = vmul.f32 %v266, %v330
  %v346 = vmul.f32 %v162, %v322
  %v347 = vmul.f32 %v164, %v326
  %v348 = vmul.f32 %v271, %v330
  %v349 = vmul.f32 %v166, %v322
  %v350 = vmul.f32 %v168, %v326
  %v351 = vmul.f32 %v274, %v330
  %v352 = vmul.f32 %v172, %v322
  %v353 = vmul.f32 %v174, %v326
  %v354 = vmul.f32 %v279, %v330
  %v355 = vmul.f32 %v176, %v322
  %v356 = vmul.f32 %v178, %v326
  %v357 = vmul.f32 %v282, %v330
  %v358 = vmul.f32 %v182, %v322
  %v359 = vmul.f32 %v184, %v326
  %v360 = vmul.f32 %v287, %v330
  %v361 = vmul.f32 %v186, %v322
  %v362 = vmul.f32 %v188, %v326
  %v363 = vmul.f32 %v290, %v330
  %v364 = vmul.f32 %v192, %v322
  %v365 = vmul.f32 %v194, %v326
  %v366 = vmul.f32 %v295, %v330
  %v367 = vmul.f32 %v196, %v322
  %v368 = vmul.f32 %v198, %v326
  %v369 = vmul.f32 %v298, %v330
  %v370 = vmul.f32 %v202, %v322
  %v371 = vmul.f32 %v204, %v326
  %v372 = vmul.f32 %v303, %v330
  %v373 = vmul.f32 %v206, %v322
  %v374 = vmul.f32 %v208, %v326
  %v375 = vmul.f32 %v306, %v330
  %v376 = vmul.f32 %v212, %v322
  %v377 = vmul.f32 %v214, %v326
  %v378 = vmul.f32 %v311, %v330
  %v379 = vmul.f32 %v216, %v322
  %v380 = vmul.f32 %v218, %v326
  %v381 = vmul.f32 %v314, %v330
  %v382 = vld [vmem:[%s3] sm:$0x7]
  %v384 = vlaneseq
  %v385 = vshrl.u32 %v384, 7
  %v386 = vsub.s32 0, %v385
  %v387 = vrot.slane %v382, %v386
  %v388 = vlaneseq
  %v389 = vshrl.u32 %v388, 7
  %v390 = vsub.s32 1, %v389
  %v391 = vrot.slane %v382, %v390
  %v392 = vlaneseq
  %v393 = vshrl.u32 %v392, 7
  %v394 = vsub.s32 2, %v393
  %v395 = vrot.slane %v382, %v394
  %v399 = vadd.f32 %v334, %v387
  %v400 = vadd.f32 %v335, %v391
  %v401 = vadd.f32 %v336, %v395
  %v402 = vadd.f32 %v337, %v387
  %v403 = vadd.f32 %v338, %v391
  %v404 = vadd.f32 %v339, %v395
  %v405 = vadd.f32 %v340, %v387
  %v406 = vadd.f32 %v341, %v391
  %v407 = vadd.f32 %v342, %v395
  %v408 = vadd.f32 %v343, %v387
  %v409 = vadd.f32 %v344, %v391
  %v410 = vadd.f32 %v345, %v395
  %v411 = vadd.f32 %v346, %v387
  %v412 = vadd.f32 %v347, %v391
  %v413 = vadd.f32 %v348, %v395
  %v414 = vadd.f32 %v349, %v387
  %v415 = vadd.f32 %v350, %v391
  %v416 = vadd.f32 %v351, %v395
  %v417 = vadd.f32 %v352, %v387
  %v418 = vadd.f32 %v353, %v391
  %v419 = vadd.f32 %v354, %v395
  %v420 = vadd.f32 %v355, %v387
  %v421 = vadd.f32 %v356, %v391
  %v422 = vadd.f32 %v357, %v395
  %v423 = vadd.f32 %v358, %v387
  %v424 = vadd.f32 %v359, %v391
  %v425 = vadd.f32 %v360, %v395
  %v426 = vadd.f32 %v361, %v387
  %v427 = vadd.f32 %v362, %v391
  %v428 = vadd.f32 %v363, %v395
  %v429 = vadd.f32 %v364, %v387
  %v430 = vadd.f32 %v365, %v391
  %v431 = vadd.f32 %v366, %v395
  %v432 = vadd.f32 %v367, %v387
  %v433 = vadd.f32 %v368, %v391
  %v434 = vadd.f32 %v369, %v395
  %v435 = vadd.f32 %v370, %v387
  %v436 = vadd.f32 %v371, %v391
  %v437 = vadd.f32 %v372, %v395
  %v438 = vadd.f32 %v373, %v387
  %v439 = vadd.f32 %v374, %v391
  %v440 = vadd.f32 %v375, %v395
  %v441 = vadd.f32 %v376, %v387
  %v442 = vadd.f32 %v377, %v391
  %v443 = vadd.f32 %v378, %v395
  %v444 = vadd.f32 %v379, %v387
  %v445 = vadd.f32 %v380, %v391
  %v446 = vadd.f32 %v381, %v395
  %v447 = vmax.f32 %v399, 0.0
  %v448 = vmax.f32 %v400, 0.0
  %v449 = vmax.f32 %v401, 0.0
  %v450 = vmax.f32 %v402, 0.0
  %v451 = vmax.f32 %v403, 0.0
  %v452 = vmax.f32 %v404, 0.0
  %v453 = vmax.f32 %v405, 0.0
  %v454 = vmax.f32 %v406, 0.0
  %v455 = vmax.f32 %v407, 0.0
  %v456 = vmax.f32 %v408, 0.0
  %v457 = vmax.f32 %v409, 0.0
  %v458 = vmax.f32 %v410, 0.0
  %v459 = vmax.f32 %v411, 0.0
  %v460 = vmax.f32 %v412, 0.0
  %v461 = vmax.f32 %v413, 0.0
  %v462 = vmax.f32 %v414, 0.0
  %v463 = vmax.f32 %v415, 0.0
  %v464 = vmax.f32 %v416, 0.0
  %v465 = vmax.f32 %v417, 0.0
  %v466 = vmax.f32 %v418, 0.0
  %v467 = vmax.f32 %v419, 0.0
  %v468 = vmax.f32 %v420, 0.0
  %v469 = vmax.f32 %v421, 0.0
  %v470 = vmax.f32 %v422, 0.0
  %v471 = vmax.f32 %v423, 0.0
  %v472 = vmax.f32 %v424, 0.0
  %v473 = vmax.f32 %v425, 0.0
  %v474 = vmax.f32 %v426, 0.0
  %v475 = vmax.f32 %v427, 0.0
  %v476 = vmax.f32 %v428, 0.0
  %v477 = vmax.f32 %v429, 0.0
  %v478 = vmax.f32 %v430, 0.0
  %v479 = vmax.f32 %v431, 0.0
  %v480 = vmax.f32 %v432, 0.0
  %v481 = vmax.f32 %v433, 0.0
  %v482 = vmax.f32 %v434, 0.0
  %v483 = vmax.f32 %v435, 0.0
  %v484 = vmax.f32 %v436, 0.0
  %v485 = vmax.f32 %v437, 0.0
  %v486 = vmax.f32 %v438, 0.0
  %v487 = vmax.f32 %v439, 0.0
  %v488 = vmax.f32 %v440, 0.0
  %v489 = vmax.f32 %v441, 0.0
  %v490 = vmax.f32 %v442, 0.0
  %v491 = vmax.f32 %v443, 0.0
  %v492 = vmax.f32 %v444, 0.0
  %v493 = vmax.f32 %v445, 0.0
  %v494 = vmax.f32 %v446, 0.0
  %495 = vst [vmem:[%s4] sm:$0xff] %v447
  %496 = vst [vmem:[%s4 + $0x8] sm:$0xff] %v448
  %497 = vst [vmem:[%s4 + $0x10] sm:$0xff] %v449
  %498 = vst [vmem:[%s4 + $0x18] sm:$0xff] %v450
  %499 = vst [vmem:[%s4 + $0x20] sm:$0xff] %v451
  %500 = vst [vmem:[%s4 + $0x28] sm:$0xff] %v452
  %501 = vst [vmem:[%s4 + $0x30] sm:$0xff] %v453
  %502 = vst [vmem:[%s4 + $0x38] sm:$0xff] %v454
  %503 = vst [vmem:[%s4 + $0x40] sm:$0xff] %v455
  %504 = vst [vmem:[%s4 + $0x48] sm:$0xff] %v456
  %505 = vst [vmem:[%s4 + $0x50] sm:$0xff] %v457
  %506 = vst [vmem:[%s4 + $0x58] sm:$0xff] %v458
  %507 = vst [vmem:[%s4 + $0x60] sm:$0xff] %v459
  %508 = vst [vmem:[%s4 + $0x68] sm:$0xff] %v460
  %509 = vst [vmem:[%s4 + $0x70] sm:$0xff] %v461
  %510 = vst [vmem:[%s4 + $0x78] sm:$0xff] %v462
  %511 = vst [vmem:[%s4 + $0x80] sm:$0xff] %v463
  %512 = vst [vmem:[%s4 + $0x88] sm:$0xff] %v464
  %513 = vst [vmem:[%s4 + $0x90] sm:$0xff] %v465
  %514 = vst [vmem:[%s4 + $0x98] sm:$0xff] %v466
  %515 = vst [vmem:[%s4 + $0xa0] sm:$0xff] %v467
  %516 = vst [vmem:[%s4 + $0xa8] sm:$0xff] %v468
  %517 = vst [vmem:[%s4 + $0xb0] sm:$0xff] %v469
  %518 = vst [vmem:[%s4 + $0xb8] sm:$0xff] %v470
  %519 = vst [vmem:[%s4 + $0xc0] sm:$0xff] %v471
  %520 = vst [vmem:[%s4 + $0xc8] sm:$0xff] %v472
  %521 = vst [vmem:[%s4 + $0xd0] sm:$0xff] %v473
  %522 = vst [vmem:[%s4 + $0xd8] sm:$0xff] %v474
  %523 = vst [vmem:[%s4 + $0xe0] sm:$0xff] %v475
  %524 = vst [vmem:[%s4 + $0xe8] sm:$0xff] %v476
  %525 = vst [vmem:[%s4 + $0xf0] sm:$0xff] %v477
  %526 = vst [vmem:[%s4 + $0xf8] sm:$0xff] %v478
  %527 = vst [vmem:[%s4 + $0x100] sm:$0xff] %v479
  %528 = vst [vmem:[%s4 + $0x108] sm:$0xff] %v480
  %529 = vst [vmem:[%s4 + $0x110] sm:$0xff] %v481
  %530 = vst [vmem:[%s4 + $0x118] sm:$0xff] %v482
  %531 = vst [vmem:[%s4 + $0x120] sm:$0xff] %v483
  %532 = vst [vmem:[%s4 + $0x128] sm:$0xff] %v484
  %533 = vst [vmem:[%s4 + $0x130] sm:$0xff] %v485
  %534 = vst [vmem:[%s4 + $0x138] sm:$0xff] %v486
  %535 = vst [vmem:[%s4 + $0x140] sm:$0xff] %v487
  %536 = vst [vmem:[%s4 + $0x148] sm:$0xff] %v488
  %537 = vst [vmem:[%s4 + $0x150] sm:$0xff] %v489
  %538 = vst [vmem:[%s4 + $0x158] sm:$0xff] %v490
  %539 = vst [vmem:[%s4 + $0x160] sm:$0xff] %v491
  %540 = vst [vmem:[%s4 + $0x168] sm:$0xff] %v492
  %541 = vst [vmem:[%s4 + $0x170] sm:$0xff] %v493
  %542 = vst [vmem:[%s4 + $0x178] sm:$0xff] %v494
  // Predicated region
  $region18: #{_lambda_.10} parent=0 // pred_check
    _
  $region19: #{_lambda_.10} parent=0 // pred_check_branch
    %544 = sbr.rel (0) target = $region21
  $region20: #{_lambda_.10} parent=0 // pred_region
    _
  $region21: #{_lambda_.10} parent=0 // pred_fallthru
    _
  // Predicated region
  $region22: #{_lambda_.10} parent=0 // pred_check
    _
  $region23: #{_lambda_.10} parent=0 // pred_check_branch
    %546 = sbr.rel (0) target = $region25
  $region24: #{_lambda_.10} parent=0 // pred_region
    _
  $region25: #{_lambda_.10} parent=0 // pred_fallthru
    _

// kernel: _lambda_.16
$region0: #{_lambda_.16}
  #allocation0 [shape = 'u32[]', space=smem, size = 0x4, offset = 0x4, fixed_abs, tag = 'smem constant byte address 0x4 - core index']
  #allocation1 [shape = 'u32[144,128]{1,0:T(1,128)}', space=vmem, size = 0x12000, scoped, tag = 'internal scratch']
  #allocation2 [shape = 'f32[2,14,8,256]{3,2,1,0:T(8,128)}', space=vmem, size = 0x38000, scoped, tag = 'scratch operand']
  %s0 = inlined_call_operand.vmem [shape: f32[2,8,8,256], index: 0, kind: input, shape index: {}]
  %s1 = inlined_call_operand.vmem [shape: bf16[7,256,256], index: 1, kind: input, shape index: {}]
  %s2 = inlined_call_operand.vmem [shape: f32[1,256], index: 2, kind: input, shape index: {}]
  %s3 = inlined_call_operand.vmem [shape: f32[1,256], index: 3, kind: input, shape index: {}]
  %s4 = inlined_call_operand.vmem [shape: f32[2,8,8,256], index: 4, kind: output, shape index: {}]
  %s5 = sld [smem:[#allocation0]]
  $region26: #{_lambda_.16} parent=0
    _
  %s7 = ssub.s32 1, %s5
  %s8 = scalar_select 0, %s7, %s5
  // Predicated region
  $region2: #{_lambda_.16} parent=0 // pred_check
    _
  $region3: #{_lambda_.16} parent=0 // pred_check_branch
    %10 = sbr.rel (0) target = $region5
  $region4: #{_lambda_.16} parent=0 // pred_region
    _
  $region5: #{_lambda_.16} parent=0 // pred_fallthru
    _
  // Predicated region
  $region6: #{_lambda_.16} parent=0 // pred_check
    _
  $region7: #{_lambda_.16} parent=0 // pred_check_branch
    %12 = sbr.rel (0) target = $region9
  $region8: #{_lambda_.16} parent=0 // pred_region
    _
  $region9: #{_lambda_.16} parent=0 // pred_fallthru
    _
  // Predicated region
  $region10: #{_lambda_.16} parent=0 // pred_check
    _
  $region11: #{_lambda_.16} parent=0 // pred_check_branch
    %14 = sbr.rel (0) target = $region13
  $region12: #{_lambda_.16} parent=0 // pred_region
    _
  $region13: #{_lambda_.16} parent=0 // pred_fallthru
    _
  // Predicated region
  $region14: #{_lambda_.16} parent=0 // pred_check
    _
  $region15: #{_lambda_.16} parent=0 // pred_check_branch
    %16 = sbr.rel (0) target = $region17
  $region16: #{_lambda_.16} parent=0 // pred_region
    _
  $region17: #{_lambda_.16} parent=0 // pred_fallthru
    _
  %17 = vst [vmem:[#allocation2] sm:$0xff] 0.0
  %18 = vst [vmem:[#allocation2 + $0x8] sm:$0xff] 0.0
  %19 = vst [vmem:[#allocation2 + $0x10] sm:$0xff] 0.0
  %20 = vst [vmem:[#allocation2 + $0x18] sm:$0xff] 0.0
  %21 = vst [vmem:[#allocation2 + $0x20] sm:$0xff] 0.0
  %22 = vst [vmem:[#allocation2 + $0x28] sm:$0xff] 0.0
  %23 = vst [vmem:[#allocation2 + $0x30] sm:$0xff] 0.0
  %24 = vst [vmem:[#allocation2 + $0x38] sm:$0xff] 0.0
  %25 = vst [vmem:[#allocation2 + $0x40] sm:$0xff] 0.0
  %26 = vst [vmem:[#allocation2 + $0x48] sm:$0xff] 0.0
  %27 = vst [vmem:[#allocation2 + $0x50] sm:$0xff] 0.0
  %28 = vst [vmem:[#allocation2 + $0x58] sm:$0xff] 0.0
  %29 = vst [vmem:[#allocation2 + $0x60] sm:$0xff] 0.0
  %30 = vst [vmem:[#allocation2 + $0x68] sm:$0xff] 0.0
  %31 = vst [vmem:[#allocation2 + $0x70] sm:$0xff] 0.0
  %32 = vst [vmem:[#allocation2 + $0x78] sm:$0xff] 0.0
  %33 = vst [vmem:[#allocation2 + $0x80] sm:$0xff] 0.0
  %34 = vst [vmem:[#allocation2 + $0x88] sm:$0xff] 0.0
  %35 = vst [vmem:[#allocation2 + $0x90] sm:$0xff] 0.0
  %36 = vst [vmem:[#allocation2 + $0x98] sm:$0xff] 0.0
  %37 = vst [vmem:[#allocation2 + $0xa0] sm:$0xff] 0.0
  %38 = vst [vmem:[#allocation2 + $0xa8] sm:$0xff] 0.0
  %39 = vst [vmem:[#allocation2 + $0xb0] sm:$0xff] 0.0
  %40 = vst [vmem:[#allocation2 + $0xb8] sm:$0xff] 0.0
  %41 = vst [vmem:[#allocation2 + $0xc0] sm:$0xff] 0.0
  %42 = vst [vmem:[#allocation2 + $0xc8] sm:$0xff] 0.0
  %43 = vst [vmem:[#allocation2 + $0xd0] sm:$0xff] 0.0
  %44 = vst [vmem:[#allocation2 + $0xd8] sm:$0xff] 0.0
  %45 = vst [vmem:[#allocation2 + $0xe0] sm:$0xff] 0.0
  %46 = vst [vmem:[#allocation2 + $0xe8] sm:$0xff] 0.0
  %47 = vst [vmem:[#allocation2 + $0xf0] sm:$0xff] 0.0
  %48 = vst [vmem:[#allocation2 + $0xf8] sm:$0xff] 0.0
  %49 = vst [vmem:[#allocation2 + $0x100] sm:$0xff] 0.0
  %50 = vst [vmem:[#allocation2 + $0x108] sm:$0xff] 0.0
  %51 = vst [vmem:[#allocation2 + $0x110] sm:$0xff] 0.0
  %52 = vst [vmem:[#allocation2 + $0x118] sm:$0xff] 0.0
  %53 = vst [vmem:[#allocation2 + $0x120] sm:$0xff] 0.0
  %54 = vst [vmem:[#allocation2 + $0x128] sm:$0xff] 0.0
  %55 = vst [vmem:[#allocation2 + $0x130] sm:$0xff] 0.0
  %56 = vst [vmem:[#allocation2 + $0x138] sm:$0xff] 0.0
  %57 = vst [vmem:[#allocation2 + $0x140] sm:$0xff] 0.0
  %58 = vst [vmem:[#allocation2 + $0x148] sm:$0xff] 0.0
  %59 = vst [vmem:[#allocation2 + $0x150] sm:$0xff] 0.0
  %60 = vst [vmem:[#allocation2 + $0x158] sm:$0xff] 0.0
  %61 = vst [vmem:[#allocation2 + $0x160] sm:$0xff] 0.0
  %62 = vst [vmem:[#allocation2 + $0x168] sm:$0xff] 0.0
  %63 = vst [vmem:[#allocation2 + $0x170] sm:$0xff] 0.0
  %64 = vst [vmem:[#allocation2 + $0x178] sm:$0xff] 0.0
  %65 = vst [vmem:[#allocation2 + $0x180] sm:$0xff] 0.0
  %66 = vst [vmem:[#allocation2 + $0x188] sm:$0xff] 0.0
  %67 = vst [vmem:[#allocation2 + $0x190] sm:$0xff] 0.0
  %68 = vst [vmem:[#allocation2 + $0x198] sm:$0xff] 0.0
  %69 = vst [vmem:[#allocation2 + $0x1a0] sm:$0xff] 0.0
  %70 = vst [vmem:[#allocation2 + $0x1a8] sm:$0xff] 0.0
  %71 = vst [vmem:[#allocation2 + $0x1b0] sm:$0xff] 0.0
  %72 = vst [vmem:[#allocation2 + $0x1b8] sm:$0xff] 0.0
  %v73 = vld [vmem:[%s0] sm:$0xff]
  %v74 = vld [vmem:[%s0 + $0x8] sm:$0xff]
  %v75 = vld [vmem:[%s0 + $0x10] sm:$0xff]
  %v76 = vld [vmem:[%s0 + $0x18] sm:$0xff]
  %v77 = vld [vmem:[%s0 + $0x20] sm:$0xff]
  %v78 = vld [vmem:[%s0 + $0x28] sm:$0xff]
  %v79 = vld [vmem:[%s0 + $0x30] sm:$0xff]
  %v80 = vld [vmem:[%s0 + $0x38] sm:$0xff]
  %v81 = vld [vmem:[%s0 + $0x40] sm:$0xff]
  %v82 = vld [vmem:[%s0 + $0x48] sm:$0xff]
  %v83 = vld [vmem:[%s0 + $0x50] sm:$0xff]
  %v84 = vld [vmem:[%s0 + $0x58] sm:$0xff]
  %v85 = vld [vmem:[%s0 + $0x60] sm:$0xff]
  %v86 = vld [vmem:[%s0 + $0x68] sm:$0xff]
  %v87 = vld [vmem:[%s0 + $0x70] sm:$0xff]
  %v88 = vld [vmem:[%s0 + $0x78] sm:$0xff]
  %v89 = vld [vmem:[%s0 + $0x80] sm:$0xff]
  %v90 = vld [vmem:[%s0 + $0x88] sm:$0xff]
  %v91 = vld [vmem:[%s0 + $0x90] sm:$0xff]
  %v92 = vld [vmem:[%s0 + $0x98] sm:$0xff]
  %v93 = vld [vmem:[%s0 + $0xa0] sm:$0xff]
  %v94 = vld [vmem:[%s0 + $0xa8] sm:$0xff]
  %v95 = vld [vmem:[%s0 + $0xb0] sm:$0xff]
  %v96 = vld [vmem:[%s0 + $0xb8] sm:$0xff]
  %v97 = vld [vmem:[%s0 + $0xc0] sm:$0xff]
  %v98 = vld [vmem:[%s0 + $0xc8] sm:$0xff]
  %v99 = vld [vmem:[%s0 + $0xd0] sm:$0xff]
  %v100 = vld [vmem:[%s0 + $0xd8] sm:$0xff]
  %v101 = vld [vmem:[%s0 + $0xe0] sm:$0xff]
  %v102 = vld [vmem:[%s0 + $0xe8] sm:$0xff]
  %v103 = vld [vmem:[%s0 + $0xf0] sm:$0xff]
  %v104 = vld [vmem:[%s0 + $0xf8] sm:$0xff]
  %s105 = scalar_lea.vmem [#allocation2], 48
  %106 = vst [vmem:[%s105] sm:$0xff] %v73
  %107 = vst [vmem:[%s105 + $0x8] sm:$0xff] %v74
  %108 = vst [vmem:[%s105 + $0x10] sm:$0xff] %v75
  %109 = vst [vmem:[%s105 + $0x18] sm:$0xff] %v76
  %110 = vst [vmem:[%s105 + $0x20] sm:$0xff] %v77
  %111 = vst [vmem:[%s105 + $0x28] sm:$0xff] %v78
  %112 = vst [vmem:[%s105 + $0x30] sm:$0xff] %v79
  %113 = vst [vmem:[%s105 + $0x38] sm:$0xff] %v80
  %114 = vst [vmem:[%s105 + $0x40] sm:$0xff] %v81
  %115 = vst [vmem:[%s105 + $0x48] sm:$0xff] %v82
  %116 = vst [vmem:[%s105 + $0x50] sm:$0xff] %v83
  %117 = vst [vmem:[%s105 + $0x58] sm:$0xff] %v84
  %118 = vst [vmem:[%s105 + $0x60] sm:$0xff] %v85
  %119 = vst [vmem:[%s105 + $0x68] sm:$0xff] %v86
  %120 = vst [vmem:[%s105 + $0x70] sm:$0xff] %v87
  %121 = vst [vmem:[%s105 + $0x78] sm:$0xff] %v88
  %122 = vst [vmem:[%s105 + $0xe0] sm:$0xff] %v89
  %123 = vst [vmem:[%s105 + $0xe8] sm:$0xff] %v90
  %124 = vst [vmem:[%s105 + $0xf0] sm:$0xff] %v91
  %125 = vst [vmem:[%s105 + $0xf8] sm:$0xff] %v92
  %126 = vst [vmem:[%s105 + $0x100] sm:$0xff] %v93
  %127 = vst [vmem:[%s105 + $0x108] sm:$0xff] %v94
  %128 = vst [vmem:[%s105 + $0x110] sm:$0xff] %v95
  %129 = vst [vmem:[%s105 + $0x118] sm:$0xff] %v96
  %130 = vst [vmem:[%s105 + $0x120] sm:$0xff] %v97
  %131 = vst [vmem:[%s105 + $0x128] sm:$0xff] %v98
  %132 = vst [vmem:[%s105 + $0x130] sm:$0xff] %v99
  %133 = vst [vmem:[%s105 + $0x138] sm:$0xff] %v100
  %134 = vst [vmem:[%s105 + $0x140] sm:$0xff] %v101
  %135 = vst [vmem:[%s105 + $0x148] sm:$0xff] %v102
  %136 = vst [vmem:[%s105 + $0x150] sm:$0xff] %v103
  %137 = vst [vmem:[%s105 + $0x158] sm:$0xff] %v104
  %v138 = vld [vmem:[#allocation2] sm:$0xff]
  %v139 = vld [vmem:[#allocation2 + $0x8] sm:$0xff]
  %v140 = vld [vmem:[#allocation2 + $0x10] sm:$0xff]
  %v141 = vld [vmem:[#allocation2 + $0x18] sm:$0xff]
  %v142 = vld [vmem:[#allocation2 + $0x20] sm:$0xff]
  %v143 = vld [vmem:[#allocation2 + $0x28] sm:$0xff]
  %v144 = vld [vmem:[#allocation2 + $0x30] sm:$0xff]
  %v145 = vld [vmem:[#allocation2 + $0x38] sm:$0xff]
  %v146 = vld [vmem:[#allocation2 + $0x40] sm:$0xff]
  %v147 = vld [vmem:[#allocation2 + $0x48] sm:$0xff]
  %v148 = vld [vmem:[#allocation2 + $0x50] sm:$0xff]
  %v149 = vld [vmem:[#allocation2 + $0x58] sm:$0xff]
  %v150 = vld [vmem:[#allocation2 + $0x60] sm:$0xff]
  %v151 = vld [vmem:[#allocation2 + $0x68] sm:$0xff]
  %v152 = vld [vmem:[#allocation2 + $0x70] sm:$0xff]
  %v153 = vld [vmem:[#allocation2 + $0x78] sm:$0xff]
  %v154 = vld [vmem:[#allocation2 + $0xe0] sm:$0xff]
  %v155 = vld [vmem:[#allocation2 + $0xe8] sm:$0xff]
  %v156 = vld [vmem:[#allocation2 + $0xf0] sm:$0xff]
  %v157 = vld [vmem:[#allocation2 + $0xf8] sm:$0xff]
  %v158 = vld [vmem:[#allocation2 + $0x100] sm:$0xff]
  %v159 = vld [vmem:[#allocation2 + $0x108] sm:$0xff]
  %v160 = vld [vmem:[#allocation2 + $0x110] sm:$0xff]
  %v161 = vld [vmem:[#allocation2 + $0x118] sm:$0xff]
  %v162 = vld [vmem:[#allocation2 + $0x120] sm:$0xff]
  %v163 = vld [vmem:[#allocation2 + $0x128] sm:$0xff]
  %v164 = vld [vmem:[#allocation2 + $0x130] sm:$0xff]
  %v165 = vld [vmem:[#allocation2 + $0x138] sm:$0xff]
  %v166 = vld [vmem:[#allocation2 + $0x140] sm:$0xff]
  %v167 = vld [vmem:[#allocation2 + $0x148] sm:$0xff]
  %v168 = vld [vmem:[#allocation2 + $0x150] sm:$0xff]
  %v169 = vld [vmem:[#allocation2 + $0x158] sm:$0xff]
  %v170 = vpack.c.bf16 %v140, %v138
  %v171 = vpack.c.bf16 %v141, %v139
  %v172 = vpack.c.bf16 %v144, %v142
  %v173 = vpack.c.bf16 %v145, %v143
  %v174 = vpack.c.bf16 %v148, %v146
  %v175 = vpack.c.bf16 %v149, %v147
  %v176 = vpack.c.bf16 %v152, %v150
  %v177 = vpack.c.bf16 %v153, %v151
  %v178 = vpack.c.bf16 %v156, %v154
  %v179 = vpack.c.bf16 %v157, %v155
  %v180 = vpack.c.bf16 %v160, %v158
  %v181 = vpack.c.bf16 %v161, %v159
  %v182 = vpack.c.bf16 %v164, %v162
  %v183 = vpack.c.bf16 %v165, %v163
  %v184 = vpack.c.bf16 %v168, %v166
  %v185 = vpack.c.bf16 %v169, %v167
  %v186 = vld [vmem:[%s1] sm:$0xff]
  %v187 = vld [vmem:[%s1 + $0x8] sm:$0xff]
  %v188 = vld [vmem:[%s1 + $0x10] sm:$0xff]
  %v189 = vld [vmem:[%s1 + $0x18] sm:$0xff]
  %v190 = vld [vmem:[%s1 + $0x20] sm:$0xff]
  %v191 = vld [vmem:[%s1 + $0x28] sm:$0xff]
  %v192 = vld [vmem:[%s1 + $0x30] sm:$0xff]
  %v193 = vld [vmem:[%s1 + $0x38] sm:$0xff]
  %v194 = vld [vmem:[%s1 + $0x40] sm:$0xff]
  %v195 = vld [vmem:[%s1 + $0x48] sm:$0xff]
  %v196 = vld [vmem:[%s1 + $0x50] sm:$0xff]
  %v197 = vld [vmem:[%s1 + $0x58] sm:$0xff]
  %v198 = vld [vmem:[%s1 + $0x60] sm:$0xff]
  %v199 = vld [vmem:[%s1 + $0x68] sm:$0xff]
  %v200 = vld [vmem:[%s1 + $0x70] sm:$0xff]
  %v201 = vld [vmem:[%s1 + $0x78] sm:$0xff]
  %v202 = vld [vmem:[%s1 + $0x80] sm:$0xff]
  %v203 = vld [vmem:[%s1 + $0x88] sm:$0xff]
  %v204 = vld [vmem:[%s1 + $0x90] sm:$0xff]
  %v205 = vld [vmem:[%s1 + $0x98] sm:$0xff]
  %v206 = vld [vmem:[%s1 + $0xa0] sm:$0xff]
  %v207 = vld [vmem:[%s1 + $0xa8] sm:$0xff]
  %v208 = vld [vmem:[%s1 + $0xb0] sm:$0xff]
  %v209 = vld [vmem:[%s1 + $0xb8] sm:$0xff]
  %v210 = vld [vmem:[%s1 + $0xc0] sm:$0xff]
  %v211 = vld [vmem:[%s1 + $0xc8] sm:$0xff]
  %v212 = vld [vmem:[%s1 + $0xd0] sm:$0xff]
  %v213 = vld [vmem:[%s1 + $0xd8] sm:$0xff]
  %v214 = vld [vmem:[%s1 + $0xe0] sm:$0xff]
  %v215 = vld [vmem:[%s1 + $0xe8] sm:$0xff]
  %v216 = vld [vmem:[%s1 + $0xf0] sm:$0xff]
  %v217 = vld [vmem:[%s1 + $0xf8] sm:$0xff]
  %s218 = scalar_lea.vmem [#allocation2], 16
  %v219 = vld [vmem:[%s218] sm:$0xff]
  %v220 = vld [vmem:[%s218 + $0x8] sm:$0xff]
  %v221 = vld [vmem:[%s218 + $0x10] sm:$0xff]
  %v222 = vld [vmem:[%s218 + $0x18] sm:$0xff]
  %v223 = vld [vmem:[%s218 + $0x20] sm:$0xff]
  %v224 = vld [vmem:[%s218 + $0x28] sm:$0xff]
  %v225 = vld [vmem:[%s218 + $0x30] sm:$0xff]
  %v226 = vld [vmem:[%s218 + $0x38] sm:$0xff]
  %v227 = vld [vmem:[%s218 + $0x40] sm:$0xff]
  %v228 = vld [vmem:[%s218 + $0x48] sm:$0xff]
  %v229 = vld [vmem:[%s218 + $0x50] sm:$0xff]
  %v230 = vld [vmem:[%s218 + $0x58] sm:$0xff]
  %v231 = vld [vmem:[%s218 + $0x60] sm:$0xff]
  %v232 = vld [vmem:[%s218 + $0x68] sm:$0xff]
  %v233 = vld [vmem:[%s218 + $0x70] sm:$0xff]
  %v234 = vld [vmem:[%s218 + $0x78] sm:$0xff]
  %v235 = vld [vmem:[%s218 + $0xe0] sm:$0xff]
  %v236 = vld [vmem:[%s218 + $0xe8] sm:$0xff]
  %v237 = vld [vmem:[%s218 + $0xf0] sm:$0xff]
  %v238 = vld [vmem:[%s218 + $0xf8] sm:$0xff]
  %v239 = vld [vmem:[%s218 + $0x100] sm:$0xff]
  %v240 = vld [vmem:[%s218 + $0x108] sm:$0xff]
  %v241 = vld [vmem:[%s218 + $0x110] sm:$0xff]
  %v242 = vld [vmem:[%s218 + $0x118] sm:$0xff]
  %v243 = vld [vmem:[%s218 + $0x120] sm:$0xff]
  %v244 = vld [vmem:[%s218 + $0x128] sm:$0xff]
  %v245 = vld [vmem:[%s218 + $0x130] sm:$0xff]
  %v246 = vld [vmem:[%s218 + $0x138] sm:$0xff]
  %v247 = vld [vmem:[%s218 + $0x140] sm:$0xff]
  %v248 = vld [vmem:[%s218 + $0x148] sm:$0xff]
  %v249 = vld [vmem:[%s218 + $0x150] sm:$0xff]
  %v250 = vld [vmem:[%s218 + $0x158] sm:$0xff]
  %v251 = vpack.c.bf16 %v221, %v219
  %v252 = vpack.c.bf16 %v222, %v220
  %v253 = vpack.c.bf16 %v225, %v223
  %v254 = vpack.c.bf16 %v226, %v224
  %v255 = vpack.c.bf16 %v229, %v227
  %v256 = vpack.c.bf16 %v230, %v228
  %v257 = vpack.c.bf16 %v233, %v231
  %v258 = vpack.c.bf16 %v234, %v232
  %v259 = vpack.c.bf16 %v237, %v235
  %v260 = vpack.c.bf16 %v238, %v236
  %v261 = vpack.c.bf16 %v241, %v239
  %v262 = vpack.c.bf16 %v242, %v240
  %v263 = vpack.c.bf16 %v245, %v243
  %v264 = vpack.c.bf16 %v246, %v244
  %v265 = vpack.c.bf16 %v249, %v247
  %v266 = vpack.c.bf16 %v250, %v248
  %s267 = scalar_lea.vmem %s1, 256
  %v268 = vld [vmem:[%s267] sm:$0xff]
  %v269 = vld [vmem:[%s267 + $0x8] sm:$0xff]
  %v270 = vld [vmem:[%s267 + $0x10] sm:$0xff]
  %v271 = vld [vmem:[%s267 + $0x18] sm:$0xff]
  %v272 = vld [vmem:[%s267 + $0x20] sm:$0xff]
  %v273 = vld [vmem:[%s267 + $0x28] sm:$0xff]
  %v274 = vld [vmem:[%s267 + $0x30] sm:$0xff]
  %v275 = vld [vmem:[%s267 + $0x38] sm:$0xff]
  %v276 = vld [vmem:[%s267 + $0x40] sm:$0xff]
  %v277 = vld [vmem:[%s267 + $0x48] sm:$0xff]
  %v278 = vld [vmem:[%s267 + $0x50] sm:$0xff]
  %v279 = vld [vmem:[%s267 + $0x58] sm:$0xff]
  %v280 = vld [vmem:[%s267 + $0x60] sm:$0xff]
  %v281 = vld [vmem:[%s267 + $0x68] sm:$0xff]
  %v282 = vld [vmem:[%s267 + $0x70] sm:$0xff]
  %v283 = vld [vmem:[%s267 + $0x78] sm:$0xff]
  %v284 = vld [vmem:[%s267 + $0x80] sm:$0xff]
  %v285 = vld [vmem:[%s267 + $0x88] sm:$0xff]
  %v286 = vld [vmem:[%s267 + $0x90] sm:$0xff]
  %v287 = vld [vmem:[%s267 + $0x98] sm:$0xff]
  %v288 = vld [vmem:[%s267 + $0xa0] sm:$0xff]
  %v289 = vld [vmem:[%s267 + $0xa8] sm:$0xff]
  %v290 = vld [vmem:[%s267 + $0xb0] sm:$0xff]
  %v291 = vld [vmem:[%s267 + $0xb8] sm:$0xff]
  %v292 = vld [vmem:[%s267 + $0xc0] sm:$0xff]
  %v293 = vld [vmem:[%s267 + $0xc8] sm:$0xff]
  %v294 = vld [vmem:[%s267 + $0xd0] sm:$0xff]
  %v295 = vld [vmem:[%s267 + $0xd8] sm:$0xff]
  %v296 = vld [vmem:[%s267 + $0xe0] sm:$0xff]
  %v297 = vld [vmem:[%s267 + $0xe8] sm:$0xff]
  %v298 = vld [vmem:[%s267 + $0xf0] sm:$0xff]
  %v299 = vld [vmem:[%s267 + $0xf8] sm:$0xff]
  %v332 = vunpack.c.l.b16 %v268
  %v333 = vunpack.c.h.b16 %v268
  %v334 = vunpack.c.l.b16 %v269
  %v335 = vunpack.c.h.b16 %v269
  %v336 = vunpack.c.l.b16 %v270
  %v337 = vunpack.c.h.b16 %v270
  %v338 = vunpack.c.l.b16 %v271
  %v339 = vunpack.c.h.b16 %v271
  %v340 = vunpack.c.l.b16 %v272
  %v341 = vunpack.c.h.b16 %v272
  %v342 = vunpack.c.l.b16 %v273
  %v343 = vunpack.c.h.b16 %v273
  %v344 = vunpack.c.l.b16 %v274
  %v345 = vunpack.c.h.b16 %v274
  %v346 = vunpack.c.l.b16 %v275
  %v347 = vunpack.c.h.b16 %v275
  %v348 = vunpack.c.l.b16 %v276
  %v349 = vunpack.c.h.b16 %v276
  %v350 = vunpack.c.l.b16 %v277
  %v351 = vunpack.c.h.b16 %v277
  %v352 = vunpack.c.l.b16 %v278
  %v353 = vunpack.c.h.b16 %v278
  %v354 = vunpack.c.l.b16 %v279
  %v355 = vunpack.c.h.b16 %v279
  %v356 = vunpack.c.l.b16 %v280
  %v357 = vunpack.c.h.b16 %v280
  %v358 = vunpack.c.l.b16 %v281
  %v359 = vunpack.c.h.b16 %v281
  %v360 = vunpack.c.l.b16 %v282
  %v361 = vunpack.c.h.b16 %v282
  %v362 = vunpack.c.l.b16 %v283
  %v363 = vunpack.c.h.b16 %v283
  %v364 = vunpack.c.l.b16 %v284
  %v365 = vunpack.c.h.b16 %v284
  %v366 = vunpack.c.l.b16 %v285
  %v367 = vunpack.c.h.b16 %v285
  %v368 = vunpack.c.l.b16 %v286
  %v369 = vunpack.c.h.b16 %v286
  %v370 = vunpack.c.l.b16 %v287
  %v371 = vunpack.c.h.b16 %v287
  %v372 = vunpack.c.l.b16 %v288
  %v373 = vunpack.c.h.b16 %v288
  %v374 = vunpack.c.l.b16 %v289
  %v375 = vunpack.c.h.b16 %v289
  %v376 = vunpack.c.l.b16 %v290
  %v377 = vunpack.c.h.b16 %v290
  %v378 = vunpack.c.l.b16 %v291
  %v379 = vunpack.c.h.b16 %v291
  %v380 = vunpack.c.l.b16 %v292
  %v381 = vunpack.c.h.b16 %v292
  %v382 = vunpack.c.l.b16 %v293
  %v383 = vunpack.c.h.b16 %v293
  %v384 = vunpack.c.l.b16 %v294
  %v385 = vunpack.c.h.b16 %v294
  %v386 = vunpack.c.l.b16 %v295
  %v387 = vunpack.c.h.b16 %v295
  %v388 = vunpack.c.l.b16 %v296
  %v389 = vunpack.c.h.b16 %v296
  %v390 = vunpack.c.l.b16 %v297
  %v391 = vunpack.c.h.b16 %v297
  %v392 = vunpack.c.l.b16 %v298
  %v393 = vunpack.c.h.b16 %v298
  %v394 = vunpack.c.l.b16 %v299
  %v395 = vunpack.c.h.b16 %v299
  %v396 = vpack.c.b16 %v334, %v332
  %v397 = vpack.c.b16 %v335, %v333
  %v398 = vpack.c.b16 %v338, %v336
  %v399 = vpack.c.b16 %v339, %v337
  %v400 = vpack.c.b16 %v342, %v340
  %v401 = vpack.c.b16 %v343, %v341
  %v402 = vpack.c.b16 %v346, %v344
  %v403 = vpack.c.b16 %v347, %v345
  %v404 = vpack.c.b16 %v350, %v348
  %v405 = vpack.c.b16 %v351, %v349
  %v406 = vpack.c.b16 %v354, %v352
  %v407 = vpack.c.b16 %v355, %v353
  %v408 = vpack.c.b16 %v358, %v356
  %v409 = vpack.c.b16 %v359, %v357
  %v410 = vpack.c.b16 %v362, %v360
  %v411 = vpack.c.b16 %v363, %v361
  %v412 = vpack.c.b16 %v366, %v364
  %v413 = vpack.c.b16 %v367, %v365
  %v414 = vpack.c.b16 %v370, %v368
  %v415 = vpack.c.b16 %v371, %v369
  %v416 = vpack.c.b16 %v374, %v372
  %v417 = vpack.c.b16 %v375, %v373
  %v418 = vpack.c.b16 %v378, %v376
  %v419 = vpack.c.b16 %v379, %v377
  %v420 = vpack.c.b16 %v382, %v380
  %v421 = vpack.c.b16 %v383, %v381
  %v422 = vpack.c.b16 %v386, %v384
  %v423 = vpack.c.b16 %v387, %v385
  %v424 = vpack.c.b16 %v390, %v388
  %v425 = vpack.c.b16 %v391, %v389
  %v426 = vpack.c.b16 %v394, %v392
  %v427 = vpack.c.b16 %v395, %v393
  %460 = vmatprep.subr.bf16.mxu0 %v397
  %461 = vmatpush1.bf16.msra.mxu0 %v396
  %462 = vmatprep.subr.bf16.mxu0 %v399
  %463 = vmatpush1.bf16.msra.mxu0 %v398
  %464 = vmatprep.subr.bf16.mxu0 %v401
  %465 = vmatpush1.bf16.msra.mxu0 %v400
  %466 = vmatprep.subr.bf16.mxu0 %v403
  %467 = vmatpush1.bf16.msra.mxu0 %v402
  %468 = vmatprep.subr.bf16.mxu0 %v405
  %469 = vmatpush1.bf16.msra.mxu0 %v404
  %470 = vmatprep.subr.bf16.mxu0 %v407
  %471 = vmatpush1.bf16.msra.mxu0 %v406
  %472 = vmatprep.subr.bf16.mxu0 %v409
  %473 = vmatpush1.bf16.msra.mxu0 %v408
  %474 = vmatprep.subr.bf16.mxu0 %v411
  %475 = vmatpush1.bf16.msra.mxu0 %v410
  %476 = vmatprep.subr.bf16.mxu0 %v413
  %477 = vmatpush1.bf16.msra.mxu0 %v412
  %478 = vmatprep.subr.bf16.mxu0 %v415
  %479 = vmatpush1.bf16.msra.mxu0 %v414
  %480 = vmatprep.subr.bf16.mxu0 %v417
  %481 = vmatpush1.bf16.msra.mxu0 %v416
  %482 = vmatprep.subr.bf16.mxu0 %v419
  %483 = vmatpush1.bf16.msra.mxu0 %v418
  %484 = vmatprep.subr.bf16.mxu0 %v421
  %485 = vmatpush1.bf16.msra.mxu0 %v420
  %486 = vmatprep.subr.bf16.mxu0 %v423
  %487 = vmatpush1.bf16.msra.mxu0 %v422
  %488 = vmatprep.subr.bf16.mxu0 %v425
  %489 = vmatpush1.bf16.msra.mxu0 %v424
  %490 = vmatprep.subr.bf16.mxu0 %v427
  %491 = vmatpush1.bf16.msra.mxu0 %v426
  %492 = vmatprep.mubr.bf16.mxu0 %v252
  %493 = vmatmul.mubr.bf16.gmra.mrb[0].mxu0 %v251
  %v494 = vpop.f32.mrb[0].mxu0
  %v495 = vadd.f32 0.0, %v494
  %v496 = vpop.f32.mrb[0].mxu0
  %v497 = vadd.f32 0.0, %v496
  %v498 = vpop.f32.mrb[0].mxu0
  %v499 = vadd.f32 0.0, %v498
  %v500 = vpop.f32.mrb[0].mxu0
  %v501 = vadd.f32 0.0, %v500
  %502 = vmatprep.mubr.bf16.mxu0 %v254
  %503 = vmatmul.mubr.bf16.gmra.mrb[0].mxu0 %v253
  %v504 = vpop.f32.mrb[0].mxu0
  %v505 = vadd.f32 0.0, %v504
  %v506 = vpop.f32.mrb[0].mxu0
  %v507 = vadd.f32 0.0, %v506
  %v508 = vpop.f32.mrb[0].mxu0
  %v509 = vadd.f32 0.0, %v508
  %v510 = vpop.f32.mrb[0].mxu0
  %v511 = vadd.f32 0.0, %v510
  %512 = vmatprep.mubr.bf16.mxu0 %v256
  %513 = vmatmul.mubr.bf16.gmra.mrb[0].mxu0 %v255
  %v514 = vpop.f32.mrb[0].mxu0
  %v515 = vadd.f32 0.0, %v514
  %v516 = vpop.f32.mrb[0].mxu0
  %v517 = vadd.f32 0.0, %v516
  %v518 = vpop.f32.mrb[0].mxu0
  %v519 = vadd.f32 0.0, %v518
  %v520 = vpop.f32.mrb[0].mxu0
  %v521 = vadd.f32 0.0, %v520
  %522 = vmatprep.mubr.bf16.mxu0 %v258
  %523 = vmatmul.mubr.bf16.gmra.mrb[0].mxu0 %v257
  %v524 = vpop.f32.mrb[0].mxu0
  %v525 = vadd.f32 0.0, %v524
  %v526 = vpop.f32.mrb[0].mxu0
  %v527 = vadd.f32 0.0, %v526
  %v528 = vpop.f32.mrb[0].mxu0
  %v529 = vadd.f32 0.0, %v528
  %v530 = vpop.f32.mrb[0].mxu0
  %v531 = vadd.f32 0.0, %v530
  %532 = vmatprep.mubr.bf16.mxu0 %v260
  %533 = vmatmul.mubr.bf16.gmra.mrb[0].mxu0 %v259
  %v534 = vpop.f32.mrb[0].mxu0
  %v535 = vadd.f32 0.0, %v534
  %v536 = vpop.f32.mrb[0].mxu0
  %v537 = vadd.f32 0.0, %v536
  %v538 = vpop.f32.mrb[0].mxu0
  %v539 = vadd.f32 0.0, %v538
  %v540 = vpop.f32.mrb[0].mxu0
  %v541 = vadd.f32 0.0, %v540
  %542 = vmatprep.mubr.bf16.mxu0 %v262
  %543 = vmatmul.mubr.bf16.gmra.mrb[0].mxu0 %v261
  %v544 = vpop.f32.mrb[0].mxu0
  %v545 = vadd.f32 0.0, %v544
  %v546 = vpop.f32.mrb[0].mxu0
  %v547 = vadd.f32 0.0, %v546
  %v548 = vpop.f32.mrb[0].mxu0
  %v549 = vadd.f32 0.0, %v548
  %v550 = vpop.f32.mrb[0].mxu0
  %v551 = vadd.f32 0.0, %v550
  %552 = vmatprep.mubr.bf16.mxu0 %v264
  %553 = vmatmul.mubr.bf16.gmra.mrb[0].mxu0 %v263
  %v554 = vpop.f32.mrb[0].mxu0
  %v555 = vadd.f32 0.0, %v554
  %v556 = vpop.f32.mrb[0].mxu0
  %v557 = vadd.f32 0.0, %v556
  %v558 = vpop.f32.mrb[0].mxu0
  %v559 = vadd.f32 0.0, %v558
  %v560 = vpop.f32.mrb[0].mxu0
  %v561 = vadd.f32 0.0, %v560
  %562 = vmatprep.mubr.bf16.mxu0 %v266
  %563 = vmatmul.mubr.bf16.gmra.mrb[0].mxu0 %v265
  %v564 = vpop.f32.mrb[0].mxu0
  %v565 = vadd.f32 0.0, %v564
  %v566 = vpop.f32.mrb[0].mxu0
  %v567 = vadd.f32 0.0, %v566
  %v568 = vpop.f32.mrb[0].mxu0
  %v569 = vadd.f32 0.0, %v568
  %v570 = vpop.f32.mrb[0].mxu0
  %v571 = vadd.f32 0.0, %v570
  %572 = vdwg.mxu0
  %v605 = vunpack.c.l.b16 %v186
  %v606 = vunpack.c.h.b16 %v186
  %v607 = vunpack.c.l.b16 %v187
  %v608 = vunpack.c.h.b16 %v187
  %v609 = vunpack.c.l.b16 %v188
  %v610 = vunpack.c.h.b16 %v188
  %v611 = vunpack.c.l.b16 %v189
  %v612 = vunpack.c.h.b16 %v189
  %v613 = vunpack.c.l.b16 %v190
  %v614 = vunpack.c.h.b16 %v190
  %v615 = vunpack.c.l.b16 %v191
  %v616 = vunpack.c.h.b16 %v191
  %v617 = vunpack.c.l.b16 %v192
  %v618 = vunpack.c.h.b16 %v192
  %v619 = vunpack.c.l.b16 %v193
  %v620 = vunpack.c.h.b16 %v193
  %v621 = vunpack.c.l.b16 %v194
  %v622 = vunpack.c.h.b16 %v194
  %v623 = vunpack.c.l.b16 %v195
  %v624 = vunpack.c.h.b16 %v195
  %v625 = vunpack.c.l.b16 %v196
  %v626 = vunpack.c.h.b16 %v196
  %v627 = vunpack.c.l.b16 %v197
  %v628 = vunpack.c.h.b16 %v197
  %v629 = vunpack.c.l.b16 %v198
  %v630 = vunpack.c.h.b16 %v198
  %v631 = vunpack.c.l.b16 %v199
  %v632 = vunpack.c.h.b16 %v199
  %v633 = vunpack.c.l.b16 %v200
  %v634 = vunpack.c.h.b16 %v200
  %v635 = vunpack.c.l.b16 %v201
  %v636 = vunpack.c.h.b16 %v201
  %v637 = vunpack.c.l.b16 %v202
  %v638 = vunpack.c.h.b16 %v202
  %v639 = vunpack.c.l.b16 %v203
  %v640 = vunpack.c.h.b16 %v203
  %v641 = vunpack.c.l.b16 %v204
  %v642 = vunpack.c.h.b16 %v204
  %v643 = vunpack.c.l.b16 %v205
  %v644 = vunpack.c.h.b16 %v205
  %v645 = vunpack.c.l.b16 %v206
  %v646 = vunpack.c.h.b16 %v206
  %v647 = vunpack.c.l.b16 %v207
  %v648 = vunpack.c.h.b16 %v207
  %v649 = vunpack.c.l.b16 %v208
  %v650 = vunpack.c.h.b16 %v208
  %v651 = vunpack.c.l.b16 %v209
  %v652 = vunpack.c.h.b16 %v209
  %v653 = vunpack.c.l.b16 %v210
  %v654 = vunpack.c.h.b16 %v210
  %v655 = vunpack.c.l.b16 %v211
  %v656 = vunpack.c.h.b16 %v211
  %v657 = vunpack.c.l.b16 %v212
  %v658 = vunpack.c.h.b16 %v212
  %v659 = vunpack.c.l.b16 %v213
  %v660 = vunpack.c.h.b16 %v213
  %v661 = vunpack.c.l.b16 %v214
  %v662 = vunpack.c.h.b16 %v214
  %v663 = vunpack.c.l.b16 %v215
  %v664 = vunpack.c.h.b16 %v215
  %v665 = vunpack.c.l.b16 %v216
  %v666 = vunpack.c.h.b16 %v216
  %v667 = vunpack.c.l.b16 %v217
  %v668 = vunpack.c.h.b16 %v217
  %v669 = vpack.c.b16 %v607, %v605
  %v670 = vpack.c.b16 %v608, %v606
  %v671 = vpack.c.b16 %v611, %v609
  %v672 = vpack.c.b16 %v612, %v610
  %v673 = vpack.c.b16 %v615, %v613
  %v674 = vpack.c.b16 %v616, %v614
  %v675 = vpack.c.b16 %v619, %v617
  %v676 = vpack.c.b16 %v620, %v618
  %v677 = vpack.c.b16 %v623, %v621
  %v678 = vpack.c.b16 %v624, %v622
  %v679 = vpack.c.b16 %v627, %v625
  %v680 = vpack.c.b16 %v628, %v626
  %v681 = vpack.c.b16 %v631, %v629
  %v682 = vpack.c.b16 %v632, %v630
  %v683 = vpack.c.b16 %v635, %v633
  %v684 = vpack.c.b16 %v636, %v634
  %v685 = vpack.c.b16 %v639, %v637
  %v686 = vpack.c.b16 %v640, %v638
  %v687 = vpack.c.b16 %v643, %v641
  %v688 = vpack.c.b16 %v644, %v642
  %v689 = vpack.c.b16 %v647, %v645
  %v690 = vpack.c.b16 %v648, %v646
  %v691 = vpack.c.b16 %v651, %v649
  %v692 = vpack.c.b16 %v652, %v650
  %v693 = vpack.c.b16 %v655, %v653
  %v694 = vpack.c.b16 %v656, %v654
  %v695 = vpack.c.b16 %v659, %v657
  %v696 = vpack.c.b16 %v660, %v658
  %v697 = vpack.c.b16 %v663, %v661
  %v698 = vpack.c.b16 %v664, %v662
  %v699 = vpack.c.b16 %v667, %v665
  %v700 = vpack.c.b16 %v668, %v666
  %733 = vmatprep.subr.bf16.mxu0 %v670
  %734 = vmatpush1.bf16.msra.mxu0 %v669
  %735 = vmatprep.subr.bf16.mxu0 %v672
  %736 = vmatpush1.bf16.msra.mxu0 %v671
  %737 = vmatprep.subr.bf16.mxu0 %v674
  %738 = vmatpush1.bf16.msra.mxu0 %v673
  %739 = vmatprep.subr.bf16.mxu0 %v676
  %740 = vmatpush1.bf16.msra.mxu0 %v675
  %741 = vmatprep.subr.bf16.mxu0 %v678
  %742 = vmatpush1.bf16.msra.mxu0 %v677
  %743 = vmatprep.subr.bf16.mxu0 %v680
  %744 = vmatpush1.bf16.msra.mxu0 %v679
  %745 = vmatprep.subr.bf16.mxu0 %v682
  %746 = vmatpush1.bf16.msra.mxu0 %v681
  %747 = vmatprep.subr.bf16.mxu0 %v684
  %748 = vmatpush1.bf16.msra.mxu0 %v683
  %749 = vmatprep.subr.bf16.mxu0 %v686
  %750 = vmatpush1.bf16.msra.mxu0 %v685
  %751 = vmatprep.subr.bf16.mxu0 %v688
  %752 = vmatpush1.bf16.msra.mxu0 %v687
  %753 = vmatprep.subr.bf16.mxu0 %v690
  %754 = vmatpush1.bf16.msra.mxu0 %v689
  %755 = vmatprep.subr.bf16.mxu0 %v692
  %756 = vmatpush1.bf16.msra.mxu0 %v691
  %757 = vmatprep.subr.bf16.mxu0 %v694
  %758 = vmatpush1.bf16.msra.mxu0 %v693
  %759 = vmatprep.subr.bf16.mxu0 %v696
  %760 = vmatpush1.bf16.msra.mxu0 %v695
  %761 = vmatprep.subr.bf16.mxu0 %v698
  %762 = vmatpush1.bf16.msra.mxu0 %v697
  %763 = vmatprep.subr.bf16.mxu0 %v700
  %764 = vmatpush1.bf16.msra.mxu0 %v699
  %765 = vmatprep.mubr.bf16.mxu0 %v171
  %766 = vmatmul.mubr.bf16.gmra.mrb[0].mxu0 %v170
  %v767 = vpop.f32.mrb[0].mxu0
  %v768 = vadd.f32 %v495, %v767
  %v769 = vpop.f32.mrb[0].mxu0
  %v770 = vadd.f32 %v497, %v769
  %v771 = vpop.f32.mrb[0].mxu0
  %v772 = vadd.f32 %v499, %v771
  %v773 = vpop.f32.mrb[0].mxu0
  %v774 = vadd.f32 %v501, %v773
  %775 = vmatprep.mubr.bf16.mxu0 %v173
  %776 = vmatmul.mubr.bf16.gmra.mrb[0].mxu0 %v172
  %v777 = vpop.f32.mrb[0].mxu0
  %v778 = vadd.f32 %v505, %v777
  %v779 = vpop.f32.mrb[0].mxu0
  %v780 = vadd.f32 %v507, %v779
  %v781 = vpop.f32.mrb[0].mxu0
  %v782 = vadd.f32 %v509, %v781
  %v783 = vpop.f32.mrb[0].mxu0
  %v784 = vadd.f32 %v511, %v783
  %785 = vmatprep.mubr.bf16.mxu0 %v175
  %786 = vmatmul.mubr.bf16.gmra.mrb[0].mxu0 %v174
  %v787 = vpop.f32.mrb[0].mxu0
  %v788 = vadd.f32 %v515, %v787
  %v789 = vpop.f32.mrb[0].mxu0
  %v790 = vadd.f32 %v517, %v789
  %v791 = vpop.f32.mrb[0].mxu0
  %v792 = vadd.f32 %v519, %v791
  %v793 = vpop.f32.mrb[0].mxu0
  %v794 = vadd.f32 %v521, %v793
  %795 = vmatprep.mubr.bf16.mxu0 %v177
  %796 = vmatmul.mubr.bf16.gmra.mrb[0].mxu0 %v176
  %v797 = vpop.f32.mrb[0].mxu0
  %v798 = vadd.f32 %v525, %v797
  %v799 = vpop.f32.mrb[0].mxu0
  %v800 = vadd.f32 %v527, %v799
  %v801 = vpop.f32.mrb[0].mxu0
  %v802 = vadd.f32 %v529, %v801
  %v803 = vpop.f32.mrb[0].mxu0
  %v804 = vadd.f32 %v531, %v803
  %805 = vmatprep.mubr.bf16.mxu0 %v179
  %806 = vmatmul.mubr.bf16.gmra.mrb[0].mxu0 %v178
  %v807 = vpop.f32.mrb[0].mxu0
  %v808 = vadd.f32 %v535, %v807
  %v809 = vpop.f32.mrb[0].mxu0
  %v810 = vadd.f32 %v537, %v809
  %v811 = vpop.f32.mrb[0].mxu0
  %v812 = vadd.f32 %v539, %v811
  %v813 = vpop.f32.mrb[0].mxu0
  %v814 = vadd.f32 %v541, %v813
  %815 = vmatprep.mubr.bf16.mxu0 %v181
  %816 = vmatmul.mubr.bf16.gmra.mrb[0].mxu0 %v180
  %v817 = vpop.f32.mrb[0].mxu0
  %v818 = vadd.f32 %v545, %v817
  %v819 = vpop.f32.mrb[0].mxu0
  %v820 = vadd.f32 %v547, %v819
  %v821 = vpop.f32.mrb[0].mxu0
  %v822 = vadd.f32 %v549, %v821
  %v823 = vpop.f32.mrb[0].mxu0
  %v824 = vadd.f32 %v551, %v823
  %825 = vmatprep.mubr.bf16.mxu0 %v183
  %826 = vmatmul.mubr.bf16.gmra.mrb[0].mxu0 %v182
  %v827 = vpop.f32.mrb[0].mxu0
  %v828 = vadd.f32 %v555, %v827
  %v829 = vpop.f32.mrb[0].mxu0
  %v830 = vadd.f32 %v557, %v829
  %v831 = vpop.f32.mrb[0].mxu0
  %v832 = vadd.f32 %v559, %v831
  %v833 = vpop.f32.mrb[0].mxu0
  %v834 = vadd.f32 %v561, %v833
  %835 = vmatprep.mubr.bf16.mxu0 %v185
  %836 = vmatmul.mubr.bf16.gmra.mrb[0].mxu0 %v184
  %v837 = vpop.f32.mrb[0].mxu0
  %v838 = vadd.f32 %v565, %v837
  %v839 = vpop.f32.mrb[0].mxu0
  %v840 = vadd.f32 %v567, %v839
  %v841 = vpop.f32.mrb[0].mxu0
  %v842 = vadd.f32 %v569, %v841
  %v843 = vpop.f32.mrb[0].mxu0
  %v844 = vadd.f32 %v571, %v843
  %845 = vdwg.mxu0
  %s846 = scalar_lea.vmem [#allocation2], 32
  %v847 = vld [vmem:[%s846] sm:$0xff]
  %v848 = vld [vmem:[%s846 + $0x8] sm:$0xff]
  %v849 = vld [vmem:[%s846 + $0x10] sm:$0xff]
  %v850 = vld [vmem:[%s846 + $0x18] sm:$0xff]
  %v851 = vld [vmem:[%s846 + $0x20] sm:$0xff]
  %v852 = vld [vmem:[%s846 + $0x28] sm:$0xff]
  %v853 = vld [vmem:[%s846 + $0x30] sm:$0xff]
  %v854 = vld [vmem:[%s846 + $0x38] sm:$0xff]
  %v855 = vld [vmem:[%s846 + $0x40] sm:$0xff]
  %v856 = vld [vmem:[%s846 + $0x48] sm:$0xff]
  %v857 = vld [vmem:[%s846 + $0x50] sm:$0xff]
  %v858 = vld [vmem:[%s846 + $0x58] sm:$0xff]
  %v859 = vld [vmem:[%s846 + $0x60] sm:$0xff]
  %v860 = vld [vmem:[%s846 + $0x68] sm:$0xff]
  %v861 = vld [vmem:[%s846 + $0x70] sm:$0xff]
  %v862 = vld [vmem:[%s846 + $0x78] sm:$0xff]
  %v863 = vld [vmem:[%s846 + $0xe0] sm:$0xff]
  %v864 = vld [vmem:[%s846 + $0xe8] sm:$0xff]
  %v865 = vld [vmem:[%s846 + $0xf0] sm:$0xff]
  %v866 = vld [vmem:[%s846 + $0xf8] sm:$0xff]
  %v867 = vld [vmem:[%s846 + $0x100] sm:$0xff]
  %v868 = vld [vmem:[%s846 + $0x108] sm:$0xff]
  %v869 = vld [vmem:[%s846 + $0x110] sm:$0xff]
  %v870 = vld [vmem:[%s846 + $0x118] sm:$0xff]
  %v871 = vld [vmem:[%s846 + $0x120] sm:$0xff]
  %v872 = vld [vmem:[%s846 + $0x128] sm:$0xff]
  %v873 = vld [vmem:[%s846 + $0x130] sm:$0xff]
  %v874 = vld [vmem:[%s846 + $0x138] sm:$0xff]
  %v875 = vld [vmem:[%s846 + $0x140] sm:$0xff]
  %v876 = vld [vmem:[%s846 + $0x148] sm:$0xff]
  %v877 = vld [vmem:[%s846 + $0x150] sm:$0xff]
  %v878 = vld [vmem:[%s846 + $0x158] sm:$0xff]
  %v879 = vpack.c.bf16 %v849, %v847
  %v880 = vpack.c.bf16 %v850, %v848
  %v881 = vpack.c.bf16 %v853, %v851
  %v882 = vpack.c.bf16 %v854, %v852
  %v883 = vpack.c.bf16 %v857, %v855
  %v884 = vpack.c.bf16 %v858, %v856
  %v885 = vpack.c.bf16 %v861, %v859
  %v886 = vpack.c.bf16 %v862, %v860
  %v887 = vpack.c.bf16 %v865, %v863
  %v888 = vpack.c.bf16 %v866, %v864
  %v889 = vpack.c.bf16 %v869, %v867
  %v890 = vpack.c.bf16 %v870, %v868
  %v891 = vpack.c.bf16 %v873, %v871
  %v892 = vpack.c.bf16 %v874, %v872
  %v893 = vpack.c.bf16 %v877, %v875
  %v894 = vpack.c.bf16 %v878, %v876
  %s895 = scalar_lea.vmem %s1, 512
  %v896 = vld [vmem:[%s895] sm:$0xff]
  %v897 = vld [vmem:[%s895 + $0x8] sm:$0xff]
  %v898 = vld [vmem:[%s895 + $0x10] sm:$0xff]
  %v899 = vld [vmem:[%s895 + $0x18] sm:$0xff]
  %v900 = vld [vmem:[%s895 + $0x20] sm:$0xff]
  %v901 = vld [vmem:[%s895 + $0x28] sm:$0xff]
  %v902 = vld [vmem:[%s895 + $0x30] sm:$0xff]
  %v903 = vld [vmem:[%s895 + $0x38] sm:$0xff]
  %v904 = vld [vmem:[%s895 + $0x40] sm:$0xff]
  %v905 = vld [vmem:[%s895 + $0x48] sm:$0xff]
  %v906 = vld [vmem:[%s895 + $0x50] sm:$0xff]
  %v907 = vld [vmem:[%s895 + $0x58] sm:$0xff]
  %v908 = vld [vmem:[%s895 + $0x60] sm:$0xff]
  %v909 = vld [vmem:[%s895 + $0x68] sm:$0xff]
  %v910 = vld [vmem:[%s895 + $0x70] sm:$0xff]
  %v911 = vld [vmem:[%s895 + $0x78] sm:$0xff]
  %v912 = vld [vmem:[%s895 + $0x80] sm:$0xff]
  %v913 = vld [vmem:[%s895 + $0x88] sm:$0xff]
  %v914 = vld [vmem:[%s895 + $0x90] sm:$0xff]
  %v915 = vld [vmem:[%s895 + $0x98] sm:$0xff]
  %v916 = vld [vmem:[%s895 + $0xa0] sm:$0xff]
  %v917 = vld [vmem:[%s895 + $0xa8] sm:$0xff]
  %v918 = vld [vmem:[%s895 + $0xb0] sm:$0xff]
  %v919 = vld [vmem:[%s895 + $0xb8] sm:$0xff]
  %v920 = vld [vmem:[%s895 + $0xc0] sm:$0xff]
  %v921 = vld [vmem:[%s895 + $0xc8] sm:$0xff]
  %v922 = vld [vmem:[%s895 + $0xd0] sm:$0xff]
  %v923 = vld [vmem:[%s895 + $0xd8] sm:$0xff]
  %v924 = vld [vmem:[%s895 + $0xe0] sm:$0xff]
  %v925 = vld [vmem:[%s895 + $0xe8] sm:$0xff]
  %v926 = vld [vmem:[%s895 + $0xf0] sm:$0xff]
  %v927 = vld [vmem:[%s895 + $0xf8] sm:$0xff]
  %v960 = vunpack.c.l.b16 %v896
  %v961 = vunpack.c.h.b16 %v896
  %v962 = vunpack.c.l.b16 %v897
  %v963 = vunpack.c.h.b16 %v897
  %v964 = vunpack.c.l.b16 %v898
  %v965 = vunpack.c.h.b16 %v898
  %v966 = vunpack.c.l.b16 %v899
  %v967 = vunpack.c.h.b16 %v899
  %v968 = vunpack.c.l.b16 %v900
  %v969 = vunpack.c.h.b16 %v900
  %v970 = vunpack.c.l.b16 %v901
  %v971 = vunpack.c.h.b16 %v901
  %v972 = vunpack.c.l.b16 %v902
  %v973 = vunpack.c.h.b16 %v902
  %v974 = vunpack.c.l.b16 %v903
  %v975 = vunpack.c.h.b16 %v903
  %v976 = vunpack.c.l.b16 %v904
  %v977 = vunpack.c.h.b16 %v904
  %v978 = vunpack.c.l.b16 %v905
  %v979 = vunpack.c.h.b16 %v905
  %v980 = vunpack.c.l.b16 %v906
  %v981 = vunpack.c.h.b16 %v906
  %v982 = vunpack.c.l.b16 %v907
  %v983 = vunpack.c.h.b16 %v907
  %v984 = vunpack.c.l.b16 %v908
  %v985 = vunpack.c.h.b16 %v908
  %v986 = vunpack.c.l.b16 %v909
  %v987 = vunpack.c.h.b16 %v909
  %v988 = vunpack.c.l.b16 %v910
  %v989 = vunpack.c.h.b16 %v910
  %v990 = vunpack.c.l.b16 %v911
  %v991 = vunpack.c.h.b16 %v911
  %v992 = vunpack.c.l.b16 %v912
  %v993 = vunpack.c.h.b16 %v912
  %v994 = vunpack.c.l.b16 %v913
  %v995 = vunpack.c.h.b16 %v913
  %v996 = vunpack.c.l.b16 %v914
  %v997 = vunpack.c.h.b16 %v914
  %v998 = vunpack.c.l.b16 %v915
  %v999 = vunpack.c.h.b16 %v915
  %v1000 = vunpack.c.l.b16 %v916
  %v1001 = vunpack.c.h.b16 %v916
  %v1002 = vunpack.c.l.b16 %v917
  %v1003 = vunpack.c.h.b16 %v917
  %v1004 = vunpack.c.l.b16 %v918
  %v1005 = vunpack.c.h.b16 %v918
  %v1006 = vunpack.c.l.b16 %v919
  %v1007 = vunpack.c.h.b16 %v919
  %v1008 = vunpack.c.l.b16 %v920
  %v1009 = vunpack.c.h.b16 %v920
  %v1010 = vunpack.c.l.b16 %v921
  %v1011 = vunpack.c.h.b16 %v921
  %v1012 = vunpack.c.l.b16 %v922
  %v1013 = vunpack.c.h.b16 %v922
  %v1014 = vunpack.c.l.b16 %v923
  %v1015 = vunpack.c.h.b16 %v923
  %v1016 = vunpack.c.l.b16 %v924
  %v1017 = vunpack.c.h.b16 %v924
  %v1018 = vunpack.c.l.b16 %v925
  %v1019 = vunpack.c.h.b16 %v925
  %v1020 = vunpack.c.l.b16 %v926
  %v1021 = vunpack.c.h.b16 %v926
  %v1022 = vunpack.c.l.b16 %v927
  %v1023 = vunpack.c.h.b16 %v927
  %v1024 = vpack.c.b16 %v962, %v960
  %v1025 = vpack.c.b16 %v963, %v961
  %v1026 = vpack.c.b16 %v966, %v964
  %v1027 = vpack.c.b16 %v967, %v965
  %v1028 = vpack.c.b16 %v970, %v968
  %v1029 = vpack.c.b16 %v971, %v969
  %v1030 = vpack.c.b16 %v974, %v972
  %v1031 = vpack.c.b16 %v975, %v973
  %v1032 = vpack.c.b16 %v978, %v976
  %v1033 = vpack.c.b16 %v979, %v977
  %v1034 = vpack.c.b16 %v982, %v980
  %v1035 = vpack.c.b16 %v983, %v981
  %v1036 = vpack.c.b16 %v986, %v984
  %v1037 = vpack.c.b16 %v987, %v985
  %v1038 = vpack.c.b16 %v990, %v988
  %v1039 = vpack.c.b16 %v991, %v989
  %v1040 = vpack.c.b16 %v994, %v992
  %v1041 = vpack.c.b16 %v995, %v993
  %v1042 = vpack.c.b16 %v998, %v996
  %v1043 = vpack.c.b16 %v999, %v997
  %v1044 = vpack.c.b16 %v1002, %v1000
  %v1045 = vpack.c.b16 %v1003, %v1001
  %v1046 = vpack.c.b16 %v1006, %v1004
  %v1047 = vpack.c.b16 %v1007, %v1005
  %v1048 = vpack.c.b16 %v1010, %v1008
  %v1049 = vpack.c.b16 %v1011, %v1009
  %v1050 = vpack.c.b16 %v1014, %v1012
  %v1051 = vpack.c.b16 %v1015, %v1013
  %v1052 = vpack.c.b16 %v1018, %v1016
  %v1053 = vpack.c.b16 %v1019, %v1017
  %v1054 = vpack.c.b16 %v1022, %v1020
  %v1055 = vpack.c.b16 %v1023, %v1021
  %1088 = vmatprep.subr.bf16.mxu0 %v1025
  %1089 = vmatpush1.bf16.msra.mxu0 %v1024
  %1090 = vmatprep.subr.bf16.mxu0 %v1027
  %1091 = vmatpush1.bf16.msra.mxu0 %v1026
  %1092 = vmatprep.subr.bf16.mxu0 %v1029
  %1093 = vmatpush1.bf16.msra.mxu0 %v1028
  %1094 = vmatprep.subr.bf16.mxu0 %v1031
  %1095 = vmatpush1.bf16.msra.mxu0 %v1030
  %1096 = vmatprep.subr.bf16.mxu0 %v1033
  %1097 = vmatpush1.bf16.msra.mxu0 %v1032
  %1098 = vmatprep.subr.bf16.mxu0 %v1035
  %1099 = vmatpush1.bf16.msra.mxu0 %v1034
  %1100 = vmatprep.subr.bf16.mxu0 %v1037
  %1101 = vmatpush1.bf16.msra.mxu0 %v1036
  %1102 = vmatprep.subr.bf16.mxu0 %v1039
  %1103 = vmatpush1.bf16.msra.mxu0 %v1038
  %1104 = vmatprep.subr.bf16.mxu0 %v1041
  %1105 = vmatpush1.bf16.msra.mxu0 %v1040
  %1106 = vmatprep.subr.bf16.mxu0 %v1043
  %1107 = vmatpush1.bf16.msra.mxu0 %v1042
  %1108 = vmatprep.subr.bf16.mxu0 %v1045
  %1109 = vmatpush1.bf16.msra.mxu0 %v1044
  %1110 = vmatprep.subr.bf16.mxu0 %v1047
  %1111 = vmatpush1.bf16.msra.mxu0 %v1046
  %1112 = vmatprep.subr.bf16.mxu0 %v1049
  %1113 = vmatpush1.bf16.msra.mxu0 %v1048
  %1114 = vmatprep.subr.bf16.mxu0 %v1051
  %1115 = vmatpush1.bf16.msra.mxu0 %v1050
  %1116 = vmatprep.subr.bf16.mxu0 %v1053
  %1117 = vmatpush1.bf16.msra.mxu0 %v1052
  %1118 = vmatprep.subr.bf16.mxu0 %v1055
  %1119 = vmatpush1.bf16.msra.mxu0 %v1054
  %1120 = vmatprep.mubr.bf16.mxu0 %v880
  %1121 = vmatmul.mubr.bf16.gmra.mrb[0].mxu0 %v879
  %v1122 = vpop.f32.mrb[0].mxu0
  %v1123 = vadd.f32 0.0, %v1122
  %v1124 = vpop.f32.mrb[0].mxu0
  %v1125 = vadd.f32 0.0, %v1124
  %v1126 = vpop.f32.mrb[0].mxu0
  %v1127 = vadd.f32 0.0, %v1126
  %v1128 = vpop.f32.mrb[0].mxu0
  %v1129 = vadd.f32 0.0, %v1128
  %1130 = vmatprep.mubr.bf16.mxu0 %v882
  %1131 = vmatmul.mubr.bf16.gmra.mrb[0].mxu0 %v881
  %v1132 = vpop.f32.mrb[0].mxu0
  %v1133 = vadd.f32 0.0, %v1132
  %v1134 = vpop.f32.mrb[0].mxu0
  %v1135 = vadd.f32 0.0, %v1134
  %v1136 = vpop.f32.mrb[0].mxu0
  %v1137 = vadd.f32 0.0, %v1136
  %v1138 = vpop.f32.mrb[0].mxu0
  %v1139 = vadd.f32 0.0, %v1138
  %1140 = vmatprep.mubr.bf16.mxu0 %v884
  %1141 = vmatmul.mubr.bf16.gmra.mrb[0].mxu0 %v883
  %v1142 = vpop.f32.mrb[0].mxu0
  %v1143 = vadd.f32 0.0, %v1142
  %v1144 = vpop.f32.mrb[0].mxu0
  %v1145 = vadd.f32 0.0, %v1144
  %v1146 = vpop.f32.mrb[0].mxu0
  %v1147 = vadd.f32 0.0, %v1146
  %v1148 = vpop.f32.mrb[0].mxu0
  %v1149 = vadd.f32 0.0, %v1148
  %1150 = vmatprep.mubr.bf16.mxu0 %v886
  %1151 = vmatmul.mubr.bf16.gmra.mrb[0].mxu0 %v885
  %v1152 = vpop.f32.mrb[0].mxu0
  %v1153 = vadd.f32 0.0, %v1152
  %v1154 = vpop.f32.mrb[0].mxu0
  %v1155 = vadd.f32 0.0, %v1154
  %v1156 = vpop.f32.mrb[0].mxu0
  %v1157 = vadd.f32 0.0, %v1156
  %v1158 = vpop.f32.mrb[0].mxu0
  %v1159 = vadd.f32 0.0, %v1158
  %1160 = vmatprep.mubr.bf16.mxu0 %v888
  %1161 = vmatmul.mubr.bf16.gmra.mrb[0].mxu0 %v887
  %v1162 = vpop.f32.mrb[0].mxu0
  %v1163 = vadd.f32 0.0, %v1162
  %v1164 = vpop.f32.mrb[0].mxu0
  %v1165 = vadd.f32 0.0, %v1164
  %v1166 = vpop.f32.mrb[0].mxu0
  %v1167 = vadd.f32 0.0, %v1166
  %v1168 = vpop.f32.mrb[0].mxu0
  %v1169 = vadd.f32 0.0, %v1168
  %1170 = vmatprep.mubr.bf16.mxu0 %v890
  %1171 = vmatmul.mubr.bf16.gmra.mrb[0].mxu0 %v889
  %v1172 = vpop.f32.mrb[0].mxu0
  %v1173 = vadd.f32 0.0, %v1172
  %v1174 = vpop.f32.mrb[0].mxu0
  %v1175 = vadd.f32 0.0, %v1174
  %v1176 = vpop.f32.mrb[0].mxu0
  %v1177 = vadd.f32 0.0, %v1176
  %v1178 = vpop.f32.mrb[0].mxu0
  %v1179 = vadd.f32 0.0, %v1178
  %1180 = vmatprep.mubr.bf16.mxu0 %v892
  %1181 = vmatmul.mubr.bf16.gmra.mrb[0].mxu0 %v891
  %v1182 = vpop.f32.mrb[0].mxu0
  %v1183 = vadd.f32 0.0, %v1182
  %v1184 = vpop.f32.mrb[0].mxu0
  %v1185 = vadd.f32 0.0, %v1184
  %v1186 = vpop.f32.mrb[0].mxu0
  %v1187 = vadd.f32 0.0, %v1186
  %v1188 = vpop.f32.mrb[0].mxu0
  %v1189 = vadd.f32 0.0, %v1188
  %1190 = vmatprep.mubr.bf16.mxu0 %v894
  %1191 = vmatmul.mubr.bf16.gmra.mrb[0].mxu0 %v893
  %v1192 = vpop.f32.mrb[0].mxu0
  %v1193 = vadd.f32 0.0, %v1192
  %v1194 = vpop.f32.mrb[0].mxu0
  %v1195 = vadd.f32 0.0, %v1194
  %v1196 = vpop.f32.mrb[0].mxu0
  %v1197 = vadd.f32 0.0, %v1196
  %v1198 = vpop.f32.mrb[0].mxu0
  %v1199 = vadd.f32 0.0, %v1198
  %1200 = vdwg.mxu0
  %v1201 = vadd.f32 %v768, %v1123
  %v1202 = vadd.f32 %v770, %v1125
  %v1203 = vadd.f32 %v772, %v1127
  %v1204 = vadd.f32 %v774, %v1129
  %v1205 = vadd.f32 %v778, %v1133
  %v1206 = vadd.f32 %v780, %v1135
  %v1207 = vadd.f32 %v782, %v1137
  %v1208 = vadd.f32 %v784, %v1139
  %v1209 = vadd.f32 %v788, %v1143
  %v1210 = vadd.f32 %v790, %v1145
  %v1211 = vadd.f32 %v792, %v1147
  %v1212 = vadd.f32 %v794, %v1149
  %v1213 = vadd.f32 %v798, %v1153
  %v1214 = vadd.f32 %v800, %v1155
  %v1215 = vadd.f32 %v802, %v1157
  %v1216 = vadd.f32 %v804, %v1159
  %v1217 = vadd.f32 %v808, %v1163
  %v1218 = vadd.f32 %v810, %v1165
  %v1219 = vadd.f32 %v812, %v1167
  %v1220 = vadd.f32 %v814, %v1169
  %v1221 = vadd.f32 %v818, %v1173
  %v1222 = vadd.f32 %v820, %v1175
  %v1223 = vadd.f32 %v822, %v1177
  %v1224 = vadd.f32 %v824, %v1179
  %v1225 = vadd.f32 %v828, %v1183
  %v1226 = vadd.f32 %v830, %v1185
  %v1227 = vadd.f32 %v832, %v1187
  %v1228 = vadd.f32 %v834, %v1189
  %v1229 = vadd.f32 %v838, %v1193
  %v1230 = vadd.f32 %v840, %v1195
  %v1231 = vadd.f32 %v842, %v1197
  %v1232 = vadd.f32 %v844, %v1199
  %v1233 = vld [vmem:[%s105] sm:$0xff]
  %v1234 = vld [vmem:[%s105 + $0x8] sm:$0xff]
  %v1235 = vld [vmem:[%s105 + $0x10] sm:$0xff]
  %v1236 = vld [vmem:[%s105 + $0x18] sm:$0xff]
  %v1237 = vld [vmem:[%s105 + $0x20] sm:$0xff]
  %v1238 = vld [vmem:[%s105 + $0x28] sm:$0xff]
  %v1239 = vld [vmem:[%s105 + $0x30] sm:$0xff]
  %v1240 = vld [vmem:[%s105 + $0x38] sm:$0xff]
  %v1241 = vld [vmem:[%s105 + $0x40] sm:$0xff]
  %v1242 = vld [vmem:[%s105 + $0x48] sm:$0xff]
  %v1243 = vld [vmem:[%s105 + $0x50] sm:$0xff]
  %v1244 = vld [vmem:[%s105 + $0x58] sm:$0xff]
  %v1245 = vld [vmem:[%s105 + $0x60] sm:$0xff]
  %v1246 = vld [vmem:[%s105 + $0x68] sm:$0xff]
  %v1247 = vld [vmem:[%s105 + $0x70] sm:$0xff]
  %v1248 = vld [vmem:[%s105 + $0x78] sm:$0xff]
  %v1249 = vld [vmem:[%s105 + $0xe0] sm:$0xff]
  %v1250 = vld [vmem:[%s105 + $0xe8] sm:$0xff]
  %v1251 = vld [vmem:[%s105 + $0xf0] sm:$0xff]
  %v1252 = vld [vmem:[%s105 + $0xf8] sm:$0xff]
  %v1253 = vld [vmem:[%s105 + $0x100] sm:$0xff]
  %v1254 = vld [vmem:[%s105 + $0x108] sm:$0xff]
  %v1255 = vld [vmem:[%s105 + $0x110] sm:$0xff]
  %v1256 = vld [vmem:[%s105 + $0x118] sm:$0xff]
  %v1257 = vld [vmem:[%s105 + $0x120] sm:$0xff]
  %v1258 = vld [vmem:[%s105 + $0x128] sm:$0xff]
  %v1259 = vld [vmem:[%s105 + $0x130] sm:$0xff]
  %v1260 = vld [vmem:[%s105 + $0x138] sm:$0xff]
  %v1261 = vld [vmem:[%s105 + $0x140] sm:$0xff]
  %v1262 = vld [vmem:[%s105 + $0x148] sm:$0xff]
  %v1263 = vld [vmem:[%s105 + $0x150] sm:$0xff]
  %v1264 = vld [vmem:[%s105 + $0x158] sm:$0xff]
  %v1265 = vpack.c.bf16 %v1235, %v1233
  %v1266 = vpack.c.bf16 %v1236, %v1234
  %v1267 = vpack.c.bf16 %v1239, %v1237
  %v1268 = vpack.c.bf16 %v1240, %v1238
  %v1269 = vpack.c.bf16 %v1243, %v1241
  %v1270 = vpack.c.bf16 %v1244, %v1242
  %v1271 = vpack.c.bf16 %v1247, %v1245
  %v1272 = vpack.c.bf16 %v1248, %v1246
  %v1273 = vpack.c.bf16 %v1251, %v1249
  %v1274 = vpack.c.bf16 %v1252, %v1250
  %v1275 = vpack.c.bf16 %v1255, %v1253
  %v1276 = vpack.c.bf16 %v1256, %v1254
  %v1277 = vpack.c.bf16 %v1259, %v1257
  %v1278 = vpack.c.bf16 %v1260, %v1258
  %v1279 = vpack.c.bf16 %v1263, %v1261
  %v1280 = vpack.c.bf16 %v1264, %v1262
  %s1281 = scalar_lea.vmem %s1, 768
  %v1282 = vld [vmem:[%s1281] sm:$0xff]
  %v1283 = vld [vmem:[%s1281 + $0x8] sm:$0xff]
  %v1284 = vld [vmem:[%s1281 + $0x10] sm:$0xff]
  %v1285 = vld [vmem:[%s1281 + $0x18] sm:$0xff]
  %v1286 = vld [vmem:[%s1281 + $0x20] sm:$0xff]
  %v1287 = vld [vmem:[%s1281 + $0x28] sm:$0xff]
  %v1288 = vld [vmem:[%s1281 + $0x30] sm:$0xff]
  %v1289 = vld [vmem:[%s1281 + $0x38] sm:$0xff]
  %v1290 = vld [vmem:[%s1281 + $0x40] sm:$0xff]
  %v1291 = vld [vmem:[%s1281 + $0x48] sm:$0xff]
  %v1292 = vld [vmem:[%s1281 + $0x50] sm:$0xff]
  %v1293 = vld [vmem:[%s1281 + $0x58] sm:$0xff]
  %v1294 = vld [vmem:[%s1281 + $0x60] sm:$0xff]
  %v1295 = vld [vmem:[%s1281 + $0x68] sm:$0xff]
  %v1296 = vld [vmem:[%s1281 + $0x70] sm:$0xff]
  %v1297 = vld [vmem:[%s1281 + $0x78] sm:$0xff]
  %v1298 = vld [vmem:[%s1281 + $0x80] sm:$0xff]
  %v1299 = vld [vmem:[%s1281 + $0x88] sm:$0xff]
  %v1300 = vld [vmem:[%s1281 + $0x90] sm:$0xff]
  %v1301 = vld [vmem:[%s1281 + $0x98] sm:$0xff]
  %v1302 = vld [vmem:[%s1281 + $0xa0] sm:$0xff]
  %v1303 = vld [vmem:[%s1281 + $0xa8] sm:$0xff]
  %v1304 = vld [vmem:[%s1281 + $0xb0] sm:$0xff]
  %v1305 = vld [vmem:[%s1281 + $0xb8] sm:$0xff]
  %v1306 = vld [vmem:[%s1281 + $0xc0] sm:$0xff]
  %v1307 = vld [vmem:[%s1281 + $0xc8] sm:$0xff]
  %v1308 = vld [vmem:[%s1281 + $0xd0] sm:$0xff]
  %v1309 = vld [vmem:[%s1281 + $0xd8] sm:$0xff]
  %v1310 = vld [vmem:[%s1281 + $0xe0] sm:$0xff]
  %v1311 = vld [vmem:[%s1281 + $0xe8] sm:$0xff]
  %v1312 = vld [vmem:[%s1281 + $0xf0] sm:$0xff]
  %v1313 = vld [vmem:[%s1281 + $0xf8] sm:$0xff]
  %v1346 = vunpack.c.l.b16 %v1282
  %v1347 = vunpack.c.h.b16 %v1282
  %v1348 = vunpack.c.l.b16 %v1283
  %v1349 = vunpack.c.h.b16 %v1283
  %v1350 = vunpack.c.l.b16 %v1284
  %v1351 = vunpack.c.h.b16 %v1284
  %v1352 = vunpack.c.l.b16 %v1285
  %v1353 = vunpack.c.h.b16 %v1285
  %v1354 = vunpack.c.l.b16 %v1286
  %v1355 = vunpack.c.h.b16 %v1286
  %v1356 = vunpack.c.l.b16 %v1287
  %v1357 = vunpack.c.h.b16 %v1287
  %v1358 = vunpack.c.l.b16 %v1288
  %v1359 = vunpack.c.h.b16 %v1288
  %v1360 = vunpack.c.l.b16 %v1289
  %v1361 = vunpack.c.h.b16 %v1289
  %v1362 = vunpack.c.l.b16 %v1290
  %v1363 = vunpack.c.h.b16 %v1290
  %v1364 = vunpack.c.l.b16 %v1291
  %v1365 = vunpack.c.h.b16 %v1291
  %v1366 = vunpack.c.l.b16 %v1292
  %v1367 = vunpack.c.h.b16 %v1292
  %v1368 = vunpack.c.l.b16 %v1293
  %v1369 = vunpack.c.h.b16 %v1293
  %v1370 = vunpack.c.l.b16 %v1294
  %v1371 = vunpack.c.h.b16 %v1294
  %v1372 = vunpack.c.l.b16 %v1295
  %v1373 = vunpack.c.h.b16 %v1295
  %v1374 = vunpack.c.l.b16 %v1296
  %v1375 = vunpack.c.h.b16 %v1296
  %v1376 = vunpack.c.l.b16 %v1297
  %v1377 = vunpack.c.h.b16 %v1297
  %v1378 = vunpack.c.l.b16 %v1298
  %v1379 = vunpack.c.h.b16 %v1298
  %v1380 = vunpack.c.l.b16 %v1299
  %v1381 = vunpack.c.h.b16 %v1299
  %v1382 = vunpack.c.l.b16 %v1300
  %v1383 = vunpack.c.h.b16 %v1300
  %v1384 = vunpack.c.l.b16 %v1301
  %v1385 = vunpack.c.h.b16 %v1301
  %v1386 = vunpack.c.l.b16 %v1302
  %v1387 = vunpack.c.h.b16 %v1302
  %v1388 = vunpack.c.l.b16 %v1303
  %v1389 = vunpack.c.h.b16 %v1303
  %v1390 = vunpack.c.l.b16 %v1304
  %v1391 = vunpack.c.h.b16 %v1304
  %v1392 = vunpack.c.l.b16 %v1305
  %v1393 = vunpack.c.h.b16 %v1305
  %v1394 = vunpack.c.l.b16 %v1306
  %v1395 = vunpack.c.h.b16 %v1306
  %v1396 = vunpack.c.l.b16 %v1307
  %v1397 = vunpack.c.h.b16 %v1307
  %v1398 = vunpack.c.l.b16 %v1308
  %v1399 = vunpack.c.h.b16 %v1308
  %v1400 = vunpack.c.l.b16 %v1309
  %v1401 = vunpack.c.h.b16 %v1309
  %v1402 = vunpack.c.l.b16 %v1310
  %v1403 = vunpack.c.h.b16 %v1310
  %v1404 = vunpack.c.l.b16 %v1311
  %v1405 = vunpack.c.h.b16 %v1311
  %v1406 = vunpack.c.l.b16 %v1312
  %v1407 = vunpack.c.h.b16 %v1312
  %v1408 = vunpack.c.l.b16 %v1313
  %v1409 = vunpack.c.h.b16 %v1313
  %v1410 = vpack.c.b16 %v1348, %v1346
  %v1411 = vpack.c.b16 %v1349, %v1347
  %v1412 = vpack.c.b16 %v1352, %v1350
  %v1413 = vpack.c.b16 %v1353, %v1351
  %v1414 = vpack.c.b16 %v1356, %v1354
  %v1415 = vpack.c.b16 %v1357, %v1355
  %v1416 = vpack.c.b16 %v1360, %v1358
  %v1417 = vpack.c.b16 %v1361, %v1359
  %v1418 = vpack.c.b16 %v1364, %v1362
  %v1419 = vpack.c.b16 %v1365, %v1363
  %v1420 = vpack.c.b16 %v1368, %v1366
  %v1421 = vpack.c.b16 %v1369, %v1367
  %v1422 = vpack.c.b16 %v1372, %v1370
  %v1423 = vpack.c.b16 %v1373, %v1371
  %v1424 = vpack.c.b16 %v1376, %v1374
  %v1425 = vpack.c.b16 %v1377, %v1375
  %v1426 = vpack.c.b16 %v1380, %v1378
  %v1427 = vpack.c.b16 %v1381, %v1379
  %v1428 = vpack.c.b16 %v1384, %v1382
  %v1429 = vpack.c.b16 %v1385, %v1383
  %v1430 = vpack.c.b16 %v1388, %v1386
  %v1431 = vpack.c.b16 %v1389, %v1387
  %v1432 = vpack.c.b16 %v1392, %v1390
  %v1433 = vpack.c.b16 %v1393, %v1391
  %v1434 = vpack.c.b16 %v1396, %v1394
  %v1435 = vpack.c.b16 %v1397, %v1395
  %v1436 = vpack.c.b16 %v1400, %v1398
  %v1437 = vpack.c.b16 %v1401, %v1399
  %v1438 = vpack.c.b16 %v1404, %v1402
  %v1439 = vpack.c.b16 %v1405, %v1403
  %v1440 = vpack.c.b16 %v1408, %v1406
  %v1441 = vpack.c.b16 %v1409, %v1407
  %1474 = vmatprep.subr.bf16.mxu0 %v1411
  %1475 = vmatpush1.bf16.msra.mxu0 %v1410
  %1476 = vmatprep.subr.bf16.mxu0 %v1413
  %1477 = vmatpush1.bf16.msra.mxu0 %v1412
  %1478 = vmatprep.subr.bf16.mxu0 %v1415
  %1479 = vmatpush1.bf16.msra.mxu0 %v1414
  %1480 = vmatprep.subr.bf16.mxu0 %v1417
  %1481 = vmatpush1.bf16.msra.mxu0 %v1416
  %1482 = vmatprep.subr.bf16.mxu0 %v1419
  %1483 = vmatpush1.bf16.msra.mxu0 %v1418
  %1484 = vmatprep.subr.bf16.mxu0 %v1421
  %1485 = vmatpush1.bf16.msra.mxu0 %v1420
  %1486 = vmatprep.subr.bf16.mxu0 %v1423
  %1487 = vmatpush1.bf16.msra.mxu0 %v1422
  %1488 = vmatprep.subr.bf16.mxu0 %v1425
  %1489 = vmatpush1.bf16.msra.mxu0 %v1424
  %1490 = vmatprep.subr.bf16.mxu0 %v1427
  %1491 = vmatpush1.bf16.msra.mxu0 %v1426
  %1492 = vmatprep.subr.bf16.mxu0 %v1429
  %1493 = vmatpush1.bf16.msra.mxu0 %v1428
  %1494 = vmatprep.subr.bf16.mxu0 %v1431
  %1495 = vmatpush1.bf16.msra.mxu0 %v1430
  %1496 = vmatprep.subr.bf16.mxu0 %v1433
  %1497 = vmatpush1.bf16.msra.mxu0 %v1432
  %1498 = vmatprep.subr.bf16.mxu0 %v1435
  %1499 = vmatpush1.bf16.msra.mxu0 %v1434
  %1500 = vmatprep.subr.bf16.mxu0 %v1437
  %1501 = vmatpush1.bf16.msra.mxu0 %v1436
  %1502 = vmatprep.subr.bf16.mxu0 %v1439
  %1503 = vmatpush1.bf16.msra.mxu0 %v1438
  %1504 = vmatprep.subr.bf16.mxu0 %v1441
  %1505 = vmatpush1.bf16.msra.mxu0 %v1440
  %1506 = vmatprep.mubr.bf16.mxu0 %v1266
  %1507 = vmatmul.mubr.bf16.gmra.mrb[0].mxu0 %v1265
  %v1508 = vpop.f32.mrb[0].mxu0
  %v1509 = vadd.f32 0.0, %v1508
  %v1510 = vpop.f32.mrb[0].mxu0
  %v1511 = vadd.f32 0.0, %v1510
  %v1512 = vpop.f32.mrb[0].mxu0
  %v1513 = vadd.f32 0.0, %v1512
  %v1514 = vpop.f32.mrb[0].mxu0
  %v1515 = vadd.f32 0.0, %v1514
  %1516 = vmatprep.mubr.bf16.mxu0 %v1268
  %1517 = vmatmul.mubr.bf16.gmra.mrb[0].mxu0 %v1267
  %v1518 = vpop.f32.mrb[0].mxu0
  %v1519 = vadd.f32 0.0, %v1518
  %v1520 = vpop.f32.mrb[0].mxu0
  %v1521 = vadd.f32 0.0, %v1520
  %v1522 = vpop.f32.mrb[0].mxu0
  %v1523 = vadd.f32 0.0, %v1522
  %v1524 = vpop.f32.mrb[0].mxu0
  %v1525 = vadd.f32 0.0, %v1524
  %1526 = vmatprep.mubr.bf16.mxu0 %v1270
  %1527 = vmatmul.mubr.bf16.gmra.mrb[0].mxu0 %v1269
  %v1528 = vpop.f32.mrb[0].mxu0
  %v1529 = vadd.f32 0.0, %v1528
  %v1530 = vpop.f32.mrb[0].mxu0
  %v1531 = vadd.f32 0.0, %v1530
  %v1532 = vpop.f32.mrb[0].mxu0
  %v1533 = vadd.f32 0.0, %v1532
  %v1534 = vpop.f32.mrb[0].mxu0
  %v1535 = vadd.f32 0.0, %v1534
  %1536 = vmatprep.mubr.bf16.mxu0 %v1272
  %1537 = vmatmul.mubr.bf16.gmra.mrb[0].mxu0 %v1271
  %v1538 = vpop.f32.mrb[0].mxu0
  %v1539 = vadd.f32 0.0, %v1538
  %v1540 = vpop.f32.mrb[0].mxu0
  %v1541 = vadd.f32 0.0, %v1540
  %v1542 = vpop.f32.mrb[0].mxu0
  %v1543 = vadd.f32 0.0, %v1542
  %v1544 = vpop.f32.mrb[0].mxu0
  %v1545 = vadd.f32 0.0, %v1544
  %1546 = vmatprep.mubr.bf16.mxu0 %v1274
  %1547 = vmatmul.mubr.bf16.gmra.mrb[0].mxu0 %v1273
  %v1548 = vpop.f32.mrb[0].mxu0
  %v1549 = vadd.f32 0.0, %v1548
  %v1550 = vpop.f32.mrb[0].mxu0
  %v1551 = vadd.f32 0.0, %v1550
  %v1552 = vpop.f32.mrb[0].mxu0
  %v1553 = vadd.f32 0.0, %v1552
  %v1554 = vpop.f32.mrb[0].mxu0
  %v1555 = vadd.f32 0.0, %v1554
  %1556 = vmatprep.mubr.bf16.mxu0 %v1276
  %1557 = vmatmul.mubr.bf16.gmra.mrb[0].mxu0 %v1275
  %v1558 = vpop.f32.mrb[0].mxu0
  %v1559 = vadd.f32 0.0, %v1558
  %v1560 = vpop.f32.mrb[0].mxu0
  %v1561 = vadd.f32 0.0, %v1560
  %v1562 = vpop.f32.mrb[0].mxu0
  %v1563 = vadd.f32 0.0, %v1562
  %v1564 = vpop.f32.mrb[0].mxu0
  %v1565 = vadd.f32 0.0, %v1564
  %1566 = vmatprep.mubr.bf16.mxu0 %v1278
  %1567 = vmatmul.mubr.bf16.gmra.mrb[0].mxu0 %v1277
  %v1568 = vpop.f32.mrb[0].mxu0
  %v1569 = vadd.f32 0.0, %v1568
  %v1570 = vpop.f32.mrb[0].mxu0
  %v1571 = vadd.f32 0.0, %v1570
  %v1572 = vpop.f32.mrb[0].mxu0
  %v1573 = vadd.f32 0.0, %v1572
  %v1574 = vpop.f32.mrb[0].mxu0
  %v1575 = vadd.f32 0.0, %v1574
  %1576 = vmatprep.mubr.bf16.mxu0 %v1280
  %1577 = vmatmul.mubr.bf16.gmra.mrb[0].mxu0 %v1279
  %v1578 = vpop.f32.mrb[0].mxu0
  %v1579 = vadd.f32 0.0, %v1578
  %v1580 = vpop.f32.mrb[0].mxu0
  %v1581 = vadd.f32 0.0, %v1580
  %v1582 = vpop.f32.mrb[0].mxu0
  %v1583 = vadd.f32 0.0, %v1582
  %v1584 = vpop.f32.mrb[0].mxu0
  %v1585 = vadd.f32 0.0, %v1584
  %1586 = vdwg.mxu0
  %v1587 = vadd.f32 %v1201, %v1509
  %v1588 = vadd.f32 %v1202, %v1511
  %v1589 = vadd.f32 %v1203, %v1513
  %v1590 = vadd.f32 %v1204, %v1515
  %v1591 = vadd.f32 %v1205, %v1519
  %v1592 = vadd.f32 %v1206, %v1521
  %v1593 = vadd.f32 %v1207, %v1523
  %v1594 = vadd.f32 %v1208, %v1525
  %v1595 = vadd.f32 %v1209, %v1529
  %v1596 = vadd.f32 %v1210, %v1531
  %v1597 = vadd.f32 %v1211, %v1533
  %v1598 = vadd.f32 %v1212, %v1535
  %v1599 = vadd.f32 %v1213, %v1539
  %v1600 = vadd.f32 %v1214, %v1541
  %v1601 = vadd.f32 %v1215, %v1543
  %v1602 = vadd.f32 %v1216, %v1545
  %v1603 = vadd.f32 %v1217, %v1549
  %v1604 = vadd.f32 %v1218, %v1551
  %v1605 = vadd.f32 %v1219, %v1553
  %v1606 = vadd.f32 %v1220, %v1555
  %v1607 = vadd.f32 %v1221, %v1559
  %v1608 = vadd.f32 %v1222, %v1561
  %v1609 = vadd.f32 %v1223, %v1563
  %v1610 = vadd.f32 %v1224, %v1565
  %v1611 = vadd.f32 %v1225, %v1569
  %v1612 = vadd.f32 %v1226, %v1571
  %v1613 = vadd.f32 %v1227, %v1573
  %v1614 = vadd.f32 %v1228, %v1575
  %v1615 = vadd.f32 %v1229, %v1579
  %v1616 = vadd.f32 %v1230, %v1581
  %v1617 = vadd.f32 %v1231, %v1583
  %v1618 = vadd.f32 %v1232, %v1585
  %s1619 = scalar_lea.vmem [#allocation2], 64
  %v1620 = vld [vmem:[%s1619] sm:$0xff]
  %v1621 = vld [vmem:[%s1619 + $0x8] sm:$0xff]
  %v1622 = vld [vmem:[%s1619 + $0x10] sm:$0xff]
  %v1623 = vld [vmem:[%s1619 + $0x18] sm:$0xff]
  %v1624 = vld [vmem:[%s1619 + $0x20] sm:$0xff]
  %v1625 = vld [vmem:[%s1619 + $0x28] sm:$0xff]
  %v1626 = vld [vmem:[%s1619 + $0x30] sm:$0xff]
  %v1627 = vld [vmem:[%s1619 + $0x38] sm:$0xff]
  %v1628 = vld [vmem:[%s1619 + $0x40] sm:$0xff]
  %v1629 = vld [vmem:[%s1619 + $0x48] sm:$0xff]
  %v1630 = vld [vmem:[%s1619 + $0x50] sm:$0xff]
  %v1631 = vld [vmem:[%s1619 + $0x58] sm:$0xff]
  %v1632 = vld [vmem:[%s1619 + $0x60] sm:$0xff]
  %v1633 = vld [vmem:[%s1619 + $0x68] sm:$0xff]
  %v1634 = vld [vmem:[%s1619 + $0x70] sm:$0xff]
  %v1635 = vld [vmem:[%s1619 + $0x78] sm:$0xff]
  %v1636 = vld [vmem:[%s1619 + $0xe0] sm:$0xff]
  %v1637 = vld [vmem:[%s1619 + $0xe8] sm:$0xff]
  %v1638 = vld [vmem:[%s1619 + $0xf0] sm:$0xff]
  %v1639 = vld [vmem:[%s1619 + $0xf8] sm:$0xff]
  %v1640 = vld [vmem:[%s1619 + $0x100] sm:$0xff]
  %v1641 = vld [vmem:[%s1619 + $0x108] sm:$0xff]
  %v1642 = vld [vmem:[%s1619 + $0x110] sm:$0xff]
  %v1643 = vld [vmem:[%s1619 + $0x118] sm:$0xff]
  %v1644 = vld [vmem:[%s1619 + $0x120] sm:$0xff]
  %v1645 = vld [vmem:[%s1619 + $0x128] sm:$0xff]
  %v1646 = vld [vmem:[%s1619 + $0x130] sm:$0xff]
  %v1647 = vld [vmem:[%s1619 + $0x138] sm:$0xff]
  %v1648 = vld [vmem:[%s1619 + $0x140] sm:$0xff]
  %v1649 = vld [vmem:[%s1619 + $0x148] sm:$0xff]
  %v1650 = vld [vmem:[%s1619 + $0x150] sm:$0xff]
  %v1651 = vld [vmem:[%s1619 + $0x158] sm:$0xff]
  %v1652 = vpack.c.bf16 %v1622, %v1620
  %v1653 = vpack.c.bf16 %v1623, %v1621
  %v1654 = vpack.c.bf16 %v1626, %v1624
  %v1655 = vpack.c.bf16 %v1627, %v1625
  %v1656 = vpack.c.bf16 %v1630, %v1628
  %v1657 = vpack.c.bf16 %v1631, %v1629
  %v1658 = vpack.c.bf16 %v1634, %v1632
  %v1659 = vpack.c.bf16 %v1635, %v1633
  %v1660 = vpack.c.bf16 %v1638, %v1636
  %v1661 = vpack.c.bf16 %v1639, %v1637
  %v1662 = vpack.c.bf16 %v1642, %v1640
  %v1663 = vpack.c.bf16 %v1643, %v1641
  %v1664 = vpack.c.bf16 %v1646, %v1644
  %v1665 = vpack.c.bf16 %v1647, %v1645
  %v1666 = vpack.c.bf16 %v1650, %v1648
  %v1667 = vpack.c.bf16 %v1651, %v1649
  %s1668 = scalar_lea.vmem %s1, 1024
  %v1669 = vld [vmem:[%s1668] sm:$0xff]
  %v1670 = vld [vmem:[%s1668 + $0x8] sm:$0xff]
  %v1671 = vld [vmem:[%s1668 + $0x10] sm:$0xff]
  %v1672 = vld [vmem:[%s1668 + $0x18] sm:$0xff]
  %v1673 = vld [vmem:[%s1668 + $0x20] sm:$0xff]
  %v1674 = vld [vmem:[%s1668 + $0x28] sm:$0xff]
  %v1675 = vld [vmem:[%s1668 + $0x30] sm:$0xff]
  %v1676 = vld [vmem:[%s1668 + $0x38] sm:$0xff]
  %v1677 = vld [vmem:[%s1668 + $0x40] sm:$0xff]
  %v1678 = vld [vmem:[%s1668 + $0x48] sm:$0xff]
  %v1679 = vld [vmem:[%s1668 + $0x50] sm:$0xff]
  %v1680 = vld [vmem:[%s1668 + $0x58] sm:$0xff]
  %v1681 = vld [vmem:[%s1668 + $0x60] sm:$0xff]
  %v1682 = vld [vmem:[%s1668 + $0x68] sm:$0xff]
  %v1683 = vld [vmem:[%s1668 + $0x70] sm:$0xff]
  %v1684 = vld [vmem:[%s1668 + $0x78] sm:$0xff]
  %v1685 = vld [vmem:[%s1668 + $0x80] sm:$0xff]
  %v1686 = vld [vmem:[%s1668 + $0x88] sm:$0xff]
  %v1687 = vld [vmem:[%s1668 + $0x90] sm:$0xff]
  %v1688 = vld [vmem:[%s1668 + $0x98] sm:$0xff]
  %v1689 = vld [vmem:[%s1668 + $0xa0] sm:$0xff]
  %v1690 = vld [vmem:[%s1668 + $0xa8] sm:$0xff]
  %v1691 = vld [vmem:[%s1668 + $0xb0] sm:$0xff]
  %v1692 = vld [vmem:[%s1668 + $0xb8] sm:$0xff]
  %v1693 = vld [vmem:[%s1668 + $0xc0] sm:$0xff]
  %v1694 = vld [vmem:[%s1668 + $0xc8] sm:$0xff]
  %v1695 = vld [vmem:[%s1668 + $0xd0] sm:$0xff]
  %v1696 = vld [vmem:[%s1668 + $0xd8] sm:$0xff]
  %v1697 = vld [vmem:[%s1668 + $0xe0] sm:$0xff]
  %v1698 = vld [vmem:[%s1668 + $0xe8] sm:$0xff]
  %v1699 = vld [vmem:[%s1668 + $0xf0] sm:$0xff]
  %v1700 = vld [vmem:[%s1668 + $0xf8] sm:$0xff]
  %v1733 = vunpack.c.l.b16 %v1669
  %v1734 = vunpack.c.h.b16 %v1669
  %v1735 = vunpack.c.l.b16 %v1670
  %v1736 = vunpack.c.h.b16 %v1670
  %v1737 = vunpack.c.l.b16 %v1671
  %v1738 = vunpack.c.h.b16 %v1671
  %v1739 = vunpack.c.l.b16 %v1672
  %v1740 = vunpack.c.h.b16 %v1672
  %v1741 = vunpack.c.l.b16 %v1673
  %v1742 = vunpack.c.h.b16 %v1673
  %v1743 = vunpack.c.l.b16 %v1674
  %v1744 = vunpack.c.h.b16 %v1674
  %v1745 = vunpack.c.l.b16 %v1675
  %v1746 = vunpack.c.h.b16 %v1675
  %v1747 = vunpack.c.l.b16 %v1676
  %v1748 = vunpack.c.h.b16 %v1676
  %v1749 = vunpack.c.l.b16 %v1677
  %v1750 = vunpack.c.h.b16 %v1677
  %v1751 = vunpack.c.l.b16 %v1678
  %v1752 = vunpack.c.h.b16 %v1678
  %v1753 = vunpack.c.l.b16 %v1679
  %v1754 = vunpack.c.h.b16 %v1679
  %v1755 = vunpack.c.l.b16 %v1680
  %v1756 = vunpack.c.h.b16 %v1680
  %v1757 = vunpack.c.l.b16 %v1681
  %v1758 = vunpack.c.h.b16 %v1681
  %v1759 = vunpack.c.l.b16 %v1682
  %v1760 = vunpack.c.h.b16 %v1682
  %v1761 = vunpack.c.l.b16 %v1683
  %v1762 = vunpack.c.h.b16 %v1683
  %v1763 = vunpack.c.l.b16 %v1684
  %v1764 = vunpack.c.h.b16 %v1684
  %v1765 = vunpack.c.l.b16 %v1685
  %v1766 = vunpack.c.h.b16 %v1685
  %v1767 = vunpack.c.l.b16 %v1686
  %v1768 = vunpack.c.h.b16 %v1686
  %v1769 = vunpack.c.l.b16 %v1687
  %v1770 = vunpack.c.h.b16 %v1687
  %v1771 = vunpack.c.l.b16 %v1688
  %v1772 = vunpack.c.h.b16 %v1688
  %v1773 = vunpack.c.l.b16 %v1689
  %v1774 = vunpack.c.h.b16 %v1689
  %v1775 = vunpack.c.l.b16 %v1690
  %v1776 = vunpack.c.h.b16 %v1690
  %v1777 = vunpack.c.l.b16 %v1691
  %v1778 = vunpack.c.h.b16 %v1691
  %v1779 = vunpack.c.l.b16 %v1692
  %v1780 = vunpack.c.h.b16 %v1692
  %v1781 = vunpack.c.l.b16 %v1693
  %v1782 = vunpack.c.h.b16 %v1693
  %v1783 = vunpack.c.l.b16 %v1694
  %v1784 = vunpack.c.h.b16 %v1694
  %v1785 = vunpack.c.l.b16 %v1695
  %v1786 = vunpack.c.h.b16 %v1695
  %v1787 = vunpack.c.l.b16 %v1696
  %v1788 = vunpack.c.h.b16 %v1696
  %v1789 = vunpack.c.l.b16 %v1697
  %v1790 = vunpack.c.h.b16 %v1697
  %v1791 = vunpack.c.l.b16 %v1698
  %v1792 = vunpack.c.h.b16 %v1698
  %v1793 = vunpack.c.l.b16 %v1699
  %v1794 = vunpack.c.h.b16 %v1699
  %v1795 = vunpack.c.l.b16 %v1700
  %v1796 = vunpack.c.h.b16 %v1700
  %v1797 = vpack.c.b16 %v1735, %v1733
  %v1798 = vpack.c.b16 %v1736, %v1734
  %v1799 = vpack.c.b16 %v1739, %v1737
  %v1800 = vpack.c.b16 %v1740, %v1738
  %v1801 = vpack.c.b16 %v1743, %v1741
  %v1802 = vpack.c.b16 %v1744, %v1742
  %v1803 = vpack.c.b16 %v1747, %v1745
  %v1804 = vpack.c.b16 %v1748, %v1746
  %v1805 = vpack.c.b16 %v1751, %v1749
  %v1806 = vpack.c.b16 %v1752, %v1750
  %v1807 = vpack.c.b16 %v1755, %v1753
  %v1808 = vpack.c.b16 %v1756, %v1754
  %v1809 = vpack.c.b16 %v1759, %v1757
  %v1810 = vpack.c.b16 %v1760, %v1758
  %v1811 = vpack.c.b16 %v1763, %v1761
  %v1812 = vpack.c.b16 %v1764, %v1762
  %v1813 = vpack.c.b16 %v1767, %v1765
  %v1814 = vpack.c.b16 %v1768, %v1766
  %v1815 = vpack.c.b16 %v1771, %v1769
  %v1816 = vpack.c.b16 %v1772, %v1770
  %v1817 = vpack.c.b16 %v1775, %v1773
  %v1818 = vpack.c.b16 %v1776, %v1774
  %v1819 = vpack.c.b16 %v1779, %v1777
  %v1820 = vpack.c.b16 %v1780, %v1778
  %v1821 = vpack.c.b16 %v1783, %v1781
  %v1822 = vpack.c.b16 %v1784, %v1782
  %v1823 = vpack.c.b16 %v1787, %v1785
  %v1824 = vpack.c.b16 %v1788, %v1786
  %v1825 = vpack.c.b16 %v1791, %v1789
  %v1826 = vpack.c.b16 %v1792, %v1790
  %v1827 = vpack.c.b16 %v1795, %v1793
  %v1828 = vpack.c.b16 %v1796, %v1794
  %1861 = vmatprep.subr.bf16.mxu0 %v1798
  %1862 = vmatpush1.bf16.msra.mxu0 %v1797
  %1863 = vmatprep.subr.bf16.mxu0 %v1800
  %1864 = vmatpush1.bf16.msra.mxu0 %v1799
  %1865 = vmatprep.subr.bf16.mxu0 %v1802
  %1866 = vmatpush1.bf16.msra.mxu0 %v1801
  %1867 = vmatprep.subr.bf16.mxu0 %v1804
  %1868 = vmatpush1.bf16.msra.mxu0 %v1803
  %1869 = vmatprep.subr.bf16.mxu0 %v1806
  %1870 = vmatpush1.bf16.msra.mxu0 %v1805
  %1871 = vmatprep.subr.bf16.mxu0 %v1808
  %1872 = vmatpush1.bf16.msra.mxu0 %v1807
  %1873 = vmatprep.subr.bf16.mxu0 %v1810
  %1874 = vmatpush1.bf16.msra.mxu0 %v1809
  %1875 = vmatprep.subr.bf16.mxu0 %v1812
  %1876 = vmatpush1.bf16.msra.mxu0 %v1811
  %1877 = vmatprep.subr.bf16.mxu0 %v1814
  %1878 = vmatpush1.bf16.msra.mxu0 %v1813
  %1879 = vmatprep.subr.bf16.mxu0 %v1816
  %1880 = vmatpush1.bf16.msra.mxu0 %v1815
  %1881 = vmatprep.subr.bf16.mxu0 %v1818
  %1882 = vmatpush1.bf16.msra.mxu0 %v1817
  %1883 = vmatprep.subr.bf16.mxu0 %v1820
  %1884 = vmatpush1.bf16.msra.mxu0 %v1819
  %1885 = vmatprep.subr.bf16.mxu0 %v1822
  %1886 = vmatpush1.bf16.msra.mxu0 %v1821
  %1887 = vmatprep.subr.bf16.mxu0 %v1824
  %1888 = vmatpush1.bf16.msra.mxu0 %v1823
  %1889 = vmatprep.subr.bf16.mxu0 %v1826
  %1890 = vmatpush1.bf16.msra.mxu0 %v1825
  %1891 = vmatprep.subr.bf16.mxu0 %v1828
  %1892 = vmatpush1.bf16.msra.mxu0 %v1827
  %1893 = vmatprep.mubr.bf16.mxu0 %v1653
  %1894 = vmatmul.mubr.bf16.gmra.mrb[0].mxu0 %v1652
  %v1895 = vpop.f32.mrb[0].mxu0
  %v1896 = vadd.f32 0.0, %v1895
  %v1897 = vpop.f32.mrb[0].mxu0
  %v1898 = vadd.f32 0.0, %v1897
  %v1899 = vpop.f32.mrb[0].mxu0
  %v1900 = vadd.f32 0.0, %v1899
  %v1901 = vpop.f32.mrb[0].mxu0
  %v1902 = vadd.f32 0.0, %v1901
  %1903 = vmatprep.mubr.bf16.mxu0 %v1655
  %1904 = vmatmul.mubr.bf16.gmra.mrb[0].mxu0 %v1654
  %v1905 = vpop.f32.mrb[0].mxu0
  %v1906 = vadd.f32 0.0, %v1905
  %v1907 = vpop.f32.mrb[0].mxu0
  %v1908 = vadd.f32 0.0, %v1907
  %v1909 = vpop.f32.mrb[0].mxu0
  %v1910 = vadd.f32 0.0, %v1909
  %v1911 = vpop.f32.mrb[0].mxu0
  %v1912 = vadd.f32 0.0, %v1911
  %1913 = vmatprep.mubr.bf16.mxu0 %v1657
  %1914 = vmatmul.mubr.bf16.gmra.mrb[0].mxu0 %v1656
  %v1915 = vpop.f32.mrb[0].mxu0
  %v1916 = vadd.f32 0.0, %v1915
  %v1917 = vpop.f32.mrb[0].mxu0
  %v1918 = vadd.f32 0.0, %v1917
  %v1919 = vpop.f32.mrb[0].mxu0
  %v1920 = vadd.f32 0.0, %v1919
  %v1921 = vpop.f32.mrb[0].mxu0
  %v1922 = vadd.f32 0.0, %v1921
  %1923 = vmatprep.mubr.bf16.mxu0 %v1659
  %1924 = vmatmul.mubr.bf16.gmra.mrb[0].mxu0 %v1658
  %v1925 = vpop.f32.mrb[0].mxu0
  %v1926 = vadd.f32 0.0, %v1925
  %v1927 = vpop.f32.mrb[0].mxu0
  %v1928 = vadd.f32 0.0, %v1927
  %v1929 = vpop.f32.mrb[0].mxu0
  %v1930 = vadd.f32 0.0, %v1929
  %v1931 = vpop.f32.mrb[0].mxu0
  %v1932 = vadd.f32 0.0, %v1931
  %1933 = vmatprep.mubr.bf16.mxu0 %v1661
  %1934 = vmatmul.mubr.bf16.gmra.mrb[0].mxu0 %v1660
  %v1935 = vpop.f32.mrb[0].mxu0
  %v1936 = vadd.f32 0.0, %v1935
  %v1937 = vpop.f32.mrb[0].mxu0
  %v1938 = vadd.f32 0.0, %v1937
  %v1939 = vpop.f32.mrb[0].mxu0
  %v1940 = vadd.f32 0.0, %v1939
  %v1941 = vpop.f32.mrb[0].mxu0
  %v1942 = vadd.f32 0.0, %v1941
  %1943 = vmatprep.mubr.bf16.mxu0 %v1663
  %1944 = vmatmul.mubr.bf16.gmra.mrb[0].mxu0 %v1662
  %v1945 = vpop.f32.mrb[0].mxu0
  %v1946 = vadd.f32 0.0, %v1945
  %v1947 = vpop.f32.mrb[0].mxu0
  %v1948 = vadd.f32 0.0, %v1947
  %v1949 = vpop.f32.mrb[0].mxu0
  %v1950 = vadd.f32 0.0, %v1949
  %v1951 = vpop.f32.mrb[0].mxu0
  %v1952 = vadd.f32 0.0, %v1951
  %1953 = vmatprep.mubr.bf16.mxu0 %v1665
  %1954 = vmatmul.mubr.bf16.gmra.mrb[0].mxu0 %v1664
  %v1955 = vpop.f32.mrb[0].mxu0
  %v1956 = vadd.f32 0.0, %v1955
  %v1957 = vpop.f32.mrb[0].mxu0
  %v1958 = vadd.f32 0.0, %v1957
  %v1959 = vpop.f32.mrb[0].mxu0
  %v1960 = vadd.f32 0.0, %v1959
  %v1961 = vpop.f32.mrb[0].mxu0
  %v1962 = vadd.f32 0.0, %v1961
  %1963 = vmatprep.mubr.bf16.mxu0 %v1667
  %1964 = vmatmul.mubr.bf16.gmra.mrb[0].mxu0 %v1666
  %v1965 = vpop.f32.mrb[0].mxu0
  %v1966 = vadd.f32 0.0, %v1965
  %v1967 = vpop.f32.mrb[0].mxu0
  %v1968 = vadd.f32 0.0, %v1967
  %v1969 = vpop.f32.mrb[0].mxu0
  %v1970 = vadd.f32 0.0, %v1969
  %v1971 = vpop.f32.mrb[0].mxu0
  %v1972 = vadd.f32 0.0, %v1971
  %1973 = vdwg.mxu0
  %v1974 = vadd.f32 %v1587, %v1896
  %v1975 = vadd.f32 %v1588, %v1898
  %v1976 = vadd.f32 %v1589, %v1900
  %v1977 = vadd.f32 %v1590, %v1902
  %v1978 = vadd.f32 %v1591, %v1906
  %v1979 = vadd.f32 %v1592, %v1908
  %v1980 = vadd.f32 %v1593, %v1910
  %v1981 = vadd.f32 %v1594, %v1912
  %v1982 = vadd.f32 %v1595, %v1916
  %v1983 = vadd.f32 %v1596, %v1918
  %v1984 = vadd.f32 %v1597, %v1920
  %v1985 = vadd.f32 %v1598, %v1922
  %v1986 = vadd.f32 %v1599, %v1926
  %v1987 = vadd.f32 %v1600, %v1928
  %v1988 = vadd.f32 %v1601, %v1930
  %v1989 = vadd.f32 %v1602, %v1932
  %v1990 = vadd.f32 %v1603, %v1936
  %v1991 = vadd.f32 %v1604, %v1938
  %v1992 = vadd.f32 %v1605, %v1940
  %v1993 = vadd.f32 %v1606, %v1942
  %v1994 = vadd.f32 %v1607, %v1946
  %v1995 = vadd.f32 %v1608, %v1948
  %v1996 = vadd.f32 %v1609, %v1950
  %v1997 = vadd.f32 %v1610, %v1952
  %v1998 = vadd.f32 %v1611, %v1956
  %v1999 = vadd.f32 %v1612, %v1958
  %v2000 = vadd.f32 %v1613, %v1960
  %v2001 = vadd.f32 %v1614, %v1962
  %v2002 = vadd.f32 %v1615, %v1966
  %v2003 = vadd.f32 %v1616, %v1968
  %v2004 = vadd.f32 %v1617, %v1970
  %v2005 = vadd.f32 %v1618, %v1972
  %s2006 = scalar_lea.vmem [#allocation2], 80
  %v2007 = vld [vmem:[%s2006] sm:$0xff]
  %v2008 = vld [vmem:[%s2006 + $0x8] sm:$0xff]
  %v2009 = vld [vmem:[%s2006 + $0x10] sm:$0xff]
  %v2010 = vld [vmem:[%s2006 + $0x18] sm:$0xff]
  %v2011 = vld [vmem:[%s2006 + $0x20] sm:$0xff]
  %v2012 = vld [vmem:[%s2006 + $0x28] sm:$0xff]
  %v2013 = vld [vmem:[%s2006 + $0x30] sm:$0xff]
  %v2014 = vld [vmem:[%s2006 + $0x38] sm:$0xff]
  %v2015 = vld [vmem:[%s2006 + $0x40] sm:$0xff]
  %v2016 = vld [vmem:[%s2006 + $0x48] sm:$0xff]
  %v2017 = vld [vmem:[%s2006 + $0x50] sm:$0xff]
  %v2018 = vld [vmem:[%s2006 + $0x58] sm:$0xff]
  %v2019 = vld [vmem:[%s2006 + $0x60] sm:$0xff]
  %v2020 = vld [vmem:[%s2006 + $0x68] sm:$0xff]
  %v2021 = vld [vmem:[%s2006 + $0x70] sm:$0xff]
  %v2022 = vld [vmem:[%s2006 + $0x78] sm:$0xff]
  %v2023 = vld [vmem:[%s2006 + $0xe0] sm:$0xff]
  %v2024 = vld [vmem:[%s2006 + $0xe8] sm:$0xff]
  %v2025 = vld [vmem:[%s2006 + $0xf0] sm:$0xff]
  %v2026 = vld [vmem:[%s2006 + $0xf8] sm:$0xff]
  %v2027 = vld [vmem:[%s2006 + $0x100] sm:$0xff]
  %v2028 = vld [vmem:[%s2006 + $0x108] sm:$0xff]
  %v2029 = vld [vmem:[%s2006 + $0x110] sm:$0xff]
  %v2030 = vld [vmem:[%s2006 + $0x118] sm:$0xff]
  %v2031 = vld [vmem:[%s2006 + $0x120] sm:$0xff]
  %v2032 = vld [vmem:[%s2006 + $0x128] sm:$0xff]
  %v2033 = vld [vmem:[%s2006 + $0x130] sm:$0xff]
  %v2034 = vld [vmem:[%s2006 + $0x138] sm:$0xff]
  %v2035 = vld [vmem:[%s2006 + $0x140] sm:$0xff]
  %v2036 = vld [vmem:[%s2006 + $0x148] sm:$0xff]
  %v2037 = vld [vmem:[%s2006 + $0x150] sm:$0xff]
  %v2038 = vld [vmem:[%s2006 + $0x158] sm:$0xff]
  %v2039 = vpack.c.bf16 %v2009, %v2007
  %v2040 = vpack.c.bf16 %v2010, %v2008
  %v2041 = vpack.c.bf16 %v2013, %v2011
  %v2042 = vpack.c.bf16 %v2014, %v2012
  %v2043 = vpack.c.bf16 %v2017, %v2015
  %v2044 = vpack.c.bf16 %v2018, %v2016
  %v2045 = vpack.c.bf16 %v2021, %v2019
  %v2046 = vpack.c.bf16 %v2022, %v2020
  %v2047 = vpack.c.bf16 %v2025, %v2023
  %v2048 = vpack.c.bf16 %v2026, %v2024
  %v2049 = vpack.c.bf16 %v2029, %v2027
  %v2050 = vpack.c.bf16 %v2030, %v2028
  %v2051 = vpack.c.bf16 %v2033, %v2031
  %v2052 = vpack.c.bf16 %v2034, %v2032
  %v2053 = vpack.c.bf16 %v2037, %v2035
  %v2054 = vpack.c.bf16 %v2038, %v2036
  %s2055 = scalar_lea.vmem %s1, 1280
  %v2056 = vld [vmem:[%s2055] sm:$0xff]
  %v2057 = vld [vmem:[%s2055 + $0x8] sm:$0xff]
  %v2058 = vld [vmem:[%s2055 + $0x10] sm:$0xff]
  %v2059 = vld [vmem:[%s2055 + $0x18] sm:$0xff]
  %v2060 = vld [vmem:[%s2055 + $0x20] sm:$0xff]
  %v2061 = vld [vmem:[%s2055 + $0x28] sm:$0xff]
  %v2062 = vld [vmem:[%s2055 + $0x30] sm:$0xff]
  %v2063 = vld [vmem:[%s2055 + $0x38] sm:$0xff]
  %v2064 = vld [vmem:[%s2055 + $0x40] sm:$0xff]
  %v2065 = vld [vmem:[%s2055 + $0x48] sm:$0xff]
  %v2066 = vld [vmem:[%s2055 + $0x50] sm:$0xff]
  %v2067 = vld [vmem:[%s2055 + $0x58] sm:$0xff]
  %v2068 = vld [vmem:[%s2055 + $0x60] sm:$0xff]
  %v2069 = vld [vmem:[%s2055 + $0x68] sm:$0xff]
  %v2070 = vld [vmem:[%s2055 + $0x70] sm:$0xff]
  %v2071 = vld [vmem:[%s2055 + $0x78] sm:$0xff]
  %v2072 = vld [vmem:[%s2055 + $0x80] sm:$0xff]
  %v2073 = vld [vmem:[%s2055 + $0x88] sm:$0xff]
  %v2074 = vld [vmem:[%s2055 + $0x90] sm:$0xff]
  %v2075 = vld [vmem:[%s2055 + $0x98] sm:$0xff]
  %v2076 = vld [vmem:[%s2055 + $0xa0] sm:$0xff]
  %v2077 = vld [vmem:[%s2055 + $0xa8] sm:$0xff]
  %v2078 = vld [vmem:[%s2055 + $0xb0] sm:$0xff]
  %v2079 = vld [vmem:[%s2055 + $0xb8] sm:$0xff]
  %v2080 = vld [vmem:[%s2055 + $0xc0] sm:$0xff]
  %v2081 = vld [vmem:[%s2055 + $0xc8] sm:$0xff]
  %v2082 = vld [vmem:[%s2055 + $0xd0] sm:$0xff]
  %v2083 = vld [vmem:[%s2055 + $0xd8] sm:$0xff]
  %v2084 = vld [vmem:[%s2055 + $0xe0] sm:$0xff]
  %v2085 = vld [vmem:[%s2055 + $0xe8] sm:$0xff]
  %v2086 = vld [vmem:[%s2055 + $0xf0] sm:$0xff]
  %v2087 = vld [vmem:[%s2055 + $0xf8] sm:$0xff]
  %v2120 = vunpack.c.l.b16 %v2056
  %v2121 = vunpack.c.h.b16 %v2056
  %v2122 = vunpack.c.l.b16 %v2057
  %v2123 = vunpack.c.h.b16 %v2057
  %v2124 = vunpack.c.l.b16 %v2058
  %v2125 = vunpack.c.h.b16 %v2058
  %v2126 = vunpack.c.l.b16 %v2059
  %v2127 = vunpack.c.h.b16 %v2059
  %v2128 = vunpack.c.l.b16 %v2060
  %v2129 = vunpack.c.h.b16 %v2060
  %v2130 = vunpack.c.l.b16 %v2061
  %v2131 = vunpack.c.h.b16 %v2061
  %v2132 = vunpack.c.l.b16 %v2062
  %v2133 = vunpack.c.h.b16 %v2062
  %v2134 = vunpack.c.l.b16 %v2063
  %v2135 = vunpack.c.h.b16 %v2063
  %v2136 = vunpack.c.l.b16 %v2064
  %v2137 = vunpack.c.h.b16 %v2064
  %v2138 = vunpack.c.l.b16 %v2065
  %v2139 = vunpack.c.h.b16 %v2065
  %v2140 = vunpack.c.l.b16 %v2066
  %v2141 = vunpack.c.h.b16 %v2066
  %v2142 = vunpack.c.l.b16 %v2067
  %v2143 = vunpack.c.h.b16 %v2067
  %v2144 = vunpack.c.l.b16 %v2068
  %v2145 = vunpack.c.h.b16 %v2068
  %v2146 = vunpack.c.l.b16 %v2069
  %v2147 = vunpack.c.h.b16 %v2069
  %v2148 = vunpack.c.l.b16 %v2070
  %v2149 = vunpack.c.h.b16 %v2070
  %v2150 = vunpack.c.l.b16 %v2071
  %v2151 = vunpack.c.h.b16 %v2071
  %v2152 = vunpack.c.l.b16 %v2072
  %v2153 = vunpack.c.h.b16 %v2072
  %v2154 = vunpack.c.l.b16 %v2073
  %v2155 = vunpack.c.h.b16 %v2073
  %v2156 = vunpack.c.l.b16 %v2074
  %v2157 = vunpack.c.h.b16 %v2074
  %v2158 = vunpack.c.l.b16 %v2075
  %v2159 = vunpack.c.h.b16 %v2075
  %v2160 = vunpack.c.l.b16 %v2076
  %v2161 = vunpack.c.h.b16 %v2076
  %v2162 = vunpack.c.l.b16 %v2077
  %v2163 = vunpack.c.h.b16 %v2077
  %v2164 = vunpack.c.l.b16 %v2078
  %v2165 = vunpack.c.h.b16 %v2078
  %v2166 = vunpack.c.l.b16 %v2079
  %v2167 = vunpack.c.h.b16 %v2079
  %v2168 = vunpack.c.l.b16 %v2080
  %v2169 = vunpack.c.h.b16 %v2080
  %v2170 = vunpack.c.l.b16 %v2081
  %v2171 = vunpack.c.h.b16 %v2081
  %v2172 = vunpack.c.l.b16 %v2082
  %v2173 = vunpack.c.h.b16 %v2082
  %v2174 = vunpack.c.l.b16 %v2083
  %v2175 = vunpack.c.h.b16 %v2083
  %v2176 = vunpack.c.l.b16 %v2084
  %v2177 = vunpack.c.h.b16 %v2084
  %v2178 = vunpack.c.l.b16 %v2085
  %v2179 = vunpack.c.h.b16 %v2085
  %v2180 = vunpack.c.l.b16 %v2086
  %v2181 = vunpack.c.h.b16 %v2086
  %v2182 = vunpack.c.l.b16 %v2087
  %v2183 = vunpack.c.h.b16 %v2087
  %v2184 = vpack.c.b16 %v2122, %v2120
  %v2185 = vpack.c.b16 %v2123, %v2121
  %v2186 = vpack.c.b16 %v2126, %v2124
  %v2187 = vpack.c.b16 %v2127, %v2125
  %v2188 = vpack.c.b16 %v2130, %v2128
  %v2189 = vpack.c.b16 %v2131, %v2129
  %v2190 = vpack.c.b16 %v2134, %v2132
  %v2191 = vpack.c.b16 %v2135, %v2133
  %v2192 = vpack.c.b16 %v2138, %v2136
  %v2193 = vpack.c.b16 %v2139, %v2137
  %v2194 = vpack.c.b16 %v2142, %v2140
  %v2195 = vpack.c.b16 %v2143, %v2141
  %v2196 = vpack.c.b16 %v2146, %v2144
  %v2197 = vpack.c.b16 %v2147, %v2145
  %v2198 = vpack.c.b16 %v2150, %v2148
  %v2199 = vpack.c.b16 %v2151, %v2149
  %v2200 = vpack.c.b16 %v2154, %v2152
  %v2201 = vpack.c.b16 %v2155, %v2153
  %v2202 = vpack.c.b16 %v2158, %v2156
  %v2203 = vpack.c.b16 %v2159, %v2157
  %v2204 = vpack.c.b16 %v2162, %v2160
  %v2205 = vpack.c.b16 %v2163, %v2161
  %v2206 = vpack.c.b16 %v2166, %v2164
  %v2207 = vpack.c.b16 %v2167, %v2165
  %v2208 = vpack.c.b16 %v2170, %v2168
  %v2209 = vpack.c.b16 %v2171, %v2169
  %v2210 = vpack.c.b16 %v2174, %v2172
  %v2211 = vpack.c.b16 %v2175, %v2173
  %v2212 = vpack.c.b16 %v2178, %v2176
  %v2213 = vpack.c.b16 %v2179, %v2177
  %v2214 = vpack.c.b16 %v2182, %v2180
  %v2215 = vpack.c.b16 %v2183, %v2181
  %2248 = vmatprep.subr.bf16.mxu0 %v2185
  %2249 = vmatpush1.bf16.msra.mxu0 %v2184
  %2250 = vmatprep.subr.bf16.mxu0 %v2187
  %2251 = vmatpush1.bf16.msra.mxu0 %v2186
  %2252 = vmatprep.subr.bf16.mxu0 %v2189
  %2253 = vmatpush1.bf16.msra.mxu0 %v2188
  %2254 = vmatprep.subr.bf16.mxu0 %v2191
  %2255 = vmatpush1.bf16.msra.mxu0 %v2190
  %2256 = vmatprep.subr.bf16.mxu0 %v2193
  %2257 = vmatpush1.bf16.msra.mxu0 %v2192
  %2258 = vmatprep.subr.bf16.mxu0 %v2195
  %2259 = vmatpush1.bf16.msra.mxu0 %v2194
  %2260 = vmatprep.subr.bf16.mxu0 %v2197
  %2261 = vmatpush1.bf16.msra.mxu0 %v2196
  %2262 = vmatprep.subr.bf16.mxu0 %v2199
  %2263 = vmatpush1.bf16.msra.mxu0 %v2198
  %2264 = vmatprep.subr.bf16.mxu0 %v2201
  %2265 = vmatpush1.bf16.msra.mxu0 %v2200
  %2266 = vmatprep.subr.bf16.mxu0 %v2203
  %2267 = vmatpush1.bf16.msra.mxu0 %v2202
  %2268 = vmatprep.subr.bf16.mxu0 %v2205
  %2269 = vmatpush1.bf16.msra.mxu0 %v2204
  %2270 = vmatprep.subr.bf16.mxu0 %v2207
  %2271 = vmatpush1.bf16.msra.mxu0 %v2206
  %2272 = vmatprep.subr.bf16.mxu0 %v2209
  %2273 = vmatpush1.bf16.msra.mxu0 %v2208
  %2274 = vmatprep.subr.bf16.mxu0 %v2211
  %2275 = vmatpush1.bf16.msra.mxu0 %v2210
  %2276 = vmatprep.subr.bf16.mxu0 %v2213
  %2277 = vmatpush1.bf16.msra.mxu0 %v2212
  %2278 = vmatprep.subr.bf16.mxu0 %v2215
  %2279 = vmatpush1.bf16.msra.mxu0 %v2214
  %2280 = vmatprep.mubr.bf16.mxu0 %v2040
  %2281 = vmatmul.mubr.bf16.gmra.mrb[0].mxu0 %v2039
  %v2282 = vpop.f32.mrb[0].mxu0
  %v2283 = vadd.f32 0.0, %v2282
  %v2284 = vpop.f32.mrb[0].mxu0
  %v2285 = vadd.f32 0.0, %v2284
  %v2286 = vpop.f32.mrb[0].mxu0
  %v2287 = vadd.f32 0.0, %v2286
  %v2288 = vpop.f32.mrb[0].mxu0
  %v2289 = vadd.f32 0.0, %v2288
  %2290 = vmatprep.mubr.bf16.mxu0 %v2042
  %2291 = vmatmul.mubr.bf16.gmra.mrb[0].mxu0 %v2041
  %v2292 = vpop.f32.mrb[0].mxu0
  %v2293 = vadd.f32 0.0, %v2292
  %v2294 = vpop.f32.mrb[0].mxu0
  %v2295 = vadd.f32 0.0, %v2294
  %v2296 = vpop.f32.mrb[0].mxu0
  %v2297 = vadd.f32 0.0, %v2296
  %v2298 = vpop.f32.mrb[0].mxu0
  %v2299 = vadd.f32 0.0, %v2298
  %2300 = vmatprep.mubr.bf16.mxu0 %v2044
  %2301 = vmatmul.mubr.bf16.gmra.mrb[0].mxu0 %v2043
  %v2302 = vpop.f32.mrb[0].mxu0
  %v2303 = vadd.f32 0.0, %v2302
  %v2304 = vpop.f32.mrb[0].mxu0
  %v2305 = vadd.f32 0.0, %v2304
  %v2306 = vpop.f32.mrb[0].mxu0
  %v2307 = vadd.f32 0.0, %v2306
  %v2308 = vpop.f32.mrb[0].mxu0
  %v2309 = vadd.f32 0.0, %v2308
  %2310 = vmatprep.mubr.bf16.mxu0 %v2046
  %2311 = vmatmul.mubr.bf16.gmra.mrb[0].mxu0 %v2045
  %v2312 = vpop.f32.mrb[0].mxu0
  %v2313 = vadd.f32 0.0, %v2312
  %v2314 = vpop.f32.mrb[0].mxu0
  %v2315 = vadd.f32 0.0, %v2314
  %v2316 = vpop.f32.mrb[0].mxu0
  %v2317 = vadd.f32 0.0, %v2316
  %v2318 = vpop.f32.mrb[0].mxu0
  %v2319 = vadd.f32 0.0, %v2318
  %2320 = vmatprep.mubr.bf16.mxu0 %v2048
  %2321 = vmatmul.mubr.bf16.gmra.mrb[0].mxu0 %v2047
  %v2322 = vpop.f32.mrb[0].mxu0
  %v2323 = vadd.f32 0.0, %v2322
  %v2324 = vpop.f32.mrb[0].mxu0
  %v2325 = vadd.f32 0.0, %v2324
  %v2326 = vpop.f32.mrb[0].mxu0
  %v2327 = vadd.f32 0.0, %v2326
  %v2328 = vpop.f32.mrb[0].mxu0
  %v2329 = vadd.f32 0.0, %v2328
  %2330 = vmatprep.mubr.bf16.mxu0 %v2050
  %2331 = vmatmul.mubr.bf16.gmra.mrb[0].mxu0 %v2049
  %v2332 = vpop.f32.mrb[0].mxu0
  %v2333 = vadd.f32 0.0, %v2332
  %v2334 = vpop.f32.mrb[0].mxu0
  %v2335 = vadd.f32 0.0, %v2334
  %v2336 = vpop.f32.mrb[0].mxu0
  %v2337 = vadd.f32 0.0, %v2336
  %v2338 = vpop.f32.mrb[0].mxu0
  %v2339 = vadd.f32 0.0, %v2338
  %2340 = vmatprep.mubr.bf16.mxu0 %v2052
  %2341 = vmatmul.mubr.bf16.gmra.mrb[0].mxu0 %v2051
  %v2342 = vpop.f32.mrb[0].mxu0
  %v2343 = vadd.f32 0.0, %v2342
  %v2344 = vpop.f32.mrb[0].mxu0
  %v2345 = vadd.f32 0.0, %v2344
  %v2346 = vpop.f32.mrb[0].mxu0
  %v2347 = vadd.f32 0.0, %v2346
  %v2348 = vpop.f32.mrb[0].mxu0
  %v2349 = vadd.f32 0.0, %v2348
  %2350 = vmatprep.mubr.bf16.mxu0 %v2054
  %2351 = vmatmul.mubr.bf16.gmra.mrb[0].mxu0 %v2053
  %v2352 = vpop.f32.mrb[0].mxu0
  %v2353 = vadd.f32 0.0, %v2352
  %v2354 = vpop.f32.mrb[0].mxu0
  %v2355 = vadd.f32 0.0, %v2354
  %v2356 = vpop.f32.mrb[0].mxu0
  %v2357 = vadd.f32 0.0, %v2356
  %v2358 = vpop.f32.mrb[0].mxu0
  %v2359 = vadd.f32 0.0, %v2358
  %2360 = vdwg.mxu0
  %v2361 = vadd.f32 %v1974, %v2283
  %v2362 = vadd.f32 %v1975, %v2285
  %v2363 = vadd.f32 %v1976, %v2287
  %v2364 = vadd.f32 %v1977, %v2289
  %v2365 = vadd.f32 %v1978, %v2293
  %v2366 = vadd.f32 %v1979, %v2295
  %v2367 = vadd.f32 %v1980, %v2297
  %v2368 = vadd.f32 %v1981, %v2299
  %v2369 = vadd.f32 %v1982, %v2303
  %v2370 = vadd.f32 %v1983, %v2305
  %v2371 = vadd.f32 %v1984, %v2307
  %v2372 = vadd.f32 %v1985, %v2309
  %v2373 = vadd.f32 %v1986, %v2313
  %v2374 = vadd.f32 %v1987, %v2315
  %v2375 = vadd.f32 %v1988, %v2317
  %v2376 = vadd.f32 %v1989, %v2319
  %v2377 = vadd.f32 %v1990, %v2323
  %v2378 = vadd.f32 %v1991, %v2325
  %v2379 = vadd.f32 %v1992, %v2327
  %v2380 = vadd.f32 %v1993, %v2329
  %v2381 = vadd.f32 %v1994, %v2333
  %v2382 = vadd.f32 %v1995, %v2335
  %v2383 = vadd.f32 %v1996, %v2337
  %v2384 = vadd.f32 %v1997, %v2339
  %v2385 = vadd.f32 %v1998, %v2343
  %v2386 = vadd.f32 %v1999, %v2345
  %v2387 = vadd.f32 %v2000, %v2347
  %v2388 = vadd.f32 %v2001, %v2349
  %v2389 = vadd.f32 %v2002, %v2353
  %v2390 = vadd.f32 %v2003, %v2355
  %v2391 = vadd.f32 %v2004, %v2357
  %v2392 = vadd.f32 %v2005, %v2359
  %s2393 = scalar_lea.vmem [#allocation2], 96
  %v2394 = vld [vmem:[%s2393] sm:$0xff]
  %v2395 = vld [vmem:[%s2393 + $0x8] sm:$0xff]
  %v2396 = vld [vmem:[%s2393 + $0x10] sm:$0xff]
  %v2397 = vld [vmem:[%s2393 + $0x18] sm:$0xff]
  %v2398 = vld [vmem:[%s2393 + $0x20] sm:$0xff]
  %v2399 = vld [vmem:[%s2393 + $0x28] sm:$0xff]
  %v2400 = vld [vmem:[%s2393 + $0x30] sm:$0xff]
  %v2401 = vld [vmem:[%s2393 + $0x38] sm:$0xff]
  %v2402 = vld [vmem:[%s2393 + $0x40] sm:$0xff]
  %v2403 = vld [vmem:[%s2393 + $0x48] sm:$0xff]
  %v2404 = vld [vmem:[%s2393 + $0x50] sm:$0xff]
  %v2405 = vld [vmem:[%s2393 + $0x58] sm:$0xff]
  %v2406 = vld [vmem:[%s2393 + $0x60] sm:$0xff]
  %v2407 = vld [vmem:[%s2393 + $0x68] sm:$0xff]
  %v2408 = vld [vmem:[%s2393 + $0x70] sm:$0xff]
  %v2409 = vld [vmem:[%s2393 + $0x78] sm:$0xff]
  %v2410 = vld [vmem:[%s2393 + $0xe0] sm:$0xff]
  %v2411 = vld [vmem:[%s2393 + $0xe8] sm:$0xff]
  %v2412 = vld [vmem:[%s2393 + $0xf0] sm:$0xff]
  %v2413 = vld [vmem:[%s2393 + $0xf8] sm:$0xff]
  %v2414 = vld [vmem:[%s2393 + $0x100] sm:$0xff]
  %v2415 = vld [vmem:[%s2393 + $0x108] sm:$0xff]
  %v2416 = vld [vmem:[%s2393 + $0x110] sm:$0xff]
  %v2417 = vld [vmem:[%s2393 + $0x118] sm:$0xff]
  %v2418 = vld [vmem:[%s2393 + $0x120] sm:$0xff]
  %v2419 = vld [vmem:[%s2393 + $0x128] sm:$0xff]
  %v2420 = vld [vmem:[%s2393 + $0x130] sm:$0xff]
  %v2421 = vld [vmem:[%s2393 + $0x138] sm:$0xff]
  %v2422 = vld [vmem:[%s2393 + $0x140] sm:$0xff]
  %v2423 = vld [vmem:[%s2393 + $0x148] sm:$0xff]
  %v2424 = vld [vmem:[%s2393 + $0x150] sm:$0xff]
  %v2425 = vld [vmem:[%s2393 + $0x158] sm:$0xff]
  %v2426 = vpack.c.bf16 %v2396, %v2394
  %v2427 = vpack.c.bf16 %v2397, %v2395
  %v2428 = vpack.c.bf16 %v2400, %v2398
  %v2429 = vpack.c.bf16 %v2401, %v2399
  %v2430 = vpack.c.bf16 %v2404, %v2402
  %v2431 = vpack.c.bf16 %v2405, %v2403
  %v2432 = vpack.c.bf16 %v2408, %v2406
  %v2433 = vpack.c.bf16 %v2409, %v2407
  %v2434 = vpack.c.bf16 %v2412, %v2410
  %v2435 = vpack.c.bf16 %v2413, %v2411
  %v2436 = vpack.c.bf16 %v2416, %v2414
  %v2437 = vpack.c.bf16 %v2417, %v2415
  %v2438 = vpack.c.bf16 %v2420, %v2418
  %v2439 = vpack.c.bf16 %v2421, %v2419
  %v2440 = vpack.c.bf16 %v2424, %v2422
  %v2441 = vpack.c.bf16 %v2425, %v2423
  %s2442 = scalar_lea.vmem %s1, 1536
  %v2443 = vld [vmem:[%s2442] sm:$0xff]
  %v2444 = vld [vmem:[%s2442 + $0x8] sm:$0xff]
  %v2445 = vld [vmem:[%s2442 + $0x10] sm:$0xff]
  %v2446 = vld [vmem:[%s2442 + $0x18] sm:$0xff]
  %v2447 = vld [vmem:[%s2442 + $0x20] sm:$0xff]
  %v2448 = vld [vmem:[%s2442 + $0x28] sm:$0xff]
  %v2449 = vld [vmem:[%s2442 + $0x30] sm:$0xff]
  %v2450 = vld [vmem:[%s2442 + $0x38] sm:$0xff]
  %v2451 = vld [vmem:[%s2442 + $0x40] sm:$0xff]
  %v2452 = vld [vmem:[%s2442 + $0x48] sm:$0xff]
  %v2453 = vld [vmem:[%s2442 + $0x50] sm:$0xff]
  %v2454 = vld [vmem:[%s2442 + $0x58] sm:$0xff]
  %v2455 = vld [vmem:[%s2442 + $0x60] sm:$0xff]
  %v2456 = vld [vmem:[%s2442 + $0x68] sm:$0xff]
  %v2457 = vld [vmem:[%s2442 + $0x70] sm:$0xff]
  %v2458 = vld [vmem:[%s2442 + $0x78] sm:$0xff]
  %v2459 = vld [vmem:[%s2442 + $0x80] sm:$0xff]
  %v2460 = vld [vmem:[%s2442 + $0x88] sm:$0xff]
  %v2461 = vld [vmem:[%s2442 + $0x90] sm:$0xff]
  %v2462 = vld [vmem:[%s2442 + $0x98] sm:$0xff]
  %v2463 = vld [vmem:[%s2442 + $0xa0] sm:$0xff]
  %v2464 = vld [vmem:[%s2442 + $0xa8] sm:$0xff]
  %v2465 = vld [vmem:[%s2442 + $0xb0] sm:$0xff]
  %v2466 = vld [vmem:[%s2442 + $0xb8] sm:$0xff]
  %v2467 = vld [vmem:[%s2442 + $0xc0] sm:$0xff]
  %v2468 = vld [vmem:[%s2442 + $0xc8] sm:$0xff]
  %v2469 = vld [vmem:[%s2442 + $0xd0] sm:$0xff]
  %v2470 = vld [vmem:[%s2442 + $0xd8] sm:$0xff]
  %v2471 = vld [vmem:[%s2442 + $0xe0] sm:$0xff]
  %v2472 = vld [vmem:[%s2442 + $0xe8] sm:$0xff]
  %v2473 = vld [vmem:[%s2442 + $0xf0] sm:$0xff]
  %v2474 = vld [vmem:[%s2442 + $0xf8] sm:$0xff]
  %v2507 = vunpack.c.l.b16 %v2443
  %v2508 = vunpack.c.h.b16 %v2443
  %v2509 = vunpack.c.l.b16 %v2444
  %v2510 = vunpack.c.h.b16 %v2444
  %v2511 = vunpack.c.l.b16 %v2445
  %v2512 = vunpack.c.h.b16 %v2445
  %v2513 = vunpack.c.l.b16 %v2446
  %v2514 = vunpack.c.h.b16 %v2446
  %v2515 = vunpack.c.l.b16 %v2447
  %v2516 = vunpack.c.h.b16 %v2447
  %v2517 = vunpack.c.l.b16 %v2448
  %v2518 = vunpack.c.h.b16 %v2448
  %v2519 = vunpack.c.l.b16 %v2449
  %v2520 = vunpack.c.h.b16 %v2449
  %v2521 = vunpack.c.l.b16 %v2450
  %v2522 = vunpack.c.h.b16 %v2450
  %v2523 = vunpack.c.l.b16 %v2451
  %v2524 = vunpack.c.h.b16 %v2451
  %v2525 = vunpack.c.l.b16 %v2452
  %v2526 = vunpack.c.h.b16 %v2452
  %v2527 = vunpack.c.l.b16 %v2453
  %v2528 = vunpack.c.h.b16 %v2453
  %v2529 = vunpack.c.l.b16 %v2454
  %v2530 = vunpack.c.h.b16 %v2454
  %v2531 = vunpack.c.l.b16 %v2455
  %v2532 = vunpack.c.h.b16 %v2455
  %v2533 = vunpack.c.l.b16 %v2456
  %v2534 = vunpack.c.h.b16 %v2456
  %v2535 = vunpack.c.l.b16 %v2457
  %v2536 = vunpack.c.h.b16 %v2457
  %v2537 = vunpack.c.l.b16 %v2458
  %v2538 = vunpack.c.h.b16 %v2458
  %v2539 = vunpack.c.l.b16 %v2459
  %v2540 = vunpack.c.h.b16 %v2459
  %v2541 = vunpack.c.l.b16 %v2460
  %v2542 = vunpack.c.h.b16 %v2460
  %v2543 = vunpack.c.l.b16 %v2461
  %v2544 = vunpack.c.h.b16 %v2461
  %v2545 = vunpack.c.l.b16 %v2462
  %v2546 = vunpack.c.h.b16 %v2462
  %v2547 = vunpack.c.l.b16 %v2463
  %v2548 = vunpack.c.h.b16 %v2463
  %v2549 = vunpack.c.l.b16 %v2464
  %v2550 = vunpack.c.h.b16 %v2464
  %v2551 = vunpack.c.l.b16 %v2465
  %v2552 = vunpack.c.h.b16 %v2465
  %v2553 = vunpack.c.l.b16 %v2466
  %v2554 = vunpack.c.h.b16 %v2466
  %v2555 = vunpack.c.l.b16 %v2467
  %v2556 = vunpack.c.h.b16 %v2467
  %v2557 = vunpack.c.l.b16 %v2468
  %v2558 = vunpack.c.h.b16 %v2468
  %v2559 = vunpack.c.l.b16 %v2469
  %v2560 = vunpack.c.h.b16 %v2469
  %v2561 = vunpack.c.l.b16 %v2470
  %v2562 = vunpack.c.h.b16 %v2470
  %v2563 = vunpack.c.l.b16 %v2471
  %v2564 = vunpack.c.h.b16 %v2471
  %v2565 = vunpack.c.l.b16 %v2472
  %v2566 = vunpack.c.h.b16 %v2472
  %v2567 = vunpack.c.l.b16 %v2473
  %v2568 = vunpack.c.h.b16 %v2473
  %v2569 = vunpack.c.l.b16 %v2474
  %v2570 = vunpack.c.h.b16 %v2474
  %v2571 = vpack.c.b16 %v2509, %v2507
  %v2572 = vpack.c.b16 %v2510, %v2508
  %v2573 = vpack.c.b16 %v2513, %v2511
  %v2574 = vpack.c.b16 %v2514, %v2512
  %v2575 = vpack.c.b16 %v2517, %v2515
  %v2576 = vpack.c.b16 %v2518, %v2516
  %v2577 = vpack.c.b16 %v2521, %v2519
  %v2578 = vpack.c.b16 %v2522, %v2520
  %v2579 = vpack.c.b16 %v2525, %v2523
  %v2580 = vpack.c.b16 %v2526, %v2524
  %v2581 = vpack.c.b16 %v2529, %v2527
  %v2582 = vpack.c.b16 %v2530, %v2528
  %v2583 = vpack.c.b16 %v2533, %v2531
  %v2584 = vpack.c.b16 %v2534, %v2532
  %v2585 = vpack.c.b16 %v2537, %v2535
  %v2586 = vpack.c.b16 %v2538, %v2536
  %v2587 = vpack.c.b16 %v2541, %v2539
  %v2588 = vpack.c.b16 %v2542, %v2540
  %v2589 = vpack.c.b16 %v2545, %v2543
  %v2590 = vpack.c.b16 %v2546, %v2544
  %v2591 = vpack.c.b16 %v2549, %v2547
  %v2592 = vpack.c.b16 %v2550, %v2548
  %v2593 = vpack.c.b16 %v2553, %v2551
  %v2594 = vpack.c.b16 %v2554, %v2552
  %v2595 = vpack.c.b16 %v2557, %v2555
  %v2596 = vpack.c.b16 %v2558, %v2556
  %v2597 = vpack.c.b16 %v2561, %v2559
  %v2598 = vpack.c.b16 %v2562, %v2560
  %v2599 = vpack.c.b16 %v2565, %v2563
  %v2600 = vpack.c.b16 %v2566, %v2564
  %v2601 = vpack.c.b16 %v2569, %v2567
  %v2602 = vpack.c.b16 %v2570, %v2568
  %2635 = vmatprep.subr.bf16.mxu0 %v2572
  %2636 = vmatpush1.bf16.msra.mxu0 %v2571
  %2637 = vmatprep.subr.bf16.mxu0 %v2574
  %2638 = vmatpush1.bf16.msra.mxu0 %v2573
  %2639 = vmatprep.subr.bf16.mxu0 %v2576
  %2640 = vmatpush1.bf16.msra.mxu0 %v2575
  %2641 = vmatprep.subr.bf16.mxu0 %v2578
  %2642 = vmatpush1.bf16.msra.mxu0 %v2577
  %2643 = vmatprep.subr.bf16.mxu0 %v2580
  %2644 = vmatpush1.bf16.msra.mxu0 %v2579
  %2645 = vmatprep.subr.bf16.mxu0 %v2582
  %2646 = vmatpush1.bf16.msra.mxu0 %v2581
  %2647 = vmatprep.subr.bf16.mxu0 %v2584
  %2648 = vmatpush1.bf16.msra.mxu0 %v2583
  %2649 = vmatprep.subr.bf16.mxu0 %v2586
  %2650 = vmatpush1.bf16.msra.mxu0 %v2585
  %2651 = vmatprep.subr.bf16.mxu0 %v2588
  %2652 = vmatpush1.bf16.msra.mxu0 %v2587
  %2653 = vmatprep.subr.bf16.mxu0 %v2590
  %2654 = vmatpush1.bf16.msra.mxu0 %v2589
  %2655 = vmatprep.subr.bf16.mxu0 %v2592
  %2656 = vmatpush1.bf16.msra.mxu0 %v2591
  %2657 = vmatprep.subr.bf16.mxu0 %v2594
  %2658 = vmatpush1.bf16.msra.mxu0 %v2593
  %2659 = vmatprep.subr.bf16.mxu0 %v2596
  %2660 = vmatpush1.bf16.msra.mxu0 %v2595
  %2661 = vmatprep.subr.bf16.mxu0 %v2598
  %2662 = vmatpush1.bf16.msra.mxu0 %v2597
  %2663 = vmatprep.subr.bf16.mxu0 %v2600
  %2664 = vmatpush1.bf16.msra.mxu0 %v2599
  %2665 = vmatprep.subr.bf16.mxu0 %v2602
  %2666 = vmatpush1.bf16.msra.mxu0 %v2601
  %2667 = vmatprep.mubr.bf16.mxu0 %v2427
  %2668 = vmatmul.mubr.bf16.gmra.mrb[0].mxu0 %v2426
  %v2669 = vpop.f32.mrb[0].mxu0
  %v2670 = vadd.f32 0.0, %v2669
  %v2671 = vpop.f32.mrb[0].mxu0
  %v2672 = vadd.f32 0.0, %v2671
  %v2673 = vpop.f32.mrb[0].mxu0
  %v2674 = vadd.f32 0.0, %v2673
  %v2675 = vpop.f32.mrb[0].mxu0
  %v2676 = vadd.f32 0.0, %v2675
  %2677 = vmatprep.mubr.bf16.mxu0 %v2429
  %2678 = vmatmul.mubr.bf16.gmra.mrb[0].mxu0 %v2428
  %v2679 = vpop.f32.mrb[0].mxu0
  %v2680 = vadd.f32 0.0, %v2679
  %v2681 = vpop.f32.mrb[0].mxu0
  %v2682 = vadd.f32 0.0, %v2681
  %v2683 = vpop.f32.mrb[0].mxu0
  %v2684 = vadd.f32 0.0, %v2683
  %v2685 = vpop.f32.mrb[0].mxu0
  %v2686 = vadd.f32 0.0, %v2685
  %2687 = vmatprep.mubr.bf16.mxu0 %v2431
  %2688 = vmatmul.mubr.bf16.gmra.mrb[0].mxu0 %v2430
  %v2689 = vpop.f32.mrb[0].mxu0
  %v2690 = vadd.f32 0.0, %v2689
  %v2691 = vpop.f32.mrb[0].mxu0
  %v2692 = vadd.f32 0.0, %v2691
  %v2693 = vpop.f32.mrb[0].mxu0
  %v2694 = vadd.f32 0.0, %v2693
  %v2695 = vpop.f32.mrb[0].mxu0
  %v2696 = vadd.f32 0.0, %v2695
  %2697 = vmatprep.mubr.bf16.mxu0 %v2433
  %2698 = vmatmul.mubr.bf16.gmra.mrb[0].mxu0 %v2432
  %v2699 = vpop.f32.mrb[0].mxu0
  %v2700 = vadd.f32 0.0, %v2699
  %v2701 = vpop.f32.mrb[0].mxu0
  %v2702 = vadd.f32 0.0, %v2701
  %v2703 = vpop.f32.mrb[0].mxu0
  %v2704 = vadd.f32 0.0, %v2703
  %v2705 = vpop.f32.mrb[0].mxu0
  %v2706 = vadd.f32 0.0, %v2705
  %2707 = vmatprep.mubr.bf16.mxu0 %v2435
  %2708 = vmatmul.mubr.bf16.gmra.mrb[0].mxu0 %v2434
  %v2709 = vpop.f32.mrb[0].mxu0
  %v2710 = vadd.f32 0.0, %v2709
  %v2711 = vpop.f32.mrb[0].mxu0
  %v2712 = vadd.f32 0.0, %v2711
  %v2713 = vpop.f32.mrb[0].mxu0
  %v2714 = vadd.f32 0.0, %v2713
  %v2715 = vpop.f32.mrb[0].mxu0
  %v2716 = vadd.f32 0.0, %v2715
  %2717 = vmatprep.mubr.bf16.mxu0 %v2437
  %2718 = vmatmul.mubr.bf16.gmra.mrb[0].mxu0 %v2436
  %v2719 = vpop.f32.mrb[0].mxu0
  %v2720 = vadd.f32 0.0, %v2719
  %v2721 = vpop.f32.mrb[0].mxu0
  %v2722 = vadd.f32 0.0, %v2721
  %v2723 = vpop.f32.mrb[0].mxu0
  %v2724 = vadd.f32 0.0, %v2723
  %v2725 = vpop.f32.mrb[0].mxu0
  %v2726 = vadd.f32 0.0, %v2725
  %2727 = vmatprep.mubr.bf16.mxu0 %v2439
  %2728 = vmatmul.mubr.bf16.gmra.mrb[0].mxu0 %v2438
  %v2729 = vpop.f32.mrb[0].mxu0
  %v2730 = vadd.f32 0.0, %v2729
  %v2731 = vpop.f32.mrb[0].mxu0
  %v2732 = vadd.f32 0.0, %v2731
  %v2733 = vpop.f32.mrb[0].mxu0
  %v2734 = vadd.f32 0.0, %v2733
  %v2735 = vpop.f32.mrb[0].mxu0
  %v2736 = vadd.f32 0.0, %v2735
  %2737 = vmatprep.mubr.bf16.mxu0 %v2441
  %2738 = vmatmul.mubr.bf16.gmra.mrb[0].mxu0 %v2440
  %v2739 = vpop.f32.mrb[0].mxu0
  %v2740 = vadd.f32 0.0, %v2739
  %v2741 = vpop.f32.mrb[0].mxu0
  %v2742 = vadd.f32 0.0, %v2741
  %v2743 = vpop.f32.mrb[0].mxu0
  %v2744 = vadd.f32 0.0, %v2743
  %v2745 = vpop.f32.mrb[0].mxu0
  %v2746 = vadd.f32 0.0, %v2745
  %2747 = vdwg.mxu0
  %v2748 = vadd.f32 %v2361, %v2670
  %v2749 = vadd.f32 %v2362, %v2672
  %v2750 = vadd.f32 %v2363, %v2674
  %v2751 = vadd.f32 %v2364, %v2676
  %v2752 = vadd.f32 %v2365, %v2680
  %v2753 = vadd.f32 %v2366, %v2682
  %v2754 = vadd.f32 %v2367, %v2684
  %v2755 = vadd.f32 %v2368, %v2686
  %v2756 = vadd.f32 %v2369, %v2690
  %v2757 = vadd.f32 %v2370, %v2692
  %v2758 = vadd.f32 %v2371, %v2694
  %v2759 = vadd.f32 %v2372, %v2696
  %v2760 = vadd.f32 %v2373, %v2700
  %v2761 = vadd.f32 %v2374, %v2702
  %v2762 = vadd.f32 %v2375, %v2704
  %v2763 = vadd.f32 %v2376, %v2706
  %v2764 = vadd.f32 %v2377, %v2710
  %v2765 = vadd.f32 %v2378, %v2712
  %v2766 = vadd.f32 %v2379, %v2714
  %v2767 = vadd.f32 %v2380, %v2716
  %v2768 = vadd.f32 %v2381, %v2720
  %v2769 = vadd.f32 %v2382, %v2722
  %v2770 = vadd.f32 %v2383, %v2724
  %v2771 = vadd.f32 %v2384, %v2726
  %v2772 = vadd.f32 %v2385, %v2730
  %v2773 = vadd.f32 %v2386, %v2732
  %v2774 = vadd.f32 %v2387, %v2734
  %v2775 = vadd.f32 %v2388, %v2736
  %v2776 = vadd.f32 %v2389, %v2740
  %v2777 = vadd.f32 %v2390, %v2742
  %v2778 = vadd.f32 %v2391, %v2744
  %v2779 = vadd.f32 %v2392, %v2746
  %v2780 = vld [vmem:[%s2] sm:$0x3]
  %v2782 = vlaneseq
  %v2783 = vshrl.u32 %v2782, 7
  %v2784 = vsub.s32 0, %v2783
  %v2785 = vrot.slane %v2780, %v2784
  %v2786 = vlaneseq
  %v2787 = vshrl.u32 %v2786, 7
  %v2788 = vsub.s32 1, %v2787
  %v2789 = vrot.slane %v2780, %v2788
  %v2792 = vmul.f32 %v2748, %v2785
  %v2793 = vmul.f32 %v2749, %v2789
  %v2794 = vmul.f32 %v2750, %v2785
  %v2795 = vmul.f32 %v2751, %v2789
  %v2796 = vmul.f32 %v2752, %v2785
  %v2797 = vmul.f32 %v2753, %v2789
  %v2798 = vmul.f32 %v2754, %v2785
  %v2799 = vmul.f32 %v2755, %v2789
  %v2800 = vmul.f32 %v2756, %v2785
  %v2801 = vmul.f32 %v2757, %v2789
  %v2802 = vmul.f32 %v2758, %v2785
  %v2803 = vmul.f32 %v2759, %v2789
  %v2804 = vmul.f32 %v2760, %v2785
  %v2805 = vmul.f32 %v2761, %v2789
  %v2806 = vmul.f32 %v2762, %v2785
  %v2807 = vmul.f32 %v2763, %v2789
  %v2808 = vmul.f32 %v2764, %v2785
  %v2809 = vmul.f32 %v2765, %v2789
  %v2810 = vmul.f32 %v2766, %v2785
  %v2811 = vmul.f32 %v2767, %v2789
  %v2812 = vmul.f32 %v2768, %v2785
  %v2813 = vmul.f32 %v2769, %v2789
  %v2814 = vmul.f32 %v2770, %v2785
  %v2815 = vmul.f32 %v2771, %v2789
  %v2816 = vmul.f32 %v2772, %v2785
  %v2817 = vmul.f32 %v2773, %v2789
  %v2818 = vmul.f32 %v2774, %v2785
  %v2819 = vmul.f32 %v2775, %v2789
  %v2820 = vmul.f32 %v2776, %v2785
  %v2821 = vmul.f32 %v2777, %v2789
  %v2822 = vmul.f32 %v2778, %v2785
  %v2823 = vmul.f32 %v2779, %v2789
  %v2824 = vld [vmem:[%s3] sm:$0x3]
  %v2826 = vlaneseq
  %v2827 = vshrl.u32 %v2826, 7
  %v2828 = vsub.s32 0, %v2827
  %v2829 = vrot.slane %v2824, %v2828
  %v2830 = vlaneseq
  %v2831 = vshrl.u32 %v2830, 7
  %v2832 = vsub.s32 1, %v2831
  %v2833 = vrot.slane %v2824, %v2832
  %v2836 = vadd.f32 %v2792, %v2829
  %v2837 = vadd.f32 %v2793, %v2833
  %v2838 = vadd.f32 %v2794, %v2829
  %v2839 = vadd.f32 %v2795, %v2833
  %v2840 = vadd.f32 %v2796, %v2829
  %v2841 = vadd.f32 %v2797, %v2833
  %v2842 = vadd.f32 %v2798, %v2829
  %v2843 = vadd.f32 %v2799, %v2833
  %v2844 = vadd.f32 %v2800, %v2829
  %v2845 = vadd.f32 %v2801, %v2833
  %v2846 = vadd.f32 %v2802, %v2829
  %v2847 = vadd.f32 %v2803, %v2833
  %v2848 = vadd.f32 %v2804, %v2829
  %v2849 = vadd.f32 %v2805, %v2833
  %v2850 = vadd.f32 %v2806, %v2829
  %v2851 = vadd.f32 %v2807, %v2833
  %v2852 = vadd.f32 %v2808, %v2829
  %v2853 = vadd.f32 %v2809, %v2833
  %v2854 = vadd.f32 %v2810, %v2829
  %v2855 = vadd.f32 %v2811, %v2833
  %v2856 = vadd.f32 %v2812, %v2829
  %v2857 = vadd.f32 %v2813, %v2833
  %v2858 = vadd.f32 %v2814, %v2829
  %v2859 = vadd.f32 %v2815, %v2833
  %v2860 = vadd.f32 %v2816, %v2829
  %v2861 = vadd.f32 %v2817, %v2833
  %v2862 = vadd.f32 %v2818, %v2829
  %v2863 = vadd.f32 %v2819, %v2833
  %v2864 = vadd.f32 %v2820, %v2829
  %v2865 = vadd.f32 %v2821, %v2833
  %v2866 = vadd.f32 %v2822, %v2829
  %v2867 = vadd.f32 %v2823, %v2833
  %v2868 = vmax.f32 %v2836, 0.0
  %v2869 = vmax.f32 %v2837, 0.0
  %v2870 = vmax.f32 %v2838, 0.0
  %v2871 = vmax.f32 %v2839, 0.0
  %v2872 = vmax.f32 %v2840, 0.0
  %v2873 = vmax.f32 %v2841, 0.0
  %v2874 = vmax.f32 %v2842, 0.0
  %v2875 = vmax.f32 %v2843, 0.0
  %v2876 = vmax.f32 %v2844, 0.0
  %v2877 = vmax.f32 %v2845, 0.0
  %v2878 = vmax.f32 %v2846, 0.0
  %v2879 = vmax.f32 %v2847, 0.0
  %v2880 = vmax.f32 %v2848, 0.0
  %v2881 = vmax.f32 %v2849, 0.0
  %v2882 = vmax.f32 %v2850, 0.0
  %v2883 = vmax.f32 %v2851, 0.0
  %v2884 = vmax.f32 %v2852, 0.0
  %v2885 = vmax.f32 %v2853, 0.0
  %v2886 = vmax.f32 %v2854, 0.0
  %v2887 = vmax.f32 %v2855, 0.0
  %v2888 = vmax.f32 %v2856, 0.0
  %v2889 = vmax.f32 %v2857, 0.0
  %v2890 = vmax.f32 %v2858, 0.0
  %v2891 = vmax.f32 %v2859, 0.0
  %v2892 = vmax.f32 %v2860, 0.0
  %v2893 = vmax.f32 %v2861, 0.0
  %v2894 = vmax.f32 %v2862, 0.0
  %v2895 = vmax.f32 %v2863, 0.0
  %v2896 = vmax.f32 %v2864, 0.0
  %v2897 = vmax.f32 %v2865, 0.0
  %v2898 = vmax.f32 %v2866, 0.0
  %v2899 = vmax.f32 %v2867, 0.0
  %2900 = vst [vmem:[%s4] sm:$0xff] %v2868
  %2901 = vst [vmem:[%s4 + $0x8] sm:$0xff] %v2869
  %2902 = vst [vmem:[%s4 + $0x10] sm:$0xff] %v2870
  %2903 = vst [vmem:[%s4 + $0x18] sm:$0xff] %v2871
  %2904 = vst [vmem:[%s4 + $0x20] sm:$0xff] %v2872
  %2905 = vst [vmem:[%s4 + $0x28] sm:$0xff] %v2873
  %2906 = vst [vmem:[%s4 + $0x30] sm:$0xff] %v2874
  %2907 = vst [vmem:[%s4 + $0x38] sm:$0xff] %v2875
  %2908 = vst [vmem:[%s4 + $0x40] sm:$0xff] %v2876
  %2909 = vst [vmem:[%s4 + $0x48] sm:$0xff] %v2877
  %2910 = vst [vmem:[%s4 + $0x50] sm:$0xff] %v2878
  %2911 = vst [vmem:[%s4 + $0x58] sm:$0xff] %v2879
  %2912 = vst [vmem:[%s4 + $0x60] sm:$0xff] %v2880
  %2913 = vst [vmem:[%s4 + $0x68] sm:$0xff] %v2881
  %2914 = vst [vmem:[%s4 + $0x70] sm:$0xff] %v2882
  %2915 = vst [vmem:[%s4 + $0x78] sm:$0xff] %v2883
  %2916 = vst [vmem:[%s4 + $0x80] sm:$0xff] %v2884
  %2917 = vst [vmem:[%s4 + $0x88] sm:$0xff] %v2885
  %2918 = vst [vmem:[%s4 + $0x90] sm:$0xff] %v2886
  %2919 = vst [vmem:[%s4 + $0x98] sm:$0xff] %v2887
  %2920 = vst [vmem:[%s4 + $0xa0] sm:$0xff] %v2888
  %2921 = vst [vmem:[%s4 + $0xa8] sm:$0xff] %v2889
  %2922 = vst [vmem:[%s4 + $0xb0] sm:$0xff] %v2890
  %2923 = vst [vmem:[%s4 + $0xb8] sm:$0xff] %v2891
  %2924 = vst [vmem:[%s4 + $0xc0] sm:$0xff] %v2892
  %2925 = vst [vmem:[%s4 + $0xc8] sm:$0xff] %v2893
  %2926 = vst [vmem:[%s4 + $0xd0] sm:$0xff] %v2894
  %2927 = vst [vmem:[%s4 + $0xd8] sm:$0xff] %v2895
  %2928 = vst [vmem:[%s4 + $0xe0] sm:$0xff] %v2896
  %2929 = vst [vmem:[%s4 + $0xe8] sm:$0xff] %v2897
  %2930 = vst [vmem:[%s4 + $0xf0] sm:$0xff] %v2898
  %2931 = vst [vmem:[%s4 + $0xf8] sm:$0xff] %v2899
  // Predicated region
  $region18: #{_lambda_.16} parent=0 // pred_check
    _
  $region19: #{_lambda_.16} parent=0 // pred_check_branch
    %2933 = sbr.rel (0) target = $region21
  $region20: #{_lambda_.16} parent=0 // pred_region
    _
  $region21: #{_lambda_.16} parent=0 // pred_fallthru
    _
  // Predicated region
  $region22: #{_lambda_.16} parent=0 // pred_check
    _
  $region23: #{_lambda_.16} parent=0 // pred_check_branch
    %2935 = sbr.rel (0) target = $region25
  $region24: #{_lambda_.16} parent=0 // pred_region
    _
  $region25: #{_lambda_.16} parent=0 // pred_fallthru
    _

// kernel: _lambda_.19
$region0: #{_lambda_.19}
  #allocation0 [shape = 'u32[]', space=smem, size = 0x4, offset = 0x4, fixed_abs, tag = 'smem constant byte address 0x4 - core index']
  #allocation1 [shape = 'u32[144,128]{1,0:T(1,128)}', space=vmem, size = 0x12000, scoped, tag = 'internal scratch']
  #allocation2 [shape = 'f32[2,10,10,32]{3,2,1,0:T(8,128)}', space=vmem, size = 0x28000, scoped, tag = 'scratch operand']
  %s0 = inlined_call_operand.vmem [shape: f32[2,8,8,32], index: 0, kind: input, shape index: {}]
  %s1 = inlined_call_operand.vmem [shape: bf16[32,128], index: 1, kind: input, shape index: {}]
  %s2 = inlined_call_operand.vmem [shape: f32[1,128], index: 2, kind: input, shape index: {}]
  %s3 = inlined_call_operand.vmem [shape: f32[1,128], index: 3, kind: input, shape index: {}]
  %s4 = inlined_call_operand.vmem [shape: f32[2,8,8,128], index: 4, kind: output, shape index: {}]
  %s5 = sld [smem:[#allocation0]]
  $region26: #{_lambda_.19} parent=0
    _
  %s7 = ssub.s32 1, %s5
  %s8 = scalar_select 0, %s7, %s5
  // Predicated region
  $region2: #{_lambda_.19} parent=0 // pred_check
    _
  $region3: #{_lambda_.19} parent=0 // pred_check_branch
    %10 = sbr.rel (0) target = $region5
  $region4: #{_lambda_.19} parent=0 // pred_region
    _
  $region5: #{_lambda_.19} parent=0 // pred_fallthru
    _
  // Predicated region
  $region6: #{_lambda_.19} parent=0 // pred_check
    _
  $region7: #{_lambda_.19} parent=0 // pred_check_branch
    %12 = sbr.rel (0) target = $region9
  $region8: #{_lambda_.19} parent=0 // pred_region
    _
  $region9: #{_lambda_.19} parent=0 // pred_fallthru
    _
  // Predicated region
  $region10: #{_lambda_.19} parent=0 // pred_check
    _
  $region11: #{_lambda_.19} parent=0 // pred_check_branch
    %14 = sbr.rel (0) target = $region13
  $region12: #{_lambda_.19} parent=0 // pred_region
    _
  $region13: #{_lambda_.19} parent=0 // pred_fallthru
    _
  // Predicated region
  $region14: #{_lambda_.19} parent=0 // pred_check
    _
  $region15: #{_lambda_.19} parent=0 // pred_check_branch
    %16 = sbr.rel (0) target = $region17
  $region16: #{_lambda_.19} parent=0 // pred_region
    _
  $region17: #{_lambda_.19} parent=0 // pred_fallthru
    _
  %vm18 = vcmask 261120
  %19 = vst.msk [vmem:[#allocation2] sm:$0xff] %vm18, 0.0
  %vm20 = vcmask 254976
  %21 = vst.msk [vmem:[#allocation2 + $0x8] sm:$0x3] %vm20, 0.0
  %22 = vst.msk [vmem:[#allocation2 + $0x10] sm:$0xff] %vm18, 0.0
  %23 = vst.msk [vmem:[#allocation2 + $0x18] sm:$0x3] %vm20, 0.0
  %24 = vst.msk [vmem:[#allocation2 + $0x20] sm:$0xff] %vm18, 0.0
  %25 = vst.msk [vmem:[#allocation2 + $0x28] sm:$0x3] %vm20, 0.0
  %26 = vst.msk [vmem:[#allocation2 + $0x30] sm:$0xff] %vm18, 0.0
  %27 = vst.msk [vmem:[#allocation2 + $0x38] sm:$0x3] %vm20, 0.0
  %28 = vst.msk [vmem:[#allocation2 + $0x40] sm:$0xff] %vm18, 0.0
  %29 = vst.msk [vmem:[#allocation2 + $0x48] sm:$0x3] %vm20, 0.0
  %30 = vst.msk [vmem:[#allocation2 + $0x50] sm:$0xff] %vm18, 0.0
  %31 = vst.msk [vmem:[#allocation2 + $0x58] sm:$0x3] %vm20, 0.0
  %32 = vst.msk [vmem:[#allocation2 + $0x60] sm:$0xff] %vm18, 0.0
  %33 = vst.msk [vmem:[#allocation2 + $0x68] sm:$0x3] %vm20, 0.0
  %34 = vst.msk [vmem:[#allocation2 + $0x70] sm:$0xff] %vm18, 0.0
  %35 = vst.msk [vmem:[#allocation2 + $0x78] sm:$0x3] %vm20, 0.0
  %36 = vst.msk [vmem:[#allocation2 + $0x80] sm:$0xff] %vm18, 0.0
  %37 = vst.msk [vmem:[#allocation2 + $0x88] sm:$0x3] %vm20, 0.0
  %38 = vst.msk [vmem:[#allocation2 + $0x90] sm:$0xff] %vm18, 0.0
  %39 = vst.msk [vmem:[#allocation2 + $0x98] sm:$0x3] %vm20, 0.0
  %40 = vst.msk [vmem:[#allocation2 + $0xa0] sm:$0xff] %vm18, 0.0
  %41 = vst.msk [vmem:[#allocation2 + $0xa8] sm:$0x3] %vm20, 0.0
  %42 = vst.msk [vmem:[#allocation2 + $0xb0] sm:$0xff] %vm18, 0.0
  %43 = vst.msk [vmem:[#allocation2 + $0xb8] sm:$0x3] %vm20, 0.0
  %44 = vst.msk [vmem:[#allocation2 + $0xc0] sm:$0xff] %vm18, 0.0
  %45 = vst.msk [vmem:[#allocation2 + $0xc8] sm:$0x3] %vm20, 0.0
  %46 = vst.msk [vmem:[#allocation2 + $0xd0] sm:$0xff] %vm18, 0.0
  %47 = vst.msk [vmem:[#allocation2 + $0xd8] sm:$0x3] %vm20, 0.0
  %48 = vst.msk [vmem:[#allocation2 + $0xe0] sm:$0xff] %vm18, 0.0
  %49 = vst.msk [vmem:[#allocation2 + $0xe8] sm:$0x3] %vm20, 0.0
  %50 = vst.msk [vmem:[#allocation2 + $0xf0] sm:$0xff] %vm18, 0.0
  %51 = vst.msk [vmem:[#allocation2 + $0xf8] sm:$0x3] %vm20, 0.0
  %52 = vst.msk [vmem:[#allocation2 + $0x100] sm:$0xff] %vm18, 0.0
  %53 = vst.msk [vmem:[#allocation2 + $0x108] sm:$0x3] %vm20, 0.0
  %54 = vst.msk [vmem:[#allocation2 + $0x110] sm:$0xff] %vm18, 0.0
  %55 = vst.msk [vmem:[#allocation2 + $0x118] sm:$0x3] %vm20, 0.0
  %56 = vst.msk [vmem:[#allocation2 + $0x120] sm:$0xff] %vm18, 0.0
  %57 = vst.msk [vmem:[#allocation2 + $0x128] sm:$0x3] %vm20, 0.0
  %58 = vst.msk [vmem:[#allocation2 + $0x130] sm:$0xff] %vm18, 0.0
  %59 = vst.msk [vmem:[#allocation2 + $0x138] sm:$0x3] %vm20, 0.0
  %v60 = vld [vmem:[%s0] sm:$0xff]
  %v61 = vld [vmem:[%s0 + $0x8] sm:$0xff]
  %v62 = vld [vmem:[%s0 + $0x10] sm:$0xff]
  %v63 = vld [vmem:[%s0 + $0x18] sm:$0xff]
  %v64 = vld [vmem:[%s0 + $0x20] sm:$0xff]
  %v65 = vld [vmem:[%s0 + $0x28] sm:$0xff]
  %v66 = vld [vmem:[%s0 + $0x30] sm:$0xff]
  %v67 = vld [vmem:[%s0 + $0x38] sm:$0xff]
  %v68 = vld [vmem:[%s0 + $0x40] sm:$0xff]
  %v69 = vld [vmem:[%s0 + $0x48] sm:$0xff]
  %v70 = vld [vmem:[%s0 + $0x50] sm:$0xff]
  %v71 = vld [vmem:[%s0 + $0x58] sm:$0xff]
  %v72 = vld [vmem:[%s0 + $0x60] sm:$0xff]
  %v73 = vld [vmem:[%s0 + $0x68] sm:$0xff]
  %v74 = vld [vmem:[%s0 + $0x70] sm:$0xff]
  %v75 = vld [vmem:[%s0 + $0x78] sm:$0xff]
  %s76 = scalar_lea.vmem [#allocation2], 16
  %77 = vst.msk [vmem:[%s76 + $0x1] sm:$0xff] %vm18, %v60
  %78 = vst.msk [vmem:[%s76 + $0x11] sm:$0xff] %vm18, %v61
  %79 = vst.msk [vmem:[%s76 + $0x21] sm:$0xff] %vm18, %v62
  %80 = vst.msk [vmem:[%s76 + $0x31] sm:$0xff] %vm18, %v63
  %81 = vst.msk [vmem:[%s76 + $0x41] sm:$0xff] %vm18, %v64
  %82 = vst.msk [vmem:[%s76 + $0x51] sm:$0xff] %vm18, %v65
  %83 = vst.msk [vmem:[%s76 + $0x61] sm:$0xff] %vm18, %v66
  %84 = vst.msk [vmem:[%s76 + $0x71] sm:$0xff] %vm18, %v67
  %85 = vst.msk [vmem:[%s76 + $0xa1] sm:$0xff] %vm18, %v68
  %86 = vst.msk [vmem:[%s76 + $0xb1] sm:$0xff] %vm18, %v69
  %87 = vst.msk [vmem:[%s76 + $0xc1] sm:$0xff] %vm18, %v70
  %88 = vst.msk [vmem:[%s76 + $0xd1] sm:$0xff] %vm18, %v71
  %89 = vst.msk [vmem:[%s76 + $0xe1] sm:$0xff] %vm18, %v72
  %90 = vst.msk [vmem:[%s76 + $0xf1] sm:$0xff] %vm18, %v73
  %91 = vst.msk [vmem:[%s76 + $0x101] sm:$0xff] %vm18, %v74
  %92 = vst.msk [vmem:[%s76 + $0x111] sm:$0xff] %vm18, %v75
  %v93 = vld [vmem:[#allocation2] sm:$0xff]
  %v94 = vld [vmem:[#allocation2 + $0x10] sm:$0xff]
  %v95 = vld [vmem:[#allocation2 + $0x20] sm:$0xff]
  %v96 = vld [vmem:[#allocation2 + $0x30] sm:$0xff]
  %v97 = vld [vmem:[#allocation2 + $0x40] sm:$0xff]
  %v98 = vld [vmem:[#allocation2 + $0x50] sm:$0xff]
  %v99 = vld [vmem:[#allocation2 + $0x60] sm:$0xff]
  %v100 = vld [vmem:[#allocation2 + $0x70] sm:$0xff]
  %v101 = vld [vmem:[#allocation2 + $0xa0] sm:$0xff]
  %v102 = vld [vmem:[#allocation2 + $0xb0] sm:$0xff]
  %v103 = vld [vmem:[#allocation2 + $0xc0] sm:$0xff]
  %v104 = vld [vmem:[#allocation2 + $0xd0] sm:$0xff]
  %v105 = vld [vmem:[#allocation2 + $0xe0] sm:$0xff]
  %v106 = vld [vmem:[#allocation2 + $0xf0] sm:$0xff]
  %v107 = vld [vmem:[#allocation2 + $0x100] sm:$0xff]
  %v108 = vld [vmem:[#allocation2 + $0x110] sm:$0xff]
  %v109 = vadd.f32 %v93, 0.0
  %v110 = vadd.f32 %v94, 0.0
  %v111 = vadd.f32 %v95, 0.0
  %v112 = vadd.f32 %v96, 0.0
  %v113 = vadd.f32 %v97, 0.0
  %v114 = vadd.f32 %v98, 0.0
  %v115 = vadd.f32 %v99, 0.0
  %v116 = vadd.f32 %v100, 0.0
  %v117 = vadd.f32 %v101, 0.0
  %v118 = vadd.f32 %v102, 0.0
  %v119 = vadd.f32 %v103, 0.0
  %v120 = vadd.f32 %v104, 0.0
  %v121 = vadd.f32 %v105, 0.0
  %v122 = vadd.f32 %v106, 0.0
  %v123 = vadd.f32 %v107, 0.0
  %v124 = vadd.f32 %v108, 0.0
  %v125 = vld [vmem:[#allocation2 + $0x1] sm:$0xff]
  %v126 = vld [vmem:[#allocation2 + $0x11] sm:$0xff]
  %v127 = vld [vmem:[#allocation2 + $0x21] sm:$0xff]
  %v128 = vld [vmem:[#allocation2 + $0x31] sm:$0xff]
  %v129 = vld [vmem:[#allocation2 + $0x41] sm:$0xff]
  %v130 = vld [vmem:[#allocation2 + $0x51] sm:$0xff]
  %v131 = vld [vmem:[#allocation2 + $0x61] sm:$0xff]
  %v132 = vld [vmem:[#allocation2 + $0x71] sm:$0xff]
  %v133 = vld [vmem:[#allocation2 + $0xa1] sm:$0xff]
  %v134 = vld [vmem:[#allocation2 + $0xb1] sm:$0xff]
  %v135 = vld [vmem:[#allocation2 + $0xc1] sm:$0xff]
  %v136 = vld [vmem:[#allocation2 + $0xd1] sm:$0xff]
  %v137 = vld [vmem:[#allocation2 + $0xe1] sm:$0xff]
  %v138 = vld [vmem:[#allocation2 + $0xf1] sm:$0xff]
  %v139 = vld [vmem:[#allocation2 + $0x101] sm:$0xff]
  %v140 = vld [vmem:[#allocation2 + $0x111] sm:$0xff]
  %v141 = vadd.f32 %v109, %v125
  %v142 = vadd.f32 %v110, %v126
  %v143 = vadd.f32 %v111, %v127
  %v144 = vadd.f32 %v112, %v128
  %v145 = vadd.f32 %v113, %v129
  %v146 = vadd.f32 %v114, %v130
  %v147 = vadd.f32 %v115, %v131
  %v148 = vadd.f32 %v116, %v132
  %v149 = vadd.f32 %v117, %v133
  %v150 = vadd.f32 %v118, %v134
  %v151 = vadd.f32 %v119, %v135
  %v152 = vadd.f32 %v120, %v136
  %v153 = vadd.f32 %v121, %v137
  %v154 = vadd.f32 %v122, %v138
  %v155 = vadd.f32 %v123, %v139
  %v156 = vadd.f32 %v124, %v140
  %v157 = vld [vmem:[#allocation2 + $0x2] sm:$0xff]
  %v158 = vld [vmem:[#allocation2 + $0x12] sm:$0xff]
  %v159 = vld [vmem:[#allocation2 + $0x22] sm:$0xff]
  %v160 = vld [vmem:[#allocation2 + $0x32] sm:$0xff]
  %v161 = vld [vmem:[#allocation2 + $0x42] sm:$0xff]
  %v162 = vld [vmem:[#allocation2 + $0x52] sm:$0xff]
  %v163 = vld [vmem:[#allocation2 + $0x62] sm:$0xff]
  %v164 = vld [vmem:[#allocation2 + $0x72] sm:$0xff]
  %v165 = vld [vmem:[#allocation2 + $0xa2] sm:$0xff]
  %v166 = vld [vmem:[#allocation2 + $0xb2] sm:$0xff]
  %v167 = vld [vmem:[#allocation2 + $0xc2] sm:$0xff]
  %v168 = vld [vmem:[#allocation2 + $0xd2] sm:$0xff]
  %v169 = vld [vmem:[#allocation2 + $0xe2] sm:$0xff]
  %v170 = vld [vmem:[#allocation2 + $0xf2] sm:$0xff]
  %v171 = vld [vmem:[#allocation2 + $0x102] sm:$0xff]
  %v172 = vld [vmem:[#allocation2 + $0x112] sm:$0xff]
  %v173 = vadd.f32 %v141, %v157
  %v174 = vadd.f32 %v142, %v158
  %v175 = vadd.f32 %v143, %v159
  %v176 = vadd.f32 %v144, %v160
  %v177 = vadd.f32 %v145, %v161
  %v178 = vadd.f32 %v146, %v162
  %v179 = vadd.f32 %v147, %v163
  %v180 = vadd.f32 %v148, %v164
  %v181 = vadd.f32 %v149, %v165
  %v182 = vadd.f32 %v150, %v166
  %v183 = vadd.f32 %v151, %v167
  %v184 = vadd.f32 %v152, %v168
  %v185 = vadd.f32 %v153, %v169
  %v186 = vadd.f32 %v154, %v170
  %v187 = vadd.f32 %v155, %v171
  %v188 = vadd.f32 %v156, %v172
  %v189 = vld [vmem:[%s76] sm:$0xff]
  %v190 = vld [vmem:[%s76 + $0x10] sm:$0xff]
  %v191 = vld [vmem:[%s76 + $0x20] sm:$0xff]
  %v192 = vld [vmem:[%s76 + $0x30] sm:$0xff]
  %v193 = vld [vmem:[%s76 + $0x40] sm:$0xff]
  %v194 = vld [vmem:[%s76 + $0x50] sm:$0xff]
  %v195 = vld [vmem:[%s76 + $0x60] sm:$0xff]
  %v196 = vld [vmem:[%s76 + $0x70] sm:$0xff]
  %v197 = vld [vmem:[%s76 + $0xa0] sm:$0xff]
  %v198 = vld [vmem:[%s76 + $0xb0] sm:$0xff]
  %v199 = vld [vmem:[%s76 + $0xc0] sm:$0xff]
  %v200 = vld [vmem:[%s76 + $0xd0] sm:$0xff]
  %v201 = vld [vmem:[%s76 + $0xe0] sm:$0xff]
  %v202 = vld [vmem:[%s76 + $0xf0] sm:$0xff]
  %v203 = vld [vmem:[%s76 + $0x100] sm:$0xff]
  %v204 = vld [vmem:[%s76 + $0x110] sm:$0xff]
  %v205 = vadd.f32 %v173, %v189
  %v206 = vadd.f32 %v174, %v190
  %v207 = vadd.f32 %v175, %v191
  %v208 = vadd.f32 %v176, %v192
  %v209 = vadd.f32 %v177, %v193
  %v210 = vadd.f32 %v178, %v194
  %v211 = vadd.f32 %v179, %v195
  %v212 = vadd.f32 %v180, %v196
  %v213 = vadd.f32 %v181, %v197
  %v214 = vadd.f32 %v182, %v198
  %v215 = vadd.f32 %v183, %v199
  %v216 = vadd.f32 %v184, %v200
  %v217 = vadd.f32 %v185, %v201
  %v218 = vadd.f32 %v186, %v202
  %v219 = vadd.f32 %v187, %v203
  %v220 = vadd.f32 %v188, %v204
  %v221 = vld [vmem:[%s76 + $0x1] sm:$0xff]
  %v222 = vld [vmem:[%s76 + $0x11] sm:$0xff]
  %v223 = vld [vmem:[%s76 + $0x21] sm:$0xff]
  %v224 = vld [vmem:[%s76 + $0x31] sm:$0xff]
  %v225 = vld [vmem:[%s76 + $0x41] sm:$0xff]
  %v226 = vld [vmem:[%s76 + $0x51] sm:$0xff]
  %v227 = vld [vmem:[%s76 + $0x61] sm:$0xff]
  %v228 = vld [vmem:[%s76 + $0x71] sm:$0xff]
  %v229 = vld [vmem:[%s76 + $0xa1] sm:$0xff]
  %v230 = vld [vmem:[%s76 + $0xb1] sm:$0xff]
  %v231 = vld [vmem:[%s76 + $0xc1] sm:$0xff]
  %v232 = vld [vmem:[%s76 + $0xd1] sm:$0xff]
  %v233 = vld [vmem:[%s76 + $0xe1] sm:$0xff]
  %v234 = vld [vmem:[%s76 + $0xf1] sm:$0xff]
  %v235 = vld [vmem:[%s76 + $0x101] sm:$0xff]
  %v236 = vld [vmem:[%s76 + $0x111] sm:$0xff]
  %v237 = vadd.f32 %v205, %v221
  %v238 = vadd.f32 %v206, %v222
  %v239 = vadd.f32 %v207, %v223
  %v240 = vadd.f32 %v208, %v224
  %v241 = vadd.f32 %v209, %v225
  %v242 = vadd.f32 %v210, %v226
  %v243 = vadd.f32 %v211, %v227
  %v244 = vadd.f32 %v212, %v228
  %v245 = vadd.f32 %v213, %v229
  %v246 = vadd.f32 %v214, %v230
  %v247 = vadd.f32 %v215, %v231
  %v248 = vadd.f32 %v216, %v232
  %v249 = vadd.f32 %v217, %v233
  %v250 = vadd.f32 %v218, %v234
  %v251 = vadd.f32 %v219, %v235
  %v252 = vadd.f32 %v220, %v236
  %v253 = vld [vmem:[%s76 + $0x2] sm:$0xff]
  %v254 = vld [vmem:[%s76 + $0x12] sm:$0xff]
  %v255 = vld [vmem:[%s76 + $0x22] sm:$0xff]
  %v256 = vld [vmem:[%s76 + $0x32] sm:$0xff]
  %v257 = vld [vmem:[%s76 + $0x42] sm:$0xff]
  %v258 = vld [vmem:[%s76 + $0x52] sm:$0xff]
  %v259 = vld [vmem:[%s76 + $0x62] sm:$0xff]
  %v260 = vld [vmem:[%s76 + $0x72] sm:$0xff]
  %v261 = vld [vmem:[%s76 + $0xa2] sm:$0xff]
  %v262 = vld [vmem:[%s76 + $0xb2] sm:$0xff]
  %v263 = vld [vmem:[%s76 + $0xc2] sm:$0xff]
  %v264 = vld [vmem:[%s76 + $0xd2] sm:$0xff]
  %v265 = vld [vmem:[%s76 + $0xe2] sm:$0xff]
  %v266 = vld [vmem:[%s76 + $0xf2] sm:$0xff]
  %v267 = vld [vmem:[%s76 + $0x102] sm:$0xff]
  %v268 = vld [vmem:[%s76 + $0x112] sm:$0xff]
  %v269 = vadd.f32 %v237, %v253
  %v270 = vadd.f32 %v238, %v254
  %v271 = vadd.f32 %v239, %v255
  %v272 = vadd.f32 %v240, %v256
  %v273 = vadd.f32 %v241, %v257
  %v274 = vadd.f32 %v242, %v258
  %v275 = vadd.f32 %v243, %v259
  %v276 = vadd.f32 %v244, %v260
  %v277 = vadd.f32 %v245, %v261
  %v278 = vadd.f32 %v246, %v262
  %v279 = vadd.f32 %v247, %v263
  %v280 = vadd.f32 %v248, %v264
  %v281 = vadd.f32 %v249, %v265
  %v282 = vadd.f32 %v250, %v266
  %v283 = vadd.f32 %v251, %v267
  %v284 = vadd.f32 %v252, %v268
  %s285 = scalar_lea.vmem [#allocation2], 32
  %v286 = vld [vmem:[%s285] sm:$0xff]
  %v287 = vld [vmem:[%s285 + $0x10] sm:$0xff]
  %v288 = vld [vmem:[%s285 + $0x20] sm:$0xff]
  %v289 = vld [vmem:[%s285 + $0x30] sm:$0xff]
  %v290 = vld [vmem:[%s285 + $0x40] sm:$0xff]
  %v291 = vld [vmem:[%s285 + $0x50] sm:$0xff]
  %v292 = vld [vmem:[%s285 + $0x60] sm:$0xff]
  %v293 = vld [vmem:[%s285 + $0x70] sm:$0xff]
  %v294 = vld [vmem:[%s285 + $0xa0] sm:$0xff]
  %v295 = vld [vmem:[%s285 + $0xb0] sm:$0xff]
  %v296 = vld [vmem:[%s285 + $0xc0] sm:$0xff]
  %v297 = vld [vmem:[%s285 + $0xd0] sm:$0xff]
  %v298 = vld [vmem:[%s285 + $0xe0] sm:$0xff]
  %v299 = vld [vmem:[%s285 + $0xf0] sm:$0xff]
  %v300 = vld [vmem:[%s285 + $0x100] sm:$0xff]
  %v301 = vld [vmem:[%s285 + $0x110] sm:$0xff]
  %v302 = vadd.f32 %v269, %v286
  %v303 = vadd.f32 %v270, %v287
  %v304 = vadd.f32 %v271, %v288
  %v305 = vadd.f32 %v272, %v289
  %v306 = vadd.f32 %v273, %v290
  %v307 = vadd.f32 %v274, %v291
  %v308 = vadd.f32 %v275, %v292
  %v309 = vadd.f32 %v276, %v293
  %v310 = vadd.f32 %v277, %v294
  %v311 = vadd.f32 %v278, %v295
  %v312 = vadd.f32 %v279, %v296
  %v313 = vadd.f32 %v280, %v297
  %v314 = vadd.f32 %v281, %v298
  %v315 = vadd.f32 %v282, %v299
  %v316 = vadd.f32 %v283, %v300
  %v317 = vadd.f32 %v284, %v301
  %v318 = vld [vmem:[%s285 + $0x1] sm:$0xff]
  %v319 = vld [vmem:[%s285 + $0x11] sm:$0xff]
  %v320 = vld [vmem:[%s285 + $0x21] sm:$0xff]
  %v321 = vld [vmem:[%s285 + $0x31] sm:$0xff]
  %v322 = vld [vmem:[%s285 + $0x41] sm:$0xff]
  %v323 = vld [vmem:[%s285 + $0x51] sm:$0xff]
  %v324 = vld [vmem:[%s285 + $0x61] sm:$0xff]
  %v325 = vld [vmem:[%s285 + $0x71] sm:$0xff]
  %v326 = vld [vmem:[%s285 + $0xa1] sm:$0xff]
  %v327 = vld [vmem:[%s285 + $0xb1] sm:$0xff]
  %v328 = vld [vmem:[%s285 + $0xc1] sm:$0xff]
  %v329 = vld [vmem:[%s285 + $0xd1] sm:$0xff]
  %v330 = vld [vmem:[%s285 + $0xe1] sm:$0xff]
  %v331 = vld [vmem:[%s285 + $0xf1] sm:$0xff]
  %v332 = vld [vmem:[%s285 + $0x101] sm:$0xff]
  %v333 = vld [vmem:[%s285 + $0x111] sm:$0xff]
  %v334 = vadd.f32 %v302, %v318
  %v335 = vadd.f32 %v303, %v319
  %v336 = vadd.f32 %v304, %v320
  %v337 = vadd.f32 %v305, %v321
  %v338 = vadd.f32 %v306, %v322
  %v339 = vadd.f32 %v307, %v323
  %v340 = vadd.f32 %v308, %v324
  %v341 = vadd.f32 %v309, %v325
  %v342 = vadd.f32 %v310, %v326
  %v343 = vadd.f32 %v311, %v327
  %v344 = vadd.f32 %v312, %v328
  %v345 = vadd.f32 %v313, %v329
  %v346 = vadd.f32 %v314, %v330
  %v347 = vadd.f32 %v315, %v331
  %v348 = vadd.f32 %v316, %v332
  %v349 = vadd.f32 %v317, %v333
  %v350 = vld [vmem:[%s285 + $0x2] sm:$0xff]
  %v351 = vld [vmem:[%s285 + $0x12] sm:$0xff]
  %v352 = vld [vmem:[%s285 + $0x22] sm:$0xff]
  %v353 = vld [vmem:[%s285 + $0x32] sm:$0xff]
  %v354 = vld [vmem:[%s285 + $0x42] sm:$0xff]
  %v355 = vld [vmem:[%s285 + $0x52] sm:$0xff]
  %v356 = vld [vmem:[%s285 + $0x62] sm:$0xff]
  %v357 = vld [vmem:[%s285 + $0x72] sm:$0xff]
  %v358 = vld [vmem:[%s285 + $0xa2] sm:$0xff]
  %v359 = vld [vmem:[%s285 + $0xb2] sm:$0xff]
  %v360 = vld [vmem:[%s285 + $0xc2] sm:$0xff]
  %v361 = vld [vmem:[%s285 + $0xd2] sm:$0xff]
  %v362 = vld [vmem:[%s285 + $0xe2] sm:$0xff]
  %v363 = vld [vmem:[%s285 + $0xf2] sm:$0xff]
  %v364 = vld [vmem:[%s285 + $0x102] sm:$0xff]
  %v365 = vld [vmem:[%s285 + $0x112] sm:$0xff]
  %v366 = vadd.f32 %v334, %v350
  %v367 = vadd.f32 %v335, %v351
  %v368 = vadd.f32 %v336, %v352
  %v369 = vadd.f32 %v337, %v353
  %v370 = vadd.f32 %v338, %v354
  %v371 = vadd.f32 %v339, %v355
  %v372 = vadd.f32 %v340, %v356
  %v373 = vadd.f32 %v341, %v357
  %v374 = vadd.f32 %v342, %v358
  %v375 = vadd.f32 %v343, %v359
  %v376 = vadd.f32 %v344, %v360
  %v377 = vadd.f32 %v345, %v361
  %v378 = vadd.f32 %v346, %v362
  %v379 = vadd.f32 %v347, %v363
  %v380 = vadd.f32 %v348, %v364
  %v381 = vadd.f32 %v349, %v365
  %v382 = vmul.f32 %v366, 0.11111111
  %v383 = vmul.f32 %v367, 0.11111111
  %v384 = vmul.f32 %v368, 0.11111111
  %v385 = vmul.f32 %v369, 0.11111111
  %v386 = vmul.f32 %v370, 0.11111111
  %v387 = vmul.f32 %v371, 0.11111111
  %v388 = vmul.f32 %v372, 0.11111111
  %v389 = vmul.f32 %v373, 0.11111111
  %v390 = vmul.f32 %v374, 0.11111111
  %v391 = vmul.f32 %v375, 0.11111111
  %v392 = vmul.f32 %v376, 0.11111111
  %v393 = vmul.f32 %v377, 0.11111111
  %v394 = vmul.f32 %v378, 0.11111111
  %v395 = vmul.f32 %v379, 0.11111111
  %v396 = vmul.f32 %v380, 0.11111111
  %v397 = vmul.f32 %v381, 0.11111111
  %v398 = vpack.c.bf16 %v383, %v382
  %v399 = vpack.c.bf16 %v385, %v384
  %v400 = vpack.c.bf16 %v387, %v386
  %v401 = vpack.c.bf16 %v389, %v388
  %v402 = vpack.c.bf16 %v391, %v390
  %v403 = vpack.c.bf16 %v393, %v392
  %v404 = vpack.c.bf16 %v395, %v394
  %v405 = vpack.c.bf16 %v397, %v396
  %v406 = vld [vmem:[%s1] sm:$0xf]
  %v407 = vld [vmem:[%s1 + $0x4] sm:$0xf]
  %v408 = vld [vmem:[%s1 + $0x8] sm:$0xf]
  %v409 = vld [vmem:[%s1 + $0xc] sm:$0xf]
  %v414 = vunpack.c.l.b16 %v406
  %v415 = vunpack.c.l.b16 %v407
  %v416 = vunpack.c.l.b16 %v408
  %v417 = vunpack.c.l.b16 %v409
  %v418 = vpack.c.b16 %v415, %v414
  %v419 = vpack.c.b16 %v417, %v416
  %v423 = vsel %vm18, %v398, 0
  %v426 = vsel %vm18, %v399, 0
  %v429 = vsel %vm18, %v400, 0
  %v432 = vsel %vm18, %v401, 0
  %v435 = vsel %vm18, %v402, 0
  %v438 = vsel %vm18, %v403, 0
  %v441 = vsel %vm18, %v404, 0
  %v444 = vsel %vm18, %v405, 0
  %446 = vmatprep.subr.bf16.mxu0 0
  %447 = vmatpush1.bf16.msra.mxu0 %v418
  %448 = vmatprep.subr.bf16.mxu0 0
  %449 = vmatpush1.bf16.msra.mxu0 %v419
  %450 = vmatprep.subr.bf16.mxu0 0
  %451 = vmatpush1.bf16.msra.mxu0 0
  %452 = vmatprep.subr.bf16.mxu0 0
  %453 = vmatpush1.bf16.msra.mxu0 0
  %454 = vmatprep.subr.bf16.mxu0 0
  %455 = vmatpush1.bf16.msra.mxu0 0
  %456 = vmatprep.subr.bf16.mxu0 0
  %457 = vmatpush1.bf16.msra.mxu0 0
  %458 = vmatprep.subr.bf16.mxu0 0
  %459 = vmatpush1.bf16.msra.mxu0 0
  %460 = vmatprep.subr.bf16.mxu0 0
  %461 = vmatpush1.bf16.msra.mxu0 0
  %462 = vmatprep.subr.bf16.mxu0 0
  %463 = vmatpush1.bf16.msra.mxu0 0
  %464 = vmatprep.subr.bf16.mxu0 0
  %465 = vmatpush1.bf16.msra.mxu0 0
  %466 = vmatprep.subr.bf16.mxu0 0
  %467 = vmatpush1.bf16.msra.mxu0 0
  %468 = vmatprep.subr.bf16.mxu0 0
  %469 = vmatpush1.bf16.msra.mxu0 0
  %470 = vmatprep.subr.bf16.mxu0 0
  %471 = vmatpush1.bf16.msra.mxu0 0
  %472 = vmatprep.subr.bf16.mxu0 0
  %473 = vmatpush1.bf16.msra.mxu0 0
  %474 = vmatprep.subr.bf16.mxu0 0
  %475 = vmatpush1.bf16.msra.mxu0 0
  %476 = vmatprep.subr.bf16.mxu0 0
  %477 = vmatpush1.bf16.msra.mxu0 0
  %478 = vmatprep.mubr.bf16.mxu0 0
  %479 = vmatmul.mubr.bf16.gmra.mrb[0].mxu0 %v423
  %v480 = vpop.f32.mrb[0].mxu0
  %v481 = vadd.f32 0.0, %v480
  %v482 = vpop.f32.mrb[0].mxu0
  %v483 = vpop.f32.mrb[0].mxu0
  %v484 = vadd.f32 0.0, %v483
  %v485 = vpop.f32.mrb[0].mxu0
  %486 = vmatprep.mubr.bf16.mxu0 0
  %487 = vmatmul.mubr.bf16.gmra.mrb[0].mxu0 %v426
  %v488 = vpop.f32.mrb[0].mxu0
  %v489 = vadd.f32 0.0, %v488
  %v490 = vpop.f32.mrb[0].mxu0
  %v491 = vpop.f32.mrb[0].mxu0
  %v492 = vadd.f32 0.0, %v491
  %v493 = vpop.f32.mrb[0].mxu0
  %494 = vmatprep.mubr.bf16.mxu0 0
  %495 = vmatmul.mubr.bf16.gmra.mrb[0].mxu0 %v429
  %v496 = vpop.f32.mrb[0].mxu0
  %v497 = vadd.f32 0.0, %v496
  %v498 = vpop.f32.mrb[0].mxu0
  %v499 = vpop.f32.mrb[0].mxu0
  %v500 = vadd.f32 0.0, %v499
  %v501 = vpop.f32.mrb[0].mxu0
  %502 = vmatprep.mubr.bf16.mxu0 0
  %503 = vmatmul.mubr.bf16.gmra.mrb[0].mxu0 %v432
  %v504 = vpop.f32.mrb[0].mxu0
  %v505 = vadd.f32 0.0, %v504
  %v506 = vpop.f32.mrb[0].mxu0
  %v507 = vpop.f32.mrb[0].mxu0
  %v508 = vadd.f32 0.0, %v507
  %v509 = vpop.f32.mrb[0].mxu0
  %510 = vmatprep.mubr.bf16.mxu0 0
  %511 = vmatmul.mubr.bf16.gmra.mrb[0].mxu0 %v435
  %v512 = vpop.f32.mrb[0].mxu0
  %v513 = vadd.f32 0.0, %v512
  %v514 = vpop.f32.mrb[0].mxu0
  %v515 = vpop.f32.mrb[0].mxu0
  %v516 = vadd.f32 0.0, %v515
  %v517 = vpop.f32.mrb[0].mxu0
  %518 = vmatprep.mubr.bf16.mxu0 0
  %519 = vmatmul.mubr.bf16.gmra.mrb[0].mxu0 %v438
  %v520 = vpop.f32.mrb[0].mxu0
  %v521 = vadd.f32 0.0, %v520
  %v522 = vpop.f32.mrb[0].mxu0
  %v523 = vpop.f32.mrb[0].mxu0
  %v524 = vadd.f32 0.0, %v523
  %v525 = vpop.f32.mrb[0].mxu0
  %526 = vmatprep.mubr.bf16.mxu0 0
  %527 = vmatmul.mubr.bf16.gmra.mrb[0].mxu0 %v441
  %v528 = vpop.f32.mrb[0].mxu0
  %v529 = vadd.f32 0.0, %v528
  %v530 = vpop.f32.mrb[0].mxu0
  %v531 = vpop.f32.mrb[0].mxu0
  %v532 = vadd.f32 0.0, %v531
  %v533 = vpop.f32.mrb[0].mxu0
  %534 = vmatprep.mubr.bf16.mxu0 0
  %535 = vmatmul.mubr.bf16.gmra.mrb[0].mxu0 %v444
  %v536 = vpop.f32.mrb[0].mxu0
  %v537 = vadd.f32 0.0, %v536
  %v538 = vpop.f32.mrb[0].mxu0
  %v539 = vpop.f32.mrb[0].mxu0
  %v540 = vadd.f32 0.0, %v539
  %v541 = vpop.f32.mrb[0].mxu0
  %542 = vdwg.mxu0
  %v543 = vld [vmem:[%s2] sm:$0x1]
  %v545 = vlaneseq
  %v546 = vshrl.u32 %v545, 7
  %v547 = vsub.s32 0, %v546
  %v548 = vrot.slane %v543, %v547
  %v550 = vmul.f32 %v481, %v548
  %v551 = vmul.f32 %v484, %v548
  %v552 = vmul.f32 %v489, %v548
  %v553 = vmul.f32 %v492, %v548
  %v554 = vmul.f32 %v497, %v548
  %v555 = vmul.f32 %v500, %v548
  %v556 = vmul.f32 %v505, %v548
  %v557 = vmul.f32 %v508, %v548
  %v558 = vmul.f32 %v513, %v548
  %v559 = vmul.f32 %v516, %v548
  %v560 = vmul.f32 %v521, %v548
  %v561 = vmul.f32 %v524, %v548
  %v562 = vmul.f32 %v529, %v548
  %v563 = vmul.f32 %v532, %v548
  %v564 = vmul.f32 %v537, %v548
  %v565 = vmul.f32 %v540, %v548
  %v566 = vld [vmem:[%s3] sm:$0x1]
  %v568 = vlaneseq
  %v569 = vshrl.u32 %v568, 7
  %v570 = vsub.s32 0, %v569
  %v571 = vrot.slane %v566, %v570
  %v573 = vadd.f32 %v550, %v571
  %v574 = vadd.f32 %v551, %v571
  %v575 = vadd.f32 %v552, %v571
  %v576 = vadd.f32 %v553, %v571
  %v577 = vadd.f32 %v554, %v571
  %v578 = vadd.f32 %v555, %v571
  %v579 = vadd.f32 %v556, %v571
  %v580 = vadd.f32 %v557, %v571
  %v581 = vadd.f32 %v558, %v571
  %v582 = vadd.f32 %v559, %v571
  %v583 = vadd.f32 %v560, %v571
  %v584 = vadd.f32 %v561, %v571
  %v585 = vadd.f32 %v562, %v571
  %v586 = vadd.f32 %v563, %v571
  %v587 = vadd.f32 %v564, %v571
  %v588 = vadd.f32 %v565, %v571
  %v589 = vmax.f32 %v573, 0.0
  %v590 = vmax.f32 %v574, 0.0
  %v591 = vmax.f32 %v575, 0.0
  %v592 = vmax.f32 %v576, 0.0
  %v593 = vmax.f32 %v577, 0.0
  %v594 = vmax.f32 %v578, 0.0
  %v595 = vmax.f32 %v579, 0.0
  %v596 = vmax.f32 %v580, 0.0
  %v597 = vmax.f32 %v581, 0.0
  %v598 = vmax.f32 %v582, 0.0
  %v599 = vmax.f32 %v583, 0.0
  %v600 = vmax.f32 %v584, 0.0
  %v601 = vmax.f32 %v585, 0.0
  %v602 = vmax.f32 %v586, 0.0
  %v603 = vmax.f32 %v587, 0.0
  %v604 = vmax.f32 %v588, 0.0
  %605 = vst [vmem:[%s4] sm:$0xff] %v589
  %606 = vst [vmem:[%s4 + $0x8] sm:$0xff] %v590
  %607 = vst [vmem:[%s4 + $0x10] sm:$0xff] %v591
  %608 = vst [vmem:[%s4 + $0x18] sm:$0xff] %v592
  %609 = vst [vmem:[%s4 + $0x20] sm:$0xff] %v593
  %610 = vst [vmem:[%s4 + $0x28] sm:$0xff] %v594
  %611 = vst [vmem:[%s4 + $0x30] sm:$0xff] %v595
  %612 = vst [vmem:[%s4 + $0x38] sm:$0xff] %v596
  %613 = vst [vmem:[%s4 + $0x40] sm:$0xff] %v597
  %614 = vst [vmem:[%s4 + $0x48] sm:$0xff] %v598
  %615 = vst [vmem:[%s4 + $0x50] sm:$0xff] %v599
  %616 = vst [vmem:[%s4 + $0x58] sm:$0xff] %v600
  %617 = vst [vmem:[%s4 + $0x60] sm:$0xff] %v601
  %618 = vst [vmem:[%s4 + $0x68] sm:$0xff] %v602
  %619 = vst [vmem:[%s4 + $0x70] sm:$0xff] %v603
  %620 = vst [vmem:[%s4 + $0x78] sm:$0xff] %v604
  // Predicated region
  $region18: #{_lambda_.19} parent=0 // pred_check
    _
  $region19: #{_lambda_.19} parent=0 // pred_check_branch
    %622 = sbr.rel (0) target = $region21
  $region20: #{_lambda_.19} parent=0 // pred_region
    _
  $region21: #{_lambda_.19} parent=0 // pred_fallthru
    _
  // Predicated region
  $region22: #{_lambda_.19} parent=0 // pred_check
    _
  $region23: #{_lambda_.19} parent=0 // pred_check_branch
    %624 = sbr.rel (0) target = $region25
  $region24: #{_lambda_.19} parent=0 // pred_region
    _
  $region25: #{_lambda_.19} parent=0 // pred_fallthru
    _

// kernel: _lambda_.15
$region0: #{_lambda_.15}
  #allocation0 [shape = 'u32[]', space=smem, size = 0x4, offset = 0x4, fixed_abs, tag = 'smem constant byte address 0x4 - core index']
  #allocation1 [shape = 'u32[144,128]{1,0:T(1,128)}', space=vmem, size = 0x12000, scoped, tag = 'internal scratch']
  #allocation2 [shape = 'f32[2,8,14,256]{3,2,1,0:T(8,128)}', space=vmem, size = 0x40000, scoped, tag = 'scratch operand']
  %s0 = inlined_call_operand.vmem [shape: f32[2,8,8,256], index: 0, kind: input, shape index: {}]
  %s1 = inlined_call_operand.vmem [shape: bf16[7,256,256], index: 1, kind: input, shape index: {}]
  %s2 = inlined_call_operand.vmem [shape: f32[1,256], index: 2, kind: input, shape index: {}]
  %s3 = inlined_call_operand.vmem [shape: f32[1,256], index: 3, kind: input, shape index: {}]
  %s4 = inlined_call_operand.vmem [shape: f32[2,8,8,256], index: 4, kind: output, shape index: {}]
  %s5 = sld [smem:[#allocation0]]
  $region26: #{_lambda_.15} parent=0
    _
  %s7 = ssub.s32 1, %s5
  %s8 = scalar_select 0, %s7, %s5
  // Predicated region
  $region2: #{_lambda_.15} parent=0 // pred_check
    _
  $region3: #{_lambda_.15} parent=0 // pred_check_branch
    %10 = sbr.rel (0) target = $region5
  $region4: #{_lambda_.15} parent=0 // pred_region
    _
  $region5: #{_lambda_.15} parent=0 // pred_fallthru
    _
  // Predicated region
  $region6: #{_lambda_.15} parent=0 // pred_check
    _
  $region7: #{_lambda_.15} parent=0 // pred_check_branch
    %12 = sbr.rel (0) target = $region9
  $region8: #{_lambda_.15} parent=0 // pred_region
    _
  $region9: #{_lambda_.15} parent=0 // pred_fallthru
    _
  // Predicated region
  $region10: #{_lambda_.15} parent=0 // pred_check
    _
  $region11: #{_lambda_.15} parent=0 // pred_check_branch
    %14 = sbr.rel (0) target = $region13
  $region12: #{_lambda_.15} parent=0 // pred_region
    _
  $region13: #{_lambda_.15} parent=0 // pred_fallthru
    _
  // Predicated region
  $region14: #{_lambda_.15} parent=0 // pred_check
    _
  $region15: #{_lambda_.15} parent=0 // pred_check_branch
    %16 = sbr.rel (0) target = $region17
  $region16: #{_lambda_.15} parent=0 // pred_region
    _
  $region17: #{_lambda_.15} parent=0 // pred_fallthru
    _
  %17 = vst [vmem:[#allocation2] sm:$0xff] 0.0
  %18 = vst [vmem:[#allocation2 + $0x8] sm:$0xff] 0.0
  %19 = vst [vmem:[#allocation2 + $0x10] sm:$0x3f] 0.0
  %20 = vst [vmem:[#allocation2 + $0x18] sm:$0x3f] 0.0
  %21 = vst [vmem:[#allocation2 + $0x20] sm:$0xff] 0.0
  %22 = vst [vmem:[#allocation2 + $0x28] sm:$0xff] 0.0
  %23 = vst [vmem:[#allocation2 + $0x30] sm:$0x3f] 0.0
  %24 = vst [vmem:[#allocation2 + $0x38] sm:$0x3f] 0.0
  %25 = vst [vmem:[#allocation2 + $0x40] sm:$0xff] 0.0
  %26 = vst [vmem:[#allocation2 + $0x48] sm:$0xff] 0.0
  %27 = vst [vmem:[#allocation2 + $0x50] sm:$0x3f] 0.0
  %28 = vst [vmem:[#allocation2 + $0x58] sm:$0x3f] 0.0
  %29 = vst [vmem:[#allocation2 + $0x60] sm:$0xff] 0.0
  %30 = vst [vmem:[#allocation2 + $0x68] sm:$0xff] 0.0
  %31 = vst [vmem:[#allocation2 + $0x70] sm:$0x3f] 0.0
  %32 = vst [vmem:[#allocation2 + $0x78] sm:$0x3f] 0.0
  %33 = vst [vmem:[#allocation2 + $0x80] sm:$0xff] 0.0
  %34 = vst [vmem:[#allocation2 + $0x88] sm:$0xff] 0.0
  %35 = vst [vmem:[#allocation2 + $0x90] sm:$0x3f] 0.0
  %36 = vst [vmem:[#allocation2 + $0x98] sm:$0x3f] 0.0
  %37 = vst [vmem:[#allocation2 + $0xa0] sm:$0xff] 0.0
  %38 = vst [vmem:[#allocation2 + $0xa8] sm:$0xff] 0.0
  %39 = vst [vmem:[#allocation2 + $0xb0] sm:$0x3f] 0.0
  %40 = vst [vmem:[#allocation2 + $0xb8] sm:$0x3f] 0.0
  %41 = vst [vmem:[#allocation2 + $0xc0] sm:$0xff] 0.0
  %42 = vst [vmem:[#allocation2 + $0xc8] sm:$0xff] 0.0
  %43 = vst [vmem:[#allocation2 + $0xd0] sm:$0x3f] 0.0
  %44 = vst [vmem:[#allocation2 + $0xd8] sm:$0x3f] 0.0
  %45 = vst [vmem:[#allocation2 + $0xe0] sm:$0xff] 0.0
  %46 = vst [vmem:[#allocation2 + $0xe8] sm:$0xff] 0.0
  %47 = vst [vmem:[#allocation2 + $0xf0] sm:$0x3f] 0.0
  %48 = vst [vmem:[#allocation2 + $0xf8] sm:$0x3f] 0.0
  %49 = vst [vmem:[#allocation2 + $0x100] sm:$0xff] 0.0
  %50 = vst [vmem:[#allocation2 + $0x108] sm:$0xff] 0.0
  %51 = vst [vmem:[#allocation2 + $0x110] sm:$0x3f] 0.0
  %52 = vst [vmem:[#allocation2 + $0x118] sm:$0x3f] 0.0
  %53 = vst [vmem:[#allocation2 + $0x120] sm:$0xff] 0.0
  %54 = vst [vmem:[#allocation2 + $0x128] sm:$0xff] 0.0
  %55 = vst [vmem:[#allocation2 + $0x130] sm:$0x3f] 0.0
  %56 = vst [vmem:[#allocation2 + $0x138] sm:$0x3f] 0.0
  %57 = vst [vmem:[#allocation2 + $0x140] sm:$0xff] 0.0
  %58 = vst [vmem:[#allocation2 + $0x148] sm:$0xff] 0.0
  %59 = vst [vmem:[#allocation2 + $0x150] sm:$0x3f] 0.0
  %60 = vst [vmem:[#allocation2 + $0x158] sm:$0x3f] 0.0
  %61 = vst [vmem:[#allocation2 + $0x160] sm:$0xff] 0.0
  %62 = vst [vmem:[#allocation2 + $0x168] sm:$0xff] 0.0
  %63 = vst [vmem:[#allocation2 + $0x170] sm:$0x3f] 0.0
  %64 = vst [vmem:[#allocation2 + $0x178] sm:$0x3f] 0.0
  %65 = vst [vmem:[#allocation2 + $0x180] sm:$0xff] 0.0
  %66 = vst [vmem:[#allocation2 + $0x188] sm:$0xff] 0.0
  %67 = vst [vmem:[#allocation2 + $0x190] sm:$0x3f] 0.0
  %68 = vst [vmem:[#allocation2 + $0x198] sm:$0x3f] 0.0
  %69 = vst [vmem:[#allocation2 + $0x1a0] sm:$0xff] 0.0
  %70 = vst [vmem:[#allocation2 + $0x1a8] sm:$0xff] 0.0
  %71 = vst [vmem:[#allocation2 + $0x1b0] sm:$0x3f] 0.0
  %72 = vst [vmem:[#allocation2 + $0x1b8] sm:$0x3f] 0.0
  %73 = vst [vmem:[#allocation2 + $0x1c0] sm:$0xff] 0.0
  %74 = vst [vmem:[#allocation2 + $0x1c8] sm:$0xff] 0.0
  %75 = vst [vmem:[#allocation2 + $0x1d0] sm:$0x3f] 0.0
  %76 = vst [vmem:[#allocation2 + $0x1d8] sm:$0x3f] 0.0
  %77 = vst [vmem:[#allocation2 + $0x1e0] sm:$0xff] 0.0
  %78 = vst [vmem:[#allocation2 + $0x1e8] sm:$0xff] 0.0
  %79 = vst [vmem:[#allocation2 + $0x1f0] sm:$0x3f] 0.0
  %80 = vst [vmem:[#allocation2 + $0x1f8] sm:$0x3f] 0.0
  %v81 = vld [vmem:[%s0] sm:$0xff]
  %v82 = vld [vmem:[%s0 + $0x8] sm:$0xff]
  %v83 = vld [vmem:[%s0 + $0x10] sm:$0xff]
  %v84 = vld [vmem:[%s0 + $0x18] sm:$0xff]
  %v85 = vld [vmem:[%s0 + $0x20] sm:$0xff]
  %v86 = vld [vmem:[%s0 + $0x28] sm:$0xff]
  %v87 = vld [vmem:[%s0 + $0x30] sm:$0xff]
  %v88 = vld [vmem:[%s0 + $0x38] sm:$0xff]
  %v89 = vld [vmem:[%s0 + $0x40] sm:$0xff]
  %v90 = vld [vmem:[%s0 + $0x48] sm:$0xff]
  %v91 = vld [vmem:[%s0 + $0x50] sm:$0xff]
  %v92 = vld [vmem:[%s0 + $0x58] sm:$0xff]
  %v93 = vld [vmem:[%s0 + $0x60] sm:$0xff]
  %v94 = vld [vmem:[%s0 + $0x68] sm:$0xff]
  %v95 = vld [vmem:[%s0 + $0x70] sm:$0xff]
  %v96 = vld [vmem:[%s0 + $0x78] sm:$0xff]
  %v97 = vld [vmem:[%s0 + $0x80] sm:$0xff]
  %v98 = vld [vmem:[%s0 + $0x88] sm:$0xff]
  %v99 = vld [vmem:[%s0 + $0x90] sm:$0xff]
  %v100 = vld [vmem:[%s0 + $0x98] sm:$0xff]
  %v101 = vld [vmem:[%s0 + $0xa0] sm:$0xff]
  %v102 = vld [vmem:[%s0 + $0xa8] sm:$0xff]
  %v103 = vld [vmem:[%s0 + $0xb0] sm:$0xff]
  %v104 = vld [vmem:[%s0 + $0xb8] sm:$0xff]
  %v105 = vld [vmem:[%s0 + $0xc0] sm:$0xff]
  %v106 = vld [vmem:[%s0 + $0xc8] sm:$0xff]
  %v107 = vld [vmem:[%s0 + $0xd0] sm:$0xff]
  %v108 = vld [vmem:[%s0 + $0xd8] sm:$0xff]
  %v109 = vld [vmem:[%s0 + $0xe0] sm:$0xff]
  %v110 = vld [vmem:[%s0 + $0xe8] sm:$0xff]
  %v111 = vld [vmem:[%s0 + $0xf0] sm:$0xff]
  %v112 = vld [vmem:[%s0 + $0xf8] sm:$0xff]
  %v145 = vrot.slane %v81, 5
  %v146 = vrot.slane %v82, 5
  %v147 = vrot.slane %v83, 5
  %v148 = vrot.slane %v84, 5
  %v149 = vrot.slane %v85, 5
  %v150 = vrot.slane %v86, 5
  %v151 = vrot.slane %v87, 5
  %v152 = vrot.slane %v88, 5
  %v153 = vrot.slane %v89, 5
  %v154 = vrot.slane %v90, 5
  %v155 = vrot.slane %v91, 5
  %v156 = vrot.slane %v92, 5
  %v157 = vrot.slane %v93, 5
  %v158 = vrot.slane %v94, 5
  %v159 = vrot.slane %v95, 5
  %v160 = vrot.slane %v96, 5
  %v161 = vrot.slane %v97, 5
  %v162 = vrot.slane %v98, 5
  %v163 = vrot.slane %v99, 5
  %v164 = vrot.slane %v100, 5
  %v165 = vrot.slane %v101, 5
  %v166 = vrot.slane %v102, 5
  %v167 = vrot.slane %v103, 5
  %v168 = vrot.slane %v104, 5
  %v169 = vrot.slane %v105, 5
  %v170 = vrot.slane %v106, 5
  %v171 = vrot.slane %v107, 5
  %v172 = vrot.slane %v108, 5
  %v173 = vrot.slane %v109, 5
  %v174 = vrot.slane %v110, 5
  %v175 = vrot.slane %v111, 5
  %v176 = vrot.slane %v112, 5
  %209 = vst [vmem:[#allocation2] sm:$0xf8] %v145
  %210 = vst [vmem:[#allocation2 + $0x8] sm:$0xf8] %v146
  %211 = vst [vmem:[#allocation2 + $0x10] sm:$0x7] %v145
  %212 = vst [vmem:[#allocation2 + $0x18] sm:$0x7] %v146
  %213 = vst [vmem:[#allocation2 + $0x20] sm:$0xf8] %v147
  %214 = vst [vmem:[#allocation2 + $0x28] sm:$0xf8] %v148
  %215 = vst [vmem:[#allocation2 + $0x30] sm:$0x7] %v147
  %216 = vst [vmem:[#allocation2 + $0x38] sm:$0x7] %v148
  %217 = vst [vmem:[#allocation2 + $0x40] sm:$0xf8] %v149
  %218 = vst [vmem:[#allocation2 + $0x48] sm:$0xf8] %v150
  %219 = vst [vmem:[#allocation2 + $0x50] sm:$0x7] %v149
  %220 = vst [vmem:[#allocation2 + $0x58] sm:$0x7] %v150
  %221 = vst [vmem:[#allocation2 + $0x60] sm:$0xf8] %v151
  %222 = vst [vmem:[#allocation2 + $0x68] sm:$0xf8] %v152
  %223 = vst [vmem:[#allocation2 + $0x70] sm:$0x7] %v151
  %224 = vst [vmem:[#allocation2 + $0x78] sm:$0x7] %v152
  %225 = vst [vmem:[#allocation2 + $0x80] sm:$0xf8] %v153
  %226 = vst [vmem:[#allocation2 + $0x88] sm:$0xf8] %v154
  %227 = vst [vmem:[#allocation2 + $0x90] sm:$0x7] %v153
  %228 = vst [vmem:[#allocation2 + $0x98] sm:$0x7] %v154
  %229 = vst [vmem:[#allocation2 + $0xa0] sm:$0xf8] %v155
  %230 = vst [vmem:[#allocation2 + $0xa8] sm:$0xf8] %v156
  %231 = vst [vmem:[#allocation2 + $0xb0] sm:$0x7] %v155
  %232 = vst [vmem:[#allocation2 + $0xb8] sm:$0x7] %v156
  %233 = vst [vmem:[#allocation2 + $0xc0] sm:$0xf8] %v157
  %234 = vst [vmem:[#allocation2 + $0xc8] sm:$0xf8] %v158
  %235 = vst [vmem:[#allocation2 + $0xd0] sm:$0x7] %v157
  %236 = vst [vmem:[#allocation2 + $0xd8] sm:$0x7] %v158
  %237 = vst [vmem:[#allocation2 + $0xe0] sm:$0xf8] %v159
  %238 = vst [vmem:[#allocation2 + $0xe8] sm:$0xf8] %v160
  %239 = vst [vmem:[#allocation2 + $0xf0] sm:$0x7] %v159
  %240 = vst [vmem:[#allocation2 + $0xf8] sm:$0x7] %v160
  %241 = vst [vmem:[#allocation2 + $0x100] sm:$0xf8] %v161
  %242 = vst [vmem:[#allocation2 + $0x108] sm:$0xf8] %v162
  %243 = vst [vmem:[#allocation2 + $0x110] sm:$0x7] %v161
  %244 = vst [vmem:[#allocation2 + $0x118] sm:$0x7] %v162
  %245 = vst [vmem:[#allocation2 + $0x120] sm:$0xf8] %v163
  %246 = vst [vmem:[#allocation2 + $0x128] sm:$0xf8] %v164
  %247 = vst [vmem:[#allocation2 + $0x130] sm:$0x7] %v163
  %248 = vst [vmem:[#allocation2 + $0x138] sm:$0x7] %v164
  %249 = vst [vmem:[#allocation2 + $0x140] sm:$0xf8] %v165
  %250 = vst [vmem:[#allocation2 + $0x148] sm:$0xf8] %v166
  %251 = vst [vmem:[#allocation2 + $0x150] sm:$0x7] %v165
  %252 = vst [vmem:[#allocation2 + $0x158] sm:$0x7] %v166
  %253 = vst [vmem:[#allocation2 + $0x160] sm:$0xf8] %v167
  %254 = vst [vmem:[#allocation2 + $0x168] sm:$0xf8] %v168
  %255 = vst [vmem:[#allocation2 + $0x170] sm:$0x7] %v167
  %256 = vst [vmem:[#allocation2 + $0x178] sm:$0x7] %v168
  %257 = vst [vmem:[#allocation2 + $0x180] sm:$0xf8] %v169
  %258 = vst [vmem:[#allocation2 + $0x188] sm:$0xf8] %v170
  %259 = vst [vmem:[#allocation2 + $0x190] sm:$0x7] %v169
  %260 = vst [vmem:[#allocation2 + $0x198] sm:$0x7] %v170
  %261 = vst [vmem:[#allocation2 + $0x1a0] sm:$0xf8] %v171
  %262 = vst [vmem:[#allocation2 + $0x1a8] sm:$0xf8] %v172
  %263 = vst [vmem:[#allocation2 + $0x1b0] sm:$0x7] %v171
  %264 = vst [vmem:[#allocation2 + $0x1b8] sm:$0x7] %v172
  %265 = vst [vmem:[#allocation2 + $0x1c0] sm:$0xf8] %v173
  %266 = vst [vmem:[#allocation2 + $0x1c8] sm:$0xf8] %v174
  %267 = vst [vmem:[#allocation2 + $0x1d0] sm:$0x7] %v173
  %268 = vst [vmem:[#allocation2 + $0x1d8] sm:$0x7] %v174
  %269 = vst [vmem:[#allocation2 + $0x1e0] sm:$0xf8] %v175
  %270 = vst [vmem:[#allocation2 + $0x1e8] sm:$0xf8] %v176
  %271 = vst [vmem:[#allocation2 + $0x1f0] sm:$0x7] %v175
  %272 = vst [vmem:[#allocation2 + $0x1f8] sm:$0x7] %v176
  %v273 = vld [vmem:[#allocation2] sm:$0xff]
  %v274 = vld [vmem:[#allocation2 + $0x8] sm:$0xff]
  %v275 = vld [vmem:[#allocation2 + $0x20] sm:$0xff]
  %v276 = vld [vmem:[#allocation2 + $0x28] sm:$0xff]
  %v277 = vld [vmem:[#allocation2 + $0x40] sm:$0xff]
  %v278 = vld [vmem:[#allocation2 + $0x48] sm:$0xff]
  %v279 = vld [vmem:[#allocation2 + $0x60] sm:$0xff]
  %v280 = vld [vmem:[#allocation2 + $0x68] sm:$0xff]
  %v281 = vld [vmem:[#allocation2 + $0x80] sm:$0xff]
  %v282 = vld [vmem:[#allocation2 + $0x88] sm:$0xff]
  %v283 = vld [vmem:[#allocation2 + $0xa0] sm:$0xff]
  %v284 = vld [vmem:[#allocation2 + $0xa8] sm:$0xff]
  %v285 = vld [vmem:[#allocation2 + $0xc0] sm:$0xff]
  %v286 = vld [vmem:[#allocation2 + $0xc8] sm:$0xff]
  %v287 = vld [vmem:[#allocation2 + $0xe0] sm:$0xff]
  %v288 = vld [vmem:[#allocation2 + $0xe8] sm:$0xff]
  %v289 = vld [vmem:[#allocation2 + $0x100] sm:$0xff]
  %v290 = vld [vmem:[#allocation2 + $0x108] sm:$0xff]
  %v291 = vld [vmem:[#allocation2 + $0x120] sm:$0xff]
  %v292 = vld [vmem:[#allocation2 + $0x128] sm:$0xff]
  %v293 = vld [vmem:[#allocation2 + $0x140] sm:$0xff]
  %v294 = vld [vmem:[#allocation2 + $0x148] sm:$0xff]
  %v295 = vld [vmem:[#allocation2 + $0x160] sm:$0xff]
  %v296 = vld [vmem:[#allocation2 + $0x168] sm:$0xff]
  %v297 = vld [vmem:[#allocation2 + $0x180] sm:$0xff]
  %v298 = vld [vmem:[#allocation2 + $0x188] sm:$0xff]
  %v299 = vld [vmem:[#allocation2 + $0x1a0] sm:$0xff]
  %v300 = vld [vmem:[#allocation2 + $0x1a8] sm:$0xff]
  %v301 = vld [vmem:[#allocation2 + $0x1c0] sm:$0xff]
  %v302 = vld [vmem:[#allocation2 + $0x1c8] sm:$0xff]
  %v303 = vld [vmem:[#allocation2 + $0x1e0] sm:$0xff]
  %v304 = vld [vmem:[#allocation2 + $0x1e8] sm:$0xff]
  %v305 = vpack.c.bf16 %v275, %v273
  %v306 = vpack.c.bf16 %v276, %v274
  %v307 = vpack.c.bf16 %v279, %v277
  %v308 = vpack.c.bf16 %v280, %v278
  %v309 = vpack.c.bf16 %v283, %v281
  %v310 = vpack.c.bf16 %v284, %v282
  %v311 = vpack.c.bf16 %v287, %v285
  %v312 = vpack.c.bf16 %v288, %v286
  %v313 = vpack.c.bf16 %v291, %v289
  %v314 = vpack.c.bf16 %v292, %v290
  %v315 = vpack.c.bf16 %v295, %v293
  %v316 = vpack.c.bf16 %v296, %v294
  %v317 = vpack.c.bf16 %v299, %v297
  %v318 = vpack.c.bf16 %v300, %v298
  %v319 = vpack.c.bf16 %v303, %v301
  %v320 = vpack.c.bf16 %v304, %v302
  %v321 = vld [vmem:[%s1] sm:$0xff]
  %v322 = vld [vmem:[%s1 + $0x8] sm:$0xff]
  %v323 = vld [vmem:[%s1 + $0x10] sm:$0xff]
  %v324 = vld [vmem:[%s1 + $0x18] sm:$0xff]
  %v325 = vld [vmem:[%s1 + $0x20] sm:$0xff]
  %v326 = vld [vmem:[%s1 + $0x28] sm:$0xff]
  %v327 = vld [vmem:[%s1 + $0x30] sm:$0xff]
  %v328 = vld [vmem:[%s1 + $0x38] sm:$0xff]
  %v329 = vld [vmem:[%s1 + $0x40] sm:$0xff]
  %v330 = vld [vmem:[%s1 + $0x48] sm:$0xff]
  %v331 = vld [vmem:[%s1 + $0x50] sm:$0xff]
  %v332 = vld [vmem:[%s1 + $0x58] sm:$0xff]
  %v333 = vld [vmem:[%s1 + $0x60] sm:$0xff]
  %v334 = vld [vmem:[%s1 + $0x68] sm:$0xff]
  %v335 = vld [vmem:[%s1 + $0x70] sm:$0xff]
  %v336 = vld [vmem:[%s1 + $0x78] sm:$0xff]
  %v337 = vld [vmem:[%s1 + $0x80] sm:$0xff]
  %v338 = vld [vmem:[%s1 + $0x88] sm:$0xff]
  %v339 = vld [vmem:[%s1 + $0x90] sm:$0xff]
  %v340 = vld [vmem:[%s1 + $0x98] sm:$0xff]
  %v341 = vld [vmem:[%s1 + $0xa0] sm:$0xff]
  %v342 = vld [vmem:[%s1 + $0xa8] sm:$0xff]
  %v343 = vld [vmem:[%s1 + $0xb0] sm:$0xff]
  %v344 = vld [vmem:[%s1 + $0xb8] sm:$0xff]
  %v345 = vld [vmem:[%s1 + $0xc0] sm:$0xff]
  %v346 = vld [vmem:[%s1 + $0xc8] sm:$0xff]
  %v347 = vld [vmem:[%s1 + $0xd0] sm:$0xff]
  %v348 = vld [vmem:[%s1 + $0xd8] sm:$0xff]
  %v349 = vld [vmem:[%s1 + $0xe0] sm:$0xff]
  %v350 = vld [vmem:[%s1 + $0xe8] sm:$0xff]
  %v351 = vld [vmem:[%s1 + $0xf0] sm:$0xff]
  %v352 = vld [vmem:[%s1 + $0xf8] sm:$0xff]
  %v353 = vld [vmem:[#allocation2] sm:$0xfe]
  %v354 = vld [vmem:[#allocation2 + $0x8] sm:$0xfe]
  %v355 = vld [vmem:[#allocation2 + $0x10] sm:$0x1]
  %v356 = vld [vmem:[#allocation2 + $0x18] sm:$0x1]
  %v357 = vld [vmem:[#allocation2 + $0x20] sm:$0xfe]
  %v358 = vld [vmem:[#allocation2 + $0x28] sm:$0xfe]
  %v359 = vld [vmem:[#allocation2 + $0x30] sm:$0x1]
  %v360 = vld [vmem:[#allocation2 + $0x38] sm:$0x1]
  %v361 = vld [vmem:[#allocation2 + $0x40] sm:$0xfe]
  %v362 = vld [vmem:[#allocation2 + $0x48] sm:$0xfe]
  %v363 = vld [vmem:[#allocation2 + $0x50] sm:$0x1]
  %v364 = vld [vmem:[#allocation2 + $0x58] sm:$0x1]
  %v365 = vld [vmem:[#allocation2 + $0x60] sm:$0xfe]
  %v366 = vld [vmem:[#allocation2 + $0x68] sm:$0xfe]
  %v367 = vld [vmem:[#allocation2 + $0x70] sm:$0x1]
  %v368 = vld [vmem:[#allocation2 + $0x78] sm:$0x1]
  %v369 = vld [vmem:[#allocation2 + $0x80] sm:$0xfe]
  %v370 = vld [vmem:[#allocation2 + $0x88] sm:$0xfe]
  %v371 = vld [vmem:[#allocation2 + $0x90] sm:$0x1]
  %v372 = vld [vmem:[#allocation2 + $0x98] sm:$0x1]
  %v373 = vld [vmem:[#allocation2 + $0xa0] sm:$0xfe]
  %v374 = vld [vmem:[#allocation2 + $0xa8] sm:$0xfe]
  %v375 = vld [vmem:[#allocation2 + $0xb0] sm:$0x1]
  %v376 = vld [vmem:[#allocation2 + $0xb8] sm:$0x1]
  %v377 = vld [vmem:[#allocation2 + $0xc0] sm:$0xfe]
  %v378 = vld [vmem:[#allocation2 + $0xc8] sm:$0xfe]
  %v379 = vld [vmem:[#allocation2 + $0xd0] sm:$0x1]
  %v380 = vld [vmem:[#allocation2 + $0xd8] sm:$0x1]
  %v381 = vld [vmem:[#allocation2 + $0xe0] sm:$0xfe]
  %v382 = vld [vmem:[#allocation2 + $0xe8] sm:$0xfe]
  %v383 = vld [vmem:[#allocation2 + $0xf0] sm:$0x1]
  %v384 = vld [vmem:[#allocation2 + $0xf8] sm:$0x1]
  %v385 = vld [vmem:[#allocation2 + $0x100] sm:$0xfe]
  %v386 = vld [vmem:[#allocation2 + $0x108] sm:$0xfe]
  %v387 = vld [vmem:[#allocation2 + $0x110] sm:$0x1]
  %v388 = vld [vmem:[#allocation2 + $0x118] sm:$0x1]
  %v389 = vld [vmem:[#allocation2 + $0x120] sm:$0xfe]
  %v390 = vld [vmem:[#allocation2 + $0x128] sm:$0xfe]
  %v391 = vld [vmem:[#allocation2 + $0x130] sm:$0x1]
  %v392 = vld [vmem:[#allocation2 + $0x138] sm:$0x1]
  %v393 = vld [vmem:[#allocation2 + $0x140] sm:$0xfe]
  %v394 = vld [vmem:[#allocation2 + $0x148] sm:$0xfe]
  %v395 = vld [vmem:[#allocation2 + $0x150] sm:$0x1]
  %v396 = vld [vmem:[#allocation2 + $0x158] sm:$0x1]
  %v397 = vld [vmem:[#allocation2 + $0x160] sm:$0xfe]
  %v398 = vld [vmem:[#allocation2 + $0x168] sm:$0xfe]
  %v399 = vld [vmem:[#allocation2 + $0x170] sm:$0x1]
  %v400 = vld [vmem:[#allocation2 + $0x178] sm:$0x1]
  %v401 = vld [vmem:[#allocation2 + $0x180] sm:$0xfe]
  %v402 = vld [vmem:[#allocation2 + $0x188] sm:$0xfe]
  %v403 = vld [vmem:[#allocation2 + $0x190] sm:$0x1]
  %v404 = vld [vmem:[#allocation2 + $0x198] sm:$0x1]
  %v405 = vld [vmem:[#allocation2 + $0x1a0] sm:$0xfe]
  %v406 = vld [vmem:[#allocation2 + $0x1a8] sm:$0xfe]
  %v407 = vld [vmem:[#allocation2 + $0x1b0] sm:$0x1]
  %v408 = vld [vmem:[#allocation2 + $0x1b8] sm:$0x1]
  %v409 = vld [vmem:[#allocation2 + $0x1c0] sm:$0xfe]
  %v410 = vld [vmem:[#allocation2 + $0x1c8] sm:$0xfe]
  %v411 = vld [vmem:[#allocation2 + $0x1d0] sm:$0x1]
  %v412 = vld [vmem:[#allocation2 + $0x1d8] sm:$0x1]
  %v413 = vld [vmem:[#allocation2 + $0x1e0] sm:$0xfe]
  %v414 = vld [vmem:[#allocation2 + $0x1e8] sm:$0xfe]
  %v415 = vld [vmem:[#allocation2 + $0x1f0] sm:$0x1]
  %v416 = vld [vmem:[#allocation2 + $0x1f8] sm:$0x1]
  %vm481 = vcmask 1046528
  %v482 = vrot.slane %v353, 1
  %v483 = vrot.slane %v355, 1
  %v484 = vsel %vm481, %v482, %v483
  %v485 = vrot.slane %v354, 1
  %v486 = vrot.slane %v356, 1
  %v487 = vsel %vm481, %v485, %v486
  %v488 = vrot.slane %v357, 1
  %v489 = vrot.slane %v359, 1
  %v490 = vsel %vm481, %v488, %v489
  %v491 = vrot.slane %v358, 1
  %v492 = vrot.slane %v360, 1
  %v493 = vsel %vm481, %v491, %v492
  %v494 = vrot.slane %v361, 1
  %v495 = vrot.slane %v363, 1
  %v496 = vsel %vm481, %v494, %v495
  %v497 = vrot.slane %v362, 1
  %v498 = vrot.slane %v364, 1
  %v499 = vsel %vm481, %v497, %v498
  %v500 = vrot.slane %v365, 1
  %v501 = vrot.slane %v367, 1
  %v502 = vsel %vm481, %v500, %v501
  %v503 = vrot.slane %v366, 1
  %v504 = vrot.slane %v368, 1
  %v505 = vsel %vm481, %v503, %v504
  %v506 = vrot.slane %v369, 1
  %v507 = vrot.slane %v371, 1
  %v508 = vsel %vm481, %v506, %v507
  %v509 = vrot.slane %v370, 1
  %v510 = vrot.slane %v372, 1
  %v511 = vsel %vm481, %v509, %v510
  %v512 = vrot.slane %v373, 1
  %v513 = vrot.slane %v375, 1
  %v514 = vsel %vm481, %v512, %v513
  %v515 = vrot.slane %v374, 1
  %v516 = vrot.slane %v376, 1
  %v517 = vsel %vm481, %v515, %v516
  %v518 = vrot.slane %v377, 1
  %v519 = vrot.slane %v379, 1
  %v520 = vsel %vm481, %v518, %v519
  %v521 = vrot.slane %v378, 1
  %v522 = vrot.slane %v380, 1
  %v523 = vsel %vm481, %v521, %v522
  %v524 = vrot.slane %v381, 1
  %v525 = vrot.slane %v383, 1
  %v526 = vsel %vm481, %v524, %v525
  %v527 = vrot.slane %v382, 1
  %v528 = vrot.slane %v384, 1
  %v529 = vsel %vm481, %v527, %v528
  %v530 = vrot.slane %v385, 1
  %v531 = vrot.slane %v387, 1
  %v532 = vsel %vm481, %v530, %v531
  %v533 = vrot.slane %v386, 1
  %v534 = vrot.slane %v388, 1
  %v535 = vsel %vm481, %v533, %v534
  %v536 = vrot.slane %v389, 1
  %v537 = vrot.slane %v391, 1
  %v538 = vsel %vm481, %v536, %v537
  %v539 = vrot.slane %v390, 1
  %v540 = vrot.slane %v392, 1
  %v541 = vsel %vm481, %v539, %v540
  %v542 = vrot.slane %v393, 1
  %v543 = vrot.slane %v395, 1
  %v544 = vsel %vm481, %v542, %v543
  %v545 = vrot.slane %v394, 1
  %v546 = vrot.slane %v396, 1
  %v547 = vsel %vm481, %v545, %v546
  %v548 = vrot.slane %v397, 1
  %v549 = vrot.slane %v399, 1
  %v550 = vsel %vm481, %v548, %v549
  %v551 = vrot.slane %v398, 1
  %v552 = vrot.slane %v400, 1
  %v553 = vsel %vm481, %v551, %v552
  %v554 = vrot.slane %v401, 1
  %v555 = vrot.slane %v403, 1
  %v556 = vsel %vm481, %v554, %v555
  %v557 = vrot.slane %v402, 1
  %v558 = vrot.slane %v404, 1
  %v559 = vsel %vm481, %v557, %v558
  %v560 = vrot.slane %v405, 1
  %v561 = vrot.slane %v407, 1
  %v562 = vsel %vm481, %v560, %v561
  %v563 = vrot.slane %v406, 1
  %v564 = vrot.slane %v408, 1
  %v565 = vsel %vm481, %v563, %v564
  %v566 = vrot.slane %v409, 1
  %v567 = vrot.slane %v411, 1
  %v568 = vsel %vm481, %v566, %v567
  %v569 = vrot.slane %v410, 1
  %v570 = vrot.slane %v412, 1
  %v571 = vsel %vm481, %v569, %v570
  %v572 = vrot.slane %v413, 1
  %v573 = vrot.slane %v415, 1
  %v574 = vsel %vm481, %v572, %v573
  %v575 = vrot.slane %v414, 1
  %v576 = vrot.slane %v416, 1
  %v577 = vsel %vm481, %v575, %v576
  %v610 = vpack.c.bf16 %v490, %v484
  %v611 = vpack.c.bf16 %v493, %v487
  %v612 = vpack.c.bf16 %v502, %v496
  %v613 = vpack.c.bf16 %v505, %v499
  %v614 = vpack.c.bf16 %v514, %v508
  %v615 = vpack.c.bf16 %v517, %v511
  %v616 = vpack.c.bf16 %v526, %v520
  %v617 = vpack.c.bf16 %v529, %v523
  %v618 = vpack.c.bf16 %v538, %v532
  %v619 = vpack.c.bf16 %v541, %v535
  %v620 = vpack.c.bf16 %v550, %v544
  %v621 = vpack.c.bf16 %v553, %v547
  %v622 = vpack.c.bf16 %v562, %v556
  %v623 = vpack.c.bf16 %v565, %v559
  %v624 = vpack.c.bf16 %v574, %v568
  %v625 = vpack.c.bf16 %v577, %v571
  %s626 = scalar_lea.vmem %s1, 256
  %v627 = vld [vmem:[%s626] sm:$0xff]
  %v628 = vld [vmem:[%s626 + $0x8] sm:$0xff]
  %v629 = vld [vmem:[%s626 + $0x10] sm:$0xff]
  %v630 = vld [vmem:[%s626 + $0x18] sm:$0xff]
  %v631 = vld [vmem:[%s626 + $0x20] sm:$0xff]
  %v632 = vld [vmem:[%s626 + $0x28] sm:$0xff]
  %v633 = vld [vmem:[%s626 + $0x30] sm:$0xff]
  %v634 = vld [vmem:[%s626 + $0x38] sm:$0xff]
  %v635 = vld [vmem:[%s626 + $0x40] sm:$0xff]
  %v636 = vld [vmem:[%s626 + $0x48] sm:$0xff]
  %v637 = vld [vmem:[%s626 + $0x50] sm:$0xff]
  %v638 = vld [vmem:[%s626 + $0x58] sm:$0xff]
  %v639 = vld [vmem:[%s626 + $0x60] sm:$0xff]
  %v640 = vld [vmem:[%s626 + $0x68] sm:$0xff]
  %v641 = vld [vmem:[%s626 + $0x70] sm:$0xff]
  %v642 = vld [vmem:[%s626 + $0x78] sm:$0xff]
  %v643 = vld [vmem:[%s626 + $0x80] sm:$0xff]
  %v644 = vld [vmem:[%s626 + $0x88] sm:$0xff]
  %v645 = vld [vmem:[%s626 + $0x90] sm:$0xff]
  %v646 = vld [vmem:[%s626 + $0x98] sm:$0xff]
  %v647 = vld [vmem:[%s626 + $0xa0] sm:$0xff]
  %v648 = vld [vmem:[%s626 + $0xa8] sm:$0xff]
  %v649 = vld [vmem:[%s626 + $0xb0] sm:$0xff]
  %v650 = vld [vmem:[%s626 + $0xb8] sm:$0xff]
  %v651 = vld [vmem:[%s626 + $0xc0] sm:$0xff]
  %v652 = vld [vmem:[%s626 + $0xc8] sm:$0xff]
  %v653 = vld [vmem:[%s626 + $0xd0] sm:$0xff]
  %v654 = vld [vmem:[%s626 + $0xd8] sm:$0xff]
  %v655 = vld [vmem:[%s626 + $0xe0] sm:$0xff]
  %v656 = vld [vmem:[%s626 + $0xe8] sm:$0xff]
  %v657 = vld [vmem:[%s626 + $0xf0] sm:$0xff]
  %v658 = vld [vmem:[%s626 + $0xf8] sm:$0xff]
  %v691 = vunpack.c.l.b16 %v627
  %v692 = vunpack.c.h.b16 %v627
  %v693 = vunpack.c.l.b16 %v628
  %v694 = vunpack.c.h.b16 %v628
  %v695 = vunpack.c.l.b16 %v629
  %v696 = vunpack.c.h.b16 %v629
  %v697 = vunpack.c.l.b16 %v630
  %v698 = vunpack.c.h.b16 %v630
  %v699 = vunpack.c.l.b16 %v631
  %v700 = vunpack.c.h.b16 %v631
  %v701 = vunpack.c.l.b16 %v632
  %v702 = vunpack.c.h.b16 %v632
  %v703 = vunpack.c.l.b16 %v633
  %v704 = vunpack.c.h.b16 %v633
  %v705 = vunpack.c.l.b16 %v634
  %v706 = vunpack.c.h.b16 %v634
  %v707 = vunpack.c.l.b16 %v635
  %v708 = vunpack.c.h.b16 %v635
  %v709 = vunpack.c.l.b16 %v636
  %v710 = vunpack.c.h.b16 %v636
  %v711 = vunpack.c.l.b16 %v637
  %v712 = vunpack.c.h.b16 %v637
  %v713 = vunpack.c.l.b16 %v638
  %v714 = vunpack.c.h.b16 %v638
  %v715 = vunpack.c.l.b16 %v639
  %v716 = vunpack.c.h.b16 %v639
  %v717 = vunpack.c.l.b16 %v640
  %v718 = vunpack.c.h.b16 %v640
  %v719 = vunpack.c.l.b16 %v641
  %v720 = vunpack.c.h.b16 %v641
  %v721 = vunpack.c.l.b16 %v642
  %v722 = vunpack.c.h.b16 %v642
  %v723 = vunpack.c.l.b16 %v643
  %v724 = vunpack.c.h.b16 %v643
  %v725 = vunpack.c.l.b16 %v644
  %v726 = vunpack.c.h.b16 %v644
  %v727 = vunpack.c.l.b16 %v645
  %v728 = vunpack.c.h.b16 %v645
  %v729 = vunpack.c.l.b16 %v646
  %v730 = vunpack.c.h.b16 %v646
  %v731 = vunpack.c.l.b16 %v647
  %v732 = vunpack.c.h.b16 %v647
  %v733 = vunpack.c.l.b16 %v648
  %v734 = vunpack.c.h.b16 %v648
  %v735 = vunpack.c.l.b16 %v649
  %v736 = vunpack.c.h.b16 %v649
  %v737 = vunpack.c.l.b16 %v650
  %v738 = vunpack.c.h.b16 %v650
  %v739 = vunpack.c.l.b16 %v651
  %v740 = vunpack.c.h.b16 %v651
  %v741 = vunpack.c.l.b16 %v652
  %v742 = vunpack.c.h.b16 %v652
  %v743 = vunpack.c.l.b16 %v653
  %v744 = vunpack.c.h.b16 %v653
  %v745 = vunpack.c.l.b16 %v654
  %v746 = vunpack.c.h.b16 %v654
  %v747 = vunpack.c.l.b16 %v655
  %v748 = vunpack.c.h.b16 %v655
  %v749 = vunpack.c.l.b16 %v656
  %v750 = vunpack.c.h.b16 %v656
  %v751 = vunpack.c.l.b16 %v657
  %v752 = vunpack.c.h.b16 %v657
  %v753 = vunpack.c.l.b16 %v658
  %v754 = vunpack.c.h.b16 %v658
  %v755 = vpack.c.b16 %v693, %v691
  %v756 = vpack.c.b16 %v694, %v692
  %v757 = vpack.c.b16 %v697, %v695
  %v758 = vpack.c.b16 %v698, %v696
  %v759 = vpack.c.b16 %v701, %v699
  %v760 = vpack.c.b16 %v702, %v700
  %v761 = vpack.c.b16 %v705, %v703
  %v762 = vpack.c.b16 %v706, %v704
  %v763 = vpack.c.b16 %v709, %v707
  %v764 = vpack.c.b16 %v710, %v708
  %v765 = vpack.c.b16 %v713, %v711
  %v766 = vpack.c.b16 %v714, %v712
  %v767 = vpack.c.b16 %v717, %v715
  %v768 = vpack.c.b16 %v718, %v716
  %v769 = vpack.c.b16 %v721, %v719
  %v770 = vpack.c.b16 %v722, %v720
  %v771 = vpack.c.b16 %v725, %v723
  %v772 = vpack.c.b16 %v726, %v724
  %v773 = vpack.c.b16 %v729, %v727
  %v774 = vpack.c.b16 %v730, %v728
  %v775 = vpack.c.b16 %v733, %v731
  %v776 = vpack.c.b16 %v734, %v732
  %v777 = vpack.c.b16 %v737, %v735
  %v778 = vpack.c.b16 %v738, %v736
  %v779 = vpack.c.b16 %v741, %v739
  %v780 = vpack.c.b16 %v742, %v740
  %v781 = vpack.c.b16 %v745, %v743
  %v782 = vpack.c.b16 %v746, %v744
  %v783 = vpack.c.b16 %v749, %v747
  %v784 = vpack.c.b16 %v750, %v748
  %v785 = vpack.c.b16 %v753, %v751
  %v786 = vpack.c.b16 %v754, %v752
  %819 = vmatprep.subr.bf16.mxu0 %v756
  %820 = vmatpush1.bf16.msra.mxu0 %v755
  %821 = vmatprep.subr.bf16.mxu0 %v758
  %822 = vmatpush1.bf16.msra.mxu0 %v757
  %823 = vmatprep.subr.bf16.mxu0 %v760
  %824 = vmatpush1.bf16.msra.mxu0 %v759
  %825 = vmatprep.subr.bf16.mxu0 %v762
  %826 = vmatpush1.bf16.msra.mxu0 %v761
  %827 = vmatprep.subr.bf16.mxu0 %v764
  %828 = vmatpush1.bf16.msra.mxu0 %v763
  %829 = vmatprep.subr.bf16.mxu0 %v766
  %830 = vmatpush1.bf16.msra.mxu0 %v765
  %831 = vmatprep.subr.bf16.mxu0 %v768
  %832 = vmatpush1.bf16.msra.mxu0 %v767
  %833 = vmatprep.subr.bf16.mxu0 %v770
  %834 = vmatpush1.bf16.msra.mxu0 %v769
  %835 = vmatprep.subr.bf16.mxu0 %v772
  %836 = vmatpush1.bf16.msra.mxu0 %v771
  %837 = vmatprep.subr.bf16.mxu0 %v774
  %838 = vmatpush1.bf16.msra.mxu0 %v773
  %839 = vmatprep.subr.bf16.mxu0 %v776
  %840 = vmatpush1.bf16.msra.mxu0 %v775
  %841 = vmatprep.subr.bf16.mxu0 %v778
  %842 = vmatpush1.bf16.msra.mxu0 %v777
  %843 = vmatprep.subr.bf16.mxu0 %v780
  %844 = vmatpush1.bf16.msra.mxu0 %v779
  %845 = vmatprep.subr.bf16.mxu0 %v782
  %846 = vmatpush1.bf16.msra.mxu0 %v781
  %847 = vmatprep.subr.bf16.mxu0 %v784
  %848 = vmatpush1.bf16.msra.mxu0 %v783
  %849 = vmatprep.subr.bf16.mxu0 %v786
  %850 = vmatpush1.bf16.msra.mxu0 %v785
  %851 = vmatprep.mubr.bf16.mxu0 %v611
  %852 = vmatmul.mubr.bf16.gmra.mrb[0].mxu0 %v610
  %v853 = vpop.f32.mrb[0].mxu0
  %v854 = vadd.f32 0.0, %v853
  %v855 = vpop.f32.mrb[0].mxu0
  %v856 = vadd.f32 0.0, %v855
  %v857 = vpop.f32.mrb[0].mxu0
  %v858 = vadd.f32 0.0, %v857
  %v859 = vpop.f32.mrb[0].mxu0
  %v860 = vadd.f32 0.0, %v859
  %861 = vmatprep.mubr.bf16.mxu0 %v613
  %862 = vmatmul.mubr.bf16.gmra.mrb[0].mxu0 %v612
  %v863 = vpop.f32.mrb[0].mxu0
  %v864 = vadd.f32 0.0, %v863
  %v865 = vpop.f32.mrb[0].mxu0
  %v866 = vadd.f32 0.0, %v865
  %v867 = vpop.f32.mrb[0].mxu0
  %v868 = vadd.f32 0.0, %v867
  %v869 = vpop.f32.mrb[0].mxu0
  %v870 = vadd.f32 0.0, %v869
  %871 = vmatprep.mubr.bf16.mxu0 %v615
  %872 = vmatmul.mubr.bf16.gmra.mrb[0].mxu0 %v614
  %v873 = vpop.f32.mrb[0].mxu0
  %v874 = vadd.f32 0.0, %v873
  %v875 = vpop.f32.mrb[0].mxu0
  %v876 = vadd.f32 0.0, %v875
  %v877 = vpop.f32.mrb[0].mxu0
  %v878 = vadd.f32 0.0, %v877
  %v879 = vpop.f32.mrb[0].mxu0
  %v880 = vadd.f32 0.0, %v879
  %881 = vmatprep.mubr.bf16.mxu0 %v617
  %882 = vmatmul.mubr.bf16.gmra.mrb[0].mxu0 %v616
  %v883 = vpop.f32.mrb[0].mxu0
  %v884 = vadd.f32 0.0, %v883
  %v885 = vpop.f32.mrb[0].mxu0
  %v886 = vadd.f32 0.0, %v885
  %v887 = vpop.f32.mrb[0].mxu0
  %v888 = vadd.f32 0.0, %v887
  %v889 = vpop.f32.mrb[0].mxu0
  %v890 = vadd.f32 0.0, %v889
  %891 = vmatprep.mubr.bf16.mxu0 %v619
  %892 = vmatmul.mubr.bf16.gmra.mrb[0].mxu0 %v618
  %v893 = vpop.f32.mrb[0].mxu0
  %v894 = vadd.f32 0.0, %v893
  %v895 = vpop.f32.mrb[0].mxu0
  %v896 = vadd.f32 0.0, %v895
  %v897 = vpop.f32.mrb[0].mxu0
  %v898 = vadd.f32 0.0, %v897
  %v899 = vpop.f32.mrb[0].mxu0
  %v900 = vadd.f32 0.0, %v899
  %901 = vmatprep.mubr.bf16.mxu0 %v621
  %902 = vmatmul.mubr.bf16.gmra.mrb[0].mxu0 %v620
  %v903 = vpop.f32.mrb[0].mxu0
  %v904 = vadd.f32 0.0, %v903
  %v905 = vpop.f32.mrb[0].mxu0
  %v906 = vadd.f32 0.0, %v905
  %v907 = vpop.f32.mrb[0].mxu0
  %v908 = vadd.f32 0.0, %v907
  %v909 = vpop.f32.mrb[0].mxu0
  %v910 = vadd.f32 0.0, %v909
  %911 = vmatprep.mubr.bf16.mxu0 %v623
  %912 = vmatmul.mubr.bf16.gmra.mrb[0].mxu0 %v622
  %v913 = vpop.f32.mrb[0].mxu0
  %v914 = vadd.f32 0.0, %v913
  %v915 = vpop.f32.mrb[0].mxu0
  %v916 = vadd.f32 0.0, %v915
  %v917 = vpop.f32.mrb[0].mxu0
  %v918 = vadd.f32 0.0, %v917
  %v919 = vpop.f32.mrb[0].mxu0
  %v920 = vadd.f32 0.0, %v919
  %921 = vmatprep.mubr.bf16.mxu0 %v625
  %922 = vmatmul.mubr.bf16.gmra.mrb[0].mxu0 %v624
  %v923 = vpop.f32.mrb[0].mxu0
  %v924 = vadd.f32 0.0, %v923
  %v925 = vpop.f32.mrb[0].mxu0
  %v926 = vadd.f32 0.0, %v925
  %v927 = vpop.f32.mrb[0].mxu0
  %v928 = vadd.f32 0.0, %v927
  %v929 = vpop.f32.mrb[0].mxu0
  %v930 = vadd.f32 0.0, %v929
  %931 = vdwg.mxu0
  %v964 = vunpack.c.l.b16 %v321
  %v965 = vunpack.c.h.b16 %v321
  %v966 = vunpack.c.l.b16 %v322
  %v967 = vunpack.c.h.b16 %v322
  %v968 = vunpack.c.l.b16 %v323
  %v969 = vunpack.c.h.b16 %v323
  %v970 = vunpack.c.l.b16 %v324
  %v971 = vunpack.c.h.b16 %v324
  %v972 = vunpack.c.l.b16 %v325
  %v973 = vunpack.c.h.b16 %v325
  %v974 = vunpack.c.l.b16 %v326
  %v975 = vunpack.c.h.b16 %v326
  %v976 = vunpack.c.l.b16 %v327
  %v977 = vunpack.c.h.b16 %v327
  %v978 = vunpack.c.l.b16 %v328
  %v979 = vunpack.c.h.b16 %v328
  %v980 = vunpack.c.l.b16 %v329
  %v981 = vunpack.c.h.b16 %v329
  %v982 = vunpack.c.l.b16 %v330
  %v983 = vunpack.c.h.b16 %v330
  %v984 = vunpack.c.l.b16 %v331
  %v985 = vunpack.c.h.b16 %v331
  %v986 = vunpack.c.l.b16 %v332
  %v987 = vunpack.c.h.b16 %v332
  %v988 = vunpack.c.l.b16 %v333
  %v989 = vunpack.c.h.b16 %v333
  %v990 = vunpack.c.l.b16 %v334
  %v991 = vunpack.c.h.b16 %v334
  %v992 = vunpack.c.l.b16 %v335
  %v993 = vunpack.c.h.b16 %v335
  %v994 = vunpack.c.l.b16 %v336
  %v995 = vunpack.c.h.b16 %v336
  %v996 = vunpack.c.l.b16 %v337
  %v997 = vunpack.c.h.b16 %v337
  %v998 = vunpack.c.l.b16 %v338
  %v999 = vunpack.c.h.b16 %v338
  %v1000 = vunpack.c.l.b16 %v339
  %v1001 = vunpack.c.h.b16 %v339
  %v1002 = vunpack.c.l.b16 %v340
  %v1003 = vunpack.c.h.b16 %v340
  %v1004 = vunpack.c.l.b16 %v341
  %v1005 = vunpack.c.h.b16 %v341
  %v1006 = vunpack.c.l.b16 %v342
  %v1007 = vunpack.c.h.b16 %v342
  %v1008 = vunpack.c.l.b16 %v343
  %v1009 = vunpack.c.h.b16 %v343
  %v1010 = vunpack.c.l.b16 %v344
  %v1011 = vunpack.c.h.b16 %v344
  %v1012 = vunpack.c.l.b16 %v345
  %v1013 = vunpack.c.h.b16 %v345
  %v1014 = vunpack.c.l.b16 %v346
  %v1015 = vunpack.c.h.b16 %v346
  %v1016 = vunpack.c.l.b16 %v347
  %v1017 = vunpack.c.h.b16 %v347
  %v1018 = vunpack.c.l.b16 %v348
  %v1019 = vunpack.c.h.b16 %v348
  %v1020 = vunpack.c.l.b16 %v349
  %v1021 = vunpack.c.h.b16 %v349
  %v1022 = vunpack.c.l.b16 %v350
  %v1023 = vunpack.c.h.b16 %v350
  %v1024 = vunpack.c.l.b16 %v351
  %v1025 = vunpack.c.h.b16 %v351
  %v1026 = vunpack.c.l.b16 %v352
  %v1027 = vunpack.c.h.b16 %v352
  %v1028 = vpack.c.b16 %v966, %v964
  %v1029 = vpack.c.b16 %v967, %v965
  %v1030 = vpack.c.b16 %v970, %v968
  %v1031 = vpack.c.b16 %v971, %v969
  %v1032 = vpack.c.b16 %v974, %v972
  %v1033 = vpack.c.b16 %v975, %v973
  %v1034 = vpack.c.b16 %v978, %v976
  %v1035 = vpack.c.b16 %v979, %v977
  %v1036 = vpack.c.b16 %v982, %v980
  %v1037 = vpack.c.b16 %v983, %v981
  %v1038 = vpack.c.b16 %v986, %v984
  %v1039 = vpack.c.b16 %v987, %v985
  %v1040 = vpack.c.b16 %v990, %v988
  %v1041 = vpack.c.b16 %v991, %v989
  %v1042 = vpack.c.b16 %v994, %v992
  %v1043 = vpack.c.b16 %v995, %v993
  %v1044 = vpack.c.b16 %v998, %v996
  %v1045 = vpack.c.b16 %v999, %v997
  %v1046 = vpack.c.b16 %v1002, %v1000
  %v1047 = vpack.c.b16 %v1003, %v1001
  %v1048 = vpack.c.b16 %v1006, %v1004
  %v1049 = vpack.c.b16 %v1007, %v1005
  %v1050 = vpack.c.b16 %v1010, %v1008
  %v1051 = vpack.c.b16 %v1011, %v1009
  %v1052 = vpack.c.b16 %v1014, %v1012
  %v1053 = vpack.c.b16 %v1015, %v1013
  %v1054 = vpack.c.b16 %v1018, %v1016
  %v1055 = vpack.c.b16 %v1019, %v1017
  %v1056 = vpack.c.b16 %v1022, %v1020
  %v1057 = vpack.c.b16 %v1023, %v1021
  %v1058 = vpack.c.b16 %v1026, %v1024
  %v1059 = vpack.c.b16 %v1027, %v1025
  %1092 = vmatprep.subr.bf16.mxu0 %v1029
  %1093 = vmatpush1.bf16.msra.mxu0 %v1028
  %1094 = vmatprep.subr.bf16.mxu0 %v1031
  %1095 = vmatpush1.bf16.msra.mxu0 %v1030
  %1096 = vmatprep.subr.bf16.mxu0 %v1033
  %1097 = vmatpush1.bf16.msra.mxu0 %v1032
  %1098 = vmatprep.subr.bf16.mxu0 %v1035
  %1099 = vmatpush1.bf16.msra.mxu0 %v1034
  %1100 = vmatprep.subr.bf16.mxu0 %v1037
  %1101 = vmatpush1.bf16.msra.mxu0 %v1036
  %1102 = vmatprep.subr.bf16.mxu0 %v1039
  %1103 = vmatpush1.bf16.msra.mxu0 %v1038
  %1104 = vmatprep.subr.bf16.mxu0 %v1041
  %1105 = vmatpush1.bf16.msra.mxu0 %v1040
  %1106 = vmatprep.subr.bf16.mxu0 %v1043
  %1107 = vmatpush1.bf16.msra.mxu0 %v1042
  %1108 = vmatprep.subr.bf16.mxu0 %v1045
  %1109 = vmatpush1.bf16.msra.mxu0 %v1044
  %1110 = vmatprep.subr.bf16.mxu0 %v1047
  %1111 = vmatpush1.bf16.msra.mxu0 %v1046
  %1112 = vmatprep.subr.bf16.mxu0 %v1049
  %1113 = vmatpush1.bf16.msra.mxu0 %v1048
  %1114 = vmatprep.subr.bf16.mxu0 %v1051
  %1115 = vmatpush1.bf16.msra.mxu0 %v1050
  %1116 = vmatprep.subr.bf16.mxu0 %v1053
  %1117 = vmatpush1.bf16.msra.mxu0 %v1052
  %1118 = vmatprep.subr.bf16.mxu0 %v1055
  %1119 = vmatpush1.bf16.msra.mxu0 %v1054
  %1120 = vmatprep.subr.bf16.mxu0 %v1057
  %1121 = vmatpush1.bf16.msra.mxu0 %v1056
  %1122 = vmatprep.subr.bf16.mxu0 %v1059
  %1123 = vmatpush1.bf16.msra.mxu0 %v1058
  %1124 = vmatprep.mubr.bf16.mxu0 %v306
  %1125 = vmatmul.mubr.bf16.gmra.mrb[0].mxu0 %v305
  %v1126 = vpop.f32.mrb[0].mxu0
  %v1127 = vadd.f32 %v854, %v1126
  %v1128 = vpop.f32.mrb[0].mxu0
  %v1129 = vadd.f32 %v856, %v1128
  %v1130 = vpop.f32.mrb[0].mxu0
  %v1131 = vadd.f32 %v858, %v1130
  %v1132 = vpop.f32.mrb[0].mxu0
  %v1133 = vadd.f32 %v860, %v1132
  %1134 = vmatprep.mubr.bf16.mxu0 %v308
  %1135 = vmatmul.mubr.bf16.gmra.mrb[0].mxu0 %v307
  %v1136 = vpop.f32.mrb[0].mxu0
  %v1137 = vadd.f32 %v864, %v1136
  %v1138 = vpop.f32.mrb[0].mxu0
  %v1139 = vadd.f32 %v866, %v1138
  %v1140 = vpop.f32.mrb[0].mxu0
  %v1141 = vadd.f32 %v868, %v1140
  %v1142 = vpop.f32.mrb[0].mxu0
  %v1143 = vadd.f32 %v870, %v1142
  %1144 = vmatprep.mubr.bf16.mxu0 %v310
  %1145 = vmatmul.mubr.bf16.gmra.mrb[0].mxu0 %v309
  %v1146 = vpop.f32.mrb[0].mxu0
  %v1147 = vadd.f32 %v874, %v1146
  %v1148 = vpop.f32.mrb[0].mxu0
  %v1149 = vadd.f32 %v876, %v1148
  %v1150 = vpop.f32.mrb[0].mxu0
  %v1151 = vadd.f32 %v878, %v1150
  %v1152 = vpop.f32.mrb[0].mxu0
  %v1153 = vadd.f32 %v880, %v1152
  %1154 = vmatprep.mubr.bf16.mxu0 %v312
  %1155 = vmatmul.mubr.bf16.gmra.mrb[0].mxu0 %v311
  %v1156 = vpop.f32.mrb[0].mxu0
  %v1157 = vadd.f32 %v884, %v1156
  %v1158 = vpop.f32.mrb[0].mxu0
  %v1159 = vadd.f32 %v886, %v1158
  %v1160 = vpop.f32.mrb[0].mxu0
  %v1161 = vadd.f32 %v888, %v1160
  %v1162 = vpop.f32.mrb[0].mxu0
  %v1163 = vadd.f32 %v890, %v1162
  %1164 = vmatprep.mubr.bf16.mxu0 %v314
  %1165 = vmatmul.mubr.bf16.gmra.mrb[0].mxu0 %v313
  %v1166 = vpop.f32.mrb[0].mxu0
  %v1167 = vadd.f32 %v894, %v1166
  %v1168 = vpop.f32.mrb[0].mxu0
  %v1169 = vadd.f32 %v896, %v1168
  %v1170 = vpop.f32.mrb[0].mxu0
  %v1171 = vadd.f32 %v898, %v1170
  %v1172 = vpop.f32.mrb[0].mxu0
  %v1173 = vadd.f32 %v900, %v1172
  %1174 = vmatprep.mubr.bf16.mxu0 %v316
  %1175 = vmatmul.mubr.bf16.gmra.mrb[0].mxu0 %v315
  %v1176 = vpop.f32.mrb[0].mxu0
  %v1177 = vadd.f32 %v904, %v1176
  %v1178 = vpop.f32.mrb[0].mxu0
  %v1179 = vadd.f32 %v906, %v1178
  %v1180 = vpop.f32.mrb[0].mxu0
  %v1181 = vadd.f32 %v908, %v1180
  %v1182 = vpop.f32.mrb[0].mxu0
  %v1183 = vadd.f32 %v910, %v1182
  %1184 = vmatprep.mubr.bf16.mxu0 %v318
  %1185 = vmatmul.mubr.bf16.gmra.mrb[0].mxu0 %v317
  %v1186 = vpop.f32.mrb[0].mxu0
  %v1187 = vadd.f32 %v914, %v1186
  %v1188 = vpop.f32.mrb[0].mxu0
  %v1189 = vadd.f32 %v916, %v1188
  %v1190 = vpop.f32.mrb[0].mxu0
  %v1191 = vadd.f32 %v918, %v1190
  %v1192 = vpop.f32.mrb[0].mxu0
  %v1193 = vadd.f32 %v920, %v1192
  %1194 = vmatprep.mubr.bf16.mxu0 %v320
  %1195 = vmatmul.mubr.bf16.gmra.mrb[0].mxu0 %v319
  %v1196 = vpop.f32.mrb[0].mxu0
  %v1197 = vadd.f32 %v924, %v1196
  %v1198 = vpop.f32.mrb[0].mxu0
  %v1199 = vadd.f32 %v926, %v1198
  %v1200 = vpop.f32.mrb[0].mxu0
  %v1201 = vadd.f32 %v928, %v1200
  %v1202 = vpop.f32.mrb[0].mxu0
  %v1203 = vadd.f32 %v930, %v1202
  %1204 = vdwg.mxu0
  %v1205 = vld [vmem:[#allocation2] sm:$0xfc]
  %v1206 = vld [vmem:[#allocation2 + $0x8] sm:$0xfc]
  %v1207 = vld [vmem:[#allocation2 + $0x10] sm:$0x3]
  %v1208 = vld [vmem:[#allocation2 + $0x18] sm:$0x3]
  %v1209 = vld [vmem:[#allocation2 + $0x20] sm:$0xfc]
  %v1210 = vld [vmem:[#allocation2 + $0x28] sm:$0xfc]
  %v1211 = vld [vmem:[#allocation2 + $0x30] sm:$0x3]
  %v1212 = vld [vmem:[#allocation2 + $0x38] sm:$0x3]
  %v1213 = vld [vmem:[#allocation2 + $0x40] sm:$0xfc]
  %v1214 = vld [vmem:[#allocation2 + $0x48] sm:$0xfc]
  %v1215 = vld [vmem:[#allocation2 + $0x50] sm:$0x3]
  %v1216 = vld [vmem:[#allocation2 + $0x58] sm:$0x3]
  %v1217 = vld [vmem:[#allocation2 + $0x60] sm:$0xfc]
  %v1218 = vld [vmem:[#allocation2 + $0x68] sm:$0xfc]
  %v1219 = vld [vmem:[#allocation2 + $0x70] sm:$0x3]
  %v1220 = vld [vmem:[#allocation2 + $0x78] sm:$0x3]
  %v1221 = vld [vmem:[#allocation2 + $0x80] sm:$0xfc]
  %v1222 = vld [vmem:[#allocation2 + $0x88] sm:$0xfc]
  %v1223 = vld [vmem:[#allocation2 + $0x90] sm:$0x3]
  %v1224 = vld [vmem:[#allocation2 + $0x98] sm:$0x3]
  %v1225 = vld [vmem:[#allocation2 + $0xa0] sm:$0xfc]
  %v1226 = vld [vmem:[#allocation2 + $0xa8] sm:$0xfc]
  %v1227 = vld [vmem:[#allocation2 + $0xb0] sm:$0x3]
  %v1228 = vld [vmem:[#allocation2 + $0xb8] sm:$0x3]
  %v1229 = vld [vmem:[#allocation2 + $0xc0] sm:$0xfc]
  %v1230 = vld [vmem:[#allocation2 + $0xc8] sm:$0xfc]
  %v1231 = vld [vmem:[#allocation2 + $0xd0] sm:$0x3]
  %v1232 = vld [vmem:[#allocation2 + $0xd8] sm:$0x3]
  %v1233 = vld [vmem:[#allocation2 + $0xe0] sm:$0xfc]
  %v1234 = vld [vmem:[#allocation2 + $0xe8] sm:$0xfc]
  %v1235 = vld [vmem:[#allocation2 + $0xf0] sm:$0x3]
  %v1236 = vld [vmem:[#allocation2 + $0xf8] sm:$0x3]
  %v1237 = vld [vmem:[#allocation2 + $0x100] sm:$0xfc]
  %v1238 = vld [vmem:[#allocation2 + $0x108] sm:$0xfc]
  %v1239 = vld [vmem:[#allocation2 + $0x110] sm:$0x3]
  %v1240 = vld [vmem:[#allocation2 + $0x118] sm:$0x3]
  %v1241 = vld [vmem:[#allocation2 + $0x120] sm:$0xfc]
  %v1242 = vld [vmem:[#allocation2 + $0x128] sm:$0xfc]
  %v1243 = vld [vmem:[#allocation2 + $0x130] sm:$0x3]
  %v1244 = vld [vmem:[#allocation2 + $0x138] sm:$0x3]
  %v1245 = vld [vmem:[#allocation2 + $0x140] sm:$0xfc]
  %v1246 = vld [vmem:[#allocation2 + $0x148] sm:$0xfc]
  %v1247 = vld [vmem:[#allocation2 + $0x150] sm:$0x3]
  %v1248 = vld [vmem:[#allocation2 + $0x158] sm:$0x3]
  %v1249 = vld [vmem:[#allocation2 + $0x160] sm:$0xfc]
  %v1250 = vld [vmem:[#allocation2 + $0x168] sm:$0xfc]
  %v1251 = vld [vmem:[#allocation2 + $0x170] sm:$0x3]
  %v1252 = vld [vmem:[#allocation2 + $0x178] sm:$0x3]
  %v1253 = vld [vmem:[#allocation2 + $0x180] sm:$0xfc]
  %v1254 = vld [vmem:[#allocation2 + $0x188] sm:$0xfc]
  %v1255 = vld [vmem:[#allocation2 + $0x190] sm:$0x3]
  %v1256 = vld [vmem:[#allocation2 + $0x198] sm:$0x3]
  %v1257 = vld [vmem:[#allocation2 + $0x1a0] sm:$0xfc]
  %v1258 = vld [vmem:[#allocation2 + $0x1a8] sm:$0xfc]
  %v1259 = vld [vmem:[#allocation2 + $0x1b0] sm:$0x3]
  %v1260 = vld [vmem:[#allocation2 + $0x1b8] sm:$0x3]
  %v1261 = vld [vmem:[#allocation2 + $0x1c0] sm:$0xfc]
  %v1262 = vld [vmem:[#allocation2 + $0x1c8] sm:$0xfc]
  %v1263 = vld [vmem:[#allocation2 + $0x1d0] sm:$0x3]
  %v1264 = vld [vmem:[#allocation2 + $0x1d8] sm:$0x3]
  %v1265 = vld [vmem:[#allocation2 + $0x1e0] sm:$0xfc]
  %v1266 = vld [vmem:[#allocation2 + $0x1e8] sm:$0xfc]
  %v1267 = vld [vmem:[#allocation2 + $0x1f0] sm:$0x3]
  %v1268 = vld [vmem:[#allocation2 + $0x1f8] sm:$0x3]
  %vm1333 = vcmask 1045504
  %v1334 = vrot.slane %v1205, 2
  %v1335 = vrot.slane %v1207, 2
  %v1336 = vsel %vm1333, %v1334, %v1335
  %v1337 = vrot.slane %v1206, 2
  %v1338 = vrot.slane %v1208, 2
  %v1339 = vsel %vm1333, %v1337, %v1338
  %v1340 = vrot.slane %v1209, 2
  %v1341 = vrot.slane %v1211, 2
  %v1342 = vsel %vm1333, %v1340, %v1341
  %v1343 = vrot.slane %v1210, 2
  %v1344 = vrot.slane %v1212, 2
  %v1345 = vsel %vm1333, %v1343, %v1344
  %v1346 = vrot.slane %v1213, 2
  %v1347 = vrot.slane %v1215, 2
  %v1348 = vsel %vm1333, %v1346, %v1347
  %v1349 = vrot.slane %v1214, 2
  %v1350 = vrot.slane %v1216, 2
  %v1351 = vsel %vm1333, %v1349, %v1350
  %v1352 = vrot.slane %v1217, 2
  %v1353 = vrot.slane %v1219, 2
  %v1354 = vsel %vm1333, %v1352, %v1353
  %v1355 = vrot.slane %v1218, 2
  %v1356 = vrot.slane %v1220, 2
  %v1357 = vsel %vm1333, %v1355, %v1356
  %v1358 = vrot.slane %v1221, 2
  %v1359 = vrot.slane %v1223, 2
  %v1360 = vsel %vm1333, %v1358, %v1359
  %v1361 = vrot.slane %v1222, 2
  %v1362 = vrot.slane %v1224, 2
  %v1363 = vsel %vm1333, %v1361, %v1362
  %v1364 = vrot.slane %v1225, 2
  %v1365 = vrot.slane %v1227, 2
  %v1366 = vsel %vm1333, %v1364, %v1365
  %v1367 = vrot.slane %v1226, 2
  %v1368 = vrot.slane %v1228, 2
  %v1369 = vsel %vm1333, %v1367, %v1368
  %v1370 = vrot.slane %v1229, 2
  %v1371 = vrot.slane %v1231, 2
  %v1372 = vsel %vm1333, %v1370, %v1371
  %v1373 = vrot.slane %v1230, 2
  %v1374 = vrot.slane %v1232, 2
  %v1375 = vsel %vm1333, %v1373, %v1374
  %v1376 = vrot.slane %v1233, 2
  %v1377 = vrot.slane %v1235, 2
  %v1378 = vsel %vm1333, %v1376, %v1377
  %v1379 = vrot.slane %v1234, 2
  %v1380 = vrot.slane %v1236, 2
  %v1381 = vsel %vm1333, %v1379, %v1380
  %v1382 = vrot.slane %v1237, 2
  %v1383 = vrot.slane %v1239, 2
  %v1384 = vsel %vm1333, %v1382, %v1383
  %v1385 = vrot.slane %v1238, 2
  %v1386 = vrot.slane %v1240, 2
  %v1387 = vsel %vm1333, %v1385, %v1386
  %v1388 = vrot.slane %v1241, 2
  %v1389 = vrot.slane %v1243, 2
  %v1390 = vsel %vm1333, %v1388, %v1389
  %v1391 = vrot.slane %v1242, 2
  %v1392 = vrot.slane %v1244, 2
  %v1393 = vsel %vm1333, %v1391, %v1392
  %v1394 = vrot.slane %v1245, 2
  %v1395 = vrot.slane %v1247, 2
  %v1396 = vsel %vm1333, %v1394, %v1395
  %v1397 = vrot.slane %v1246, 2
  %v1398 = vrot.slane %v1248, 2
  %v1399 = vsel %vm1333, %v1397, %v1398
  %v1400 = vrot.slane %v1249, 2
  %v1401 = vrot.slane %v1251, 2
  %v1402 = vsel %vm1333, %v1400, %v1401
  %v1403 = vrot.slane %v1250, 2
  %v1404 = vrot.slane %v1252, 2
  %v1405 = vsel %vm1333, %v1403, %v1404
  %v1406 = vrot.slane %v1253, 2
  %v1407 = vrot.slane %v1255, 2
  %v1408 = vsel %vm1333, %v1406, %v1407
  %v1409 = vrot.slane %v1254, 2
  %v1410 = vrot.slane %v1256, 2
  %v1411 = vsel %vm1333, %v1409, %v1410
  %v1412 = vrot.slane %v1257, 2
  %v1413 = vrot.slane %v1259, 2
  %v1414 = vsel %vm1333, %v1412, %v1413
  %v1415 = vrot.slane %v1258, 2
  %v1416 = vrot.slane %v1260, 2
  %v1417 = vsel %vm1333, %v1415, %v1416
  %v1418 = vrot.slane %v1261, 2
  %v1419 = vrot.slane %v1263, 2
  %v1420 = vsel %vm1333, %v1418, %v1419
  %v1421 = vrot.slane %v1262, 2
  %v1422 = vrot.slane %v1264, 2
  %v1423 = vsel %vm1333, %v1421, %v1422
  %v1424 = vrot.slane %v1265, 2
  %v1425 = vrot.slane %v1267, 2
  %v1426 = vsel %vm1333, %v1424, %v1425
  %v1427 = vrot.slane %v1266, 2
  %v1428 = vrot.slane %v1268, 2
  %v1429 = vsel %vm1333, %v1427, %v1428
  %v1462 = vpack.c.bf16 %v1342, %v1336
  %v1463 = vpack.c.bf16 %v1345, %v1339
  %v1464 = vpack.c.bf16 %v1354, %v1348
  %v1465 = vpack.c.bf16 %v1357, %v1351
  %v1466 = vpack.c.bf16 %v1366, %v1360
  %v1467 = vpack.c.bf16 %v1369, %v1363
  %v1468 = vpack.c.bf16 %v1378, %v1372
  %v1469 = vpack.c.bf16 %v1381, %v1375
  %v1470 = vpack.c.bf16 %v1390, %v1384
  %v1471 = vpack.c.bf16 %v1393, %v1387
  %v1472 = vpack.c.bf16 %v1402, %v1396
  %v1473 = vpack.c.bf16 %v1405, %v1399
  %v1474 = vpack.c.bf16 %v1414, %v1408
  %v1475 = vpack.c.bf16 %v1417, %v1411
  %v1476 = vpack.c.bf16 %v1426, %v1420
  %v1477 = vpack.c.bf16 %v1429, %v1423
  %s1478 = scalar_lea.vmem %s1, 512
  %v1479 = vld [vmem:[%s1478] sm:$0xff]
  %v1480 = vld [vmem:[%s1478 + $0x8] sm:$0xff]
  %v1481 = vld [vmem:[%s1478 + $0x10] sm:$0xff]
  %v1482 = vld [vmem:[%s1478 + $0x18] sm:$0xff]
  %v1483 = vld [vmem:[%s1478 + $0x20] sm:$0xff]
  %v1484 = vld [vmem:[%s1478 + $0x28] sm:$0xff]
  %v1485 = vld [vmem:[%s1478 + $0x30] sm:$0xff]
  %v1486 = vld [vmem:[%s1478 + $0x38] sm:$0xff]
  %v1487 = vld [vmem:[%s1478 + $0x40] sm:$0xff]
  %v1488 = vld [vmem:[%s1478 + $0x48] sm:$0xff]
  %v1489 = vld [vmem:[%s1478 + $0x50] sm:$0xff]
  %v1490 = vld [vmem:[%s1478 + $0x58] sm:$0xff]
  %v1491 = vld [vmem:[%s1478 + $0x60] sm:$0xff]
  %v1492 = vld [vmem:[%s1478 + $0x68] sm:$0xff]
  %v1493 = vld [vmem:[%s1478 + $0x70] sm:$0xff]
  %v1494 = vld [vmem:[%s1478 + $0x78] sm:$0xff]
  %v1495 = vld [vmem:[%s1478 + $0x80] sm:$0xff]
  %v1496 = vld [vmem:[%s1478 + $0x88] sm:$0xff]
  %v1497 = vld [vmem:[%s1478 + $0x90] sm:$0xff]
  %v1498 = vld [vmem:[%s1478 + $0x98] sm:$0xff]
  %v1499 = vld [vmem:[%s1478 + $0xa0] sm:$0xff]
  %v1500 = vld [vmem:[%s1478 + $0xa8] sm:$0xff]
  %v1501 = vld [vmem:[%s1478 + $0xb0] sm:$0xff]
  %v1502 = vld [vmem:[%s1478 + $0xb8] sm:$0xff]
  %v1503 = vld [vmem:[%s1478 + $0xc0] sm:$0xff]
  %v1504 = vld [vmem:[%s1478 + $0xc8] sm:$0xff]
  %v1505 = vld [vmem:[%s1478 + $0xd0] sm:$0xff]
  %v1506 = vld [vmem:[%s1478 + $0xd8] sm:$0xff]
  %v1507 = vld [vmem:[%s1478 + $0xe0] sm:$0xff]
  %v1508 = vld [vmem:[%s1478 + $0xe8] sm:$0xff]
  %v1509 = vld [vmem:[%s1478 + $0xf0] sm:$0xff]
  %v1510 = vld [vmem:[%s1478 + $0xf8] sm:$0xff]
  %v1543 = vunpack.c.l.b16 %v1479
  %v1544 = vunpack.c.h.b16 %v1479
  %v1545 = vunpack.c.l.b16 %v1480
  %v1546 = vunpack.c.h.b16 %v1480
  %v1547 = vunpack.c.l.b16 %v1481
  %v1548 = vunpack.c.h.b16 %v1481
  %v1549 = vunpack.c.l.b16 %v1482
  %v1550 = vunpack.c.h.b16 %v1482
  %v1551 = vunpack.c.l.b16 %v1483
  %v1552 = vunpack.c.h.b16 %v1483
  %v1553 = vunpack.c.l.b16 %v1484
  %v1554 = vunpack.c.h.b16 %v1484
  %v1555 = vunpack.c.l.b16 %v1485
  %v1556 = vunpack.c.h.b16 %v1485
  %v1557 = vunpack.c.l.b16 %v1486
  %v1558 = vunpack.c.h.b16 %v1486
  %v1559 = vunpack.c.l.b16 %v1487
  %v1560 = vunpack.c.h.b16 %v1487
  %v1561 = vunpack.c.l.b16 %v1488
  %v1562 = vunpack.c.h.b16 %v1488
  %v1563 = vunpack.c.l.b16 %v1489
  %v1564 = vunpack.c.h.b16 %v1489
  %v1565 = vunpack.c.l.b16 %v1490
  %v1566 = vunpack.c.h.b16 %v1490
  %v1567 = vunpack.c.l.b16 %v1491
  %v1568 = vunpack.c.h.b16 %v1491
  %v1569 = vunpack.c.l.b16 %v1492
  %v1570 = vunpack.c.h.b16 %v1492
  %v1571 = vunpack.c.l.b16 %v1493
  %v1572 = vunpack.c.h.b16 %v1493
  %v1573 = vunpack.c.l.b16 %v1494
  %v1574 = vunpack.c.h.b16 %v1494
  %v1575 = vunpack.c.l.b16 %v1495
  %v1576 = vunpack.c.h.b16 %v1495
  %v1577 = vunpack.c.l.b16 %v1496
  %v1578 = vunpack.c.h.b16 %v1496
  %v1579 = vunpack.c.l.b16 %v1497
  %v1580 = vunpack.c.h.b16 %v1497
  %v1581 = vunpack.c.l.b16 %v1498
  %v1582 = vunpack.c.h.b16 %v1498
  %v1583 = vunpack.c.l.b16 %v1499
  %v1584 = vunpack.c.h.b16 %v1499
  %v1585 = vunpack.c.l.b16 %v1500
  %v1586 = vunpack.c.h.b16 %v1500
  %v1587 = vunpack.c.l.b16 %v1501
  %v1588 = vunpack.c.h.b16 %v1501
  %v1589 = vunpack.c.l.b16 %v1502
  %v1590 = vunpack.c.h.b16 %v1502
  %v1591 = vunpack.c.l.b16 %v1503
  %v1592 = vunpack.c.h.b16 %v1503
  %v1593 = vunpack.c.l.b16 %v1504
  %v1594 = vunpack.c.h.b16 %v1504
  %v1595 = vunpack.c.l.b16 %v1505
  %v1596 = vunpack.c.h.b16 %v1505
  %v1597 = vunpack.c.l.b16 %v1506
  %v1598 = vunpack.c.h.b16 %v1506
  %v1599 = vunpack.c.l.b16 %v1507
  %v1600 = vunpack.c.h.b16 %v1507
  %v1601 = vunpack.c.l.b16 %v1508
  %v1602 = vunpack.c.h.b16 %v1508
  %v1603 = vunpack.c.l.b16 %v1509
  %v1604 = vunpack.c.h.b16 %v1509
  %v1605 = vunpack.c.l.b16 %v1510
  %v1606 = vunpack.c.h.b16 %v1510
  %v1607 = vpack.c.b16 %v1545, %v1543
  %v1608 = vpack.c.b16 %v1546, %v1544
  %v1609 = vpack.c.b16 %v1549, %v1547
  %v1610 = vpack.c.b16 %v1550, %v1548
  %v1611 = vpack.c.b16 %v1553, %v1551
  %v1612 = vpack.c.b16 %v1554, %v1552
  %v1613 = vpack.c.b16 %v1557, %v1555
  %v1614 = vpack.c.b16 %v1558, %v1556
  %v1615 = vpack.c.b16 %v1561, %v1559
  %v1616 = vpack.c.b16 %v1562, %v1560
  %v1617 = vpack.c.b16 %v1565, %v1563
  %v1618 = vpack.c.b16 %v1566, %v1564
  %v1619 = vpack.c.b16 %v1569, %v1567
  %v1620 = vpack.c.b16 %v1570, %v1568
  %v1621 = vpack.c.b16 %v1573, %v1571
  %v1622 = vpack.c.b16 %v1574, %v1572
  %v1623 = vpack.c.b16 %v1577, %v1575
  %v1624 = vpack.c.b16 %v1578, %v1576
  %v1625 = vpack.c.b16 %v1581, %v1579
  %v1626 = vpack.c.b16 %v1582, %v1580
  %v1627 = vpack.c.b16 %v1585, %v1583
  %v1628 = vpack.c.b16 %v1586, %v1584
  %v1629 = vpack.c.b16 %v1589, %v1587
  %v1630 = vpack.c.b16 %v1590, %v1588
  %v1631 = vpack.c.b16 %v1593, %v1591
  %v1632 = vpack.c.b16 %v1594, %v1592
  %v1633 = vpack.c.b16 %v1597, %v1595
  %v1634 = vpack.c.b16 %v1598, %v1596
  %v1635 = vpack.c.b16 %v1601, %v1599
  %v1636 = vpack.c.b16 %v1602, %v1600
  %v1637 = vpack.c.b16 %v1605, %v1603
  %v1638 = vpack.c.b16 %v1606, %v1604
  %1671 = vmatprep.subr.bf16.mxu0 %v1608
  %1672 = vmatpush1.bf16.msra.mxu0 %v1607
  %1673 = vmatprep.subr.bf16.mxu0 %v1610
  %1674 = vmatpush1.bf16.msra.mxu0 %v1609
  %1675 = vmatprep.subr.bf16.mxu0 %v1612
  %1676 = vmatpush1.bf16.msra.mxu0 %v1611
  %1677 = vmatprep.subr.bf16.mxu0 %v1614
  %1678 = vmatpush1.bf16.msra.mxu0 %v1613
  %1679 = vmatprep.subr.bf16.mxu0 %v1616
  %1680 = vmatpush1.bf16.msra.mxu0 %v1615
  %1681 = vmatprep.subr.bf16.mxu0 %v1618
  %1682 = vmatpush1.bf16.msra.mxu0 %v1617
  %1683 = vmatprep.subr.bf16.mxu0 %v1620
  %1684 = vmatpush1.bf16.msra.mxu0 %v1619
  %1685 = vmatprep.subr.bf16.mxu0 %v1622
  %1686 = vmatpush1.bf16.msra.mxu0 %v1621
  %1687 = vmatprep.subr.bf16.mxu0 %v1624
  %1688 = vmatpush1.bf16.msra.mxu0 %v1623
  %1689 = vmatprep.subr.bf16.mxu0 %v1626
  %1690 = vmatpush1.bf16.msra.mxu0 %v1625
  %1691 = vmatprep.subr.bf16.mxu0 %v1628
  %1692 = vmatpush1.bf16.msra.mxu0 %v1627
  %1693 = vmatprep.subr.bf16.mxu0 %v1630
  %1694 = vmatpush1.bf16.msra.mxu0 %v1629
  %1695 = vmatprep.subr.bf16.mxu0 %v1632
  %1696 = vmatpush1.bf16.msra.mxu0 %v1631
  %1697 = vmatprep.subr.bf16.mxu0 %v1634
  %1698 = vmatpush1.bf16.msra.mxu0 %v1633
  %1699 = vmatprep.subr.bf16.mxu0 %v1636
  %1700 = vmatpush1.bf16.msra.mxu0 %v1635
  %1701 = vmatprep.subr.bf16.mxu0 %v1638
  %1702 = vmatpush1.bf16.msra.mxu0 %v1637
  %1703 = vmatprep.mubr.bf16.mxu0 %v1463
  %1704 = vmatmul.mubr.bf16.gmra.mrb[0].mxu0 %v1462
  %v1705 = vpop.f32.mrb[0].mxu0
  %v1706 = vadd.f32 0.0, %v1705
  %v1707 = vpop.f32.mrb[0].mxu0
  %v1708 = vadd.f32 0.0, %v1707
  %v1709 = vpop.f32.mrb[0].mxu0
  %v1710 = vadd.f32 0.0, %v1709
  %v1711 = vpop.f32.mrb[0].mxu0
  %v1712 = vadd.f32 0.0, %v1711
  %1713 = vmatprep.mubr.bf16.mxu0 %v1465
  %1714 = vmatmul.mubr.bf16.gmra.mrb[0].mxu0 %v1464
  %v1715 = vpop.f32.mrb[0].mxu0
  %v1716 = vadd.f32 0.0, %v1715
  %v1717 = vpop.f32.mrb[0].mxu0
  %v1718 = vadd.f32 0.0, %v1717
  %v1719 = vpop.f32.mrb[0].mxu0
  %v1720 = vadd.f32 0.0, %v1719
  %v1721 = vpop.f32.mrb[0].mxu0
  %v1722 = vadd.f32 0.0, %v1721
  %1723 = vmatprep.mubr.bf16.mxu0 %v1467
  %1724 = vmatmul.mubr.bf16.gmra.mrb[0].mxu0 %v1466
  %v1725 = vpop.f32.mrb[0].mxu0
  %v1726 = vadd.f32 0.0, %v1725
  %v1727 = vpop.f32.mrb[0].mxu0
  %v1728 = vadd.f32 0.0, %v1727
  %v1729 = vpop.f32.mrb[0].mxu0
  %v1730 = vadd.f32 0.0, %v1729
  %v1731 = vpop.f32.mrb[0].mxu0
  %v1732 = vadd.f32 0.0, %v1731
  %1733 = vmatprep.mubr.bf16.mxu0 %v1469
  %1734 = vmatmul.mubr.bf16.gmra.mrb[0].mxu0 %v1468
  %v1735 = vpop.f32.mrb[0].mxu0
  %v1736 = vadd.f32 0.0, %v1735
  %v1737 = vpop.f32.mrb[0].mxu0
  %v1738 = vadd.f32 0.0, %v1737
  %v1739 = vpop.f32.mrb[0].mxu0
  %v1740 = vadd.f32 0.0, %v1739
  %v1741 = vpop.f32.mrb[0].mxu0
  %v1742 = vadd.f32 0.0, %v1741
  %1743 = vmatprep.mubr.bf16.mxu0 %v1471
  %1744 = vmatmul.mubr.bf16.gmra.mrb[0].mxu0 %v1470
  %v1745 = vpop.f32.mrb[0].mxu0
  %v1746 = vadd.f32 0.0, %v1745
  %v1747 = vpop.f32.mrb[0].mxu0
  %v1748 = vadd.f32 0.0, %v1747
  %v1749 = vpop.f32.mrb[0].mxu0
  %v1750 = vadd.f32 0.0, %v1749
  %v1751 = vpop.f32.mrb[0].mxu0
  %v1752 = vadd.f32 0.0, %v1751
  %1753 = vmatprep.mubr.bf16.mxu0 %v1473
  %1754 = vmatmul.mubr.bf16.gmra.mrb[0].mxu0 %v1472
  %v1755 = vpop.f32.mrb[0].mxu0
  %v1756 = vadd.f32 0.0, %v1755
  %v1757 = vpop.f32.mrb[0].mxu0
  %v1758 = vadd.f32 0.0, %v1757
  %v1759 = vpop.f32.mrb[0].mxu0
  %v1760 = vadd.f32 0.0, %v1759
  %v1761 = vpop.f32.mrb[0].mxu0
  %v1762 = vadd.f32 0.0, %v1761
  %1763 = vmatprep.mubr.bf16.mxu0 %v1475
  %1764 = vmatmul.mubr.bf16.gmra.mrb[0].mxu0 %v1474
  %v1765 = vpop.f32.mrb[0].mxu0
  %v1766 = vadd.f32 0.0, %v1765
  %v1767 = vpop.f32.mrb[0].mxu0
  %v1768 = vadd.f32 0.0, %v1767
  %v1769 = vpop.f32.mrb[0].mxu0
  %v1770 = vadd.f32 0.0, %v1769
  %v1771 = vpop.f32.mrb[0].mxu0
  %v1772 = vadd.f32 0.0, %v1771
  %1773 = vmatprep.mubr.bf16.mxu0 %v1477
  %1774 = vmatmul.mubr.bf16.gmra.mrb[0].mxu0 %v1476
  %v1775 = vpop.f32.mrb[0].mxu0
  %v1776 = vadd.f32 0.0, %v1775
  %v1777 = vpop.f32.mrb[0].mxu0
  %v1778 = vadd.f32 0.0, %v1777
  %v1779 = vpop.f32.mrb[0].mxu0
  %v1780 = vadd.f32 0.0, %v1779
  %v1781 = vpop.f32.mrb[0].mxu0
  %v1782 = vadd.f32 0.0, %v1781
  %1783 = vdwg.mxu0
  %v1784 = vadd.f32 %v1127, %v1706
  %v1785 = vadd.f32 %v1129, %v1708
  %v1786 = vadd.f32 %v1131, %v1710
  %v1787 = vadd.f32 %v1133, %v1712
  %v1788 = vadd.f32 %v1137, %v1716
  %v1789 = vadd.f32 %v1139, %v1718
  %v1790 = vadd.f32 %v1141, %v1720
  %v1791 = vadd.f32 %v1143, %v1722
  %v1792 = vadd.f32 %v1147, %v1726
  %v1793 = vadd.f32 %v1149, %v1728
  %v1794 = vadd.f32 %v1151, %v1730
  %v1795 = vadd.f32 %v1153, %v1732
  %v1796 = vadd.f32 %v1157, %v1736
  %v1797 = vadd.f32 %v1159, %v1738
  %v1798 = vadd.f32 %v1161, %v1740
  %v1799 = vadd.f32 %v1163, %v1742
  %v1800 = vadd.f32 %v1167, %v1746
  %v1801 = vadd.f32 %v1169, %v1748
  %v1802 = vadd.f32 %v1171, %v1750
  %v1803 = vadd.f32 %v1173, %v1752
  %v1804 = vadd.f32 %v1177, %v1756
  %v1805 = vadd.f32 %v1179, %v1758
  %v1806 = vadd.f32 %v1181, %v1760
  %v1807 = vadd.f32 %v1183, %v1762
  %v1808 = vadd.f32 %v1187, %v1766
  %v1809 = vadd.f32 %v1189, %v1768
  %v1810 = vadd.f32 %v1191, %v1770
  %v1811 = vadd.f32 %v1193, %v1772
  %v1812 = vadd.f32 %v1197, %v1776
  %v1813 = vadd.f32 %v1199, %v1778
  %v1814 = vadd.f32 %v1201, %v1780
  %v1815 = vadd.f32 %v1203, %v1782
  %v1816 = vld [vmem:[#allocation2] sm:$0xf8]
  %v1817 = vld [vmem:[#allocation2 + $0x8] sm:$0xf8]
  %v1818 = vld [vmem:[#allocation2 + $0x10] sm:$0x7]
  %v1819 = vld [vmem:[#allocation2 + $0x18] sm:$0x7]
  %v1820 = vld [vmem:[#allocation2 + $0x20] sm:$0xf8]
  %v1821 = vld [vmem:[#allocation2 + $0x28] sm:$0xf8]
  %v1822 = vld [vmem:[#allocation2 + $0x30] sm:$0x7]
  %v1823 = vld [vmem:[#allocation2 + $0x38] sm:$0x7]
  %v1824 = vld [vmem:[#allocation2 + $0x40] sm:$0xf8]
  %v1825 = vld [vmem:[#allocation2 + $0x48] sm:$0xf8]
  %v1826 = vld [vmem:[#allocation2 + $0x50] sm:$0x7]
  %v1827 = vld [vmem:[#allocation2 + $0x58] sm:$0x7]
  %v1828 = vld [vmem:[#allocation2 + $0x60] sm:$0xf8]
  %v1829 = vld [vmem:[#allocation2 + $0x68] sm:$0xf8]
  %v1830 = vld [vmem:[#allocation2 + $0x70] sm:$0x7]
  %v1831 = vld [vmem:[#allocation2 + $0x78] sm:$0x7]
  %v1832 = vld [vmem:[#allocation2 + $0x80] sm:$0xf8]
  %v1833 = vld [vmem:[#allocation2 + $0x88] sm:$0xf8]
  %v1834 = vld [vmem:[#allocation2 + $0x90] sm:$0x7]
  %v1835 = vld [vmem:[#allocation2 + $0x98] sm:$0x7]
  %v1836 = vld [vmem:[#allocation2 + $0xa0] sm:$0xf8]
  %v1837 = vld [vmem:[#allocation2 + $0xa8] sm:$0xf8]
  %v1838 = vld [vmem:[#allocation2 + $0xb0] sm:$0x7]
  %v1839 = vld [vmem:[#allocation2 + $0xb8] sm:$0x7]
  %v1840 = vld [vmem:[#allocation2 + $0xc0] sm:$0xf8]
  %v1841 = vld [vmem:[#allocation2 + $0xc8] sm:$0xf8]
  %v1842 = vld [vmem:[#allocation2 + $0xd0] sm:$0x7]
  %v1843 = vld [vmem:[#allocation2 + $0xd8] sm:$0x7]
  %v1844 = vld [vmem:[#allocation2 + $0xe0] sm:$0xf8]
  %v1845 = vld [vmem:[#allocation2 + $0xe8] sm:$0xf8]
  %v1846 = vld [vmem:[#allocation2 + $0xf0] sm:$0x7]
  %v1847 = vld [vmem:[#allocation2 + $0xf8] sm:$0x7]
  %v1848 = vld [vmem:[#allocation2 + $0x100] sm:$0xf8]
  %v1849 = vld [vmem:[#allocation2 + $0x108] sm:$0xf8]
  %v1850 = vld [vmem:[#allocation2 + $0x110] sm:$0x7]
  %v1851 = vld [vmem:[#allocation2 + $0x118] sm:$0x7]
  %v1852 = vld [vmem:[#allocation2 + $0x120] sm:$0xf8]
  %v1853 = vld [vmem:[#allocation2 + $0x128] sm:$0xf8]
  %v1854 = vld [vmem:[#allocation2 + $0x130] sm:$0x7]
  %v1855 = vld [vmem:[#allocation2 + $0x138] sm:$0x7]
  %v1856 = vld [vmem:[#allocation2 + $0x140] sm:$0xf8]
  %v1857 = vld [vmem:[#allocation2 + $0x148] sm:$0xf8]
  %v1858 = vld [vmem:[#allocation2 + $0x150] sm:$0x7]
  %v1859 = vld [vmem:[#allocation2 + $0x158] sm:$0x7]
  %v1860 = vld [vmem:[#allocation2 + $0x160] sm:$0xf8]
  %v1861 = vld [vmem:[#allocation2 + $0x168] sm:$0xf8]
  %v1862 = vld [vmem:[#allocation2 + $0x170] sm:$0x7]
  %v1863 = vld [vmem:[#allocation2 + $0x178] sm:$0x7]
  %v1864 = vld [vmem:[#allocation2 + $0x180] sm:$0xf8]
  %v1865 = vld [vmem:[#allocation2 + $0x188] sm:$0xf8]
  %v1866 = vld [vmem:[#allocation2 + $0x190] sm:$0x7]
  %v1867 = vld [vmem:[#allocation2 + $0x198] sm:$0x7]
  %v1868 = vld [vmem:[#allocation2 + $0x1a0] sm:$0xf8]
  %v1869 = vld [vmem:[#allocation2 + $0x1a8] sm:$0xf8]
  %v1870 = vld [vmem:[#allocation2 + $0x1b0] sm:$0x7]
  %v1871 = vld [vmem:[#allocation2 + $0x1b8] sm:$0x7]
  %v1872 = vld [vmem:[#allocation2 + $0x1c0] sm:$0xf8]
  %v1873 = vld [vmem:[#allocation2 + $0x1c8] sm:$0xf8]
  %v1874 = vld [vmem:[#allocation2 + $0x1d0] sm:$0x7]
  %v1875 = vld [vmem:[#allocation2 + $0x1d8] sm:$0x7]
  %v1876 = vld [vmem:[#allocation2 + $0x1e0] sm:$0xf8]
  %v1877 = vld [vmem:[#allocation2 + $0x1e8] sm:$0xf8]
  %v1878 = vld [vmem:[#allocation2 + $0x1f0] sm:$0x7]
  %v1879 = vld [vmem:[#allocation2 + $0x1f8] sm:$0x7]
  %vm1944 = vcmask 1044480
  %v1945 = vrot.slane %v1816, 3
  %v1946 = vrot.slane %v1818, 3
  %v1947 = vsel %vm1944, %v1945, %v1946
  %v1948 = vrot.slane %v1817, 3
  %v1949 = vrot.slane %v1819, 3
  %v1950 = vsel %vm1944, %v1948, %v1949
  %v1951 = vrot.slane %v1820, 3
  %v1952 = vrot.slane %v1822, 3
  %v1953 = vsel %vm1944, %v1951, %v1952
  %v1954 = vrot.slane %v1821, 3
  %v1955 = vrot.slane %v1823, 3
  %v1956 = vsel %vm1944, %v1954, %v1955
  %v1957 = vrot.slane %v1824, 3
  %v1958 = vrot.slane %v1826, 3
  %v1959 = vsel %vm1944, %v1957, %v1958
  %v1960 = vrot.slane %v1825, 3
  %v1961 = vrot.slane %v1827, 3
  %v1962 = vsel %vm1944, %v1960, %v1961
  %v1963 = vrot.slane %v1828, 3
  %v1964 = vrot.slane %v1830, 3
  %v1965 = vsel %vm1944, %v1963, %v1964
  %v1966 = vrot.slane %v1829, 3
  %v1967 = vrot.slane %v1831, 3
  %v1968 = vsel %vm1944, %v1966, %v1967
  %v1969 = vrot.slane %v1832, 3
  %v1970 = vrot.slane %v1834, 3
  %v1971 = vsel %vm1944, %v1969, %v1970
  %v1972 = vrot.slane %v1833, 3
  %v1973 = vrot.slane %v1835, 3
  %v1974 = vsel %vm1944, %v1972, %v1973
  %v1975 = vrot.slane %v1836, 3
  %v1976 = vrot.slane %v1838, 3
  %v1977 = vsel %vm1944, %v1975, %v1976
  %v1978 = vrot.slane %v1837, 3
  %v1979 = vrot.slane %v1839, 3
  %v1980 = vsel %vm1944, %v1978, %v1979
  %v1981 = vrot.slane %v1840, 3
  %v1982 = vrot.slane %v1842, 3
  %v1983 = vsel %vm1944, %v1981, %v1982
  %v1984 = vrot.slane %v1841, 3
  %v1985 = vrot.slane %v1843, 3
  %v1986 = vsel %vm1944, %v1984, %v1985
  %v1987 = vrot.slane %v1844, 3
  %v1988 = vrot.slane %v1846, 3
  %v1989 = vsel %vm1944, %v1987, %v1988
  %v1990 = vrot.slane %v1845, 3
  %v1991 = vrot.slane %v1847, 3
  %v1992 = vsel %vm1944, %v1990, %v1991
  %v1993 = vrot.slane %v1848, 3
  %v1994 = vrot.slane %v1850, 3
  %v1995 = vsel %vm1944, %v1993, %v1994
  %v1996 = vrot.slane %v1849, 3
  %v1997 = vrot.slane %v1851, 3
  %v1998 = vsel %vm1944, %v1996, %v1997
  %v1999 = vrot.slane %v1852, 3
  %v2000 = vrot.slane %v1854, 3
  %v2001 = vsel %vm1944, %v1999, %v2000
  %v2002 = vrot.slane %v1853, 3
  %v2003 = vrot.slane %v1855, 3
  %v2004 = vsel %vm1944, %v2002, %v2003
  %v2005 = vrot.slane %v1856, 3
  %v2006 = vrot.slane %v1858, 3
  %v2007 = vsel %vm1944, %v2005, %v2006
  %v2008 = vrot.slane %v1857, 3
  %v2009 = vrot.slane %v1859, 3
  %v2010 = vsel %vm1944, %v2008, %v2009
  %v2011 = vrot.slane %v1860, 3
  %v2012 = vrot.slane %v1862, 3
  %v2013 = vsel %vm1944, %v2011, %v2012
  %v2014 = vrot.slane %v1861, 3
  %v2015 = vrot.slane %v1863, 3
  %v2016 = vsel %vm1944, %v2014, %v2015
  %v2017 = vrot.slane %v1864, 3
  %v2018 = vrot.slane %v1866, 3
  %v2019 = vsel %vm1944, %v2017, %v2018
  %v2020 = vrot.slane %v1865, 3
  %v2021 = vrot.slane %v1867, 3
  %v2022 = vsel %vm1944, %v2020, %v2021
  %v2023 = vrot.slane %v1868, 3
  %v2024 = vrot.slane %v1870, 3
  %v2025 = vsel %vm1944, %v2023, %v2024
  %v2026 = vrot.slane %v1869, 3
  %v2027 = vrot.slane %v1871, 3
  %v2028 = vsel %vm1944, %v2026, %v2027
  %v2029 = vrot.slane %v1872, 3
  %v2030 = vrot.slane %v1874, 3
  %v2031 = vsel %vm1944, %v2029, %v2030
  %v2032 = vrot.slane %v1873, 3
  %v2033 = vrot.slane %v1875, 3
  %v2034 = vsel %vm1944, %v2032, %v2033
  %v2035 = vrot.slane %v1876, 3
  %v2036 = vrot.slane %v1878, 3
  %v2037 = vsel %vm1944, %v2035, %v2036
  %v2038 = vrot.slane %v1877, 3
  %v2039 = vrot.slane %v1879, 3
  %v2040 = vsel %vm1944, %v2038, %v2039
  %v2073 = vpack.c.bf16 %v1953, %v1947
  %v2074 = vpack.c.bf16 %v1956, %v1950
  %v2075 = vpack.c.bf16 %v1965, %v1959
  %v2076 = vpack.c.bf16 %v1968, %v1962
  %v2077 = vpack.c.bf16 %v1977, %v1971
  %v2078 = vpack.c.bf16 %v1980, %v1974
  %v2079 = vpack.c.bf16 %v1989, %v1983
  %v2080 = vpack.c.bf16 %v1992, %v1986
  %v2081 = vpack.c.bf16 %v2001, %v1995
  %v2082 = vpack.c.bf16 %v2004, %v1998
  %v2083 = vpack.c.bf16 %v2013, %v2007
  %v2084 = vpack.c.bf16 %v2016, %v2010
  %v2085 = vpack.c.bf16 %v2025, %v2019
  %v2086 = vpack.c.bf16 %v2028, %v2022
  %v2087 = vpack.c.bf16 %v2037, %v2031
  %v2088 = vpack.c.bf16 %v2040, %v2034
  %s2089 = scalar_lea.vmem %s1, 768
  %v2090 = vld [vmem:[%s2089] sm:$0xff]
  %v2091 = vld [vmem:[%s2089 + $0x8] sm:$0xff]
  %v2092 = vld [vmem:[%s2089 + $0x10] sm:$0xff]
  %v2093 = vld [vmem:[%s2089 + $0x18] sm:$0xff]
  %v2094 = vld [vmem:[%s2089 + $0x20] sm:$0xff]
  %v2095 = vld [vmem:[%s2089 + $0x28] sm:$0xff]
  %v2096 = vld [vmem:[%s2089 + $0x30] sm:$0xff]
  %v2097 = vld [vmem:[%s2089 + $0x38] sm:$0xff]
  %v2098 = vld [vmem:[%s2089 + $0x40] sm:$0xff]
  %v2099 = vld [vmem:[%s2089 + $0x48] sm:$0xff]
  %v2100 = vld [vmem:[%s2089 + $0x50] sm:$0xff]
  %v2101 = vld [vmem:[%s2089 + $0x58] sm:$0xff]
  %v2102 = vld [vmem:[%s2089 + $0x60] sm:$0xff]
  %v2103 = vld [vmem:[%s2089 + $0x68] sm:$0xff]
  %v2104 = vld [vmem:[%s2089 + $0x70] sm:$0xff]
  %v2105 = vld [vmem:[%s2089 + $0x78] sm:$0xff]
  %v2106 = vld [vmem:[%s2089 + $0x80] sm:$0xff]
  %v2107 = vld [vmem:[%s2089 + $0x88] sm:$0xff]
  %v2108 = vld [vmem:[%s2089 + $0x90] sm:$0xff]
  %v2109 = vld [vmem:[%s2089 + $0x98] sm:$0xff]
  %v2110 = vld [vmem:[%s2089 + $0xa0] sm:$0xff]
  %v2111 = vld [vmem:[%s2089 + $0xa8] sm:$0xff]
  %v2112 = vld [vmem:[%s2089 + $0xb0] sm:$0xff]
  %v2113 = vld [vmem:[%s2089 + $0xb8] sm:$0xff]
  %v2114 = vld [vmem:[%s2089 + $0xc0] sm:$0xff]
  %v2115 = vld [vmem:[%s2089 + $0xc8] sm:$0xff]
  %v2116 = vld [vmem:[%s2089 + $0xd0] sm:$0xff]
  %v2117 = vld [vmem:[%s2089 + $0xd8] sm:$0xff]
  %v2118 = vld [vmem:[%s2089 + $0xe0] sm:$0xff]
  %v2119 = vld [vmem:[%s2089 + $0xe8] sm:$0xff]
  %v2120 = vld [vmem:[%s2089 + $0xf0] sm:$0xff]
  %v2121 = vld [vmem:[%s2089 + $0xf8] sm:$0xff]
  %v2154 = vunpack.c.l.b16 %v2090
  %v2155 = vunpack.c.h.b16 %v2090
  %v2156 = vunpack.c.l.b16 %v2091
  %v2157 = vunpack.c.h.b16 %v2091
  %v2158 = vunpack.c.l.b16 %v2092
  %v2159 = vunpack.c.h.b16 %v2092
  %v2160 = vunpack.c.l.b16 %v2093
  %v2161 = vunpack.c.h.b16 %v2093
  %v2162 = vunpack.c.l.b16 %v2094
  %v2163 = vunpack.c.h.b16 %v2094
  %v2164 = vunpack.c.l.b16 %v2095
  %v2165 = vunpack.c.h.b16 %v2095
  %v2166 = vunpack.c.l.b16 %v2096
  %v2167 = vunpack.c.h.b16 %v2096
  %v2168 = vunpack.c.l.b16 %v2097
  %v2169 = vunpack.c.h.b16 %v2097
  %v2170 = vunpack.c.l.b16 %v2098
  %v2171 = vunpack.c.h.b16 %v2098
  %v2172 = vunpack.c.l.b16 %v2099
  %v2173 = vunpack.c.h.b16 %v2099
  %v2174 = vunpack.c.l.b16 %v2100
  %v2175 = vunpack.c.h.b16 %v2100
  %v2176 = vunpack.c.l.b16 %v2101
  %v2177 = vunpack.c.h.b16 %v2101
  %v2178 = vunpack.c.l.b16 %v2102
  %v2179 = vunpack.c.h.b16 %v2102
  %v2180 = vunpack.c.l.b16 %v2103
  %v2181 = vunpack.c.h.b16 %v2103
  %v2182 = vunpack.c.l.b16 %v2104
  %v2183 = vunpack.c.h.b16 %v2104
  %v2184 = vunpack.c.l.b16 %v2105
  %v2185 = vunpack.c.h.b16 %v2105
  %v2186 = vunpack.c.l.b16 %v2106
  %v2187 = vunpack.c.h.b16 %v2106
  %v2188 = vunpack.c.l.b16 %v2107
  %v2189 = vunpack.c.h.b16 %v2107
  %v2190 = vunpack.c.l.b16 %v2108
  %v2191 = vunpack.c.h.b16 %v2108
  %v2192 = vunpack.c.l.b16 %v2109
  %v2193 = vunpack.c.h.b16 %v2109
  %v2194 = vunpack.c.l.b16 %v2110
  %v2195 = vunpack.c.h.b16 %v2110
  %v2196 = vunpack.c.l.b16 %v2111
  %v2197 = vunpack.c.h.b16 %v2111
  %v2198 = vunpack.c.l.b16 %v2112
  %v2199 = vunpack.c.h.b16 %v2112
  %v2200 = vunpack.c.l.b16 %v2113
  %v2201 = vunpack.c.h.b16 %v2113
  %v2202 = vunpack.c.l.b16 %v2114
  %v2203 = vunpack.c.h.b16 %v2114
  %v2204 = vunpack.c.l.b16 %v2115
  %v2205 = vunpack.c.h.b16 %v2115
  %v2206 = vunpack.c.l.b16 %v2116
  %v2207 = vunpack.c.h.b16 %v2116
  %v2208 = vunpack.c.l.b16 %v2117
  %v2209 = vunpack.c.h.b16 %v2117
  %v2210 = vunpack.c.l.b16 %v2118
  %v2211 = vunpack.c.h.b16 %v2118
  %v2212 = vunpack.c.l.b16 %v2119
  %v2213 = vunpack.c.h.b16 %v2119
  %v2214 = vunpack.c.l.b16 %v2120
  %v2215 = vunpack.c.h.b16 %v2120
  %v2216 = vunpack.c.l.b16 %v2121
  %v2217 = vunpack.c.h.b16 %v2121
  %v2218 = vpack.c.b16 %v2156, %v2154
  %v2219 = vpack.c.b16 %v2157, %v2155
  %v2220 = vpack.c.b16 %v2160, %v2158
  %v2221 = vpack.c.b16 %v2161, %v2159
  %v2222 = vpack.c.b16 %v2164, %v2162
  %v2223 = vpack.c.b16 %v2165, %v2163
  %v2224 = vpack.c.b16 %v2168, %v2166
  %v2225 = vpack.c.b16 %v2169, %v2167
  %v2226 = vpack.c.b16 %v2172, %v2170
  %v2227 = vpack.c.b16 %v2173, %v2171
  %v2228 = vpack.c.b16 %v2176, %v2174
  %v2229 = vpack.c.b16 %v2177, %v2175
  %v2230 = vpack.c.b16 %v2180, %v2178
  %v2231 = vpack.c.b16 %v2181, %v2179
  %v2232 = vpack.c.b16 %v2184, %v2182
  %v2233 = vpack.c.b16 %v2185, %v2183
  %v2234 = vpack.c.b16 %v2188, %v2186
  %v2235 = vpack.c.b16 %v2189, %v2187
  %v2236 = vpack.c.b16 %v2192, %v2190
  %v2237 = vpack.c.b16 %v2193, %v2191
  %v2238 = vpack.c.b16 %v2196, %v2194
  %v2239 = vpack.c.b16 %v2197, %v2195
  %v2240 = vpack.c.b16 %v2200, %v2198
  %v2241 = vpack.c.b16 %v2201, %v2199
  %v2242 = vpack.c.b16 %v2204, %v2202
  %v2243 = vpack.c.b16 %v2205, %v2203
  %v2244 = vpack.c.b16 %v2208, %v2206
  %v2245 = vpack.c.b16 %v2209, %v2207
  %v2246 = vpack.c.b16 %v2212, %v2210
  %v2247 = vpack.c.b16 %v2213, %v2211
  %v2248 = vpack.c.b16 %v2216, %v2214
  %v2249 = vpack.c.b16 %v2217, %v2215
  %2282 = vmatprep.subr.bf16.mxu0 %v2219
  %2283 = vmatpush1.bf16.msra.mxu0 %v2218
  %2284 = vmatprep.subr.bf16.mxu0 %v2221
  %2285 = vmatpush1.bf16.msra.mxu0 %v2220
  %2286 = vmatprep.subr.bf16.mxu0 %v2223
  %2287 = vmatpush1.bf16.msra.mxu0 %v2222
  %2288 = vmatprep.subr.bf16.mxu0 %v2225
  %2289 = vmatpush1.bf16.msra.mxu0 %v2224
  %2290 = vmatprep.subr.bf16.mxu0 %v2227
  %2291 = vmatpush1.bf16.msra.mxu0 %v2226
  %2292 = vmatprep.subr.bf16.mxu0 %v2229
  %2293 = vmatpush1.bf16.msra.mxu0 %v2228
  %2294 = vmatprep.subr.bf16.mxu0 %v2231
  %2295 = vmatpush1.bf16.msra.mxu0 %v2230
  %2296 = vmatprep.subr.bf16.mxu0 %v2233
  %2297 = vmatpush1.bf16.msra.mxu0 %v2232
  %2298 = vmatprep.subr.bf16.mxu0 %v2235
  %2299 = vmatpush1.bf16.msra.mxu0 %v2234
  %2300 = vmatprep.subr.bf16.mxu0 %v2237
  %2301 = vmatpush1.bf16.msra.mxu0 %v2236
  %2302 = vmatprep.subr.bf16.mxu0 %v2239
  %2303 = vmatpush1.bf16.msra.mxu0 %v2238
  %2304 = vmatprep.subr.bf16.mxu0 %v2241
  %2305 = vmatpush1.bf16.msra.mxu0 %v2240
  %2306 = vmatprep.subr.bf16.mxu0 %v2243
  %2307 = vmatpush1.bf16.msra.mxu0 %v2242
  %2308 = vmatprep.subr.bf16.mxu0 %v2245
  %2309 = vmatpush1.bf16.msra.mxu0 %v2244
  %2310 = vmatprep.subr.bf16.mxu0 %v2247
  %2311 = vmatpush1.bf16.msra.mxu0 %v2246
  %2312 = vmatprep.subr.bf16.mxu0 %v2249
  %2313 = vmatpush1.bf16.msra.mxu0 %v2248
  %2314 = vmatprep.mubr.bf16.mxu0 %v2074
  %2315 = vmatmul.mubr.bf16.gmra.mrb[0].mxu0 %v2073
  %v2316 = vpop.f32.mrb[0].mxu0
  %v2317 = vadd.f32 0.0, %v2316
  %v2318 = vpop.f32.mrb[0].mxu0
  %v2319 = vadd.f32 0.0, %v2318
  %v2320 = vpop.f32.mrb[0].mxu0
  %v2321 = vadd.f32 0.0, %v2320
  %v2322 = vpop.f32.mrb[0].mxu0
  %v2323 = vadd.f32 0.0, %v2322
  %2324 = vmatprep.mubr.bf16.mxu0 %v2076
  %2325 = vmatmul.mubr.bf16.gmra.mrb[0].mxu0 %v2075
  %v2326 = vpop.f32.mrb[0].mxu0
  %v2327 = vadd.f32 0.0, %v2326
  %v2328 = vpop.f32.mrb[0].mxu0
  %v2329 = vadd.f32 0.0, %v2328
  %v2330 = vpop.f32.mrb[0].mxu0
  %v2331 = vadd.f32 0.0, %v2330
  %v2332 = vpop.f32.mrb[0].mxu0
  %v2333 = vadd.f32 0.0, %v2332
  %2334 = vmatprep.mubr.bf16.mxu0 %v2078
  %2335 = vmatmul.mubr.bf16.gmra.mrb[0].mxu0 %v2077
  %v2336 = vpop.f32.mrb[0].mxu0
  %v2337 = vadd.f32 0.0, %v2336
  %v2338 = vpop.f32.mrb[0].mxu0
  %v2339 = vadd.f32 0.0, %v2338
  %v2340 = vpop.f32.mrb[0].mxu0
  %v2341 = vadd.f32 0.0, %v2340
  %v2342 = vpop.f32.mrb[0].mxu0
  %v2343 = vadd.f32 0.0, %v2342
  %2344 = vmatprep.mubr.bf16.mxu0 %v2080
  %2345 = vmatmul.mubr.bf16.gmra.mrb[0].mxu0 %v2079
  %v2346 = vpop.f32.mrb[0].mxu0
  %v2347 = vadd.f32 0.0, %v2346
  %v2348 = vpop.f32.mrb[0].mxu0
  %v2349 = vadd.f32 0.0, %v2348
  %v2350 = vpop.f32.mrb[0].mxu0
  %v2351 = vadd.f32 0.0, %v2350
  %v2352 = vpop.f32.mrb[0].mxu0
  %v2353 = vadd.f32 0.0, %v2352
  %2354 = vmatprep.mubr.bf16.mxu0 %v2082
  %2355 = vmatmul.mubr.bf16.gmra.mrb[0].mxu0 %v2081
  %v2356 = vpop.f32.mrb[0].mxu0
  %v2357 = vadd.f32 0.0, %v2356
  %v2358 = vpop.f32.mrb[0].mxu0
  %v2359 = vadd.f32 0.0, %v2358
  %v2360 = vpop.f32.mrb[0].mxu0
  %v2361 = vadd.f32 0.0, %v2360
  %v2362 = vpop.f32.mrb[0].mxu0
  %v2363 = vadd.f32 0.0, %v2362
  %2364 = vmatprep.mubr.bf16.mxu0 %v2084
  %2365 = vmatmul.mubr.bf16.gmra.mrb[0].mxu0 %v2083
  %v2366 = vpop.f32.mrb[0].mxu0
  %v2367 = vadd.f32 0.0, %v2366
  %v2368 = vpop.f32.mrb[0].mxu0
  %v2369 = vadd.f32 0.0, %v2368
  %v2370 = vpop.f32.mrb[0].mxu0
  %v2371 = vadd.f32 0.0, %v2370
  %v2372 = vpop.f32.mrb[0].mxu0
  %v2373 = vadd.f32 0.0, %v2372
  %2374 = vmatprep.mubr.bf16.mxu0 %v2086
  %2375 = vmatmul.mubr.bf16.gmra.mrb[0].mxu0 %v2085
  %v2376 = vpop.f32.mrb[0].mxu0
  %v2377 = vadd.f32 0.0, %v2376
  %v2378 = vpop.f32.mrb[0].mxu0
  %v2379 = vadd.f32 0.0, %v2378
  %v2380 = vpop.f32.mrb[0].mxu0
  %v2381 = vadd.f32 0.0, %v2380
  %v2382 = vpop.f32.mrb[0].mxu0
  %v2383 = vadd.f32 0.0, %v2382
  %2384 = vmatprep.mubr.bf16.mxu0 %v2088
  %2385 = vmatmul.mubr.bf16.gmra.mrb[0].mxu0 %v2087
  %v2386 = vpop.f32.mrb[0].mxu0
  %v2387 = vadd.f32 0.0, %v2386
  %v2388 = vpop.f32.mrb[0].mxu0
  %v2389 = vadd.f32 0.0, %v2388
  %v2390 = vpop.f32.mrb[0].mxu0
  %v2391 = vadd.f32 0.0, %v2390
  %v2392 = vpop.f32.mrb[0].mxu0
  %v2393 = vadd.f32 0.0, %v2392
  %2394 = vdwg.mxu0
  %v2395 = vadd.f32 %v1784, %v2317
  %v2396 = vadd.f32 %v1785, %v2319
  %v2397 = vadd.f32 %v1786, %v2321
  %v2398 = vadd.f32 %v1787, %v2323
  %v2399 = vadd.f32 %v1788, %v2327
  %v2400 = vadd.f32 %v1789, %v2329
  %v2401 = vadd.f32 %v1790, %v2331
  %v2402 = vadd.f32 %v1791, %v2333
  %v2403 = vadd.f32 %v1792, %v2337
  %v2404 = vadd.f32 %v1793, %v2339
  %v2405 = vadd.f32 %v1794, %v2341
  %v2406 = vadd.f32 %v1795, %v2343
  %v2407 = vadd.f32 %v1796, %v2347
  %v2408 = vadd.f32 %v1797, %v2349
  %v2409 = vadd.f32 %v1798, %v2351
  %v2410 = vadd.f32 %v1799, %v2353
  %v2411 = vadd.f32 %v1800, %v2357
  %v2412 = vadd.f32 %v1801, %v2359
  %v2413 = vadd.f32 %v1802, %v2361
  %v2414 = vadd.f32 %v1803, %v2363
  %v2415 = vadd.f32 %v1804, %v2367
  %v2416 = vadd.f32 %v1805, %v2369
  %v2417 = vadd.f32 %v1806, %v2371
  %v2418 = vadd.f32 %v1807, %v2373
  %v2419 = vadd.f32 %v1808, %v2377
  %v2420 = vadd.f32 %v1809, %v2379
  %v2421 = vadd.f32 %v1810, %v2381
  %v2422 = vadd.f32 %v1811, %v2383
  %v2423 = vadd.f32 %v1812, %v2387
  %v2424 = vadd.f32 %v1813, %v2389
  %v2425 = vadd.f32 %v1814, %v2391
  %v2426 = vadd.f32 %v1815, %v2393
  %v2427 = vld [vmem:[#allocation2] sm:$0xf0]
  %v2428 = vld [vmem:[#allocation2 + $0x8] sm:$0xf0]
  %v2429 = vld [vmem:[#allocation2 + $0x10] sm:$0xf]
  %v2430 = vld [vmem:[#allocation2 + $0x18] sm:$0xf]
  %v2431 = vld [vmem:[#allocation2 + $0x20] sm:$0xf0]
  %v2432 = vld [vmem:[#allocation2 + $0x28] sm:$0xf0]
  %v2433 = vld [vmem:[#allocation2 + $0x30] sm:$0xf]
  %v2434 = vld [vmem:[#allocation2 + $0x38] sm:$0xf]
  %v2435 = vld [vmem:[#allocation2 + $0x40] sm:$0xf0]
  %v2436 = vld [vmem:[#allocation2 + $0x48] sm:$0xf0]
  %v2437 = vld [vmem:[#allocation2 + $0x50] sm:$0xf]
  %v2438 = vld [vmem:[#allocation2 + $0x58] sm:$0xf]
  %v2439 = vld [vmem:[#allocation2 + $0x60] sm:$0xf0]
  %v2440 = vld [vmem:[#allocation2 + $0x68] sm:$0xf0]
  %v2441 = vld [vmem:[#allocation2 + $0x70] sm:$0xf]
  %v2442 = vld [vmem:[#allocation2 + $0x78] sm:$0xf]
  %v2443 = vld [vmem:[#allocation2 + $0x80] sm:$0xf0]
  %v2444 = vld [vmem:[#allocation2 + $0x88] sm:$0xf0]
  %v2445 = vld [vmem:[#allocation2 + $0x90] sm:$0xf]
  %v2446 = vld [vmem:[#allocation2 + $0x98] sm:$0xf]
  %v2447 = vld [vmem:[#allocation2 + $0xa0] sm:$0xf0]
  %v2448 = vld [vmem:[#allocation2 + $0xa8] sm:$0xf0]
  %v2449 = vld [vmem:[#allocation2 + $0xb0] sm:$0xf]
  %v2450 = vld [vmem:[#allocation2 + $0xb8] sm:$0xf]
  %v2451 = vld [vmem:[#allocation2 + $0xc0] sm:$0xf0]
  %v2452 = vld [vmem:[#allocation2 + $0xc8] sm:$0xf0]
  %v2453 = vld [vmem:[#allocation2 + $0xd0] sm:$0xf]
  %v2454 = vld [vmem:[#allocation2 + $0xd8] sm:$0xf]
  %v2455 = vld [vmem:[#allocation2 + $0xe0] sm:$0xf0]
  %v2456 = vld [vmem:[#allocation2 + $0xe8] sm:$0xf0]
  %v2457 = vld [vmem:[#allocation2 + $0xf0] sm:$0xf]
  %v2458 = vld [vmem:[#allocation2 + $0xf8] sm:$0xf]
  %v2459 = vld [vmem:[#allocation2 + $0x100] sm:$0xf0]
  %v2460 = vld [vmem:[#allocation2 + $0x108] sm:$0xf0]
  %v2461 = vld [vmem:[#allocation2 + $0x110] sm:$0xf]
  %v2462 = vld [vmem:[#allocation2 + $0x118] sm:$0xf]
  %v2463 = vld [vmem:[#allocation2 + $0x120] sm:$0xf0]
  %v2464 = vld [vmem:[#allocation2 + $0x128] sm:$0xf0]
  %v2465 = vld [vmem:[#allocation2 + $0x130] sm:$0xf]
  %v2466 = vld [vmem:[#allocation2 + $0x138] sm:$0xf]
  %v2467 = vld [vmem:[#allocation2 + $0x140] sm:$0xf0]
  %v2468 = vld [vmem:[#allocation2 + $0x148] sm:$0xf0]
  %v2469 = vld [vmem:[#allocation2 + $0x150] sm:$0xf]
  %v2470 = vld [vmem:[#allocation2 + $0x158] sm:$0xf]
  %v2471 = vld [vmem:[#allocation2 + $0x160] sm:$0xf0]
  %v2472 = vld [vmem:[#allocation2 + $0x168] sm:$0xf0]
  %v2473 = vld [vmem:[#allocation2 + $0x170] sm:$0xf]
  %v2474 = vld [vmem:[#allocation2 + $0x178] sm:$0xf]
  %v2475 = vld [vmem:[#allocation2 + $0x180] sm:$0xf0]
  %v2476 = vld [vmem:[#allocation2 + $0x188] sm:$0xf0]
  %v2477 = vld [vmem:[#allocation2 + $0x190] sm:$0xf]
  %v2478 = vld [vmem:[#allocation2 + $0x198] sm:$0xf]
  %v2479 = vld [vmem:[#allocation2 + $0x1a0] sm:$0xf0]
  %v2480 = vld [vmem:[#allocation2 + $0x1a8] sm:$0xf0]
  %v2481 = vld [vmem:[#allocation2 + $0x1b0] sm:$0xf]
  %v2482 = vld [vmem:[#allocation2 + $0x1b8] sm:$0xf]
  %v2483 = vld [vmem:[#allocation2 + $0x1c0] sm:$0xf0]
  %v2484 = vld [vmem:[#allocation2 + $0x1c8] sm:$0xf0]
  %v2485 = vld [vmem:[#allocation2 + $0x1d0] sm:$0xf]
  %v2486 = vld [vmem:[#allocation2 + $0x1d8] sm:$0xf]
  %v2487 = vld [vmem:[#allocation2 + $0x1e0] sm:$0xf0]
  %v2488 = vld [vmem:[#allocation2 + $0x1e8] sm:$0xf0]
  %v2489 = vld [vmem:[#allocation2 + $0x1f0] sm:$0xf]
  %v2490 = vld [vmem:[#allocation2 + $0x1f8] sm:$0xf]
  %vm2555 = vcmask 1043456
  %v2556 = vrot.slane %v2427, 4
  %v2557 = vrot.slane %v2429, 4
  %v2558 = vsel %vm2555, %v2556, %v2557
  %v2559 = vrot.slane %v2428, 4
  %v2560 = vrot.slane %v2430, 4
  %v2561 = vsel %vm2555, %v2559, %v2560
  %v2562 = vrot.slane %v2431, 4
  %v2563 = vrot.slane %v2433, 4
  %v2564 = vsel %vm2555, %v2562, %v2563
  %v2565 = vrot.slane %v2432, 4
  %v2566 = vrot.slane %v2434, 4
  %v2567 = vsel %vm2555, %v2565, %v2566
  %v2568 = vrot.slane %v2435, 4
  %v2569 = vrot.slane %v2437, 4
  %v2570 = vsel %vm2555, %v2568, %v2569
  %v2571 = vrot.slane %v2436, 4
  %v2572 = vrot.slane %v2438, 4
  %v2573 = vsel %vm2555, %v2571, %v2572
  %v2574 = vrot.slane %v2439, 4
  %v2575 = vrot.slane %v2441, 4
  %v2576 = vsel %vm2555, %v2574, %v2575
  %v2577 = vrot.slane %v2440, 4
  %v2578 = vrot.slane %v2442, 4
  %v2579 = vsel %vm2555, %v2577, %v2578
  %v2580 = vrot.slane %v2443, 4
  %v2581 = vrot.slane %v2445, 4
  %v2582 = vsel %vm2555, %v2580, %v2581
  %v2583 = vrot.slane %v2444, 4
  %v2584 = vrot.slane %v2446, 4
  %v2585 = vsel %vm2555, %v2583, %v2584
  %v2586 = vrot.slane %v2447, 4
  %v2587 = vrot.slane %v2449, 4
  %v2588 = vsel %vm2555, %v2586, %v2587
  %v2589 = vrot.slane %v2448, 4
  %v2590 = vrot.slane %v2450, 4
  %v2591 = vsel %vm2555, %v2589, %v2590
  %v2592 = vrot.slane %v2451, 4
  %v2593 = vrot.slane %v2453, 4
  %v2594 = vsel %vm2555, %v2592, %v2593
  %v2595 = vrot.slane %v2452, 4
  %v2596 = vrot.slane %v2454, 4
  %v2597 = vsel %vm2555, %v2595, %v2596
  %v2598 = vrot.slane %v2455, 4
  %v2599 = vrot.slane %v2457, 4
  %v2600 = vsel %vm2555, %v2598, %v2599
  %v2601 = vrot.slane %v2456, 4
  %v2602 = vrot.slane %v2458, 4
  %v2603 = vsel %vm2555, %v2601, %v2602
  %v2604 = vrot.slane %v2459, 4
  %v2605 = vrot.slane %v2461, 4
  %v2606 = vsel %vm2555, %v2604, %v2605
  %v2607 = vrot.slane %v2460, 4
  %v2608 = vrot.slane %v2462, 4
  %v2609 = vsel %vm2555, %v2607, %v2608
  %v2610 = vrot.slane %v2463, 4
  %v2611 = vrot.slane %v2465, 4
  %v2612 = vsel %vm2555, %v2610, %v2611
  %v2613 = vrot.slane %v2464, 4
  %v2614 = vrot.slane %v2466, 4
  %v2615 = vsel %vm2555, %v2613, %v2614
  %v2616 = vrot.slane %v2467, 4
  %v2617 = vrot.slane %v2469, 4
  %v2618 = vsel %vm2555, %v2616, %v2617
  %v2619 = vrot.slane %v2468, 4
  %v2620 = vrot.slane %v2470, 4
  %v2621 = vsel %vm2555, %v2619, %v2620
  %v2622 = vrot.slane %v2471, 4
  %v2623 = vrot.slane %v2473, 4
  %v2624 = vsel %vm2555, %v2622, %v2623
  %v2625 = vrot.slane %v2472, 4
  %v2626 = vrot.slane %v2474, 4
  %v2627 = vsel %vm2555, %v2625, %v2626
  %v2628 = vrot.slane %v2475, 4
  %v2629 = vrot.slane %v2477, 4
  %v2630 = vsel %vm2555, %v2628, %v2629
  %v2631 = vrot.slane %v2476, 4
  %v2632 = vrot.slane %v2478, 4
  %v2633 = vsel %vm2555, %v2631, %v2632
  %v2634 = vrot.slane %v2479, 4
  %v2635 = vrot.slane %v2481, 4
  %v2636 = vsel %vm2555, %v2634, %v2635
  %v2637 = vrot.slane %v2480, 4
  %v2638 = vrot.slane %v2482, 4
  %v2639 = vsel %vm2555, %v2637, %v2638
  %v2640 = vrot.slane %v2483, 4
  %v2641 = vrot.slane %v2485, 4
  %v2642 = vsel %vm2555, %v2640, %v2641
  %v2643 = vrot.slane %v2484, 4
  %v2644 = vrot.slane %v2486, 4
  %v2645 = vsel %vm2555, %v2643, %v2644
  %v2646 = vrot.slane %v2487, 4
  %v2647 = vrot.slane %v2489, 4
  %v2648 = vsel %vm2555, %v2646, %v2647
  %v2649 = vrot.slane %v2488, 4
  %v2650 = vrot.slane %v2490, 4
  %v2651 = vsel %vm2555, %v2649, %v2650
  %v2684 = vpack.c.bf16 %v2564, %v2558
  %v2685 = vpack.c.bf16 %v2567, %v2561
  %v2686 = vpack.c.bf16 %v2576, %v2570
  %v2687 = vpack.c.bf16 %v2579, %v2573
  %v2688 = vpack.c.bf16 %v2588, %v2582
  %v2689 = vpack.c.bf16 %v2591, %v2585
  %v2690 = vpack.c.bf16 %v2600, %v2594
  %v2691 = vpack.c.bf16 %v2603, %v2597
  %v2692 = vpack.c.bf16 %v2612, %v2606
  %v2693 = vpack.c.bf16 %v2615, %v2609
  %v2694 = vpack.c.bf16 %v2624, %v2618
  %v2695 = vpack.c.bf16 %v2627, %v2621
  %v2696 = vpack.c.bf16 %v2636, %v2630
  %v2697 = vpack.c.bf16 %v2639, %v2633
  %v2698 = vpack.c.bf16 %v2648, %v2642
  %v2699 = vpack.c.bf16 %v2651, %v2645
  %s2700 = scalar_lea.vmem %s1, 1024
  %v2701 = vld [vmem:[%s2700] sm:$0xff]
  %v2702 = vld [vmem:[%s2700 + $0x8] sm:$0xff]
  %v2703 = vld [vmem:[%s2700 + $0x10] sm:$0xff]
  %v2704 = vld [vmem:[%s2700 + $0x18] sm:$0xff]
  %v2705 = vld [vmem:[%s2700 + $0x20] sm:$0xff]
  %v2706 = vld [vmem:[%s2700 + $0x28] sm:$0xff]
  %v2707 = vld [vmem:[%s2700 + $0x30] sm:$0xff]
  %v2708 = vld [vmem:[%s2700 + $0x38] sm:$0xff]
  %v2709 = vld [vmem:[%s2700 + $0x40] sm:$0xff]
  %v2710 = vld [vmem:[%s2700 + $0x48] sm:$0xff]
  %v2711 = vld [vmem:[%s2700 + $0x50] sm:$0xff]
  %v2712 = vld [vmem:[%s2700 + $0x58] sm:$0xff]
  %v2713 = vld [vmem:[%s2700 + $0x60] sm:$0xff]
  %v2714 = vld [vmem:[%s2700 + $0x68] sm:$0xff]
  %v2715 = vld [vmem:[%s2700 + $0x70] sm:$0xff]
  %v2716 = vld [vmem:[%s2700 + $0x78] sm:$0xff]
  %v2717 = vld [vmem:[%s2700 + $0x80] sm:$0xff]
  %v2718 = vld [vmem:[%s2700 + $0x88] sm:$0xff]
  %v2719 = vld [vmem:[%s2700 + $0x90] sm:$0xff]
  %v2720 = vld [vmem:[%s2700 + $0x98] sm:$0xff]
  %v2721 = vld [vmem:[%s2700 + $0xa0] sm:$0xff]
  %v2722 = vld [vmem:[%s2700 + $0xa8] sm:$0xff]
  %v2723 = vld [vmem:[%s2700 + $0xb0] sm:$0xff]
  %v2724 = vld [vmem:[%s2700 + $0xb8] sm:$0xff]
  %v2725 = vld [vmem:[%s2700 + $0xc0] sm:$0xff]
  %v2726 = vld [vmem:[%s2700 + $0xc8] sm:$0xff]
  %v2727 = vld [vmem:[%s2700 + $0xd0] sm:$0xff]
  %v2728 = vld [vmem:[%s2700 + $0xd8] sm:$0xff]
  %v2729 = vld [vmem:[%s2700 + $0xe0] sm:$0xff]
  %v2730 = vld [vmem:[%s2700 + $0xe8] sm:$0xff]
  %v2731 = vld [vmem:[%s2700 + $0xf0] sm:$0xff]
  %v2732 = vld [vmem:[%s2700 + $0xf8] sm:$0xff]
  %v2765 = vunpack.c.l.b16 %v2701
  %v2766 = vunpack.c.h.b16 %v2701
  %v2767 = vunpack.c.l.b16 %v2702
  %v2768 = vunpack.c.h.b16 %v2702
  %v2769 = vunpack.c.l.b16 %v2703
  %v2770 = vunpack.c.h.b16 %v2703
  %v2771 = vunpack.c.l.b16 %v2704
  %v2772 = vunpack.c.h.b16 %v2704
  %v2773 = vunpack.c.l.b16 %v2705
  %v2774 = vunpack.c.h.b16 %v2705
  %v2775 = vunpack.c.l.b16 %v2706
  %v2776 = vunpack.c.h.b16 %v2706
  %v2777 = vunpack.c.l.b16 %v2707
  %v2778 = vunpack.c.h.b16 %v2707
  %v2779 = vunpack.c.l.b16 %v2708
  %v2780 = vunpack.c.h.b16 %v2708
  %v2781 = vunpack.c.l.b16 %v2709
  %v2782 = vunpack.c.h.b16 %v2709
  %v2783 = vunpack.c.l.b16 %v2710
  %v2784 = vunpack.c.h.b16 %v2710
  %v2785 = vunpack.c.l.b16 %v2711
  %v2786 = vunpack.c.h.b16 %v2711
  %v2787 = vunpack.c.l.b16 %v2712
  %v2788 = vunpack.c.h.b16 %v2712
  %v2789 = vunpack.c.l.b16 %v2713
  %v2790 = vunpack.c.h.b16 %v2713
  %v2791 = vunpack.c.l.b16 %v2714
  %v2792 = vunpack.c.h.b16 %v2714
  %v2793 = vunpack.c.l.b16 %v2715
  %v2794 = vunpack.c.h.b16 %v2715
  %v2795 = vunpack.c.l.b16 %v2716
  %v2796 = vunpack.c.h.b16 %v2716
  %v2797 = vunpack.c.l.b16 %v2717
  %v2798 = vunpack.c.h.b16 %v2717
  %v2799 = vunpack.c.l.b16 %v2718
  %v2800 = vunpack.c.h.b16 %v2718
  %v2801 = vunpack.c.l.b16 %v2719
  %v2802 = vunpack.c.h.b16 %v2719
  %v2803 = vunpack.c.l.b16 %v2720
  %v2804 = vunpack.c.h.b16 %v2720
  %v2805 = vunpack.c.l.b16 %v2721
  %v2806 = vunpack.c.h.b16 %v2721
  %v2807 = vunpack.c.l.b16 %v2722
  %v2808 = vunpack.c.h.b16 %v2722
  %v2809 = vunpack.c.l.b16 %v2723
  %v2810 = vunpack.c.h.b16 %v2723
  %v2811 = vunpack.c.l.b16 %v2724
  %v2812 = vunpack.c.h.b16 %v2724
  %v2813 = vunpack.c.l.b16 %v2725
  %v2814 = vunpack.c.h.b16 %v2725
  %v2815 = vunpack.c.l.b16 %v2726
  %v2816 = vunpack.c.h.b16 %v2726
  %v2817 = vunpack.c.l.b16 %v2727
  %v2818 = vunpack.c.h.b16 %v2727
  %v2819 = vunpack.c.l.b16 %v2728
  %v2820 = vunpack.c.h.b16 %v2728
  %v2821 = vunpack.c.l.b16 %v2729
  %v2822 = vunpack.c.h.b16 %v2729
  %v2823 = vunpack.c.l.b16 %v2730
  %v2824 = vunpack.c.h.b16 %v2730
  %v2825 = vunpack.c.l.b16 %v2731
  %v2826 = vunpack.c.h.b16 %v2731
  %v2827 = vunpack.c.l.b16 %v2732
  %v2828 = vunpack.c.h.b16 %v2732
  %v2829 = vpack.c.b16 %v2767, %v2765
  %v2830 = vpack.c.b16 %v2768, %v2766
  %v2831 = vpack.c.b16 %v2771, %v2769
  %v2832 = vpack.c.b16 %v2772, %v2770
  %v2833 = vpack.c.b16 %v2775, %v2773
  %v2834 = vpack.c.b16 %v2776, %v2774
  %v2835 = vpack.c.b16 %v2779, %v2777
  %v2836 = vpack.c.b16 %v2780, %v2778
  %v2837 = vpack.c.b16 %v2783, %v2781
  %v2838 = vpack.c.b16 %v2784, %v2782
  %v2839 = vpack.c.b16 %v2787, %v2785
  %v2840 = vpack.c.b16 %v2788, %v2786
  %v2841 = vpack.c.b16 %v2791, %v2789
  %v2842 = vpack.c.b16 %v2792, %v2790
  %v2843 = vpack.c.b16 %v2795, %v2793
  %v2844 = vpack.c.b16 %v2796, %v2794
  %v2845 = vpack.c.b16 %v2799, %v2797
  %v2846 = vpack.c.b16 %v2800, %v2798
  %v2847 = vpack.c.b16 %v2803, %v2801
  %v2848 = vpack.c.b16 %v2804, %v2802
  %v2849 = vpack.c.b16 %v2807, %v2805
  %v2850 = vpack.c.b16 %v2808, %v2806
  %v2851 = vpack.c.b16 %v2811, %v2809
  %v2852 = vpack.c.b16 %v2812, %v2810
  %v2853 = vpack.c.b16 %v2815, %v2813
  %v2854 = vpack.c.b16 %v2816, %v2814
  %v2855 = vpack.c.b16 %v2819, %v2817
  %v2856 = vpack.c.b16 %v2820, %v2818
  %v2857 = vpack.c.b16 %v2823, %v2821
  %v2858 = vpack.c.b16 %v2824, %v2822
  %v2859 = vpack.c.b16 %v2827, %v2825
  %v2860 = vpack.c.b16 %v2828, %v2826
  %2893 = vmatprep.subr.bf16.mxu0 %v2830
  %2894 = vmatpush1.bf16.msra.mxu0 %v2829
  %2895 = vmatprep.subr.bf16.mxu0 %v2832
  %2896 = vmatpush1.bf16.msra.mxu0 %v2831
  %2897 = vmatprep.subr.bf16.mxu0 %v2834
  %2898 = vmatpush1.bf16.msra.mxu0 %v2833
  %2899 = vmatprep.subr.bf16.mxu0 %v2836
  %2900 = vmatpush1.bf16.msra.mxu0 %v2835
  %2901 = vmatprep.subr.bf16.mxu0 %v2838
  %2902 = vmatpush1.bf16.msra.mxu0 %v2837
  %2903 = vmatprep.subr.bf16.mxu0 %v2840
  %2904 = vmatpush1.bf16.msra.mxu0 %v2839
  %2905 = vmatprep.subr.bf16.mxu0 %v2842
  %2906 = vmatpush1.bf16.msra.mxu0 %v2841
  %2907 = vmatprep.subr.bf16.mxu0 %v2844
  %2908 = vmatpush1.bf16.msra.mxu0 %v2843
  %2909 = vmatprep.subr.bf16.mxu0 %v2846
  %2910 = vmatpush1.bf16.msra.mxu0 %v2845
  %2911 = vmatprep.subr.bf16.mxu0 %v2848
  %2912 = vmatpush1.bf16.msra.mxu0 %v2847
  %2913 = vmatprep.subr.bf16.mxu0 %v2850
  %2914 = vmatpush1.bf16.msra.mxu0 %v2849
  %2915 = vmatprep.subr.bf16.mxu0 %v2852
  %2916 = vmatpush1.bf16.msra.mxu0 %v2851
  %2917 = vmatprep.subr.bf16.mxu0 %v2854
  %2918 = vmatpush1.bf16.msra.mxu0 %v2853
  %2919 = vmatprep.subr.bf16.mxu0 %v2856
  %2920 = vmatpush1.bf16.msra.mxu0 %v2855
  %2921 = vmatprep.subr.bf16.mxu0 %v2858
  %2922 = vmatpush1.bf16.msra.mxu0 %v2857
  %2923 = vmatprep.subr.bf16.mxu0 %v2860
  %2924 = vmatpush1.bf16.msra.mxu0 %v2859
  %2925 = vmatprep.mubr.bf16.mxu0 %v2685
  %2926 = vmatmul.mubr.bf16.gmra.mrb[0].mxu0 %v2684
  %v2927 = vpop.f32.mrb[0].mxu0
  %v2928 = vadd.f32 0.0, %v2927
  %v2929 = vpop.f32.mrb[0].mxu0
  %v2930 = vadd.f32 0.0, %v2929
  %v2931 = vpop.f32.mrb[0].mxu0
  %v2932 = vadd.f32 0.0, %v2931
  %v2933 = vpop.f32.mrb[0].mxu0
  %v2934 = vadd.f32 0.0, %v2933
  %2935 = vmatprep.mubr.bf16.mxu0 %v2687
  %2936 = vmatmul.mubr.bf16.gmra.mrb[0].mxu0 %v2686
  %v2937 = vpop.f32.mrb[0].mxu0
  %v2938 = vadd.f32 0.0, %v2937
  %v2939 = vpop.f32.mrb[0].mxu0
  %v2940 = vadd.f32 0.0, %v2939
  %v2941 = vpop.f32.mrb[0].mxu0
  %v2942 = vadd.f32 0.0, %v2941
  %v2943 = vpop.f32.mrb[0].mxu0
  %v2944 = vadd.f32 0.0, %v2943
  %2945 = vmatprep.mubr.bf16.mxu0 %v2689
  %2946 = vmatmul.mubr.bf16.gmra.mrb[0].mxu0 %v2688
  %v2947 = vpop.f32.mrb[0].mxu0
  %v2948 = vadd.f32 0.0, %v2947
  %v2949 = vpop.f32.mrb[0].mxu0
  %v2950 = vadd.f32 0.0, %v2949
  %v2951 = vpop.f32.mrb[0].mxu0
  %v2952 = vadd.f32 0.0, %v2951
  %v2953 = vpop.f32.mrb[0].mxu0
  %v2954 = vadd.f32 0.0, %v2953
  %2955 = vmatprep.mubr.bf16.mxu0 %v2691
  %2956 = vmatmul.mubr.bf16.gmra.mrb[0].mxu0 %v2690
  %v2957 = vpop.f32.mrb[0].mxu0
  %v2958 = vadd.f32 0.0, %v2957
  %v2959 = vpop.f32.mrb[0].mxu0
  %v2960 = vadd.f32 0.0, %v2959
  %v2961 = vpop.f32.mrb[0].mxu0
  %v2962 = vadd.f32 0.0, %v2961
  %v2963 = vpop.f32.mrb[0].mxu0
  %v2964 = vadd.f32 0.0, %v2963
  %2965 = vmatprep.mubr.bf16.mxu0 %v2693
  %2966 = vmatmul.mubr.bf16.gmra.mrb[0].mxu0 %v2692
  %v2967 = vpop.f32.mrb[0].mxu0
  %v2968 = vadd.f32 0.0, %v2967
  %v2969 = vpop.f32.mrb[0].mxu0
  %v2970 = vadd.f32 0.0, %v2969
  %v2971 = vpop.f32.mrb[0].mxu0
  %v2972 = vadd.f32 0.0, %v2971
  %v2973 = vpop.f32.mrb[0].mxu0
  %v2974 = vadd.f32 0.0, %v2973
  %2975 = vmatprep.mubr.bf16.mxu0 %v2695
  %2976 = vmatmul.mubr.bf16.gmra.mrb[0].mxu0 %v2694
  %v2977 = vpop.f32.mrb[0].mxu0
  %v2978 = vadd.f32 0.0, %v2977
  %v2979 = vpop.f32.mrb[0].mxu0
  %v2980 = vadd.f32 0.0, %v2979
  %v2981 = vpop.f32.mrb[0].mxu0
  %v2982 = vadd.f32 0.0, %v2981
  %v2983 = vpop.f32.mrb[0].mxu0
  %v2984 = vadd.f32 0.0, %v2983
  %2985 = vmatprep.mubr.bf16.mxu0 %v2697
  %2986 = vmatmul.mubr.bf16.gmra.mrb[0].mxu0 %v2696
  %v2987 = vpop.f32.mrb[0].mxu0
  %v2988 = vadd.f32 0.0, %v2987
  %v2989 = vpop.f32.mrb[0].mxu0
  %v2990 = vadd.f32 0.0, %v2989
  %v2991 = vpop.f32.mrb[0].mxu0
  %v2992 = vadd.f32 0.0, %v2991
  %v2993 = vpop.f32.mrb[0].mxu0
  %v2994 = vadd.f32 0.0, %v2993
  %2995 = vmatprep.mubr.bf16.mxu0 %v2699
  %2996 = vmatmul.mubr.bf16.gmra.mrb[0].mxu0 %v2698
  %v2997 = vpop.f32.mrb[0].mxu0
  %v2998 = vadd.f32 0.0, %v2997
  %v2999 = vpop.f32.mrb[0].mxu0
  %v3000 = vadd.f32 0.0, %v2999
  %v3001 = vpop.f32.mrb[0].mxu0
  %v3002 = vadd.f32 0.0, %v3001
  %v3003 = vpop.f32.mrb[0].mxu0
  %v3004 = vadd.f32 0.0, %v3003
  %3005 = vdwg.mxu0
  %v3006 = vadd.f32 %v2395, %v2928
  %v3007 = vadd.f32 %v2396, %v2930
  %v3008 = vadd.f32 %v2397, %v2932
  %v3009 = vadd.f32 %v2398, %v2934
  %v3010 = vadd.f32 %v2399, %v2938
  %v3011 = vadd.f32 %v2400, %v2940
  %v3012 = vadd.f32 %v2401, %v2942
  %v3013 = vadd.f32 %v2402, %v2944
  %v3014 = vadd.f32 %v2403, %v2948
  %v3015 = vadd.f32 %v2404, %v2950
  %v3016 = vadd.f32 %v2405, %v2952
  %v3017 = vadd.f32 %v2406, %v2954
  %v3018 = vadd.f32 %v2407, %v2958
  %v3019 = vadd.f32 %v2408, %v2960
  %v3020 = vadd.f32 %v2409, %v2962
  %v3021 = vadd.f32 %v2410, %v2964
  %v3022 = vadd.f32 %v2411, %v2968
  %v3023 = vadd.f32 %v2412, %v2970
  %v3024 = vadd.f32 %v2413, %v2972
  %v3025 = vadd.f32 %v2414, %v2974
  %v3026 = vadd.f32 %v2415, %v2978
  %v3027 = vadd.f32 %v2416, %v2980
  %v3028 = vadd.f32 %v2417, %v2982
  %v3029 = vadd.f32 %v2418, %v2984
  %v3030 = vadd.f32 %v2419, %v2988
  %v3031 = vadd.f32 %v2420, %v2990
  %v3032 = vadd.f32 %v2421, %v2992
  %v3033 = vadd.f32 %v2422, %v2994
  %v3034 = vadd.f32 %v2423, %v2998
  %v3035 = vadd.f32 %v2424, %v3000
  %v3036 = vadd.f32 %v2425, %v3002
  %v3037 = vadd.f32 %v2426, %v3004
  %v3038 = vld [vmem:[#allocation2] sm:$0xe0]
  %v3039 = vld [vmem:[#allocation2 + $0x8] sm:$0xe0]
  %v3040 = vld [vmem:[#allocation2 + $0x10] sm:$0x1f]
  %v3041 = vld [vmem:[#allocation2 + $0x18] sm:$0x1f]
  %v3042 = vld [vmem:[#allocation2 + $0x20] sm:$0xe0]
  %v3043 = vld [vmem:[#allocation2 + $0x28] sm:$0xe0]
  %v3044 = vld [vmem:[#allocation2 + $0x30] sm:$0x1f]
  %v3045 = vld [vmem:[#allocation2 + $0x38] sm:$0x1f]
  %v3046 = vld [vmem:[#allocation2 + $0x40] sm:$0xe0]
  %v3047 = vld [vmem:[#allocation2 + $0x48] sm:$0xe0]
  %v3048 = vld [vmem:[#allocation2 + $0x50] sm:$0x1f]
  %v3049 = vld [vmem:[#allocation2 + $0x58] sm:$0x1f]
  %v3050 = vld [vmem:[#allocation2 + $0x60] sm:$0xe0]
  %v3051 = vld [vmem:[#allocation2 + $0x68] sm:$0xe0]
  %v3052 = vld [vmem:[#allocation2 + $0x70] sm:$0x1f]
  %v3053 = vld [vmem:[#allocation2 + $0x78] sm:$0x1f]
  %v3054 = vld [vmem:[#allocation2 + $0x80] sm:$0xe0]
  %v3055 = vld [vmem:[#allocation2 + $0x88] sm:$0xe0]
  %v3056 = vld [vmem:[#allocation2 + $0x90] sm:$0x1f]
  %v3057 = vld [vmem:[#allocation2 + $0x98] sm:$0x1f]
  %v3058 = vld [vmem:[#allocation2 + $0xa0] sm:$0xe0]
  %v3059 = vld [vmem:[#allocation2 + $0xa8] sm:$0xe0]
  %v3060 = vld [vmem:[#allocation2 + $0xb0] sm:$0x1f]
  %v3061 = vld [vmem:[#allocation2 + $0xb8] sm:$0x1f]
  %v3062 = vld [vmem:[#allocation2 + $0xc0] sm:$0xe0]
  %v3063 = vld [vmem:[#allocation2 + $0xc8] sm:$0xe0]
  %v3064 = vld [vmem:[#allocation2 + $0xd0] sm:$0x1f]
  %v3065 = vld [vmem:[#allocation2 + $0xd8] sm:$0x1f]
  %v3066 = vld [vmem:[#allocation2 + $0xe0] sm:$0xe0]
  %v3067 = vld [vmem:[#allocation2 + $0xe8] sm:$0xe0]
  %v3068 = vld [vmem:[#allocation2 + $0xf0] sm:$0x1f]
  %v3069 = vld [vmem:[#allocation2 + $0xf8] sm:$0x1f]
  %v3070 = vld [vmem:[#allocation2 + $0x100] sm:$0xe0]
  %v3071 = vld [vmem:[#allocation2 + $0x108] sm:$0xe0]
  %v3072 = vld [vmem:[#allocation2 + $0x110] sm:$0x1f]
  %v3073 = vld [vmem:[#allocation2 + $0x118] sm:$0x1f]
  %v3074 = vld [vmem:[#allocation2 + $0x120] sm:$0xe0]
  %v3075 = vld [vmem:[#allocation2 + $0x128] sm:$0xe0]
  %v3076 = vld [vmem:[#allocation2 + $0x130] sm:$0x1f]
  %v3077 = vld [vmem:[#allocation2 + $0x138] sm:$0x1f]
  %v3078 = vld [vmem:[#allocation2 + $0x140] sm:$0xe0]
  %v3079 = vld [vmem:[#allocation2 + $0x148] sm:$0xe0]
  %v3080 = vld [vmem:[#allocation2 + $0x150] sm:$0x1f]
  %v3081 = vld [vmem:[#allocation2 + $0x158] sm:$0x1f]
  %v3082 = vld [vmem:[#allocation2 + $0x160] sm:$0xe0]
  %v3083 = vld [vmem:[#allocation2 + $0x168] sm:$0xe0]
  %v3084 = vld [vmem:[#allocation2 + $0x170] sm:$0x1f]
  %v3085 = vld [vmem:[#allocation2 + $0x178] sm:$0x1f]
  %v3086 = vld [vmem:[#allocation2 + $0x180] sm:$0xe0]
  %v3087 = vld [vmem:[#allocation2 + $0x188] sm:$0xe0]
  %v3088 = vld [vmem:[#allocation2 + $0x190] sm:$0x1f]
  %v3089 = vld [vmem:[#allocation2 + $0x198] sm:$0x1f]
  %v3090 = vld [vmem:[#allocation2 + $0x1a0] sm:$0xe0]
  %v3091 = vld [vmem:[#allocation2 + $0x1a8] sm:$0xe0]
  %v3092 = vld [vmem:[#allocation2 + $0x1b0] sm:$0x1f]
  %v3093 = vld [vmem:[#allocation2 + $0x1b8] sm:$0x1f]
  %v3094 = vld [vmem:[#allocation2 + $0x1c0] sm:$0xe0]
  %v3095 = vld [vmem:[#allocation2 + $0x1c8] sm:$0xe0]
  %v3096 = vld [vmem:[#allocation2 + $0x1d0] sm:$0x1f]
  %v3097 = vld [vmem:[#allocation2 + $0x1d8] sm:$0x1f]
  %v3098 = vld [vmem:[#allocation2 + $0x1e0] sm:$0xe0]
  %v3099 = vld [vmem:[#allocation2 + $0x1e8] sm:$0xe0]
  %v3100 = vld [vmem:[#allocation2 + $0x1f0] sm:$0x1f]
  %v3101 = vld [vmem:[#allocation2 + $0x1f8] sm:$0x1f]
  %vm3166 = vcmask 1042432
  %v3167 = vrot.slane %v3038, 5
  %v3168 = vrot.slane %v3040, 5
  %v3169 = vsel %vm3166, %v3167, %v3168
  %v3170 = vrot.slane %v3039, 5
  %v3171 = vrot.slane %v3041, 5
  %v3172 = vsel %vm3166, %v3170, %v3171
  %v3173 = vrot.slane %v3042, 5
  %v3174 = vrot.slane %v3044, 5
  %v3175 = vsel %vm3166, %v3173, %v3174
  %v3176 = vrot.slane %v3043, 5
  %v3177 = vrot.slane %v3045, 5
  %v3178 = vsel %vm3166, %v3176, %v3177
  %v3179 = vrot.slane %v3046, 5
  %v3180 = vrot.slane %v3048, 5
  %v3181 = vsel %vm3166, %v3179, %v3180
  %v3182 = vrot.slane %v3047, 5
  %v3183 = vrot.slane %v3049, 5
  %v3184 = vsel %vm3166, %v3182, %v3183
  %v3185 = vrot.slane %v3050, 5
  %v3186 = vrot.slane %v3052, 5
  %v3187 = vsel %vm3166, %v3185, %v3186
  %v3188 = vrot.slane %v3051, 5
  %v3189 = vrot.slane %v3053, 5
  %v3190 = vsel %vm3166, %v3188, %v3189
  %v3191 = vrot.slane %v3054, 5
  %v3192 = vrot.slane %v3056, 5
  %v3193 = vsel %vm3166, %v3191, %v3192
  %v3194 = vrot.slane %v3055, 5
  %v3195 = vrot.slane %v3057, 5
  %v3196 = vsel %vm3166, %v3194, %v3195
  %v3197 = vrot.slane %v3058, 5
  %v3198 = vrot.slane %v3060, 5
  %v3199 = vsel %vm3166, %v3197, %v3198
  %v3200 = vrot.slane %v3059, 5
  %v3201 = vrot.slane %v3061, 5
  %v3202 = vsel %vm3166, %v3200, %v3201
  %v3203 = vrot.slane %v3062, 5
  %v3204 = vrot.slane %v3064, 5
  %v3205 = vsel %vm3166, %v3203, %v3204
  %v3206 = vrot.slane %v3063, 5
  %v3207 = vrot.slane %v3065, 5
  %v3208 = vsel %vm3166, %v3206, %v3207
  %v3209 = vrot.slane %v3066, 5
  %v3210 = vrot.slane %v3068, 5
  %v3211 = vsel %vm3166, %v3209, %v3210
  %v3212 = vrot.slane %v3067, 5
  %v3213 = vrot.slane %v3069, 5
  %v3214 = vsel %vm3166, %v3212, %v3213
  %v3215 = vrot.slane %v3070, 5
  %v3216 = vrot.slane %v3072, 5
  %v3217 = vsel %vm3166, %v3215, %v3216
  %v3218 = vrot.slane %v3071, 5
  %v3219 = vrot.slane %v3073, 5
  %v3220 = vsel %vm3166, %v3218, %v3219
  %v3221 = vrot.slane %v3074, 5
  %v3222 = vrot.slane %v3076, 5
  %v3223 = vsel %vm3166, %v3221, %v3222
  %v3224 = vrot.slane %v3075, 5
  %v3225 = vrot.slane %v3077, 5
  %v3226 = vsel %vm3166, %v3224, %v3225
  %v3227 = vrot.slane %v3078, 5
  %v3228 = vrot.slane %v3080, 5
  %v3229 = vsel %vm3166, %v3227, %v3228
  %v3230 = vrot.slane %v3079, 5
  %v3231 = vrot.slane %v3081, 5
  %v3232 = vsel %vm3166, %v3230, %v3231
  %v3233 = vrot.slane %v3082, 5
  %v3234 = vrot.slane %v3084, 5
  %v3235 = vsel %vm3166, %v3233, %v3234
  %v3236 = vrot.slane %v3083, 5
  %v3237 = vrot.slane %v3085, 5
  %v3238 = vsel %vm3166, %v3236, %v3237
  %v3239 = vrot.slane %v3086, 5
  %v3240 = vrot.slane %v3088, 5
  %v3241 = vsel %vm3166, %v3239, %v3240
  %v3242 = vrot.slane %v3087, 5
  %v3243 = vrot.slane %v3089, 5
  %v3244 = vsel %vm3166, %v3242, %v3243
  %v3245 = vrot.slane %v3090, 5
  %v3246 = vrot.slane %v3092, 5
  %v3247 = vsel %vm3166, %v3245, %v3246
  %v3248 = vrot.slane %v3091, 5
  %v3249 = vrot.slane %v3093, 5
  %v3250 = vsel %vm3166, %v3248, %v3249
  %v3251 = vrot.slane %v3094, 5
  %v3252 = vrot.slane %v3096, 5
  %v3253 = vsel %vm3166, %v3251, %v3252
  %v3254 = vrot.slane %v3095, 5
  %v3255 = vrot.slane %v3097, 5
  %v3256 = vsel %vm3166, %v3254, %v3255
  %v3257 = vrot.slane %v3098, 5
  %v3258 = vrot.slane %v3100, 5
  %v3259 = vsel %vm3166, %v3257, %v3258
  %v3260 = vrot.slane %v3099, 5
  %v3261 = vrot.slane %v3101, 5
  %v3262 = vsel %vm3166, %v3260, %v3261
  %v3295 = vpack.c.bf16 %v3175, %v3169
  %v3296 = vpack.c.bf16 %v3178, %v3172
  %v3297 = vpack.c.bf16 %v3187, %v3181
  %v3298 = vpack.c.bf16 %v3190, %v3184
  %v3299 = vpack.c.bf16 %v3199, %v3193
  %v3300 = vpack.c.bf16 %v3202, %v3196
  %v3301 = vpack.c.bf16 %v3211, %v3205
  %v3302 = vpack.c.bf16 %v3214, %v3208
  %v3303 = vpack.c.bf16 %v3223, %v3217
  %v3304 = vpack.c.bf16 %v3226, %v3220
  %v3305 = vpack.c.bf16 %v3235, %v3229
  %v3306 = vpack.c.bf16 %v3238, %v3232
  %v3307 = vpack.c.bf16 %v3247, %v3241
  %v3308 = vpack.c.bf16 %v3250, %v3244
  %v3309 = vpack.c.bf16 %v3259, %v3253
  %v3310 = vpack.c.bf16 %v3262, %v3256
  %s3311 = scalar_lea.vmem %s1, 1280
  %v3312 = vld [vmem:[%s3311] sm:$0xff]
  %v3313 = vld [vmem:[%s3311 + $0x8] sm:$0xff]
  %v3314 = vld [vmem:[%s3311 + $0x10] sm:$0xff]
  %v3315 = vld [vmem:[%s3311 + $0x18] sm:$0xff]
  %v3316 = vld [vmem:[%s3311 + $0x20] sm:$0xff]
  %v3317 = vld [vmem:[%s3311 + $0x28] sm:$0xff]
  %v3318 = vld [vmem:[%s3311 + $0x30] sm:$0xff]
  %v3319 = vld [vmem:[%s3311 + $0x38] sm:$0xff]
  %v3320 = vld [vmem:[%s3311 + $0x40] sm:$0xff]
  %v3321 = vld [vmem:[%s3311 + $0x48] sm:$0xff]
  %v3322 = vld [vmem:[%s3311 + $0x50] sm:$0xff]
  %v3323 = vld [vmem:[%s3311 + $0x58] sm:$0xff]
  %v3324 = vld [vmem:[%s3311 + $0x60] sm:$0xff]
  %v3325 = vld [vmem:[%s3311 + $0x68] sm:$0xff]
  %v3326 = vld [vmem:[%s3311 + $0x70] sm:$0xff]
  %v3327 = vld [vmem:[%s3311 + $0x78] sm:$0xff]
  %v3328 = vld [vmem:[%s3311 + $0x80] sm:$0xff]
  %v3329 = vld [vmem:[%s3311 + $0x88] sm:$0xff]
  %v3330 = vld [vmem:[%s3311 + $0x90] sm:$0xff]
  %v3331 = vld [vmem:[%s3311 + $0x98] sm:$0xff]
  %v3332 = vld [vmem:[%s3311 + $0xa0] sm:$0xff]
  %v3333 = vld [vmem:[%s3311 + $0xa8] sm:$0xff]
  %v3334 = vld [vmem:[%s3311 + $0xb0] sm:$0xff]
  %v3335 = vld [vmem:[%s3311 + $0xb8] sm:$0xff]
  %v3336 = vld [vmem:[%s3311 + $0xc0] sm:$0xff]
  %v3337 = vld [vmem:[%s3311 + $0xc8] sm:$0xff]
  %v3338 = vld [vmem:[%s3311 + $0xd0] sm:$0xff]
  %v3339 = vld [vmem:[%s3311 + $0xd8] sm:$0xff]
  %v3340 = vld [vmem:[%s3311 + $0xe0] sm:$0xff]
  %v3341 = vld [vmem:[%s3311 + $0xe8] sm:$0xff]
  %v3342 = vld [vmem:[%s3311 + $0xf0] sm:$0xff]
  %v3343 = vld [vmem:[%s3311 + $0xf8] sm:$0xff]
  %v3376 = vunpack.c.l.b16 %v3312
  %v3377 = vunpack.c.h.b16 %v3312
  %v3378 = vunpack.c.l.b16 %v3313
  %v3379 = vunpack.c.h.b16 %v3313
  %v3380 = vunpack.c.l.b16 %v3314
  %v3381 = vunpack.c.h.b16 %v3314
  %v3382 = vunpack.c.l.b16 %v3315
  %v3383 = vunpack.c.h.b16 %v3315
  %v3384 = vunpack.c.l.b16 %v3316
  %v3385 = vunpack.c.h.b16 %v3316
  %v3386 = vunpack.c.l.b16 %v3317
  %v3387 = vunpack.c.h.b16 %v3317
  %v3388 = vunpack.c.l.b16 %v3318
  %v3389 = vunpack.c.h.b16 %v3318
  %v3390 = vunpack.c.l.b16 %v3319
  %v3391 = vunpack.c.h.b16 %v3319
  %v3392 = vunpack.c.l.b16 %v3320
  %v3393 = vunpack.c.h.b16 %v3320
  %v3394 = vunpack.c.l.b16 %v3321
  %v3395 = vunpack.c.h.b16 %v3321
  %v3396 = vunpack.c.l.b16 %v3322
  %v3397 = vunpack.c.h.b16 %v3322
  %v3398 = vunpack.c.l.b16 %v3323
  %v3399 = vunpack.c.h.b16 %v3323
  %v3400 = vunpack.c.l.b16 %v3324
  %v3401 = vunpack.c.h.b16 %v3324
  %v3402 = vunpack.c.l.b16 %v3325
  %v3403 = vunpack.c.h.b16 %v3325
  %v3404 = vunpack.c.l.b16 %v3326
  %v3405 = vunpack.c.h.b16 %v3326
  %v3406 = vunpack.c.l.b16 %v3327
  %v3407 = vunpack.c.h.b16 %v3327
  %v3408 = vunpack.c.l.b16 %v3328
  %v3409 = vunpack.c.h.b16 %v3328
  %v3410 = vunpack.c.l.b16 %v3329
  %v3411 = vunpack.c.h.b16 %v3329
  %v3412 = vunpack.c.l.b16 %v3330
  %v3413 = vunpack.c.h.b16 %v3330
  %v3414 = vunpack.c.l.b16 %v3331
  %v3415 = vunpack.c.h.b16 %v3331
  %v3416 = vunpack.c.l.b16 %v3332
  %v3417 = vunpack.c.h.b16 %v3332
  %v3418 = vunpack.c.l.b16 %v3333
  %v3419 = vunpack.c.h.b16 %v3333
  %v3420 = vunpack.c.l.b16 %v3334
  %v3421 = vunpack.c.h.b16 %v3334
  %v3422 = vunpack.c.l.b16 %v3335
  %v3423 = vunpack.c.h.b16 %v3335
  %v3424 = vunpack.c.l.b16 %v3336
  %v3425 = vunpack.c.h.b16 %v3336
  %v3426 = vunpack.c.l.b16 %v3337
  %v3427 = vunpack.c.h.b16 %v3337
  %v3428 = vunpack.c.l.b16 %v3338
  %v3429 = vunpack.c.h.b16 %v3338
  %v3430 = vunpack.c.l.b16 %v3339
  %v3431 = vunpack.c.h.b16 %v3339
  %v3432 = vunpack.c.l.b16 %v3340
  %v3433 = vunpack.c.h.b16 %v3340
  %v3434 = vunpack.c.l.b16 %v3341
  %v3435 = vunpack.c.h.b16 %v3341
  %v3436 = vunpack.c.l.b16 %v3342
  %v3437 = vunpack.c.h.b16 %v3342
  %v3438 = vunpack.c.l.b16 %v3343
  %v3439 = vunpack.c.h.b16 %v3343
  %v3440 = vpack.c.b16 %v3378, %v3376
  %v3441 = vpack.c.b16 %v3379, %v3377
  %v3442 = vpack.c.b16 %v3382, %v3380
  %v3443 = vpack.c.b16 %v3383, %v3381
  %v3444 = vpack.c.b16 %v3386, %v3384
  %v3445 = vpack.c.b16 %v3387, %v3385
  %v3446 = vpack.c.b16 %v3390, %v3388
  %v3447 = vpack.c.b16 %v3391, %v3389
  %v3448 = vpack.c.b16 %v3394, %v3392
  %v3449 = vpack.c.b16 %v3395, %v3393
  %v3450 = vpack.c.b16 %v3398, %v3396
  %v3451 = vpack.c.b16 %v3399, %v3397
  %v3452 = vpack.c.b16 %v3402, %v3400
  %v3453 = vpack.c.b16 %v3403, %v3401
  %v3454 = vpack.c.b16 %v3406, %v3404
  %v3455 = vpack.c.b16 %v3407, %v3405
  %v3456 = vpack.c.b16 %v3410, %v3408
  %v3457 = vpack.c.b16 %v3411, %v3409
  %v3458 = vpack.c.b16 %v3414, %v3412
  %v3459 = vpack.c.b16 %v3415, %v3413
  %v3460 = vpack.c.b16 %v3418, %v3416
  %v3461 = vpack.c.b16 %v3419, %v3417
  %v3462 = vpack.c.b16 %v3422, %v3420
  %v3463 = vpack.c.b16 %v3423, %v3421
  %v3464 = vpack.c.b16 %v3426, %v3424
  %v3465 = vpack.c.b16 %v3427, %v3425
  %v3466 = vpack.c.b16 %v3430, %v3428
  %v3467 = vpack.c.b16 %v3431, %v3429
  %v3468 = vpack.c.b16 %v3434, %v3432
  %v3469 = vpack.c.b16 %v3435, %v3433
  %v3470 = vpack.c.b16 %v3438, %v3436
  %v3471 = vpack.c.b16 %v3439, %v3437
  %3504 = vmatprep.subr.bf16.mxu0 %v3441
  %3505 = vmatpush1.bf16.msra.mxu0 %v3440
  %3506 = vmatprep.subr.bf16.mxu0 %v3443
  %3507 = vmatpush1.bf16.msra.mxu0 %v3442
  %3508 = vmatprep.subr.bf16.mxu0 %v3445
  %3509 = vmatpush1.bf16.msra.mxu0 %v3444
  %3510 = vmatprep.subr.bf16.mxu0 %v3447
  %3511 = vmatpush1.bf16.msra.mxu0 %v3446
  %3512 = vmatprep.subr.bf16.mxu0 %v3449
  %3513 = vmatpush1.bf16.msra.mxu0 %v3448
  %3514 = vmatprep.subr.bf16.mxu0 %v3451
  %3515 = vmatpush1.bf16.msra.mxu0 %v3450
  %3516 = vmatprep.subr.bf16.mxu0 %v3453
  %3517 = vmatpush1.bf16.msra.mxu0 %v3452
  %3518 = vmatprep.subr.bf16.mxu0 %v3455
  %3519 = vmatpush1.bf16.msra.mxu0 %v3454
  %3520 = vmatprep.subr.bf16.mxu0 %v3457
  %3521 = vmatpush1.bf16.msra.mxu0 %v3456
  %3522 = vmatprep.subr.bf16.mxu0 %v3459
  %3523 = vmatpush1.bf16.msra.mxu0 %v3458
  %3524 = vmatprep.subr.bf16.mxu0 %v3461
  %3525 = vmatpush1.bf16.msra.mxu0 %v3460
  %3526 = vmatprep.subr.bf16.mxu0 %v3463
  %3527 = vmatpush1.bf16.msra.mxu0 %v3462
  %3528 = vmatprep.subr.bf16.mxu0 %v3465
  %3529 = vmatpush1.bf16.msra.mxu0 %v3464
  %3530 = vmatprep.subr.bf16.mxu0 %v3467
  %3531 = vmatpush1.bf16.msra.mxu0 %v3466
  %3532 = vmatprep.subr.bf16.mxu0 %v3469
  %3533 = vmatpush1.bf16.msra.mxu0 %v3468
  %3534 = vmatprep.subr.bf16.mxu0 %v3471
  %3535 = vmatpush1.bf16.msra.mxu0 %v3470
  %3536 = vmatprep.mubr.bf16.mxu0 %v3296
  %3537 = vmatmul.mubr.bf16.gmra.mrb[0].mxu0 %v3295
  %v3538 = vpop.f32.mrb[0].mxu0
  %v3539 = vadd.f32 0.0, %v3538
  %v3540 = vpop.f32.mrb[0].mxu0
  %v3541 = vadd.f32 0.0, %v3540
  %v3542 = vpop.f32.mrb[0].mxu0
  %v3543 = vadd.f32 0.0, %v3542
  %v3544 = vpop.f32.mrb[0].mxu0
  %v3545 = vadd.f32 0.0, %v3544
  %3546 = vmatprep.mubr.bf16.mxu0 %v3298
  %3547 = vmatmul.mubr.bf16.gmra.mrb[0].mxu0 %v3297
  %v3548 = vpop.f32.mrb[0].mxu0
  %v3549 = vadd.f32 0.0, %v3548
  %v3550 = vpop.f32.mrb[0].mxu0
  %v3551 = vadd.f32 0.0, %v3550
  %v3552 = vpop.f32.mrb[0].mxu0
  %v3553 = vadd.f32 0.0, %v3552
  %v3554 = vpop.f32.mrb[0].mxu0
  %v3555 = vadd.f32 0.0, %v3554
  %3556 = vmatprep.mubr.bf16.mxu0 %v3300
  %3557 = vmatmul.mubr.bf16.gmra.mrb[0].mxu0 %v3299
  %v3558 = vpop.f32.mrb[0].mxu0
  %v3559 = vadd.f32 0.0, %v3558
  %v3560 = vpop.f32.mrb[0].mxu0
  %v3561 = vadd.f32 0.0, %v3560
  %v3562 = vpop.f32.mrb[0].mxu0
  %v3563 = vadd.f32 0.0, %v3562
  %v3564 = vpop.f32.mrb[0].mxu0
  %v3565 = vadd.f32 0.0, %v3564
  %3566 = vmatprep.mubr.bf16.mxu0 %v3302
  %3567 = vmatmul.mubr.bf16.gmra.mrb[0].mxu0 %v3301
  %v3568 = vpop.f32.mrb[0].mxu0
  %v3569 = vadd.f32 0.0, %v3568
  %v3570 = vpop.f32.mrb[0].mxu0
  %v3571 = vadd.f32 0.0, %v3570
  %v3572 = vpop.f32.mrb[0].mxu0
  %v3573 = vadd.f32 0.0, %v3572
  %v3574 = vpop.f32.mrb[0].mxu0
  %v3575 = vadd.f32 0.0, %v3574
  %3576 = vmatprep.mubr.bf16.mxu0 %v3304
  %3577 = vmatmul.mubr.bf16.gmra.mrb[0].mxu0 %v3303
  %v3578 = vpop.f32.mrb[0].mxu0
  %v3579 = vadd.f32 0.0, %v3578
  %v3580 = vpop.f32.mrb[0].mxu0
  %v3581 = vadd.f32 0.0, %v3580
  %v3582 = vpop.f32.mrb[0].mxu0
  %v3583 = vadd.f32 0.0, %v3582
  %v3584 = vpop.f32.mrb[0].mxu0
  %v3585 = vadd.f32 0.0, %v3584
  %3586 = vmatprep.mubr.bf16.mxu0 %v3306
  %3587 = vmatmul.mubr.bf16.gmra.mrb[0].mxu0 %v3305
  %v3588 = vpop.f32.mrb[0].mxu0
  %v3589 = vadd.f32 0.0, %v3588
  %v3590 = vpop.f32.mrb[0].mxu0
  %v3591 = vadd.f32 0.0, %v3590
  %v3592 = vpop.f32.mrb[0].mxu0
  %v3593 = vadd.f32 0.0, %v3592
  %v3594 = vpop.f32.mrb[0].mxu0
  %v3595 = vadd.f32 0.0, %v3594
  %3596 = vmatprep.mubr.bf16.mxu0 %v3308
  %3597 = vmatmul.mubr.bf16.gmra.mrb[0].mxu0 %v3307
  %v3598 = vpop.f32.mrb[0].mxu0
  %v3599 = vadd.f32 0.0, %v3598
  %v3600 = vpop.f32.mrb[0].mxu0
  %v3601 = vadd.f32 0.0, %v3600
  %v3602 = vpop.f32.mrb[0].mxu0
  %v3603 = vadd.f32 0.0, %v3602
  %v3604 = vpop.f32.mrb[0].mxu0
  %v3605 = vadd.f32 0.0, %v3604
  %3606 = vmatprep.mubr.bf16.mxu0 %v3310
  %3607 = vmatmul.mubr.bf16.gmra.mrb[0].mxu0 %v3309
  %v3608 = vpop.f32.mrb[0].mxu0
  %v3609 = vadd.f32 0.0, %v3608
  %v3610 = vpop.f32.mrb[0].mxu0
  %v3611 = vadd.f32 0.0, %v3610
  %v3612 = vpop.f32.mrb[0].mxu0
  %v3613 = vadd.f32 0.0, %v3612
  %v3614 = vpop.f32.mrb[0].mxu0
  %v3615 = vadd.f32 0.0, %v3614
  %3616 = vdwg.mxu0
  %v3617 = vadd.f32 %v3006, %v3539
  %v3618 = vadd.f32 %v3007, %v3541
  %v3619 = vadd.f32 %v3008, %v3543
  %v3620 = vadd.f32 %v3009, %v3545
  %v3621 = vadd.f32 %v3010, %v3549
  %v3622 = vadd.f32 %v3011, %v3551
  %v3623 = vadd.f32 %v3012, %v3553
  %v3624 = vadd.f32 %v3013, %v3555
  %v3625 = vadd.f32 %v3014, %v3559
  %v3626 = vadd.f32 %v3015, %v3561
  %v3627 = vadd.f32 %v3016, %v3563
  %v3628 = vadd.f32 %v3017, %v3565
  %v3629 = vadd.f32 %v3018, %v3569
  %v3630 = vadd.f32 %v3019, %v3571
  %v3631 = vadd.f32 %v3020, %v3573
  %v3632 = vadd.f32 %v3021, %v3575
  %v3633 = vadd.f32 %v3022, %v3579
  %v3634 = vadd.f32 %v3023, %v3581
  %v3635 = vadd.f32 %v3024, %v3583
  %v3636 = vadd.f32 %v3025, %v3585
  %v3637 = vadd.f32 %v3026, %v3589
  %v3638 = vadd.f32 %v3027, %v3591
  %v3639 = vadd.f32 %v3028, %v3593
  %v3640 = vadd.f32 %v3029, %v3595
  %v3641 = vadd.f32 %v3030, %v3599
  %v3642 = vadd.f32 %v3031, %v3601
  %v3643 = vadd.f32 %v3032, %v3603
  %v3644 = vadd.f32 %v3033, %v3605
  %v3645 = vadd.f32 %v3034, %v3609
  %v3646 = vadd.f32 %v3035, %v3611
  %v3647 = vadd.f32 %v3036, %v3613
  %v3648 = vadd.f32 %v3037, %v3615
  %v3649 = vld [vmem:[#allocation2] sm:$0xc0]
  %v3650 = vld [vmem:[#allocation2 + $0x8] sm:$0xc0]
  %v3651 = vld [vmem:[#allocation2 + $0x10] sm:$0x3f]
  %v3652 = vld [vmem:[#allocation2 + $0x18] sm:$0x3f]
  %v3653 = vld [vmem:[#allocation2 + $0x20] sm:$0xc0]
  %v3654 = vld [vmem:[#allocation2 + $0x28] sm:$0xc0]
  %v3655 = vld [vmem:[#allocation2 + $0x30] sm:$0x3f]
  %v3656 = vld [vmem:[#allocation2 + $0x38] sm:$0x3f]
  %v3657 = vld [vmem:[#allocation2 + $0x40] sm:$0xc0]
  %v3658 = vld [vmem:[#allocation2 + $0x48] sm:$0xc0]
  %v3659 = vld [vmem:[#allocation2 + $0x50] sm:$0x3f]
  %v3660 = vld [vmem:[#allocation2 + $0x58] sm:$0x3f]
  %v3661 = vld [vmem:[#allocation2 + $0x60] sm:$0xc0]
  %v3662 = vld [vmem:[#allocation2 + $0x68] sm:$0xc0]
  %v3663 = vld [vmem:[#allocation2 + $0x70] sm:$0x3f]
  %v3664 = vld [vmem:[#allocation2 + $0x78] sm:$0x3f]
  %v3665 = vld [vmem:[#allocation2 + $0x80] sm:$0xc0]
  %v3666 = vld [vmem:[#allocation2 + $0x88] sm:$0xc0]
  %v3667 = vld [vmem:[#allocation2 + $0x90] sm:$0x3f]
  %v3668 = vld [vmem:[#allocation2 + $0x98] sm:$0x3f]
  %v3669 = vld [vmem:[#allocation2 + $0xa0] sm:$0xc0]
  %v3670 = vld [vmem:[#allocation2 + $0xa8] sm:$0xc0]
  %v3671 = vld [vmem:[#allocation2 + $0xb0] sm:$0x3f]
  %v3672 = vld [vmem:[#allocation2 + $0xb8] sm:$0x3f]
  %v3673 = vld [vmem:[#allocation2 + $0xc0] sm:$0xc0]
  %v3674 = vld [vmem:[#allocation2 + $0xc8] sm:$0xc0]
  %v3675 = vld [vmem:[#allocation2 + $0xd0] sm:$0x3f]
  %v3676 = vld [vmem:[#allocation2 + $0xd8] sm:$0x3f]
  %v3677 = vld [vmem:[#allocation2 + $0xe0] sm:$0xc0]
  %v3678 = vld [vmem:[#allocation2 + $0xe8] sm:$0xc0]
  %v3679 = vld [vmem:[#allocation2 + $0xf0] sm:$0x3f]
  %v3680 = vld [vmem:[#allocation2 + $0xf8] sm:$0x3f]
  %v3681 = vld [vmem:[#allocation2 + $0x100] sm:$0xc0]
  %v3682 = vld [vmem:[#allocation2 + $0x108] sm:$0xc0]
  %v3683 = vld [vmem:[#allocation2 + $0x110] sm:$0x3f]
  %v3684 = vld [vmem:[#allocation2 + $0x118] sm:$0x3f]
  %v3685 = vld [vmem:[#allocation2 + $0x120] sm:$0xc0]
  %v3686 = vld [vmem:[#allocation2 + $0x128] sm:$0xc0]
  %v3687 = vld [vmem:[#allocation2 + $0x130] sm:$0x3f]
  %v3688 = vld [vmem:[#allocation2 + $0x138] sm:$0x3f]
  %v3689 = vld [vmem:[#allocation2 + $0x140] sm:$0xc0]
  %v3690 = vld [vmem:[#allocation2 + $0x148] sm:$0xc0]
  %v3691 = vld [vmem:[#allocation2 + $0x150] sm:$0x3f]
  %v3692 = vld [vmem:[#allocation2 + $0x158] sm:$0x3f]
  %v3693 = vld [vmem:[#allocation2 + $0x160] sm:$0xc0]
  %v3694 = vld [vmem:[#allocation2 + $0x168] sm:$0xc0]
  %v3695 = vld [vmem:[#allocation2 + $0x170] sm:$0x3f]
  %v3696 = vld [vmem:[#allocation2 + $0x178] sm:$0x3f]
  %v3697 = vld [vmem:[#allocation2 + $0x180] sm:$0xc0]
  %v3698 = vld [vmem:[#allocation2 + $0x188] sm:$0xc0]
  %v3699 = vld [vmem:[#allocation2 + $0x190] sm:$0x3f]
  %v3700 = vld [vmem:[#allocation2 + $0x198] sm:$0x3f]
  %v3701 = vld [vmem:[#allocation2 + $0x1a0] sm:$0xc0]
  %v3702 = vld [vmem:[#allocation2 + $0x1a8] sm:$0xc0]
  %v3703 = vld [vmem:[#allocation2 + $0x1b0] sm:$0x3f]
  %v3704 = vld [vmem:[#allocation2 + $0x1b8] sm:$0x3f]
  %v3705 = vld [vmem:[#allocation2 + $0x1c0] sm:$0xc0]
  %v3706 = vld [vmem:[#allocation2 + $0x1c8] sm:$0xc0]
  %v3707 = vld [vmem:[#allocation2 + $0x1d0] sm:$0x3f]
  %v3708 = vld [vmem:[#allocation2 + $0x1d8] sm:$0x3f]
  %v3709 = vld [vmem:[#allocation2 + $0x1e0] sm:$0xc0]
  %v3710 = vld [vmem:[#allocation2 + $0x1e8] sm:$0xc0]
  %v3711 = vld [vmem:[#allocation2 + $0x1f0] sm:$0x3f]
  %v3712 = vld [vmem:[#allocation2 + $0x1f8] sm:$0x3f]
  %vm3777 = vcmask 1041408
  %v3778 = vrot.slane %v3649, 6
  %v3779 = vrot.slane %v3651, 6
  %v3780 = vsel %vm3777, %v3778, %v3779
  %v3781 = vrot.slane %v3650, 6
  %v3782 = vrot.slane %v3652, 6
  %v3783 = vsel %vm3777, %v3781, %v3782
  %v3784 = vrot.slane %v3653, 6
  %v3785 = vrot.slane %v3655, 6
  %v3786 = vsel %vm3777, %v3784, %v3785
  %v3787 = vrot.slane %v3654, 6
  %v3788 = vrot.slane %v3656, 6
  %v3789 = vsel %vm3777, %v3787, %v3788
  %v3790 = vrot.slane %v3657, 6
  %v3791 = vrot.slane %v3659, 6
  %v3792 = vsel %vm3777, %v3790, %v3791
  %v3793 = vrot.slane %v3658, 6
  %v3794 = vrot.slane %v3660, 6
  %v3795 = vsel %vm3777, %v3793, %v3794
  %v3796 = vrot.slane %v3661, 6
  %v3797 = vrot.slane %v3663, 6
  %v3798 = vsel %vm3777, %v3796, %v3797
  %v3799 = vrot.slane %v3662, 6
  %v3800 = vrot.slane %v3664, 6
  %v3801 = vsel %vm3777, %v3799, %v3800
  %v3802 = vrot.slane %v3665, 6
  %v3803 = vrot.slane %v3667, 6
  %v3804 = vsel %vm3777, %v3802, %v3803
  %v3805 = vrot.slane %v3666, 6
  %v3806 = vrot.slane %v3668, 6
  %v3807 = vsel %vm3777, %v3805, %v3806
  %v3808 = vrot.slane %v3669, 6
  %v3809 = vrot.slane %v3671, 6
  %v3810 = vsel %vm3777, %v3808, %v3809
  %v3811 = vrot.slane %v3670, 6
  %v3812 = vrot.slane %v3672, 6
  %v3813 = vsel %vm3777, %v3811, %v3812
  %v3814 = vrot.slane %v3673, 6
  %v3815 = vrot.slane %v3675, 6
  %v3816 = vsel %vm3777, %v3814, %v3815
  %v3817 = vrot.slane %v3674, 6
  %v3818 = vrot.slane %v3676, 6
  %v3819 = vsel %vm3777, %v3817, %v3818
  %v3820 = vrot.slane %v3677, 6
  %v3821 = vrot.slane %v3679, 6
  %v3822 = vsel %vm3777, %v3820, %v3821
  %v3823 = vrot.slane %v3678, 6
  %v3824 = vrot.slane %v3680, 6
  %v3825 = vsel %vm3777, %v3823, %v3824
  %v3826 = vrot.slane %v3681, 6
  %v3827 = vrot.slane %v3683, 6
  %v3828 = vsel %vm3777, %v3826, %v3827
  %v3829 = vrot.slane %v3682, 6
  %v3830 = vrot.slane %v3684, 6
  %v3831 = vsel %vm3777, %v3829, %v3830
  %v3832 = vrot.slane %v3685, 6
  %v3833 = vrot.slane %v3687, 6
  %v3834 = vsel %vm3777, %v3832, %v3833
  %v3835 = vrot.slane %v3686, 6
  %v3836 = vrot.slane %v3688, 6
  %v3837 = vsel %vm3777, %v3835, %v3836
  %v3838 = vrot.slane %v3689, 6
  %v3839 = vrot.slane %v3691, 6
  %v3840 = vsel %vm3777, %v3838, %v3839
  %v3841 = vrot.slane %v3690, 6
  %v3842 = vrot.slane %v3692, 6
  %v3843 = vsel %vm3777, %v3841, %v3842
  %v3844 = vrot.slane %v3693, 6
  %v3845 = vrot.slane %v3695, 6
  %v3846 = vsel %vm3777, %v3844, %v3845
  %v3847 = vrot.slane %v3694, 6
  %v3848 = vrot.slane %v3696, 6
  %v3849 = vsel %vm3777, %v3847, %v3848
  %v3850 = vrot.slane %v3697, 6
  %v3851 = vrot.slane %v3699, 6
  %v3852 = vsel %vm3777, %v3850, %v3851
  %v3853 = vrot.slane %v3698, 6
  %v3854 = vrot.slane %v3700, 6
  %v3855 = vsel %vm3777, %v3853, %v3854
  %v3856 = vrot.slane %v3701, 6
  %v3857 = vrot.slane %v3703, 6
  %v3858 = vsel %vm3777, %v3856, %v3857
  %v3859 = vrot.slane %v3702, 6
  %v3860 = vrot.slane %v3704, 6
  %v3861 = vsel %vm3777, %v3859, %v3860
  %v3862 = vrot.slane %v3705, 6
  %v3863 = vrot.slane %v3707, 6
  %v3864 = vsel %vm3777, %v3862, %v3863
  %v3865 = vrot.slane %v3706, 6
  %v3866 = vrot.slane %v3708, 6
  %v3867 = vsel %vm3777, %v3865, %v3866
  %v3868 = vrot.slane %v3709, 6
  %v3869 = vrot.slane %v3711, 6
  %v3870 = vsel %vm3777, %v3868, %v3869
  %v3871 = vrot.slane %v3710, 6
  %v3872 = vrot.slane %v3712, 6
  %v3873 = vsel %vm3777, %v3871, %v3872
  %v3906 = vpack.c.bf16 %v3786, %v3780
  %v3907 = vpack.c.bf16 %v3789, %v3783
  %v3908 = vpack.c.bf16 %v3798, %v3792
  %v3909 = vpack.c.bf16 %v3801, %v3795
  %v3910 = vpack.c.bf16 %v3810, %v3804
  %v3911 = vpack.c.bf16 %v3813, %v3807
  %v3912 = vpack.c.bf16 %v3822, %v3816
  %v3913 = vpack.c.bf16 %v3825, %v3819
  %v3914 = vpack.c.bf16 %v3834, %v3828
  %v3915 = vpack.c.bf16 %v3837, %v3831
  %v3916 = vpack.c.bf16 %v3846, %v3840
  %v3917 = vpack.c.bf16 %v3849, %v3843
  %v3918 = vpack.c.bf16 %v3858, %v3852
  %v3919 = vpack.c.bf16 %v3861, %v3855
  %v3920 = vpack.c.bf16 %v3870, %v3864
  %v3921 = vpack.c.bf16 %v3873, %v3867
  %s3922 = scalar_lea.vmem %s1, 1536
  %v3923 = vld [vmem:[%s3922] sm:$0xff]
  %v3924 = vld [vmem:[%s3922 + $0x8] sm:$0xff]
  %v3925 = vld [vmem:[%s3922 + $0x10] sm:$0xff]
  %v3926 = vld [vmem:[%s3922 + $0x18] sm:$0xff]
  %v3927 = vld [vmem:[%s3922 + $0x20] sm:$0xff]
  %v3928 = vld [vmem:[%s3922 + $0x28] sm:$0xff]
  %v3929 = vld [vmem:[%s3922 + $0x30] sm:$0xff]
  %v3930 = vld [vmem:[%s3922 + $0x38] sm:$0xff]
  %v3931 = vld [vmem:[%s3922 + $0x40] sm:$0xff]
  %v3932 = vld [vmem:[%s3922 + $0x48] sm:$0xff]
  %v3933 = vld [vmem:[%s3922 + $0x50] sm:$0xff]
  %v3934 = vld [vmem:[%s3922 + $0x58] sm:$0xff]
  %v3935 = vld [vmem:[%s3922 + $0x60] sm:$0xff]
  %v3936 = vld [vmem:[%s3922 + $0x68] sm:$0xff]
  %v3937 = vld [vmem:[%s3922 + $0x70] sm:$0xff]
  %v3938 = vld [vmem:[%s3922 + $0x78] sm:$0xff]
  %v3939 = vld [vmem:[%s3922 + $0x80] sm:$0xff]
  %v3940 = vld [vmem:[%s3922 + $0x88] sm:$0xff]
  %v3941 = vld [vmem:[%s3922 + $0x90] sm:$0xff]
  %v3942 = vld [vmem:[%s3922 + $0x98] sm:$0xff]
  %v3943 = vld [vmem:[%s3922 + $0xa0] sm:$0xff]
  %v3944 = vld [vmem:[%s3922 + $0xa8] sm:$0xff]
  %v3945 = vld [vmem:[%s3922 + $0xb0] sm:$0xff]
  %v3946 = vld [vmem:[%s3922 + $0xb8] sm:$0xff]
  %v3947 = vld [vmem:[%s3922 + $0xc0] sm:$0xff]
  %v3948 = vld [vmem:[%s3922 + $0xc8] sm:$0xff]
  %v3949 = vld [vmem:[%s3922 + $0xd0] sm:$0xff]
  %v3950 = vld [vmem:[%s3922 + $0xd8] sm:$0xff]
  %v3951 = vld [vmem:[%s3922 + $0xe0] sm:$0xff]
  %v3952 = vld [vmem:[%s3922 + $0xe8] sm:$0xff]
  %v3953 = vld [vmem:[%s3922 + $0xf0] sm:$0xff]
  %v3954 = vld [vmem:[%s3922 + $0xf8] sm:$0xff]
  %v3987 = vunpack.c.l.b16 %v3923
  %v3988 = vunpack.c.h.b16 %v3923
  %v3989 = vunpack.c.l.b16 %v3924
  %v3990 = vunpack.c.h.b16 %v3924
  %v3991 = vunpack.c.l.b16 %v3925
  %v3992 = vunpack.c.h.b16 %v3925
  %v3993 = vunpack.c.l.b16 %v3926
  %v3994 = vunpack.c.h.b16 %v3926
  %v3995 = vunpack.c.l.b16 %v3927
  %v3996 = vunpack.c.h.b16 %v3927
  %v3997 = vunpack.c.l.b16 %v3928
  %v3998 = vunpack.c.h.b16 %v3928
  %v3999 = vunpack.c.l.b16 %v3929
  %v4000 = vunpack.c.h.b16 %v3929
  %v4001 = vunpack.c.l.b16 %v3930
  %v4002 = vunpack.c.h.b16 %v3930
  %v4003 = vunpack.c.l.b16 %v3931
  %v4004 = vunpack.c.h.b16 %v3931
  %v4005 = vunpack.c.l.b16 %v3932
  %v4006 = vunpack.c.h.b16 %v3932
  %v4007 = vunpack.c.l.b16 %v3933
  %v4008 = vunpack.c.h.b16 %v3933
  %v4009 = vunpack.c.l.b16 %v3934
  %v4010 = vunpack.c.h.b16 %v3934
  %v4011 = vunpack.c.l.b16 %v3935
  %v4012 = vunpack.c.h.b16 %v3935
  %v4013 = vunpack.c.l.b16 %v3936
  %v4014 = vunpack.c.h.b16 %v3936
  %v4015 = vunpack.c.l.b16 %v3937
  %v4016 = vunpack.c.h.b16 %v3937
  %v4017 = vunpack.c.l.b16 %v3938
  %v4018 = vunpack.c.h.b16 %v3938
  %v4019 = vunpack.c.l.b16 %v3939
  %v4020 = vunpack.c.h.b16 %v3939
  %v4021 = vunpack.c.l.b16 %v3940
  %v4022 = vunpack.c.h.b16 %v3940
  %v4023 = vunpack.c.l.b16 %v3941
  %v4024 = vunpack.c.h.b16 %v3941
  %v4025 = vunpack.c.l.b16 %v3942
  %v4026 = vunpack.c.h.b16 %v3942
  %v4027 = vunpack.c.l.b16 %v3943
  %v4028 = vunpack.c.h.b16 %v3943
  %v4029 = vunpack.c.l.b16 %v3944
  %v4030 = vunpack.c.h.b16 %v3944
  %v4031 = vunpack.c.l.b16 %v3945
  %v4032 = vunpack.c.h.b16 %v3945
  %v4033 = vunpack.c.l.b16 %v3946
  %v4034 = vunpack.c.h.b16 %v3946
  %v4035 = vunpack.c.l.b16 %v3947
  %v4036 = vunpack.c.h.b16 %v3947
  %v4037 = vunpack.c.l.b16 %v3948
  %v4038 = vunpack.c.h.b16 %v3948
  %v4039 = vunpack.c.l.b16 %v3949
  %v4040 = vunpack.c.h.b16 %v3949
  %v4041 = vunpack.c.l.b16 %v3950
  %v4042 = vunpack.c.h.b16 %v3950
  %v4043 = vunpack.c.l.b16 %v3951
  %v4044 = vunpack.c.h.b16 %v3951
  %v4045 = vunpack.c.l.b16 %v3952
  %v4046 = vunpack.c.h.b16 %v3952
  %v4047 = vunpack.c.l.b16 %v3953
  %v4048 = vunpack.c.h.b16 %v3953
  %v4049 = vunpack.c.l.b16 %v3954
  %v4050 = vunpack.c.h.b16 %v3954
  %v4051 = vpack.c.b16 %v3989, %v3987
  %v4052 = vpack.c.b16 %v3990, %v3988
  %v4053 = vpack.c.b16 %v3993, %v3991
  %v4054 = vpack.c.b16 %v3994, %v3992
  %v4055 = vpack.c.b16 %v3997, %v3995
  %v4056 = vpack.c.b16 %v3998, %v3996
  %v4057 = vpack.c.b16 %v4001, %v3999
  %v4058 = vpack.c.b16 %v4002, %v4000
  %v4059 = vpack.c.b16 %v4005, %v4003
  %v4060 = vpack.c.b16 %v4006, %v4004
  %v4061 = vpack.c.b16 %v4009, %v4007
  %v4062 = vpack.c.b16 %v4010, %v4008
  %v4063 = vpack.c.b16 %v4013, %v4011
  %v4064 = vpack.c.b16 %v4014, %v4012
  %v4065 = vpack.c.b16 %v4017, %v4015
  %v4066 = vpack.c.b16 %v4018, %v4016
  %v4067 = vpack.c.b16 %v4021, %v4019
  %v4068 = vpack.c.b16 %v4022, %v4020
  %v4069 = vpack.c.b16 %v4025, %v4023
  %v4070 = vpack.c.b16 %v4026, %v4024
  %v4071 = vpack.c.b16 %v4029, %v4027
  %v4072 = vpack.c.b16 %v4030, %v4028
  %v4073 = vpack.c.b16 %v4033, %v4031
  %v4074 = vpack.c.b16 %v4034, %v4032
  %v4075 = vpack.c.b16 %v4037, %v4035
  %v4076 = vpack.c.b16 %v4038, %v4036
  %v4077 = vpack.c.b16 %v4041, %v4039
  %v4078 = vpack.c.b16 %v4042, %v4040
  %v4079 = vpack.c.b16 %v4045, %v4043
  %v4080 = vpack.c.b16 %v4046, %v4044
  %v4081 = vpack.c.b16 %v4049, %v4047
  %v4082 = vpack.c.b16 %v4050, %v4048
  %4115 = vmatprep.subr.bf16.mxu0 %v4052
  %4116 = vmatpush1.bf16.msra.mxu0 %v4051
  %4117 = vmatprep.subr.bf16.mxu0 %v4054
  %4118 = vmatpush1.bf16.msra.mxu0 %v4053
  %4119 = vmatprep.subr.bf16.mxu0 %v4056
  %4120 = vmatpush1.bf16.msra.mxu0 %v4055
  %4121 = vmatprep.subr.bf16.mxu0 %v4058
  %4122 = vmatpush1.bf16.msra.mxu0 %v4057
  %4123 = vmatprep.subr.bf16.mxu0 %v4060
  %4124 = vmatpush1.bf16.msra.mxu0 %v4059
  %4125 = vmatprep.subr.bf16.mxu0 %v4062
  %4126 = vmatpush1.bf16.msra.mxu0 %v4061
  %4127 = vmatprep.subr.bf16.mxu0 %v4064
  %4128 = vmatpush1.bf16.msra.mxu0 %v4063
  %4129 = vmatprep.subr.bf16.mxu0 %v4066
  %4130 = vmatpush1.bf16.msra.mxu0 %v4065
  %4131 = vmatprep.subr.bf16.mxu0 %v4068
  %4132 = vmatpush1.bf16.msra.mxu0 %v4067
  %4133 = vmatprep.subr.bf16.mxu0 %v4070
  %4134 = vmatpush1.bf16.msra.mxu0 %v4069
  %4135 = vmatprep.subr.bf16.mxu0 %v4072
  %4136 = vmatpush1.bf16.msra.mxu0 %v4071
  %4137 = vmatprep.subr.bf16.mxu0 %v4074
  %4138 = vmatpush1.bf16.msra.mxu0 %v4073
  %4139 = vmatprep.subr.bf16.mxu0 %v4076
  %4140 = vmatpush1.bf16.msra.mxu0 %v4075
  %4141 = vmatprep.subr.bf16.mxu0 %v4078
  %4142 = vmatpush1.bf16.msra.mxu0 %v4077
  %4143 = vmatprep.subr.bf16.mxu0 %v4080
  %4144 = vmatpush1.bf16.msra.mxu0 %v4079
  %4145 = vmatprep.subr.bf16.mxu0 %v4082
  %4146 = vmatpush1.bf16.msra.mxu0 %v4081
  %4147 = vmatprep.mubr.bf16.mxu0 %v3907
  %4148 = vmatmul.mubr.bf16.gmra.mrb[0].mxu0 %v3906
  %v4149 = vpop.f32.mrb[0].mxu0
  %v4150 = vadd.f32 0.0, %v4149
  %v4151 = vpop.f32.mrb[0].mxu0
  %v4152 = vadd.f32 0.0, %v4151
  %v4153 = vpop.f32.mrb[0].mxu0
  %v4154 = vadd.f32 0.0, %v4153
  %v4155 = vpop.f32.mrb[0].mxu0
  %v4156 = vadd.f32 0.0, %v4155
  %4157 = vmatprep.mubr.bf16.mxu0 %v3909
  %4158 = vmatmul.mubr.bf16.gmra.mrb[0].mxu0 %v3908
  %v4159 = vpop.f32.mrb[0].mxu0
  %v4160 = vadd.f32 0.0, %v4159
  %v4161 = vpop.f32.mrb[0].mxu0
  %v4162 = vadd.f32 0.0, %v4161
  %v4163 = vpop.f32.mrb[0].mxu0
  %v4164 = vadd.f32 0.0, %v4163
  %v4165 = vpop.f32.mrb[0].mxu0
  %v4166 = vadd.f32 0.0, %v4165
  %4167 = vmatprep.mubr.bf16.mxu0 %v3911
  %4168 = vmatmul.mubr.bf16.gmra.mrb[0].mxu0 %v3910
  %v4169 = vpop.f32.mrb[0].mxu0
  %v4170 = vadd.f32 0.0, %v4169
  %v4171 = vpop.f32.mrb[0].mxu0
  %v4172 = vadd.f32 0.0, %v4171
  %v4173 = vpop.f32.mrb[0].mxu0
  %v4174 = vadd.f32 0.0, %v4173
  %v4175 = vpop.f32.mrb[0].mxu0
  %v4176 = vadd.f32 0.0, %v4175
  %4177 = vmatprep.mubr.bf16.mxu0 %v3913
  %4178 = vmatmul.mubr.bf16.gmra.mrb[0].mxu0 %v3912
  %v4179 = vpop.f32.mrb[0].mxu0
  %v4180 = vadd.f32 0.0, %v4179
  %v4181 = vpop.f32.mrb[0].mxu0
  %v4182 = vadd.f32 0.0, %v4181
  %v4183 = vpop.f32.mrb[0].mxu0
  %v4184 = vadd.f32 0.0, %v4183
  %v4185 = vpop.f32.mrb[0].mxu0
  %v4186 = vadd.f32 0.0, %v4185
  %4187 = vmatprep.mubr.bf16.mxu0 %v3915
  %4188 = vmatmul.mubr.bf16.gmra.mrb[0].mxu0 %v3914
  %v4189 = vpop.f32.mrb[0].mxu0
  %v4190 = vadd.f32 0.0, %v4189
  %v4191 = vpop.f32.mrb[0].mxu0
  %v4192 = vadd.f32 0.0, %v4191
  %v4193 = vpop.f32.mrb[0].mxu0
  %v4194 = vadd.f32 0.0, %v4193
  %v4195 = vpop.f32.mrb[0].mxu0
  %v4196 = vadd.f32 0.0, %v4195
  %4197 = vmatprep.mubr.bf16.mxu0 %v3917
  %4198 = vmatmul.mubr.bf16.gmra.mrb[0].mxu0 %v3916
  %v4199 = vpop.f32.mrb[0].mxu0
  %v4200 = vadd.f32 0.0, %v4199
  %v4201 = vpop.f32.mrb[0].mxu0
  %v4202 = vadd.f32 0.0, %v4201
  %v4203 = vpop.f32.mrb[0].mxu0
  %v4204 = vadd.f32 0.0, %v4203
  %v4205 = vpop.f32.mrb[0].mxu0
  %v4206 = vadd.f32 0.0, %v4205
  %4207 = vmatprep.mubr.bf16.mxu0 %v3919
  %4208 = vmatmul.mubr.bf16.gmra.mrb[0].mxu0 %v3918
  %v4209 = vpop.f32.mrb[0].mxu0
  %v4210 = vadd.f32 0.0, %v4209
  %v4211 = vpop.f32.mrb[0].mxu0
  %v4212 = vadd.f32 0.0, %v4211
  %v4213 = vpop.f32.mrb[0].mxu0
  %v4214 = vadd.f32 0.0, %v4213
  %v4215 = vpop.f32.mrb[0].mxu0
  %v4216 = vadd.f32 0.0, %v4215
  %4217 = vmatprep.mubr.bf16.mxu0 %v3921
  %4218 = vmatmul.mubr.bf16.gmra.mrb[0].mxu0 %v3920
  %v4219 = vpop.f32.mrb[0].mxu0
  %v4220 = vadd.f32 0.0, %v4219
  %v4221 = vpop.f32.mrb[0].mxu0
  %v4222 = vadd.f32 0.0, %v4221
  %v4223 = vpop.f32.mrb[0].mxu0
  %v4224 = vadd.f32 0.0, %v4223
  %v4225 = vpop.f32.mrb[0].mxu0
  %v4226 = vadd.f32 0.0, %v4225
  %4227 = vdwg.mxu0
  %v4228 = vadd.f32 %v3617, %v4150
  %v4229 = vadd.f32 %v3618, %v4152
  %v4230 = vadd.f32 %v3619, %v4154
  %v4231 = vadd.f32 %v3620, %v4156
  %v4232 = vadd.f32 %v3621, %v4160
  %v4233 = vadd.f32 %v3622, %v4162
  %v4234 = vadd.f32 %v3623, %v4164
  %v4235 = vadd.f32 %v3624, %v4166
  %v4236 = vadd.f32 %v3625, %v4170
  %v4237 = vadd.f32 %v3626, %v4172
  %v4238 = vadd.f32 %v3627, %v4174
  %v4239 = vadd.f32 %v3628, %v4176
  %v4240 = vadd.f32 %v3629, %v4180
  %v4241 = vadd.f32 %v3630, %v4182
  %v4242 = vadd.f32 %v3631, %v4184
  %v4243 = vadd.f32 %v3632, %v4186
  %v4244 = vadd.f32 %v3633, %v4190
  %v4245 = vadd.f32 %v3634, %v4192
  %v4246 = vadd.f32 %v3635, %v4194
  %v4247 = vadd.f32 %v3636, %v4196
  %v4248 = vadd.f32 %v3637, %v4200
  %v4249 = vadd.f32 %v3638, %v4202
  %v4250 = vadd.f32 %v3639, %v4204
  %v4251 = vadd.f32 %v3640, %v4206
  %v4252 = vadd.f32 %v3641, %v4210
  %v4253 = vadd.f32 %v3642, %v4212
  %v4254 = vadd.f32 %v3643, %v4214
  %v4255 = vadd.f32 %v3644, %v4216
  %v4256 = vadd.f32 %v3645, %v4220
  %v4257 = vadd.f32 %v3646, %v4222
  %v4258 = vadd.f32 %v3647, %v4224
  %v4259 = vadd.f32 %v3648, %v4226
  %v4260 = vld [vmem:[%s2] sm:$0x3]
  %v4262 = vlaneseq
  %v4263 = vshrl.u32 %v4262, 7
  %v4264 = vsub.s32 0, %v4263
  %v4265 = vrot.slane %v4260, %v4264
  %v4266 = vlaneseq
  %v4267 = vshrl.u32 %v4266, 7
  %v4268 = vsub.s32 1, %v4267
  %v4269 = vrot.slane %v4260, %v4268
  %v4272 = vmul.f32 %v4228, %v4265
  %v4273 = vmul.f32 %v4229, %v4269
  %v4274 = vmul.f32 %v4230, %v4265
  %v4275 = vmul.f32 %v4231, %v4269
  %v4276 = vmul.f32 %v4232, %v4265
  %v4277 = vmul.f32 %v4233, %v4269
  %v4278 = vmul.f32 %v4234, %v4265
  %v4279 = vmul.f32 %v4235, %v4269
  %v4280 = vmul.f32 %v4236, %v4265
  %v4281 = vmul.f32 %v4237, %v4269
  %v4282 = vmul.f32 %v4238, %v4265
  %v4283 = vmul.f32 %v4239, %v4269
  %v4284 = vmul.f32 %v4240, %v4265
  %v4285 = vmul.f32 %v4241, %v4269
  %v4286 = vmul.f32 %v4242, %v4265
  %v4287 = vmul.f32 %v4243, %v4269
  %v4288 = vmul.f32 %v4244, %v4265
  %v4289 = vmul.f32 %v4245, %v4269
  %v4290 = vmul.f32 %v4246, %v4265
  %v4291 = vmul.f32 %v4247, %v4269
  %v4292 = vmul.f32 %v4248, %v4265
  %v4293 = vmul.f32 %v4249, %v4269
  %v4294 = vmul.f32 %v4250, %v4265
  %v4295 = vmul.f32 %v4251, %v4269
  %v4296 = vmul.f32 %v4252, %v4265
  %v4297 = vmul.f32 %v4253, %v4269
  %v4298 = vmul.f32 %v4254, %v4265
  %v4299 = vmul.f32 %v4255, %v4269
  %v4300 = vmul.f32 %v4256, %v4265
  %v4301 = vmul.f32 %v4257, %v4269
  %v4302 = vmul.f32 %v4258, %v4265
  %v4303 = vmul.f32 %v4259, %v4269
  %v4304 = vld [vmem:[%s3] sm:$0x3]
  %v4306 = vlaneseq
  %v4307 = vshrl.u32 %v4306, 7
  %v4308 = vsub.s32 0, %v4307
  %v4309 = vrot.slane %v4304, %v4308
  %v4310 = vlaneseq
  %v4311 = vshrl.u32 %v4310, 7
  %v4312 = vsub.s32 1, %v4311
  %v4313 = vrot.slane %v4304, %v4312
  %v4316 = vadd.f32 %v4272, %v4309
  %v4317 = vadd.f32 %v4273, %v4313
  %v4318 = vadd.f32 %v4274, %v4309
  %v4319 = vadd.f32 %v4275, %v4313
  %v4320 = vadd.f32 %v4276, %v4309
  %v4321 = vadd.f32 %v4277, %v4313
  %v4322 = vadd.f32 %v4278, %v4309
  %v4323 = vadd.f32 %v4279, %v4313
  %v4324 = vadd.f32 %v4280, %v4309
  %v4325 = vadd.f32 %v4281, %v4313
  %v4326 = vadd.f32 %v4282, %v4309
  %v4327 = vadd.f32 %v4283, %v4313
  %v4328 = vadd.f32 %v4284, %v4309
  %v4329 = vadd.f32 %v4285, %v4313
  %v4330 = vadd.f32 %v4286, %v4309
  %v4331 = vadd.f32 %v4287, %v4313
  %v4332 = vadd.f32 %v4288, %v4309
  %v4333 = vadd.f32 %v4289, %v4313
  %v4334 = vadd.f32 %v4290, %v4309
  %v4335 = vadd.f32 %v4291, %v4313
  %v4336 = vadd.f32 %v4292, %v4309
  %v4337 = vadd.f32 %v4293, %v4313
  %v4338 = vadd.f32 %v4294, %v4309
  %v4339 = vadd.f32 %v4295, %v4313
  %v4340 = vadd.f32 %v4296, %v4309
  %v4341 = vadd.f32 %v4297, %v4313
  %v4342 = vadd.f32 %v4298, %v4309
  %v4343 = vadd.f32 %v4299, %v4313
  %v4344 = vadd.f32 %v4300, %v4309
  %v4345 = vadd.f32 %v4301, %v4313
  %v4346 = vadd.f32 %v4302, %v4309
  %v4347 = vadd.f32 %v4303, %v4313
  %v4348 = vmax.f32 %v4316, 0.0
  %v4349 = vmax.f32 %v4317, 0.0
  %v4350 = vmax.f32 %v4318, 0.0
  %v4351 = vmax.f32 %v4319, 0.0
  %v4352 = vmax.f32 %v4320, 0.0
  %v4353 = vmax.f32 %v4321, 0.0
  %v4354 = vmax.f32 %v4322, 0.0
  %v4355 = vmax.f32 %v4323, 0.0
  %v4356 = vmax.f32 %v4324, 0.0
  %v4357 = vmax.f32 %v4325, 0.0
  %v4358 = vmax.f32 %v4326, 0.0
  %v4359 = vmax.f32 %v4327, 0.0
  %v4360 = vmax.f32 %v4328, 0.0
  %v4361 = vmax.f32 %v4329, 0.0
  %v4362 = vmax.f32 %v4330, 0.0
  %v4363 = vmax.f32 %v4331, 0.0
  %v4364 = vmax.f32 %v4332, 0.0
  %v4365 = vmax.f32 %v4333, 0.0
  %v4366 = vmax.f32 %v4334, 0.0
  %v4367 = vmax.f32 %v4335, 0.0
  %v4368 = vmax.f32 %v4336, 0.0
  %v4369 = vmax.f32 %v4337, 0.0
  %v4370 = vmax.f32 %v4338, 0.0
  %v4371 = vmax.f32 %v4339, 0.0
  %v4372 = vmax.f32 %v4340, 0.0
  %v4373 = vmax.f32 %v4341, 0.0
  %v4374 = vmax.f32 %v4342, 0.0
  %v4375 = vmax.f32 %v4343, 0.0
  %v4376 = vmax.f32 %v4344, 0.0
  %v4377 = vmax.f32 %v4345, 0.0
  %v4378 = vmax.f32 %v4346, 0.0
  %v4379 = vmax.f32 %v4347, 0.0
  %4380 = vst [vmem:[%s4] sm:$0xff] %v4348
  %4381 = vst [vmem:[%s4 + $0x8] sm:$0xff] %v4349
  %4382 = vst [vmem:[%s4 + $0x10] sm:$0xff] %v4350
  %4383 = vst [vmem:[%s4 + $0x18] sm:$0xff] %v4351
  %4384 = vst [vmem:[%s4 + $0x20] sm:$0xff] %v4352
  %4385 = vst [vmem:[%s4 + $0x28] sm:$0xff] %v4353
  %4386 = vst [vmem:[%s4 + $0x30] sm:$0xff] %v4354
  %4387 = vst [vmem:[%s4 + $0x38] sm:$0xff] %v4355
  %4388 = vst [vmem:[%s4 + $0x40] sm:$0xff] %v4356
  %4389 = vst [vmem:[%s4 + $0x48] sm:$0xff] %v4357
  %4390 = vst [vmem:[%s4 + $0x50] sm:$0xff] %v4358
  %4391 = vst [vmem:[%s4 + $0x58] sm:$0xff] %v4359
  %4392 = vst [vmem:[%s4 + $0x60] sm:$0xff] %v4360
  %4393 = vst [vmem:[%s4 + $0x68] sm:$0xff] %v4361
  %4394 = vst [vmem:[%s4 + $0x70] sm:$0xff] %v4362
  %4395 = vst [vmem:[%s4 + $0x78] sm:$0xff] %v4363
  %4396 = vst [vmem:[%s4 + $0x80] sm:$0xff] %v4364
  %4397 = vst [vmem:[%s4 + $0x88] sm:$0xff] %v4365
  %4398 = vst [vmem:[%s4 + $0x90] sm:$0xff] %v4366
  %4399 = vst [vmem:[%s4 + $0x98] sm:$0xff] %v4367
  %4400 = vst [vmem:[%s4 + $0xa0] sm:$0xff] %v4368
  %4401 = vst [vmem:[%s4 + $0xa8] sm:$0xff] %v4369
  %4402 = vst [vmem:[%s4 + $0xb0] sm:$0xff] %v4370
  %4403 = vst [vmem:[%s4 + $0xb8] sm:$0xff] %v4371
  %4404 = vst [vmem:[%s4 + $0xc0] sm:$0xff] %v4372
  %4405 = vst [vmem:[%s4 + $0xc8] sm:$0xff] %v4373
  %4406 = vst [vmem:[%s4 + $0xd0] sm:$0xff] %v4374
  %4407 = vst [vmem:[%s4 + $0xd8] sm:$0xff] %v4375
  %4408 = vst [vmem:[%s4 + $0xe0] sm:$0xff] %v4376
  %4409 = vst [vmem:[%s4 + $0xe8] sm:$0xff] %v4377
  %4410 = vst [vmem:[%s4 + $0xf0] sm:$0xff] %v4378
  %4411 = vst [vmem:[%s4 + $0xf8] sm:$0xff] %v4379
  // Predicated region
  $region18: #{_lambda_.15} parent=0 // pred_check
    _
  $region19: #{_lambda_.15} parent=0 // pred_check_branch
    %4413 = sbr.rel (0) target = $region21
  $region20: #{_lambda_.15} parent=0 // pred_region
    _
  $region21: #{_lambda_.15} parent=0 // pred_fallthru
    _
  // Predicated region
  $region22: #{_lambda_.15} parent=0 // pred_check
    _
  $region23: #{_lambda_.15} parent=0 // pred_check_branch
    %4415 = sbr.rel (0) target = $region25
  $region24: #{_lambda_.15} parent=0 // pred_region
    _
  $region25: #{_lambda_.15} parent=0 // pred_fallthru
    _

</llo_original>
